<compile_context>
chip_gen: v7x
topology: tpu7x:2x2x1
jax: 0.10.0
libtpu: 0.0.40
codegen_flags: <defaults>
</compile_context>

<pallas_src>
import math

import jax
import jax.numpy as jnp
from jax.experimental import pallas as pl
from jax.experimental.pallas import tpu as pltpu

EPS = 1e-5

# Column blocks (in units of D) of the packed (D, 8*D) weight matrix, stored
# (in, out) so every GEMM is a plain `h @ W` (no transposed contraction, no
# per-matmul relayout):  [ LIN | Q K V | O | A G | PW2 ]
C_LIN, C_Q, C_K, C_V, C_O, C_A, C_G, C_PW2 = range(8)
NW_COLS = 8

# Rows of the packed (NVEC, D) vector tensor (biases / scales, always f32).
(V_BL, V_G1, V_B1, V_BQ, V_BK, V_BV, V_BO, V_G2, V_B2, V_BA, V_BG,
 V_DW0, V_DW1, V_DW2, V_DWB, V_BP2, V_GF, V_BF) = range(18)
NVEC = 18


# ----------------------------------------------------------------------------
# shared per-tile math (used by the Pallas kernel AND by a plain-JAX reference)
# ----------------------------------------------------------------------------
def _tile_forward(xt, halo, Wp, V, *, kc, keep_prev, keep_next, approx_recip):
    """xt: (bt, T, D) f32 batch-major tile; halo: (2, T, D) f32 neighbour rows;
    Wp: (D, 8*D) compute-dtype packed weights (in, out); V: (NVEC, D) f32.
    kc: None -> full softmax, int -> flash key-chunk (multiple of 128).
    Returns the ConformerBlock output tile, (bt, T, D) f32."""
    bt, T, D = xt.shape
    cdt = Wp.dtype
    f32 = jnp.float32

    def vrow(r):                       # (1, D) f32, broadcasts against (b, t, D)
        return V[r:r + 1, :]

    def mm(h, c0, c1):                 # y = h @ Wp[:, c0*D:c1*D]   (f32 acc)
        b, t, _ = h.shape
        h2 = h.reshape(b * t, D).astype(cdt)      # free when T % 8 == 0
        y2 = jnp.dot(h2, Wp[:, c0 * D:c1 * D], preferred_element_type=f32)
        return y2.reshape(b, t, (c1 - c0) * D)

    def layer_norm(h, g, b):
        mu = jnp.mean(h, axis=-1, keepdims=True)
        var = jnp.mean(jnp.square(h - mu), axis=-1, keepdims=True)
        return (h - mu) * jax.lax.rsqrt(var + EPS) * g + b

    def recip(x):
        return pl.reciprocal(x, approx=True) if approx_recip else 1.0 / x

    def attention(q, k, v):
        # 1/sqrt(D) is already folded into the Q weights/bias.
        if kc is None or kc >= T:
            # Resident-T path: one T-wide QK^T, one softmax, one T-wide PV.
            s = jnp.einsum("bqd,bkd->bqk", q, k, preferred_element_type=f32)
            m = jnp.max(s, axis=-1, keepdims=True)
            e = jnp.exp(s - m)
            p = (e * recip(jnp.sum(e, axis=-1, keepdims=True))).astype(cdt)
            return jnp.einsum("bqk,bkd->bqd", p, v, preferred_element_type=f32)

        # Flash/online-softmax fallback for long T (kc is a lane-dense
        # multiple of 128 dividing T); fori_loop bounds the live ranges.
        b = q.shape[0]

        def body(c, carry):
            m, l, acc = carry
            ks = jax.lax.dynamic_slice_in_dim(k, c * kc, kc, axis=1)
            vs = jax.lax.dynamic_slice_in_dim(v, c * kc, kc, axis=1)
            s = jnp.einsum("bqd,bkd->bqk", q, ks, preferred_element_type=f32)
            m_new = jnp.maximum(m, jnp.max(s, axis=-1, keepdims=True))
            alpha = jnp.exp(m - m_new)
            p = jnp.exp(s - m_new)
            l = alpha * l + jnp.sum(p, axis=-1, keepdims=True)
            acc = alpha * acc + jnp.einsum("bqk,bkd->bqd", p.astype(cdt), vs,
                                           preferred_element_type=f32)
            return m_new, l, acc

        init = (jnp.full((b, T, 1), -1e30, f32),
                jnp.zeros((b, T, 1), f32),
                jnp.zeros((b, T, D), f32))
        m, l, acc = jax.lax.fori_loop(0, T // kc, body, init)
        return acc * recip(l)

    # Merge the halo rows into the main tile: ONE pre-conv pass over
    # (bt+2, T, D) — the 2 extra rows ride along the big-M GEMMs for free.
    xe = jnp.concatenate([halo[0:1], xt, halo[1:2]], axis=0)

    # x = x + 0.5 * Linear(x)                 (0.5 folded into W / bias)
    y = xe + mm(xe, C_LIN, C_LIN + 1) + vrow(V_BL)

    # MHSA module: external Q/K/V Linears fused with MHA in_proj offline,
    # Q/K/V emitted by ONE (D, 3D) GEMM, attention scale folded into Q.
    hn = layer_norm(y, vrow(V_G1), vrow(V_B1))
    qkv = mm(hn, C_Q, C_V + 1)
    q = (qkv[..., :D] + vrow(V_BQ)).astype(cdt)
    k = (qkv[..., D:2 * D] + vrow(V_BK)).astype(cdt)
    v = (qkv[..., 2 * D:] + vrow(V_BV)).astype(cdt)
    y = y + mm(attention(q, k, v), C_O, C_O + 1) + vrow(V_BO)

    # Convolution module up to the GLU (value/gate from ONE (D, 2D) GEMM).
    hn = layer_norm(y, vrow(V_G2), vrow(V_B2))
    ag = mm(hn, C_A, C_G + 1)
    hg = (ag[..., :D] + vrow(V_BA)) * jax.nn.sigmoid(ag[..., D:] + vrow(V_BG))

    # depthwise Conv1d(k=3, padding=1, groups=D) along the *batch* axis;
    # the halo GLU rows are masked at the global batch boundary (== zero
    # padding); eval-mode BatchNorm is folded into the taps / bias.
    hg_m = jnp.concatenate([hg[0:1] * keep_prev, hg[1:bt + 1],
                            hg[bt + 1:bt + 2] * keep_next], axis=0)
    hd = (hg_m[0:bt] * vrow(V_DW0) + hg_m[1:bt + 1] * vrow(V_DW1)
          + hg_m[2:bt + 2] * vrow(V_DW2) + vrow(V_DWB))
    hd = hd * jax.nn.sigmoid(hd)                               # SiLU
    y = y[1:bt + 1] + mm(hd, C_PW2, C_PW2 + 1) + vrow(V_BP2)   # pointwise 2
    # x = x + 0.5 * Linear(x)  (same shared linear layer)
    y = y + mm(y, C_LIN, C_LIN + 1) + vrow(V_BL)
    return layer_norm(y, vrow(V_GF), vrow(V_BF))               # final LayerNorm


# ----------------------------------------------------------------------------
# Pallas kernel + wrapper
# ----------------------------------------------------------------------------
def _make_kernel(kc, approx_recip):
    def kernel(x_ref, halo_ref, w_ref, v_ref, o_ref):
        i = pl.program_id(0)
        n = pl.num_programs(0)
        keep_prev = jnp.where(i > 0, 1.0, 0.0)
        keep_next = jnp.where(i < n - 1, 1.0, 0.0)
        out = _tile_forward(x_ref[...], halo_ref[0], w_ref[...], v_ref[...],
                            kc=kc, keep_prev=keep_prev, keep_next=keep_next,
                            approx_recip=approx_recip)
        o_ref[...] = out.astype(o_ref.dtype)
    return kernel


def _fold_params(params, compute_dtype):
    """Offline parameter folding / fusion / packing (done in the wrapper)."""
    D = params["wl"].shape[0]
    scale = 1.0 / math.sqrt(D)                   # MHA scale, folded into Q
    wl05 = 0.5 * params["wl"]
    bl05 = 0.5 * params["bl"]
    # Linear(dim,dim) composed with MultiheadAttention in_proj -> one matmul.
    wqf = scale * (params["wqi"] @ params["wq"])
    bqf = scale * (params["bq"] @ params["wqi"].T + params["bqi"])
    wkf = params["wki"] @ params["wk"]
    bkf = params["bk"] @ params["wki"].T + params["bki"]
    wvf = params["wvi"] @ params["wv"]
    bvf = params["bv"] @ params["wvi"].T + params["bvi"]
    # pointwise conv1 split into GLU value / gate halves.
    wa, wg = params["wpw1"][:D, :], params["wpw1"][D:, :]
    ba, bg = params["bpw1"][:, :D], params["bpw1"][:, D:]
    # eval-mode BatchNorm folded into the depthwise taps / bias.
    s = params["bng"] * jax.lax.rsqrt(params["bnv"] + EPS)       # (1, D)
    wdw_f = params["wdw"] * s                                    # (3, D)
    bdw_f = (params["bdw"] - params["bnm"]) * s + params["bnb"]  # (1, D)

    # One (D, 8*D) packed (in, out) weight matrix: [LIN | Q K V | O | A G | PW2]
    Wp = jnp.concatenate(
        [wl05.T, wqf.T, wkf.T, wvf.T, params["wo"].T, wa.T, wg.T,
         params["wpw2"].T], axis=1).astype(compute_dtype)
    V = jnp.concatenate(
        [bl05, params["g1"], params["b1"], bqf, bkf, bvf, params["bo"],
         params["g2"], params["b2"], ba, bg,
         wdw_f[0:1], wdw_f[1:2], wdw_f[2:3], bdw_f,
         params["bpw2"], params["gf"], params["bf"]],
        axis=0).astype(jnp.float32)                              # (NVEC, D)
    return Wp, V


def _attention_mode(T, key_chunk):
    """None -> one full-softmax pass (score block resident for T <= 1024);
    otherwise a lane-dense flash key-chunk (multiple of 128 dividing T)."""
    if key_chunk is not None and 128 <= key_chunk < T and T % key_chunk == 0:
        return key_chunk
    if T <= 1024:
        return None
    for kc in (512, 384, 256, 128):
        if T % kc == 0:
            return kc
    return None


def _pick_tb(B, T, block_b):
    """Batch-tile size: target GEMM M = tb*T ~ 512, keep >= 2 grid tiles."""
    divs = [d for d in range(1, B + 1) if B % d == 0]
    if block_b:
        cap = min(block_b, B)
    else:
        cap = max(1, min(B, -(-512 // max(T, 1))))      # ceil(512 / T)
    tb = max([d for d in divs if d <= cap] or [1])
    if B // tb < 2:                    # v7x: 2 TensorCores -> want >= 2 tiles
        smaller = [d for d in divs if d <= max(B // 2, 1)]
        if smaller:
            tb = max(smaller)
    # TODO(synk): prime/odd B degrades tb (up to 200% halo overhead); padding B
    # to a friendlier multiple in the caller would avoid it.
    return tb


def _vmem_limit_bytes():
    """VMEM budget per generation: ~100 MiB on 128 MiB chips (v5e/v6e),
    ~48 MiB on v7x's 64 MiB, with a conservative fallback."""
    mib = 1024 * 1024
    try:
        cap = int(getattr(pltpu.get_tpu_info(), "vmem_capacity_bytes", 0))
    except Exception:
        cap = 0
    if cap <= 0:
        cap = 64 * mib
    return int(min(max(cap - 16 * mib, 32 * mib), 100 * mib))


def conformer_block(x, params, *, block_b=None, key_chunk=None,
                    compute_dtype=jnp.bfloat16):
    """ConformerBlock forward.  x: (T, B, D) float32; returns (T, B, D) f32."""
    T, B, D = x.shape
    tb = _pick_tb(B, T, block_b)
    nb = B // tb
    kc = _attention_mode(T, key_chunk)

    Wp, V = _fold_params(params, compute_dtype)

    # Batch-major working layout (B, T, D): D stays on lanes, attention is
    # canonical per batch row, the depthwise shift is a leading-axis concat,
    # and the (tb, T, D) output tile is lane-dense for D multiples of 128.
    # TODO(synk): for D not a multiple of 128, lanes are under-filled; a padded
    # D (with masked LayerNorm statistics) would improve VPU/store efficiency.
    xb = jnp.transpose(x, (1, 0, 2)).astype(jnp.float32)
    xr = xb.reshape(nb, tb, T, D)
    zero = jnp.zeros((1, 1, T, D), jnp.float32)
    prev = jnp.concatenate([zero, xr[:-1, tb - 1:tb]], axis=0)   # (nb, 1, T, D)
    nxt = jnp.concatenate([xr[1:, 0:1], zero], axis=0)           # (nb, 1, T, D)
    halo = jnp.concatenate([prev, nxt], axis=1)                  # (nb, 2, T, D)

    kernel = _make_kernel(kc, approx_recip=(compute_dtype != jnp.float32))
    compiler_params = pltpu.CompilerParams(
        dimension_semantics=("parallel",),
        vmem_limit_bytes=_vmem_limit_bytes())

    def call(single_buffer_consts):
        kw = {}
        if single_buffer_consts and hasattr(pl, "Buffered"):
            # Constant operands: block index never changes -> single buffer
            # (saves a full weight-stack copy of VMEM, matters most on v7x).
            kw = dict(pipeline_mode=pl.Buffered(1))
        w_spec = pl.BlockSpec((D, NW_COLS * D), lambda i: (0, 0), **kw)
        v_spec = pl.BlockSpec((NVEC, D), lambda i: (0, 0), **kw)
        return pl.pallas_call(
            kernel,
            out_shape=jax.ShapeDtypeStruct((B, T, D), jnp.float32),
            grid=(nb,),
            in_specs=[
                pl.BlockSpec((tb, T, D), lambda i: (i, 0, 0)),       # x tile
                pl.BlockSpec((1, 2, T, D), lambda i: (i, 0, 0, 0)),  # halo rows
                w_spec,                                              # weights
                v_spec,                                              # biases
            ],
            out_specs=pl.BlockSpec((tb, T, D), lambda i: (i, 0, 0)),
            compiler_params=compiler_params,
        )(xb, halo, Wp, V)

    try:
        out_b = call(True)
    except Exception:        # pipeline_mode unsupported -> default buffering
        out_b = call(False)
    return jnp.transpose(out_b, (1, 0, 2))


# ----------------------------------------------------------------------------
# references (plain JAX, run through XLA) for self-checking
# ----------------------------------------------------------------------------
def _matched_reference(x, params, *, key_chunk=None, compute_dtype=jnp.bfloat16):
    """Same folded-parameter / mixed-precision math as the kernel, evaluated as
    one un-tiled call (zero halo).  Validates tiling + halo + lowering."""
    T, B, D = x.shape
    kc = _attention_mode(T, key_chunk)
    Wp, V = _fold_params(params, compute_dtype)
    xb = jnp.transpose(x, (1, 0, 2)).astype(jnp.float32)
    halo = jnp.zeros((2, T, D), jnp.float32)
    out_b = _tile_forward(xb, halo, Wp, V, kc=kc, keep_prev=0.0, keep_next=0.0,
                          approx_recip=False)
    return jnp.transpose(out_b, (1, 0, 2))


def _reference_forward(x, p):
    """Faithful float32 reference of the PyTorch module (un-fused params)."""
    HI = jax.lax.Precision.HIGHEST

    def lin(h, w, b):
        return jnp.einsum("tbd,od->tbo", h, w, precision=HI) + b

    def ln(h, g, b):
        mu = jnp.mean(h, axis=-1, keepdims=True)
        var = jnp.mean(jnp.square(h - mu), axis=-1, keepdims=True)
        return (h - mu) * jax.lax.rsqrt(var + EPS) * g + b

    T, B, D = x.shape
    x = x + 0.5 * lin(x, p["wl"], p["bl"])
    # MHSA module
    h = ln(x, p["g1"], p["b1"])
    q = lin(lin(h, p["wq"], p["bq"]), p["wqi"], p["bqi"])
    k = lin(lin(h, p["wk"], p["bk"]), p["wki"], p["bki"])
    v = lin(lin(h, p["wv"], p["bv"]), p["wvi"], p["bvi"])
    s = jnp.einsum("tbd,sbd->bts", q, k, precision=HI) / math.sqrt(D)
    s = s - jnp.max(s, axis=-1, keepdims=True)
    e = jnp.exp(s)
    attn = e / jnp.sum(e, axis=-1, keepdims=True)
    ctx = jnp.einsum("bts,sbd->tbd", attn, v, precision=HI)
    x = x + lin(ctx, p["wo"], p["bo"])
    # Convolution module
    h = ln(x, p["g2"], p["b2"])
    h = lin(h, p["wpw1"], p["bpw1"])
    h = h[..., :D] * jax.nn.sigmoid(h[..., D:])                  # GLU(dim=1)
    z = jnp.zeros((T, 1, D), h.dtype)
    h_prev = jnp.concatenate([z, h[:, :-1, :]], axis=1)
    h_next = jnp.concatenate([h[:, 1:, :], z], axis=1)
    h = (h_prev * p["wdw"][0:1] + h * p["wdw"][1:2] + h_next * p["wdw"][2:3]
         + p["bdw"])
    h = (h - p["bnm"]) * jax.lax.rsqrt(p["bnv"] + EPS) * p["bng"] + p["bnb"]
    h = h * jax.nn.sigmoid(h)                                    # SiLU
    h = lin(h, p["wpw2"], p["bpw2"])
    x = x + h
    x = x + 0.5 * lin(x, p["wl"], p["bl"])
    return ln(x, p["gf"], p["bf"])


# ----------------------------------------------------------------------------
# parameter initialisation (PyTorch layouts: Linear weights are (out, in))
# ----------------------------------------------------------------------------
def init_params(key, dim):
    D = dim
    s = 0.1
    keys = iter(jax.random.split(key, 48))

    def rnd(shape, scale=s):
        return jax.random.normal(next(keys), shape, jnp.float32) * scale

    return {
        "wl": rnd((D, D)), "bl": rnd((1, D)),
        "g1": 1.0 + rnd((1, D)), "b1": rnd((1, D)),
        "wq": rnd((D, D)), "bq": rnd((1, D)),
        "wk": rnd((D, D)), "bk": rnd((1, D)),
        "wv": rnd((D, D)), "bv": rnd((1, D)),
        "wqi": rnd((D, D)), "bqi": rnd((1, D)),
        "wki": rnd((D, D)), "bki": rnd((1, D)),
        "wvi": rnd((D, D)), "bvi": rnd((1, D)),
        "wo": rnd((D, D)), "bo": rnd((1, D)),
        "g2": 1.0 + rnd((1, D)), "b2": rnd((1, D)),
        "wpw1": rnd((2 * D, D)), "bpw1": rnd((1, 2 * D)),
        "wdw": rnd((3, D), 0.6), "bdw": rnd((1, D), 0.3),
        "bng": 1.0 + rnd((1, D), 0.3), "bnb": rnd((1, D), 0.3),
        "bnm": rnd((1, D), 0.3),
        "bnv": jax.random.uniform(next(keys), (1, D), jnp.float32, 0.5, 1.5),
        "wpw2": rnd((D, D)), "bpw2": rnd((1, D)),
        "gf": 1.0 + rnd((1, D)), "bf": rnd((1, D)),
    }


if __name__ == "__main__":
    T, B, D = 16, 16, 128          # (seq, batch, dim) -> 2 batch tiles of 8
    key = jax.random.PRNGKey(0)
    kx, kp = jax.random.split(key)
    x = jax.random.normal(kx, (T, B, D), jnp.float32)
    params = init_params(kp, D)

    out = jax.block_until_ready(
        conformer_block(x, params, compute_dtype=jnp.bfloat16))
    assert out.shape == (T, B, D) and out.dtype == jnp.float32

    # (1) matched-precision reference: same folded params / attention math /
    #     bf16 casts run through XLA — catches tiling, halo and lowering bugs.
    ref_match = jax.block_until_ready(
        _matched_reference(x, params, compute_dtype=jnp.bfloat16))
    err_match = float(jnp.max(jnp.abs(out - ref_match)))
    assert err_match < 5e-2, f"mismatch vs matched-precision reference: {err_match}"

    # (2) faithful float32 reference of the PyTorch module (un-fused params,
    #     full softmax) — catches folding / fusion / algorithm bugs.
    ref_exact = jax.block_until_ready(_reference_forward(x, params))
    err_exact = float(jnp.max(jnp.abs(out - ref_exact)))
    assert err_exact < 2e-1, f"mismatch vs float32 reference: {err_exact}"

    print("KERNEL_OK")
</pallas_src>

<mosaic_0001>
module attributes {stable_mosaic.version = 11 : i64} {
  func.func @kernel(%arg0: i32, %arg1: memref<8x16x128xf32, #tpu.memory_space<vmem>>, %arg2: memref<1x2x16x128xf32, #tpu.memory_space<vmem>>, %arg3: memref<128x1024xbf16, #tpu.memory_space<vmem>>, %arg4: memref<18x128xf32, #tpu.memory_space<vmem>>, %arg5: memref<8x16x128xf32, #tpu.memory_space<vmem>>) attributes {dimension_semantics = [#tpu.dimension_semantics<parallel>], iteration_bounds = array<i64: 2>, scalar_prefetch = 0 : i64, scratch_operands = 0 : i64, tpu.core_type = #tpu.core_type<tc>, window_params = [{transform_indices = @transform_0, window_bounds = array<i64: 8, 16, 128>}, {transform_indices = @transform_1, window_bounds = array<i64: 1, 2, 16, 128>}, {pipeline_mode = #tpu.pipeline_mode<synchronous>, transform_indices = @transform_2, window_bounds = array<i64: 128, 1024>}, {pipeline_mode = #tpu.pipeline_mode<synchronous>, transform_indices = @transform_3, window_bounds = array<i64: 18, 128>}, {transform_indices = @transform_4, window_bounds = array<i64: 8, 16, 128>}]} {
    %c0_i32 = arith.constant 0 : i32
    %0 = arith.cmpi sgt, %arg0, %c0_i32 : i32
    %cst = arith.constant 1.000000e+00 : f32
    %cst_0 = arith.constant 0.000000e+00 : f32
    %1 = arith.select %0, %cst, %cst_0 : f32
    %c1_i32 = arith.constant 1 : i32
    %2 = arith.cmpi slt, %arg0, %c1_i32 : i32
    %cst_1 = arith.constant 1.000000e+00 : f32
    %cst_2 = arith.constant 0.000000e+00 : f32
    %3 = arith.select %2, %cst_1, %cst_2 : f32
    %c0 = arith.constant 0 : index
    %c0_3 = arith.constant 0 : index
    %c0_4 = arith.constant 0 : index
    %4 = vector.load %arg1[%c0, %c0_3, %c0_4] : memref<8x16x128xf32, #tpu.memory_space<vmem>>, vector<8x16x128xf32>
    %c0_5 = arith.constant 0 : index
    %c0_6 = arith.constant 0 : index
    %c0_7 = arith.constant 0 : index
    %c0_8 = arith.constant 0 : index
    %5 = vector.load %arg2[%c0_5, %c0_6, %c0_7, %c0_8] : memref<1x2x16x128xf32, #tpu.memory_space<vmem>>, vector<1x2x16x128xf32>
    %6 = vector.shape_cast %5 : vector<1x2x16x128xf32> to vector<2x16x128xf32>
    %c0_9 = arith.constant 0 : index
    %c0_10 = arith.constant 0 : index
    %7 = vector.load %arg3[%c0_9, %c0_10] : memref<128x1024xbf16, #tpu.memory_space<vmem>>, vector<128x1024xbf16>
    %c0_11 = arith.constant 0 : index
    %c0_12 = arith.constant 0 : index
    %8 = vector.load %arg4[%c0_11, %c0_12] : memref<18x128xf32, #tpu.memory_space<vmem>>, vector<18x128xf32>
    %9 = vector.extract_strided_slice %6 {offsets = [0, 0, 0], sizes = [1, 16, 128], strides = [1, 1, 1]} : vector<2x16x128xf32> to vector<1x16x128xf32>
    %10 = vector.extract_strided_slice %6 {offsets = [1, 0, 0], sizes = [1, 16, 128], strides = [1, 1, 1]} : vector<2x16x128xf32> to vector<1x16x128xf32>
    %11 = tpu.concatenate %9, %4, %10 in 0 : vector<1x16x128xf32>, vector<8x16x128xf32>, vector<1x16x128xf32> -> vector<10x16x128xf32>
    %12 = vector.shape_cast %11 : vector<10x16x128xf32> to vector<160x128xf32>
    %13 = arith.truncf %12 : vector<160x128xf32> to vector<160x128xbf16>
    %14 = vector.extract_strided_slice %7 {offsets = [0, 0], sizes = [128, 128], strides = [1, 1]} : vector<128x1024xbf16> to vector<128x128xbf16>
    %cst_13 = arith.constant dense<0.000000e+00> : vector<160x128xf32>
    %15 = tpu.matmul %13, %14, %cst_13 {dimension_numbers = #tpu.dot_dimension_numbers<[1], [0], [0], [1], [0, 0, 1, 1], [], []>} : vector<160x128xbf16>, vector<128x128xbf16>, vector<160x128xf32> -> vector<160x128xf32>
    %16 = vector.shape_cast %15 : vector<160x128xf32> to vector<10x16x128xf32>
    %17 = arith.addf %11, %16 : vector<10x16x128xf32>
    %18 = vector.extract_strided_slice %8 {offsets = [0, 0], sizes = [1, 128], strides = [1, 1]} : vector<18x128xf32> to vector<1x128xf32>
    %19 = vector.shape_cast %18 : vector<1x128xf32> to vector<1x1x128xf32>
    %20 = vector.broadcast %19 : vector<1x1x128xf32> to vector<10x16x128xf32>
    %21 = arith.addf %17, %20 : vector<10x16x128xf32>
    %22 = vector.extract_strided_slice %8 {offsets = [1, 0], sizes = [1, 128], strides = [1, 1]} : vector<18x128xf32> to vector<1x128xf32>
    %23 = vector.extract_strided_slice %8 {offsets = [2, 0], sizes = [1, 128], strides = [1, 1]} : vector<18x128xf32> to vector<1x128xf32>
    %cst_14 = arith.constant dense<0.000000e+00> : vector<10x16xf32>
    %24 = vector.multi_reduction <add>, %21, %cst_14 [2] : vector<10x16x128xf32> to vector<10x16xf32>
    %25 = vector.shape_cast %24 : vector<10x16xf32> to vector<10x16x1xf32>
    %cst_15 = arith.constant 1.280000e+02 : f32
    %26 = vector.broadcast %cst_15 : f32 to vector<10x16x1xf32>
    %27 = arith.divf %25, %26 : vector<10x16x1xf32>
    %28 = vector.broadcast %27 : vector<10x16x1xf32> to vector<10x16x128xf32>
    %29 = arith.subf %21, %28 : vector<10x16x128xf32>
    %30 = arith.mulf %29, %29 : vector<10x16x128xf32>
    %cst_16 = arith.constant dense<0.000000e+00> : vector<10x16xf32>
    %31 = vector.multi_reduction <add>, %30, %cst_16 [2] : vector<10x16x128xf32> to vector<10x16xf32>
    %32 = vector.shape_cast %31 : vector<10x16xf32> to vector<10x16x1xf32>
    %cst_17 = arith.constant 1.280000e+02 : f32
    %33 = vector.broadcast %cst_17 : f32 to vector<10x16x1xf32>
    %34 = arith.divf %32, %33 : vector<10x16x1xf32>
    %35 = vector.broadcast %27 : vector<10x16x1xf32> to vector<10x16x128xf32>
    %36 = arith.subf %21, %35 : vector<10x16x128xf32>
    %cst_18 = arith.constant 9.99999974E-6 : f32
    %37 = vector.broadcast %cst_18 : f32 to vector<10x16x1xf32>
    %38 = arith.addf %34, %37 : vector<10x16x1xf32>
    %39 = math.rsqrt %38 : vector<10x16x1xf32>
    %40 = vector.broadcast %39 : vector<10x16x1xf32> to vector<10x16x128xf32>
    %41 = arith.mulf %36, %40 : vector<10x16x128xf32>
    %42 = vector.shape_cast %22 : vector<1x128xf32> to vector<1x1x128xf32>
    %43 = vector.broadcast %42 : vector<1x1x128xf32> to vector<10x16x128xf32>
    %44 = arith.mulf %41, %43 : vector<10x16x128xf32>
    %45 = vector.shape_cast %23 : vector<1x128xf32> to vector<1x1x128xf32>
    %46 = vector.broadcast %45 : vector<1x1x128xf32> to vector<10x16x128xf32>
    %47 = arith.addf %44, %46 : vector<10x16x128xf32>
    %48 = vector.shape_cast %47 : vector<10x16x128xf32> to vector<160x128xf32>
    %49 = arith.truncf %48 : vector<160x128xf32> to vector<160x128xbf16>
    %50 = vector.extract_strided_slice %7 {offsets = [0, 128], sizes = [128, 384], strides = [1, 1]} : vector<128x1024xbf16> to vector<128x384xbf16>
    %cst_19 = arith.constant dense<0.000000e+00> : vector<160x384xf32>
    %51 = tpu.matmul %49, %50, %cst_19 {dimension_numbers = #tpu.dot_dimension_numbers<[1], [0], [0], [1], [0, 0, 1, 1], [], []>} : vector<160x128xbf16>, vector<128x384xbf16>, vector<160x384xf32> -> vector<160x384xf32>
    %52 = vector.shape_cast %51 : vector<160x384xf32> to vector<10x16x384xf32>
    %53 = vector.extract_strided_slice %52 {offsets = [0, 0, 0], sizes = [10, 16, 128], strides = [1, 1, 1]} : vector<10x16x384xf32> to vector<10x16x128xf32>
    %54 = vector.extract_strided_slice %8 {offsets = [3, 0], sizes = [1, 128], strides = [1, 1]} : vector<18x128xf32> to vector<1x128xf32>
    %55 = vector.shape_cast %54 : vector<1x128xf32> to vector<1x1x128xf32>
    %56 = vector.broadcast %55 : vector<1x1x128xf32> to vector<10x16x128xf32>
    %57 = arith.addf %53, %56 : vector<10x16x128xf32>
    %58 = arith.truncf %57 : vector<10x16x128xf32> to vector<10x16x128xbf16>
    %59 = vector.extract_strided_slice %52 {offsets = [0, 0, 128], sizes = [10, 16, 128], strides = [1, 1, 1]} : vector<10x16x384xf32> to vector<10x16x128xf32>
    %60 = vector.extract_strided_slice %8 {offsets = [4, 0], sizes = [1, 128], strides = [1, 1]} : vector<18x128xf32> to vector<1x128xf32>
    %61 = vector.shape_cast %60 : vector<1x128xf32> to vector<1x1x128xf32>
    %62 = vector.broadcast %61 : vector<1x1x128xf32> to vector<10x16x128xf32>
    %63 = arith.addf %59, %62 : vector<10x16x128xf32>
    %64 = arith.truncf %63 : vector<10x16x128xf32> to vector<10x16x128xbf16>
    %65 = vector.extract_strided_slice %52 {offsets = [0, 0, 256], sizes = [10, 16, 128], strides = [1, 1, 1]} : vector<10x16x384xf32> to vector<10x16x128xf32>
    %66 = vector.extract_strided_slice %8 {offsets = [5, 0], sizes = [1, 128], strides = [1, 1]} : vector<18x128xf32> to vector<1x128xf32>
    %67 = vector.shape_cast %66 : vector<1x128xf32> to vector<1x1x128xf32>
    %68 = vector.broadcast %67 : vector<1x1x128xf32> to vector<10x16x128xf32>
    %69 = arith.addf %65, %68 : vector<10x16x128xf32>
    %70 = arith.truncf %69 : vector<10x16x128xf32> to vector<10x16x128xbf16>
    "tpu.trace_start"() <{level = 10 : i32, message = "bqd,bkd->bqk"}> : () -> ()
    %cst_20 = arith.constant dense<0.000000e+00> : vector<10x16x16xf32>
    %71 = tpu.matmul %58, %64, %cst_20 {dimension_numbers = #tpu.dot_dimension_numbers<[2], [2], [1], [1], [0, 0, 0, 1, 1, 1], [0], [0]>} : vector<10x16x128xbf16>, vector<10x16x128xbf16>, vector<10x16x16xf32> -> vector<10x16x16xf32>
    "tpu.trace_stop"() : () -> ()
    %cst_21 = arith.constant dense<0xFF800000> : vector<10x16xf32>
    %72 = vector.multi_reduction <maximumf>, %71, %cst_21 [2] : vector<10x16x16xf32> to vector<10x16xf32>
    %73 = vector.shape_cast %72 : vector<10x16xf32> to vector<10x16x1xf32>
    %74 = vector.broadcast %73 : vector<10x16x1xf32> to vector<10x16x16xf32>
    %75 = arith.subf %71, %74 : vector<10x16x16xf32>
    %76 = math.exp %75 : vector<10x16x16xf32>
    %cst_22 = arith.constant dense<0.000000e+00> : vector<10x16xf32>
    %77 = vector.multi_reduction <add>, %76, %cst_22 [2] : vector<10x16x16xf32> to vector<10x16xf32>
    %78 = vector.shape_cast %77 : vector<10x16xf32> to vector<10x16x1xf32>
    %79 = tpu.reciprocal %78 {approx = true} : vector<10x16x1xf32> -> vector<10x16x1xf32>
    %80 = vector.broadcast %79 : vector<10x16x1xf32> to vector<10x16x16xf32>
    %81 = arith.mulf %76, %80 : vector<10x16x16xf32>
    %82 = arith.truncf %81 : vector<10x16x16xf32> to vector<10x16x16xbf16>
    "tpu.trace_start"() <{level = 10 : i32, message = "bqk,bkd->bqd"}> : () -> ()
    %cst_23 = arith.constant dense<0.000000e+00> : vector<10x16x128xf32>
    %83 = tpu.matmul %82, %70, %cst_23 {dimension_numbers = #tpu.dot_dimension_numbers<[2], [1], [1], [2], [0, 0, 0, 1, 1, 2], [0], [0]>} : vector<10x16x16xbf16>, vector<10x16x128xbf16>, vector<10x16x128xf32> -> vector<10x16x128xf32>
    "tpu.trace_stop"() : () -> ()
    %84 = vector.shape_cast %83 : vector<10x16x128xf32> to vector<160x128xf32>
    %85 = arith.truncf %84 : vector<160x128xf32> to vector<160x128xbf16>
    %86 = vector.extract_strided_slice %7 {offsets = [0, 512], sizes = [128, 128], strides = [1, 1]} : vector<128x1024xbf16> to vector<128x128xbf16>
    %cst_24 = arith.constant dense<0.000000e+00> : vector<160x128xf32>
    %87 = tpu.matmul %85, %86, %cst_24 {dimension_numbers = #tpu.dot_dimension_numbers<[1], [0], [0], [1], [0, 0, 1, 1], [], []>} : vector<160x128xbf16>, vector<128x128xbf16>, vector<160x128xf32> -> vector<160x128xf32>
    %88 = vector.shape_cast %87 : vector<160x128xf32> to vector<10x16x128xf32>
    %89 = arith.addf %21, %88 : vector<10x16x128xf32>
    %90 = vector.extract_strided_slice %8 {offsets = [6, 0], sizes = [1, 128], strides = [1, 1]} : vector<18x128xf32> to vector<1x128xf32>
    %91 = vector.shape_cast %90 : vector<1x128xf32> to vector<1x1x128xf32>
    %92 = vector.broadcast %91 : vector<1x1x128xf32> to vector<10x16x128xf32>
    %93 = arith.addf %89, %92 : vector<10x16x128xf32>
    %94 = vector.extract_strided_slice %8 {offsets = [7, 0], sizes = [1, 128], strides = [1, 1]} : vector<18x128xf32> to vector<1x128xf32>
    %95 = vector.extract_strided_slice %8 {offsets = [8, 0], sizes = [1, 128], strides = [1, 1]} : vector<18x128xf32> to vector<1x128xf32>
    %cst_25 = arith.constant dense<0.000000e+00> : vector<10x16xf32>
    %96 = vector.multi_reduction <add>, %93, %cst_25 [2] : vector<10x16x128xf32> to vector<10x16xf32>
    %97 = vector.shape_cast %96 : vector<10x16xf32> to vector<10x16x1xf32>
    %cst_26 = arith.constant 1.280000e+02 : f32
    %98 = vector.broadcast %cst_26 : f32 to vector<10x16x1xf32>
    %99 = arith.divf %97, %98 : vector<10x16x1xf32>
    %100 = vector.broadcast %99 : vector<10x16x1xf32> to vector<10x16x128xf32>
    %101 = arith.subf %93, %100 : vector<10x16x128xf32>
    %102 = arith.mulf %101, %101 : vector<10x16x128xf32>
    %cst_27 = arith.constant dense<0.000000e+00> : vector<10x16xf32>
    %103 = vector.multi_reduction <add>, %102, %cst_27 [2] : vector<10x16x128xf32> to vector<10x16xf32>
    %104 = vector.shape_cast %103 : vector<10x16xf32> to vector<10x16x1xf32>
    %cst_28 = arith.constant 1.280000e+02 : f32
    %105 = vector.broadcast %cst_28 : f32 to vector<10x16x1xf32>
    %106 = arith.divf %104, %105 : vector<10x16x1xf32>
    %107 = vector.broadcast %99 : vector<10x16x1xf32> to vector<10x16x128xf32>
    %108 = arith.subf %93, %107 : vector<10x16x128xf32>
    %cst_29 = arith.constant 9.99999974E-6 : f32
    %109 = vector.broadcast %cst_29 : f32 to vector<10x16x1xf32>
    %110 = arith.addf %106, %109 : vector<10x16x1xf32>
    %111 = math.rsqrt %110 : vector<10x16x1xf32>
    %112 = vector.broadcast %111 : vector<10x16x1xf32> to vector<10x16x128xf32>
    %113 = arith.mulf %108, %112 : vector<10x16x128xf32>
    %114 = vector.shape_cast %94 : vector<1x128xf32> to vector<1x1x128xf32>
    %115 = vector.broadcast %114 : vector<1x1x128xf32> to vector<10x16x128xf32>
    %116 = arith.mulf %113, %115 : vector<10x16x128xf32>
    %117 = vector.shape_cast %95 : vector<1x128xf32> to vector<1x1x128xf32>
    %118 = vector.broadcast %117 : vector<1x1x128xf32> to vector<10x16x128xf32>
    %119 = arith.addf %116, %118 : vector<10x16x128xf32>
    %120 = vector.shape_cast %119 : vector<10x16x128xf32> to vector<160x128xf32>
    %121 = arith.truncf %120 : vector<160x128xf32> to vector<160x128xbf16>
    %122 = vector.extract_strided_slice %7 {offsets = [0, 640], sizes = [128, 256], strides = [1, 1]} : vector<128x1024xbf16> to vector<128x256xbf16>
    %cst_30 = arith.constant dense<0.000000e+00> : vector<160x256xf32>
    %123 = tpu.matmul %121, %122, %cst_30 {dimension_numbers = #tpu.dot_dimension_numbers<[1], [0], [0], [1], [0, 0, 1, 1], [], []>} : vector<160x128xbf16>, vector<128x256xbf16>, vector<160x256xf32> -> vector<160x256xf32>
    %124 = vector.shape_cast %123 : vector<160x256xf32> to vector<10x16x256xf32>
    %125 = vector.extract_strided_slice %124 {offsets = [0, 0, 0], sizes = [10, 16, 128], strides = [1, 1, 1]} : vector<10x16x256xf32> to vector<10x16x128xf32>
    %126 = vector.extract_strided_slice %8 {offsets = [9, 0], sizes = [1, 128], strides = [1, 1]} : vector<18x128xf32> to vector<1x128xf32>
    %127 = vector.shape_cast %126 : vector<1x128xf32> to vector<1x1x128xf32>
    %128 = vector.broadcast %127 : vector<1x1x128xf32> to vector<10x16x128xf32>
    %129 = arith.addf %125, %128 : vector<10x16x128xf32>
    %130 = vector.extract_strided_slice %124 {offsets = [0, 0, 128], sizes = [10, 16, 128], strides = [1, 1, 1]} : vector<10x16x256xf32> to vector<10x16x128xf32>
    %131 = vector.extract_strided_slice %8 {offsets = [10, 0], sizes = [1, 128], strides = [1, 1]} : vector<18x128xf32> to vector<1x128xf32>
    %132 = vector.shape_cast %131 : vector<1x128xf32> to vector<1x1x128xf32>
    %133 = vector.broadcast %132 : vector<1x1x128xf32> to vector<10x16x128xf32>
    %134 = arith.addf %130, %133 : vector<10x16x128xf32>
    %135 = arith.negf %134 : vector<10x16x128xf32>
    %136 = math.exp %135 : vector<10x16x128xf32>
    %cst_31 = arith.constant 1.000000e+00 : f32
    %137 = vector.broadcast %cst_31 : f32 to vector<10x16x128xf32>
    %138 = arith.addf %137, %136 : vector<10x16x128xf32>
    %139 = arith.divf %137, %138 : vector<10x16x128xf32>
    %140 = arith.mulf %129, %139 : vector<10x16x128xf32>
    %141 = vector.extract_strided_slice %140 {offsets = [0, 0, 0], sizes = [1, 16, 128], strides = [1, 1, 1]} : vector<10x16x128xf32> to vector<1x16x128xf32>
    %142 = vector.broadcast %1 : f32 to vector<1x16x128xf32>
    %143 = arith.mulf %141, %142 : vector<1x16x128xf32>
    %144 = vector.extract_strided_slice %140 {offsets = [1, 0, 0], sizes = [8, 16, 128], strides = [1, 1, 1]} : vector<10x16x128xf32> to vector<8x16x128xf32>
    %145 = vector.extract_strided_slice %140 {offsets = [9, 0, 0], sizes = [1, 16, 128], strides = [1, 1, 1]} : vector<10x16x128xf32> to vector<1x16x128xf32>
    %146 = vector.broadcast %3 : f32 to vector<1x16x128xf32>
    %147 = arith.mulf %145, %146 : vector<1x16x128xf32>
    %148 = tpu.concatenate %143, %144, %147 in 0 : vector<1x16x128xf32>, vector<8x16x128xf32>, vector<1x16x128xf32> -> vector<10x16x128xf32>
    %149 = vector.extract_strided_slice %148 {offsets = [0, 0, 0], sizes = [8, 16, 128], strides = [1, 1, 1]} : vector<10x16x128xf32> to vector<8x16x128xf32>
    %150 = vector.extract_strided_slice %8 {offsets = [11, 0], sizes = [1, 128], strides = [1, 1]} : vector<18x128xf32> to vector<1x128xf32>
    %151 = vector.shape_cast %150 : vector<1x128xf32> to vector<1x1x128xf32>
    %152 = vector.broadcast %151 : vector<1x1x128xf32> to vector<8x16x128xf32>
    %153 = arith.mulf %149, %152 : vector<8x16x128xf32>
    %154 = vector.extract_strided_slice %148 {offsets = [1, 0, 0], sizes = [8, 16, 128], strides = [1, 1, 1]} : vector<10x16x128xf32> to vector<8x16x128xf32>
    %155 = vector.extract_strided_slice %8 {offsets = [12, 0], sizes = [1, 128], strides = [1, 1]} : vector<18x128xf32> to vector<1x128xf32>
    %156 = vector.shape_cast %155 : vector<1x128xf32> to vector<1x1x128xf32>
    %157 = vector.broadcast %156 : vector<1x1x128xf32> to vector<8x16x128xf32>
    %158 = arith.mulf %154, %157 : vector<8x16x128xf32>
    %159 = arith.addf %153, %158 : vector<8x16x128xf32>
    %160 = vector.extract_strided_slice %148 {offsets = [2, 0, 0], sizes = [8, 16, 128], strides = [1, 1, 1]} : vector<10x16x128xf32> to vector<8x16x128xf32>
    %161 = vector.extract_strided_slice %8 {offsets = [13, 0], sizes = [1, 128], strides = [1, 1]} : vector<18x128xf32> to vector<1x128xf32>
    %162 = vector.shape_cast %161 : vector<1x128xf32> to vector<1x1x128xf32>
    %163 = vector.broadcast %162 : vector<1x1x128xf32> to vector<8x16x128xf32>
    %164 = arith.mulf %160, %163 : vector<8x16x128xf32>
    %165 = arith.addf %159, %164 : vector<8x16x128xf32>
    %166 = vector.extract_strided_slice %8 {offsets = [14, 0], sizes = [1, 128], strides = [1, 1]} : vector<18x128xf32> to vector<1x128xf32>
    %167 = vector.shape_cast %166 : vector<1x128xf32> to vector<1x1x128xf32>
    %168 = vector.broadcast %167 : vector<1x1x128xf32> to vector<8x16x128xf32>
    %169 = arith.addf %165, %168 : vector<8x16x128xf32>
    %170 = arith.negf %169 : vector<8x16x128xf32>
    %171 = math.exp %170 : vector<8x16x128xf32>
    %cst_32 = arith.constant 1.000000e+00 : f32
    %172 = vector.broadcast %cst_32 : f32 to vector<8x16x128xf32>
    %173 = arith.addf %172, %171 : vector<8x16x128xf32>
    %174 = arith.divf %172, %173 : vector<8x16x128xf32>
    %175 = arith.mulf %169, %174 : vector<8x16x128xf32>
    %176 = vector.extract_strided_slice %93 {offsets = [1, 0, 0], sizes = [8, 16, 128], strides = [1, 1, 1]} : vector<10x16x128xf32> to vector<8x16x128xf32>
    %177 = vector.shape_cast %175 : vector<8x16x128xf32> to vector<128x128xf32>
    %178 = arith.truncf %177 : vector<128x128xf32> to vector<128x128xbf16>
    %179 = vector.extract_strided_slice %7 {offsets = [0, 896], sizes = [128, 128], strides = [1, 1]} : vector<128x1024xbf16> to vector<128x128xbf16>
    %cst_33 = arith.constant dense<0.000000e+00> : vector<128x128xf32>
    %180 = tpu.matmul %178, %179, %cst_33 {dimension_numbers = #tpu.dot_dimension_numbers<[1], [0], [0], [1], [0, 0, 1, 1], [], []>} : vector<128x128xbf16>, vector<128x128xbf16>, vector<128x128xf32> -> vector<128x128xf32>
    %181 = vector.shape_cast %180 : vector<128x128xf32> to vector<8x16x128xf32>
    %182 = arith.addf %176, %181 : vector<8x16x128xf32>
    %183 = vector.extract_strided_slice %8 {offsets = [15, 0], sizes = [1, 128], strides = [1, 1]} : vector<18x128xf32> to vector<1x128xf32>
    %184 = vector.shape_cast %183 : vector<1x128xf32> to vector<1x1x128xf32>
    %185 = vector.broadcast %184 : vector<1x1x128xf32> to vector<8x16x128xf32>
    %186 = arith.addf %182, %185 : vector<8x16x128xf32>
    %187 = vector.shape_cast %186 : vector<8x16x128xf32> to vector<128x128xf32>
    %188 = arith.truncf %187 : vector<128x128xf32> to vector<128x128xbf16>
    %189 = vector.extract_strided_slice %7 {offsets = [0, 0], sizes = [128, 128], strides = [1, 1]} : vector<128x1024xbf16> to vector<128x128xbf16>
    %cst_34 = arith.constant dense<0.000000e+00> : vector<128x128xf32>
    %190 = tpu.matmul %188, %189, %cst_34 {dimension_numbers = #tpu.dot_dimension_numbers<[1], [0], [0], [1], [0, 0, 1, 1], [], []>} : vector<128x128xbf16>, vector<128x128xbf16>, vector<128x128xf32> -> vector<128x128xf32>
    %191 = vector.shape_cast %190 : vector<128x128xf32> to vector<8x16x128xf32>
    %192 = arith.addf %186, %191 : vector<8x16x128xf32>
    %193 = vector.extract_strided_slice %8 {offsets = [0, 0], sizes = [1, 128], strides = [1, 1]} : vector<18x128xf32> to vector<1x128xf32>
    %194 = vector.shape_cast %193 : vector<1x128xf32> to vector<1x1x128xf32>
    %195 = vector.broadcast %194 : vector<1x1x128xf32> to vector<8x16x128xf32>
    %196 = arith.addf %192, %195 : vector<8x16x128xf32>
    %197 = vector.extract_strided_slice %8 {offsets = [16, 0], sizes = [1, 128], strides = [1, 1]} : vector<18x128xf32> to vector<1x128xf32>
    %198 = vector.extract_strided_slice %8 {offsets = [17, 0], sizes = [1, 128], strides = [1, 1]} : vector<18x128xf32> to vector<1x128xf32>
    %cst_35 = arith.constant dense<0.000000e+00> : vector<8x16xf32>
    %199 = vector.multi_reduction <add>, %196, %cst_35 [2] : vector<8x16x128xf32> to vector<8x16xf32>
    %200 = vector.shape_cast %199 : vector<8x16xf32> to vector<8x16x1xf32>
    %cst_36 = arith.constant 1.280000e+02 : f32
    %201 = vector.broadcast %cst_36 : f32 to vector<8x16x1xf32>
    %202 = arith.divf %200, %201 : vector<8x16x1xf32>
    %203 = vector.broadcast %202 : vector<8x16x1xf32> to vector<8x16x128xf32>
    %204 = arith.subf %196, %203 : vector<8x16x128xf32>
    %205 = arith.mulf %204, %204 : vector<8x16x128xf32>
    %cst_37 = arith.constant dense<0.000000e+00> : vector<8x16xf32>
    %206 = vector.multi_reduction <add>, %205, %cst_37 [2] : vector<8x16x128xf32> to vector<8x16xf32>
    %207 = vector.shape_cast %206 : vector<8x16xf32> to vector<8x16x1xf32>
    %cst_38 = arith.constant 1.280000e+02 : f32
    %208 = vector.broadcast %cst_38 : f32 to vector<8x16x1xf32>
    %209 = arith.divf %207, %208 : vector<8x16x1xf32>
    %210 = vector.broadcast %202 : vector<8x16x1xf32> to vector<8x16x128xf32>
    %211 = arith.subf %196, %210 : vector<8x16x128xf32>
    %cst_39 = arith.constant 9.99999974E-6 : f32
    %212 = vector.broadcast %cst_39 : f32 to vector<8x16x1xf32>
    %213 = arith.addf %209, %212 : vector<8x16x1xf32>
    %214 = math.rsqrt %213 : vector<8x16x1xf32>
    %215 = vector.broadcast %214 : vector<8x16x1xf32> to vector<8x16x128xf32>
    %216 = arith.mulf %211, %215 : vector<8x16x128xf32>
    %217 = vector.shape_cast %197 : vector<1x128xf32> to vector<1x1x128xf32>
    %218 = vector.broadcast %217 : vector<1x1x128xf32> to vector<8x16x128xf32>
    %219 = arith.mulf %216, %218 : vector<8x16x128xf32>
    %220 = vector.shape_cast %198 : vector<1x128xf32> to vector<1x1x128xf32>
    %221 = vector.broadcast %220 : vector<1x1x128xf32> to vector<8x16x128xf32>
    %222 = arith.addf %219, %221 : vector<8x16x128xf32>
    %c0_40 = arith.constant 0 : index
    %c0_41 = arith.constant 0 : index
    %c0_42 = arith.constant 0 : index
    %223 = vector.load %arg5[%c0_40, %c0_41, %c0_42] : memref<8x16x128xf32, #tpu.memory_space<vmem>>, vector<8x16x128xf32>
    tpu.vector_store %arg5[%c0_40, %c0_41, %c0_42], %222 {strides = array<i32>} : memref<8x16x128xf32, #tpu.memory_space<vmem>>, vector<8x16x128xf32>,
    return
  }
  func.func @transform_0(%arg0: i32) -> (i32, i32, i32) {
    %c0_i32 = arith.constant 0 : i32
    %c0_i32_0 = arith.constant 0 : i32
    %c0_i32_1 = arith.constant 0 : i32
    return %arg0, %c0_i32, %c0_i32_0 : i32, i32, i32
  }
  func.func @transform_1(%arg0: i32) -> (i32, i32, i32, i32) {
    %c0_i32 = arith.constant 0 : i32
    %c0_i32_0 = arith.constant 0 : i32
    %c0_i32_1 = arith.constant 0 : i32
    %c0_i32_2 = arith.constant 0 : i32
    return %arg0, %c0_i32, %c0_i32_0, %c0_i32_1 : i32, i32, i32, i32
  }
  func.func @transform_2(%arg0: i32) -> (i32, i32) {
    %c0_i32 = arith.constant 0 : i32
    %c0_i32_0 = arith.constant 0 : i32
    %c0_i32_1 = arith.constant 0 : i32
    return %c0_i32, %c0_i32_0 : i32, i32
  }
  func.func @transform_3(%arg0: i32) -> (i32, i32) {
    %c0_i32 = arith.constant 0 : i32
    %c0_i32_0 = arith.constant 0 : i32
    %c0_i32_1 = arith.constant 0 : i32
    return %c0_i32, %c0_i32_0 : i32, i32
  }
  func.func @transform_4(%arg0: i32) -> (i32, i32, i32) {
    %c0_i32 = arith.constant 0 : i32
    %c0_i32_0 = arith.constant 0 : i32
    %c0_i32_1 = arith.constant 0 : i32
    return %arg0, %c0_i32, %c0_i32_0 : i32, i32, i32
  }
}

module attributes {stable_mosaic.version = 11 : i64} {
  func.func @kernel(%arg0: i32, %arg1: memref<8x16x128xf32, #tpu.memory_space<vmem>>, %arg2: memref<1x2x16x128xf32, #tpu.memory_space<vmem>>, %arg3: memref<128x1024xbf16, #tpu.memory_space<vmem>>, %arg4: memref<18x128xf32, #tpu.memory_space<vmem>>, %arg5: memref<8x16x128xf32, #tpu.memory_space<vmem>>) attributes {dimension_semantics = [#tpu.dimension_semantics<parallel>], iteration_bounds = array<i64: 2>, scalar_prefetch = 0 : i64, scratch_operands = 0 : i64, tpu.core_type = #tpu.core_type<tc>, window_params = [{transform_indices = @transform_0, window_bounds = array<i64: 8, 16, 128>}, {transform_indices = @transform_1, window_bounds = array<i64: 1, 2, 16, 128>}, {pipeline_mode = #tpu.pipeline_mode<synchronous>, transform_indices = @transform_2, window_bounds = array<i64: 128, 1024>}, {pipeline_mode = #tpu.pipeline_mode<synchronous>, transform_indices = @transform_3, window_bounds = array<i64: 18, 128>}, {transform_indices = @transform_4, window_bounds = array<i64: 8, 16, 128>}]} {
    %c0_i32 = arith.constant 0 : i32
    %0 = arith.cmpi sgt, %arg0, %c0_i32 : i32
    %cst = arith.constant 1.000000e+00 : f32
    %cst_0 = arith.constant 0.000000e+00 : f32
    %1 = arith.select %0, %cst, %cst_0 : f32
    %c1_i32 = arith.constant 1 : i32
    %2 = arith.cmpi slt, %arg0, %c1_i32 : i32
    %cst_1 = arith.constant 1.000000e+00 : f32
    %cst_2 = arith.constant 0.000000e+00 : f32
    %3 = arith.select %2, %cst_1, %cst_2 : f32
    %c0 = arith.constant 0 : index
    %c0_3 = arith.constant 0 : index
    %c0_4 = arith.constant 0 : index
    %4 = vector.load %arg1[%c0, %c0_3, %c0_4] : memref<8x16x128xf32, #tpu.memory_space<vmem>>, vector<8x16x128xf32>
    %c0_5 = arith.constant 0 : index
    %c0_6 = arith.constant 0 : index
    %c0_7 = arith.constant 0 : index
    %c0_8 = arith.constant 0 : index
    %5 = vector.load %arg2[%c0_5, %c0_6, %c0_7, %c0_8] : memref<1x2x16x128xf32, #tpu.memory_space<vmem>>, vector<1x2x16x128xf32>
    %6 = vector.shape_cast %5 : vector<1x2x16x128xf32> to vector<2x16x128xf32>
    %c0_9 = arith.constant 0 : index
    %c0_10 = arith.constant 0 : index
    %7 = vector.load %arg3[%c0_9, %c0_10] : memref<128x1024xbf16, #tpu.memory_space<vmem>>, vector<128x1024xbf16>
    %c0_11 = arith.constant 0 : index
    %c0_12 = arith.constant 0 : index
    %8 = vector.load %arg4[%c0_11, %c0_12] : memref<18x128xf32, #tpu.memory_space<vmem>>, vector<18x128xf32>
    %9 = vector.extract_strided_slice %6 {offsets = [0, 0, 0], sizes = [1, 16, 128], strides = [1, 1, 1]} : vector<2x16x128xf32> to vector<1x16x128xf32>
    %10 = vector.extract_strided_slice %6 {offsets = [1, 0, 0], sizes = [1, 16, 128], strides = [1, 1, 1]} : vector<2x16x128xf32> to vector<1x16x128xf32>
    %11 = tpu.concatenate %9, %4, %10 in 0 : vector<1x16x128xf32>, vector<8x16x128xf32>, vector<1x16x128xf32> -> vector<10x16x128xf32>
    %12 = vector.shape_cast %11 : vector<10x16x128xf32> to vector<160x128xf32>
    %13 = arith.truncf %12 : vector<160x128xf32> to vector<160x128xbf16>
    %14 = vector.extract_strided_slice %7 {offsets = [0, 0], sizes = [128, 128], strides = [1, 1]} : vector<128x1024xbf16> to vector<128x128xbf16>
    %cst_13 = arith.constant dense<0.000000e+00> : vector<160x128xf32>
    %15 = tpu.matmul %13, %14, %cst_13 {dimension_numbers = #tpu.dot_dimension_numbers<[1], [0], [0], [1], [0, 0, 1, 1], [], []>} : vector<160x128xbf16>, vector<128x128xbf16>, vector<160x128xf32> -> vector<160x128xf32>
    %16 = vector.shape_cast %15 : vector<160x128xf32> to vector<10x16x128xf32>
    %17 = arith.addf %11, %16 : vector<10x16x128xf32>
    %18 = vector.extract_strided_slice %8 {offsets = [0, 0], sizes = [1, 128], strides = [1, 1]} : vector<18x128xf32> to vector<1x128xf32>
    %19 = vector.shape_cast %18 : vector<1x128xf32> to vector<1x1x128xf32>
    %20 = vector.broadcast %19 : vector<1x1x128xf32> to vector<10x16x128xf32>
    %21 = arith.addf %17, %20 : vector<10x16x128xf32>
    %22 = vector.extract_strided_slice %8 {offsets = [1, 0], sizes = [1, 128], strides = [1, 1]} : vector<18x128xf32> to vector<1x128xf32>
    %23 = vector.extract_strided_slice %8 {offsets = [2, 0], sizes = [1, 128], strides = [1, 1]} : vector<18x128xf32> to vector<1x128xf32>
    %cst_14 = arith.constant dense<0.000000e+00> : vector<10x16xf32>
    %24 = vector.multi_reduction <add>, %21, %cst_14 [2] : vector<10x16x128xf32> to vector<10x16xf32>
    %25 = vector.shape_cast %24 : vector<10x16xf32> to vector<10x16x1xf32>
    %cst_15 = arith.constant 1.280000e+02 : f32
    %26 = vector.broadcast %cst_15 : f32 to vector<10x16x1xf32>
    %27 = arith.divf %25, %26 : vector<10x16x1xf32>
    %28 = vector.broadcast %27 : vector<10x16x1xf32> to vector<10x16x128xf32>
    %29 = arith.subf %21, %28 : vector<10x16x128xf32>
    %30 = arith.mulf %29, %29 : vector<10x16x128xf32>
    %cst_16 = arith.constant dense<0.000000e+00> : vector<10x16xf32>
    %31 = vector.multi_reduction <add>, %30, %cst_16 [2] : vector<10x16x128xf32> to vector<10x16xf32>
    %32 = vector.shape_cast %31 : vector<10x16xf32> to vector<10x16x1xf32>
    %cst_17 = arith.constant 1.280000e+02 : f32
    %33 = vector.broadcast %cst_17 : f32 to vector<10x16x1xf32>
    %34 = arith.divf %32, %33 : vector<10x16x1xf32>
    %35 = vector.broadcast %27 : vector<10x16x1xf32> to vector<10x16x128xf32>
    %36 = arith.subf %21, %35 : vector<10x16x128xf32>
    %cst_18 = arith.constant 9.99999974E-6 : f32
    %37 = vector.broadcast %cst_18 : f32 to vector<10x16x1xf32>
    %38 = arith.addf %34, %37 : vector<10x16x1xf32>
    %39 = math.rsqrt %38 : vector<10x16x1xf32>
    %40 = vector.broadcast %39 : vector<10x16x1xf32> to vector<10x16x128xf32>
    %41 = arith.mulf %36, %40 : vector<10x16x128xf32>
    %42 = vector.shape_cast %22 : vector<1x128xf32> to vector<1x1x128xf32>
    %43 = vector.broadcast %42 : vector<1x1x128xf32> to vector<10x16x128xf32>
    %44 = arith.mulf %41, %43 : vector<10x16x128xf32>
    %45 = vector.shape_cast %23 : vector<1x128xf32> to vector<1x1x128xf32>
    %46 = vector.broadcast %45 : vector<1x1x128xf32> to vector<10x16x128xf32>
    %47 = arith.addf %44, %46 : vector<10x16x128xf32>
    %48 = vector.shape_cast %47 : vector<10x16x128xf32> to vector<160x128xf32>
    %49 = arith.truncf %48 : vector<160x128xf32> to vector<160x128xbf16>
    %50 = vector.extract_strided_slice %7 {offsets = [0, 128], sizes = [128, 384], strides = [1, 1]} : vector<128x1024xbf16> to vector<128x384xbf16>
    %cst_19 = arith.constant dense<0.000000e+00> : vector<160x384xf32>
    %51 = tpu.matmul %49, %50, %cst_19 {dimension_numbers = #tpu.dot_dimension_numbers<[1], [0], [0], [1], [0, 0, 1, 1], [], []>} : vector<160x128xbf16>, vector<128x384xbf16>, vector<160x384xf32> -> vector<160x384xf32>
    %52 = vector.shape_cast %51 : vector<160x384xf32> to vector<10x16x384xf32>
    %53 = vector.extract_strided_slice %52 {offsets = [0, 0, 0], sizes = [10, 16, 128], strides = [1, 1, 1]} : vector<10x16x384xf32> to vector<10x16x128xf32>
    %54 = vector.extract_strided_slice %8 {offsets = [3, 0], sizes = [1, 128], strides = [1, 1]} : vector<18x128xf32> to vector<1x128xf32>
    %55 = vector.shape_cast %54 : vector<1x128xf32> to vector<1x1x128xf32>
    %56 = vector.broadcast %55 : vector<1x1x128xf32> to vector<10x16x128xf32>
    %57 = arith.addf %53, %56 : vector<10x16x128xf32>
    %58 = arith.truncf %57 : vector<10x16x128xf32> to vector<10x16x128xbf16>
    %59 = vector.extract_strided_slice %52 {offsets = [0, 0, 128], sizes = [10, 16, 128], strides = [1, 1, 1]} : vector<10x16x384xf32> to vector<10x16x128xf32>
    %60 = vector.extract_strided_slice %8 {offsets = [4, 0], sizes = [1, 128], strides = [1, 1]} : vector<18x128xf32> to vector<1x128xf32>
    %61 = vector.shape_cast %60 : vector<1x128xf32> to vector<1x1x128xf32>
    %62 = vector.broadcast %61 : vector<1x1x128xf32> to vector<10x16x128xf32>
    %63 = arith.addf %59, %62 : vector<10x16x128xf32>
    %64 = arith.truncf %63 : vector<10x16x128xf32> to vector<10x16x128xbf16>
    %65 = vector.extract_strided_slice %52 {offsets = [0, 0, 256], sizes = [10, 16, 128], strides = [1, 1, 1]} : vector<10x16x384xf32> to vector<10x16x128xf32>
    %66 = vector.extract_strided_slice %8 {offsets = [5, 0], sizes = [1, 128], strides = [1, 1]} : vector<18x128xf32> to vector<1x128xf32>
    %67 = vector.shape_cast %66 : vector<1x128xf32> to vector<1x1x128xf32>
    %68 = vector.broadcast %67 : vector<1x1x128xf32> to vector<10x16x128xf32>
    %69 = arith.addf %65, %68 : vector<10x16x128xf32>
    %70 = arith.truncf %69 : vector<10x16x128xf32> to vector<10x16x128xbf16>
    "tpu.trace_start"() <{level = 10 : i32, message = "bqd,bkd->bqk"}> : () -> ()
    %cst_20 = arith.constant dense<0.000000e+00> : vector<10x16x16xf32>
    %71 = tpu.matmul %58, %64, %cst_20 {dimension_numbers = #tpu.dot_dimension_numbers<[2], [2], [1], [1], [0, 0, 0, 1, 1, 1], [0], [0]>} : vector<10x16x128xbf16>, vector<10x16x128xbf16>, vector<10x16x16xf32> -> vector<10x16x16xf32>
    "tpu.trace_stop"() : () -> ()
    %cst_21 = arith.constant dense<0xFF800000> : vector<10x16xf32>
    %72 = vector.multi_reduction <maximumf>, %71, %cst_21 [2] : vector<10x16x16xf32> to vector<10x16xf32>
    %73 = vector.shape_cast %72 : vector<10x16xf32> to vector<10x16x1xf32>
    %74 = vector.broadcast %73 : vector<10x16x1xf32> to vector<10x16x16xf32>
    %75 = arith.subf %71, %74 : vector<10x16x16xf32>
    %76 = math.exp %75 : vector<10x16x16xf32>
    %cst_22 = arith.constant dense<0.000000e+00> : vector<10x16xf32>
    %77 = vector.multi_reduction <add>, %76, %cst_22 [2] : vector<10x16x16xf32> to vector<10x16xf32>
    %78 = vector.shape_cast %77 : vector<10x16xf32> to vector<10x16x1xf32>
    %79 = tpu.reciprocal %78 {approx = true} : vector<10x16x1xf32> -> vector<10x16x1xf32>
    %80 = vector.broadcast %79 : vector<10x16x1xf32> to vector<10x16x16xf32>
    %81 = arith.mulf %76, %80 : vector<10x16x16xf32>
    %82 = arith.truncf %81 : vector<10x16x16xf32> to vector<10x16x16xbf16>
    "tpu.trace_start"() <{level = 10 : i32, message = "bqk,bkd->bqd"}> : () -> ()
    %cst_23 = arith.constant dense<0.000000e+00> : vector<10x16x128xf32>
    %83 = tpu.matmul %82, %70, %cst_23 {dimension_numbers = #tpu.dot_dimension_numbers<[2], [1], [1], [2], [0, 0, 0, 1, 1, 2], [0], [0]>} : vector<10x16x16xbf16>, vector<10x16x128xbf16>, vector<10x16x128xf32> -> vector<10x16x128xf32>
    "tpu.trace_stop"() : () -> ()
    %84 = vector.shape_cast %83 : vector<10x16x128xf32> to vector<160x128xf32>
    %85 = arith.truncf %84 : vector<160x128xf32> to vector<160x128xbf16>
    %86 = vector.extract_strided_slice %7 {offsets = [0, 512], sizes = [128, 128], strides = [1, 1]} : vector<128x1024xbf16> to vector<128x128xbf16>
    %cst_24 = arith.constant dense<0.000000e+00> : vector<160x128xf32>
    %87 = tpu.matmul %85, %86, %cst_24 {dimension_numbers = #tpu.dot_dimension_numbers<[1], [0], [0], [1], [0, 0, 1, 1], [], []>} : vector<160x128xbf16>, vector<128x128xbf16>, vector<160x128xf32> -> vector<160x128xf32>
    %88 = vector.shape_cast %87 : vector<160x128xf32> to vector<10x16x128xf32>
    %89 = arith.addf %21, %88 : vector<10x16x128xf32>
    %90 = vector.extract_strided_slice %8 {offsets = [6, 0], sizes = [1, 128], strides = [1, 1]} : vector<18x128xf32> to vector<1x128xf32>
    %91 = vector.shape_cast %90 : vector<1x128xf32> to vector<1x1x128xf32>
    %92 = vector.broadcast %91 : vector<1x1x128xf32> to vector<10x16x128xf32>
    %93 = arith.addf %89, %92 : vector<10x16x128xf32>
    %94 = vector.extract_strided_slice %8 {offsets = [7, 0], sizes = [1, 128], strides = [1, 1]} : vector<18x128xf32> to vector<1x128xf32>
    %95 = vector.extract_strided_slice %8 {offsets = [8, 0], sizes = [1, 128], strides = [1, 1]} : vector<18x128xf32> to vector<1x128xf32>
    %cst_25 = arith.constant dense<0.000000e+00> : vector<10x16xf32>
    %96 = vector.multi_reduction <add>, %93, %cst_25 [2] : vector<10x16x128xf32> to vector<10x16xf32>
    %97 = vector.shape_cast %96 : vector<10x16xf32> to vector<10x16x1xf32>
    %cst_26 = arith.constant 1.280000e+02 : f32
    %98 = vector.broadcast %cst_26 : f32 to vector<10x16x1xf32>
    %99 = arith.divf %97, %98 : vector<10x16x1xf32>
    %100 = vector.broadcast %99 : vector<10x16x1xf32> to vector<10x16x128xf32>
    %101 = arith.subf %93, %100 : vector<10x16x128xf32>
    %102 = arith.mulf %101, %101 : vector<10x16x128xf32>
    %cst_27 = arith.constant dense<0.000000e+00> : vector<10x16xf32>
    %103 = vector.multi_reduction <add>, %102, %cst_27 [2] : vector<10x16x128xf32> to vector<10x16xf32>
    %104 = vector.shape_cast %103 : vector<10x16xf32> to vector<10x16x1xf32>
    %cst_28 = arith.constant 1.280000e+02 : f32
    %105 = vector.broadcast %cst_28 : f32 to vector<10x16x1xf32>
    %106 = arith.divf %104, %105 : vector<10x16x1xf32>
    %107 = vector.broadcast %99 : vector<10x16x1xf32> to vector<10x16x128xf32>
    %108 = arith.subf %93, %107 : vector<10x16x128xf32>
    %cst_29 = arith.constant 9.99999974E-6 : f32
    %109 = vector.broadcast %cst_29 : f32 to vector<10x16x1xf32>
    %110 = arith.addf %106, %109 : vector<10x16x1xf32>
    %111 = math.rsqrt %110 : vector<10x16x1xf32>
    %112 = vector.broadcast %111 : vector<10x16x1xf32> to vector<10x16x128xf32>
    %113 = arith.mulf %108, %112 : vector<10x16x128xf32>
    %114 = vector.shape_cast %94 : vector<1x128xf32> to vector<1x1x128xf32>
    %115 = vector.broadcast %114 : vector<1x1x128xf32> to vector<10x16x128xf32>
    %116 = arith.mulf %113, %115 : vector<10x16x128xf32>
    %117 = vector.shape_cast %95 : vector<1x128xf32> to vector<1x1x128xf32>
    %118 = vector.broadcast %117 : vector<1x1x128xf32> to vector<10x16x128xf32>
    %119 = arith.addf %116, %118 : vector<10x16x128xf32>
    %120 = vector.shape_cast %119 : vector<10x16x128xf32> to vector<160x128xf32>
    %121 = arith.truncf %120 : vector<160x128xf32> to vector<160x128xbf16>
    %122 = vector.extract_strided_slice %7 {offsets = [0, 640], sizes = [128, 256], strides = [1, 1]} : vector<128x1024xbf16> to vector<128x256xbf16>
    %cst_30 = arith.constant dense<0.000000e+00> : vector<160x256xf32>
    %123 = tpu.matmul %121, %122, %cst_30 {dimension_numbers = #tpu.dot_dimension_numbers<[1], [0], [0], [1], [0, 0, 1, 1], [], []>} : vector<160x128xbf16>, vector<128x256xbf16>, vector<160x256xf32> -> vector<160x256xf32>
    %124 = vector.shape_cast %123 : vector<160x256xf32> to vector<10x16x256xf32>
    %125 = vector.extract_strided_slice %124 {offsets = [0, 0, 0], sizes = [10, 16, 128], strides = [1, 1, 1]} : vector<10x16x256xf32> to vector<10x16x128xf32>
    %126 = vector.extract_strided_slice %8 {offsets = [9, 0], sizes = [1, 128], strides = [1, 1]} : vector<18x128xf32> to vector<1x128xf32>
    %127 = vector.shape_cast %126 : vector<1x128xf32> to vector<1x1x128xf32>
    %128 = vector.broadcast %127 : vector<1x1x128xf32> to vector<10x16x128xf32>
    %129 = arith.addf %125, %128 : vector<10x16x128xf32>
    %130 = vector.extract_strided_slice %124 {offsets = [0, 0, 128], sizes = [10, 16, 128], strides = [1, 1, 1]} : vector<10x16x256xf32> to vector<10x16x128xf32>
    %131 = vector.extract_strided_slice %8 {offsets = [10, 0], sizes = [1, 128], strides = [1, 1]} : vector<18x128xf32> to vector<1x128xf32>
    %132 = vector.shape_cast %131 : vector<1x128xf32> to vector<1x1x128xf32>
    %133 = vector.broadcast %132 : vector<1x1x128xf32> to vector<10x16x128xf32>
    %134 = arith.addf %130, %133 : vector<10x16x128xf32>
    %135 = arith.negf %134 : vector<10x16x128xf32>
    %136 = math.exp %135 : vector<10x16x128xf32>
    %cst_31 = arith.constant 1.000000e+00 : f32
    %137 = vector.broadcast %cst_31 : f32 to vector<10x16x128xf32>
    %138 = arith.addf %137, %136 : vector<10x16x128xf32>
    %139 = arith.divf %137, %138 : vector<10x16x128xf32>
    %140 = arith.mulf %129, %139 : vector<10x16x128xf32>
    %141 = vector.extract_strided_slice %140 {offsets = [0, 0, 0], sizes = [1, 16, 128], strides = [1, 1, 1]} : vector<10x16x128xf32> to vector<1x16x128xf32>
    %142 = vector.broadcast %1 : f32 to vector<1x16x128xf32>
    %143 = arith.mulf %141, %142 : vector<1x16x128xf32>
    %144 = vector.extract_strided_slice %140 {offsets = [1, 0, 0], sizes = [8, 16, 128], strides = [1, 1, 1]} : vector<10x16x128xf32> to vector<8x16x128xf32>
    %145 = vector.extract_strided_slice %140 {offsets = [9, 0, 0], sizes = [1, 16, 128], strides = [1, 1, 1]} : vector<10x16x128xf32> to vector<1x16x128xf32>
    %146 = vector.broadcast %3 : f32 to vector<1x16x128xf32>
    %147 = arith.mulf %145, %146 : vector<1x16x128xf32>
    %148 = tpu.concatenate %143, %144, %147 in 0 : vector<1x16x128xf32>, vector<8x16x128xf32>, vector<1x16x128xf32> -> vector<10x16x128xf32>
    %149 = vector.extract_strided_slice %148 {offsets = [0, 0, 0], sizes = [8, 16, 128], strides = [1, 1, 1]} : vector<10x16x128xf32> to vector<8x16x128xf32>
    %150 = vector.extract_strided_slice %8 {offsets = [11, 0], sizes = [1, 128], strides = [1, 1]} : vector<18x128xf32> to vector<1x128xf32>
    %151 = vector.shape_cast %150 : vector<1x128xf32> to vector<1x1x128xf32>
    %152 = vector.broadcast %151 : vector<1x1x128xf32> to vector<8x16x128xf32>
    %153 = arith.mulf %149, %152 : vector<8x16x128xf32>
    %154 = vector.extract_strided_slice %148 {offsets = [1, 0, 0], sizes = [8, 16, 128], strides = [1, 1, 1]} : vector<10x16x128xf32> to vector<8x16x128xf32>
    %155 = vector.extract_strided_slice %8 {offsets = [12, 0], sizes = [1, 128], strides = [1, 1]} : vector<18x128xf32> to vector<1x128xf32>
    %156 = vector.shape_cast %155 : vector<1x128xf32> to vector<1x1x128xf32>
    %157 = vector.broadcast %156 : vector<1x1x128xf32> to vector<8x16x128xf32>
    %158 = arith.mulf %154, %157 : vector<8x16x128xf32>
    %159 = arith.addf %153, %158 : vector<8x16x128xf32>
    %160 = vector.extract_strided_slice %148 {offsets = [2, 0, 0], sizes = [8, 16, 128], strides = [1, 1, 1]} : vector<10x16x128xf32> to vector<8x16x128xf32>
    %161 = vector.extract_strided_slice %8 {offsets = [13, 0], sizes = [1, 128], strides = [1, 1]} : vector<18x128xf32> to vector<1x128xf32>
    %162 = vector.shape_cast %161 : vector<1x128xf32> to vector<1x1x128xf32>
    %163 = vector.broadcast %162 : vector<1x1x128xf32> to vector<8x16x128xf32>
    %164 = arith.mulf %160, %163 : vector<8x16x128xf32>
    %165 = arith.addf %159, %164 : vector<8x16x128xf32>
    %166 = vector.extract_strided_slice %8 {offsets = [14, 0], sizes = [1, 128], strides = [1, 1]} : vector<18x128xf32> to vector<1x128xf32>
    %167 = vector.shape_cast %166 : vector<1x128xf32> to vector<1x1x128xf32>
    %168 = vector.broadcast %167 : vector<1x1x128xf32> to vector<8x16x128xf32>
    %169 = arith.addf %165, %168 : vector<8x16x128xf32>
    %170 = arith.negf %169 : vector<8x16x128xf32>
    %171 = math.exp %170 : vector<8x16x128xf32>
    %cst_32 = arith.constant 1.000000e+00 : f32
    %172 = vector.broadcast %cst_32 : f32 to vector<8x16x128xf32>
    %173 = arith.addf %172, %171 : vector<8x16x128xf32>
    %174 = arith.divf %172, %173 : vector<8x16x128xf32>
    %175 = arith.mulf %169, %174 : vector<8x16x128xf32>
    %176 = vector.extract_strided_slice %93 {offsets = [1, 0, 0], sizes = [8, 16, 128], strides = [1, 1, 1]} : vector<10x16x128xf32> to vector<8x16x128xf32>
    %177 = vector.shape_cast %175 : vector<8x16x128xf32> to vector<128x128xf32>
    %178 = arith.truncf %177 : vector<128x128xf32> to vector<128x128xbf16>
    %179 = vector.extract_strided_slice %7 {offsets = [0, 896], sizes = [128, 128], strides = [1, 1]} : vector<128x1024xbf16> to vector<128x128xbf16>
    %cst_33 = arith.constant dense<0.000000e+00> : vector<128x128xf32>
    %180 = tpu.matmul %178, %179, %cst_33 {dimension_numbers = #tpu.dot_dimension_numbers<[1], [0], [0], [1], [0, 0, 1, 1], [], []>} : vector<128x128xbf16>, vector<128x128xbf16>, vector<128x128xf32> -> vector<128x128xf32>
    %181 = vector.shape_cast %180 : vector<128x128xf32> to vector<8x16x128xf32>
    %182 = arith.addf %176, %181 : vector<8x16x128xf32>
    %183 = vector.extract_strided_slice %8 {offsets = [15, 0], sizes = [1, 128], strides = [1, 1]} : vector<18x128xf32> to vector<1x128xf32>
    %184 = vector.shape_cast %183 : vector<1x128xf32> to vector<1x1x128xf32>
    %185 = vector.broadcast %184 : vector<1x1x128xf32> to vector<8x16x128xf32>
    %186 = arith.addf %182, %185 : vector<8x16x128xf32>
    %187 = vector.shape_cast %186 : vector<8x16x128xf32> to vector<128x128xf32>
    %188 = arith.truncf %187 : vector<128x128xf32> to vector<128x128xbf16>
    %189 = vector.extract_strided_slice %7 {offsets = [0, 0], sizes = [128, 128], strides = [1, 1]} : vector<128x1024xbf16> to vector<128x128xbf16>
    %cst_34 = arith.constant dense<0.000000e+00> : vector<128x128xf32>
    %190 = tpu.matmul %188, %189, %cst_34 {dimension_numbers = #tpu.dot_dimension_numbers<[1], [0], [0], [1], [0, 0, 1, 1], [], []>} : vector<128x128xbf16>, vector<128x128xbf16>, vector<128x128xf32> -> vector<128x128xf32>
    %191 = vector.shape_cast %190 : vector<128x128xf32> to vector<8x16x128xf32>
    %192 = arith.addf %186, %191 : vector<8x16x128xf32>
    %193 = vector.extract_strided_slice %8 {offsets = [0, 0], sizes = [1, 128], strides = [1, 1]} : vector<18x128xf32> to vector<1x128xf32>
    %194 = vector.shape_cast %193 : vector<1x128xf32> to vector<1x1x128xf32>
    %195 = vector.broadcast %194 : vector<1x1x128xf32> to vector<8x16x128xf32>
    %196 = arith.addf %192, %195 : vector<8x16x128xf32>
    %197 = vector.extract_strided_slice %8 {offsets = [16, 0], sizes = [1, 128], strides = [1, 1]} : vector<18x128xf32> to vector<1x128xf32>
    %198 = vector.extract_strided_slice %8 {offsets = [17, 0], sizes = [1, 128], strides = [1, 1]} : vector<18x128xf32> to vector<1x128xf32>
    %cst_35 = arith.constant dense<0.000000e+00> : vector<8x16xf32>
    %199 = vector.multi_reduction <add>, %196, %cst_35 [2] : vector<8x16x128xf32> to vector<8x16xf32>
    %200 = vector.shape_cast %199 : vector<8x16xf32> to vector<8x16x1xf32>
    %cst_36 = arith.constant 1.280000e+02 : f32
    %201 = vector.broadcast %cst_36 : f32 to vector<8x16x1xf32>
    %202 = arith.divf %200, %201 : vector<8x16x1xf32>
    %203 = vector.broadcast %202 : vector<8x16x1xf32> to vector<8x16x128xf32>
    %204 = arith.subf %196, %203 : vector<8x16x128xf32>
    %205 = arith.mulf %204, %204 : vector<8x16x128xf32>
    %cst_37 = arith.constant dense<0.000000e+00> : vector<8x16xf32>
    %206 = vector.multi_reduction <add>, %205, %cst_37 [2] : vector<8x16x128xf32> to vector<8x16xf32>
    %207 = vector.shape_cast %206 : vector<8x16xf32> to vector<8x16x1xf32>
    %cst_38 = arith.constant 1.280000e+02 : f32
    %208 = vector.broadcast %cst_38 : f32 to vector<8x16x1xf32>
    %209 = arith.divf %207, %208 : vector<8x16x1xf32>
    %210 = vector.broadcast %202 : vector<8x16x1xf32> to vector<8x16x128xf32>
    %211 = arith.subf %196, %210 : vector<8x16x128xf32>
    %cst_39 = arith.constant 9.99999974E-6 : f32
    %212 = vector.broadcast %cst_39 : f32 to vector<8x16x1xf32>
    %213 = arith.addf %209, %212 : vector<8x16x1xf32>
    %214 = math.rsqrt %213 : vector<8x16x1xf32>
    %215 = vector.broadcast %214 : vector<8x16x1xf32> to vector<8x16x128xf32>
    %216 = arith.mulf %211, %215 : vector<8x16x128xf32>
    %217 = vector.shape_cast %197 : vector<1x128xf32> to vector<1x1x128xf32>
    %218 = vector.broadcast %217 : vector<1x1x128xf32> to vector<8x16x128xf32>
    %219 = arith.mulf %216, %218 : vector<8x16x128xf32>
    %220 = vector.shape_cast %198 : vector<1x128xf32> to vector<1x1x128xf32>
    %221 = vector.broadcast %220 : vector<1x1x128xf32> to vector<8x16x128xf32>
    %222 = arith.addf %219, %221 : vector<8x16x128xf32>
    %c0_40 = arith.constant 0 : index
    %c0_41 = arith.constant 0 : index
    %c0_42 = arith.constant 0 : index
    %223 = vector.load %arg5[%c0_40, %c0_41, %c0_42] : memref<8x16x128xf32, #tpu.memory_space<vmem>>, vector<8x16x128xf32>
    tpu.vector_store %arg5[%c0_40, %c0_41, %c0_42], %222 {strides = array<i32>} : memref<8x16x128xf32, #tpu.memory_space<vmem>>, vector<8x16x128xf32>,
    return
  }
  func.func @transform_0(%arg0: i32) -> (i32, i32, i32) {
    %c0_i32 = arith.constant 0 : i32
    %c0_i32_0 = arith.constant 0 : i32
    %c0_i32_1 = arith.constant 0 : i32
    return %arg0, %c0_i32, %c0_i32_0 : i32, i32, i32
  }
  func.func @transform_1(%arg0: i32) -> (i32, i32, i32, i32) {
    %c0_i32 = arith.constant 0 : i32
    %c0_i32_0 = arith.constant 0 : i32
    %c0_i32_1 = arith.constant 0 : i32
    %c0_i32_2 = arith.constant 0 : i32
    return %arg0, %c0_i32, %c0_i32_0, %c0_i32_1 : i32, i32, i32, i32
  }
  func.func @transform_2(%arg0: i32) -> (i32, i32) {
    %c0_i32 = arith.constant 0 : i32
    %c0_i32_0 = arith.constant 0 : i32
    %c0_i32_1 = arith.constant 0 : i32
    return %c0_i32, %c0_i32_0 : i32, i32
  }
  func.func @transform_3(%arg0: i32) -> (i32, i32) {
    %c0_i32 = arith.constant 0 : i32
    %c0_i32_0 = arith.constant 0 : i32
    %c0_i32_1 = arith.constant 0 : i32
    return %c0_i32, %c0_i32_0 : i32, i32
  }
  func.func @transform_4(%arg0: i32) -> (i32, i32, i32) {
    %c0_i32 = arith.constant 0 : i32
    %c0_i32_0 = arith.constant 0 : i32
    %c0_i32_1 = arith.constant 0 : i32
    return %arg0, %c0_i32, %c0_i32_0 : i32, i32, i32
  }
}

</mosaic_0001>

<llo_original>
// kernel: tpu_custom_call.1
$region0: #{tpu_custom_call.1}
  #allocation0 [shape = 'u32[]', space=smem, size = 0x4, offset = 0x4, fixed_abs, tag = 'smem constant byte address 0x4 - core index']
  #allocation1 [shape = 'u32[144,128]{1,0:T(1,128)}', space=vmem, size = 0x12000, scoped, tag = 'internal scratch']
  %s0 = inlined_call_operand.hbm [shape: f32[16,16,128], index: 0, kind: input, shape index: {}]
  %s1 = inlined_call_operand.hbm [shape: f32[2,2,16,128], index: 1, kind: input, shape index: {}]
  %s2 = inlined_call_operand.hbm [shape: bf16[128,1024], index: 2, kind: input, shape index: {}]
  %s3 = inlined_call_operand.hbm [shape: f32[18,128], index: 3, kind: input, shape index: {}]
  %s4 = inlined_call_operand.hbm [shape: f32[16,16,128], index: 4, kind: output, shape index: {}]
  %s5 = sld [smem:[#allocation0]]
  $region65: #{tpu_custom_call.1} parent=0
    _
  %s7 = ssub.s32 1, %s5
  %s8 = scalar_select 0, %s7, %s5
  $region1: #{tpu_custom_call.1} parent=0
    #allocation2 [shape = 'u8[131072]{0}', space=vmem, size = 0x20000, scoped, tag = 'input window, operand 0']
    #allocation3 [shape = 's32[2]{0}', space=sflag, size = 0x8, scoped, tag = 'scoped memory for tpu_custom_call.1']
    #allocation4 [shape = 's32[2]{0}', space=sflag, size = 0x8, scoped, tag = 'scoped memory for tpu_custom_call.1']
    #allocation5 [shape = 'u8[32768]{0}', space=vmem, size = 0x8000, scoped, tag = 'input window, operand 1']
    #allocation6 [shape = 's32[2]{0}', space=sflag, size = 0x8, scoped, tag = 'scoped memory for tpu_custom_call.1']
    #allocation7 [shape = 'u8[262144]{0}', space=vmem, size = 0x40000, scoped, tag = 'input window, operand 2, single buffered']
    #allocation8 [shape = 'u8[12288]{0}', space=vmem, size = 0x3000, scoped, tag = 'input window, operand 3, single buffered']
    #allocation9 [shape = 's32[1]{0}', space=sflag, size = 0x4, scoped, tag = 'scoped memory for tpu_custom_call.1']
    #allocation10 [shape = 'u8[131072]{0}', space=vmem, size = 0x20000, scoped, tag = 'output window, operand 0']
    %9 = vsyncpa [#allocation3], 0
    %s10 = scalar_lea.sflag [#allocation3], 1
    %11 = vsyncpa %s10, 0
    %12 = vsyncpa [#allocation6], 0
    %s13 = scalar_lea.sflag [#allocation6], 1
    %14 = vsyncpa %s13, 0
    %15 = vsyncpa [#allocation9], 0
    %16 = vsyncpa [#allocation4], 0
    %s17 = scalar_lea.sflag [#allocation4], 1
    %18 = vsyncpa %s17, 0
    loop: start=0, step=1, limit=4
    $region2: #{tpu_custom_call.1} parent=1 // loop_pre_header
      _
    $region3: #{tpu_custom_call.1} parent=1 // loop_header
      %s20 = sphi 0, %s24
      %p21 = scmp.ge.s32.totalorder %s20, 4
      %s30 = sphi 0, %s32
      %s33 = sphi 0, %s30
      %s34 = sphi 0, %s33
      %s50 = sphi 0, %s34
      %s56 = sphi 0, %s58
      %s59 = sphi 0, %s56
      %s60 = sphi 0, %s59
      %s76 = sphi 0, %s60
      %s80 = sphi 0, %s80
      %s82 = sphi 0, %s80
      %s83 = sphi 0, %s82
      %s97 = sphi 0, %s83
      %s101 = sphi 0, %s101
      %s103 = sphi 0, %s101
      %s104 = sphi 0, %s103
      %s118 = sphi 0, %s104
      %s124 = sphi 0, %s126
      %s127 = sphi 0, %s124
      %s128 = sphi 0, %s127
      %s144 = sphi 0, %s128
    $region4: #{tpu_custom_call.1} parent=1 // loop_header_branch
      %23 = sbr.rel (%p21) target = $region8
    $region5: #{tpu_custom_call.1} parent=1 // loop_body
      %s25 = ssub.s32 %s20, 1
      %s26 = ssub.s32 %s20, 2
      %s27 = sadd.s32 %s20, 1
      %s28 = ssub.s32 %s20, %s27
      %p29 = scmp.eq.s32.totalorder %s28, 0
      %s31 = sadd.s32 %s30, 1
      %s32 = scalar_select %p29, %s30, %s31
      %p35 = pneg %p29
      %p36 = scmp.eq.s32.totalorder %s20, 1
      %p37 = por %p35, %p36
      %p38 = scmp.ne.s32.totalorder %s30, %s33
      %p39 = scmp.eq.s32.totalorder %s20, 0
      %p40 = por %p38, %p39
      %p41 = scmp.ne.s32.totalorder %s30, %s33
      %p42 = scmp.eq.s32.totalorder %s25, 1
      %p43 = por %p41, %p42
      %p44 = scmp.ne.s32.totalorder %s33, %s34
      %p45 = scmp.eq.s32.totalorder %s25, 0
      %p46 = por %p44, %p45
      %p47 = scmp.ne.s32.totalorder %s33, %s34
      %p48 = scmp.eq.s32.totalorder %s26, 1
      %p49 = por %p47, %p48
      %p51 = scmp.ne.s32.totalorder %s34, %s50
      %p52 = scmp.eq.s32.totalorder %s26, 0
      %p53 = por %p51, %p52
      %s54 = ssub.s32 %s20, %s27
      %p55 = scmp.eq.s32.totalorder %s54, 0
      %s57 = sadd.s32 %s56, 1
      %s58 = scalar_select %p55, %s56, %s57
      %p61 = pneg %p55
      %p62 = scmp.eq.s32.totalorder %s20, 1
      %p63 = por %p61, %p62
      %p64 = scmp.ne.s32.totalorder %s56, %s59
      %p65 = scmp.eq.s32.totalorder %s20, 0
      %p66 = por %p64, %p65
      %p67 = scmp.ne.s32.totalorder %s56, %s59
      %p68 = scmp.eq.s32.totalorder %s25, 1
      %p69 = por %p67, %p68
      %p70 = scmp.ne.s32.totalorder %s59, %s60
      %p71 = scmp.eq.s32.totalorder %s25, 0
      %p72 = por %p70, %p71
      %p73 = scmp.ne.s32.totalorder %s59, %s60
      %p74 = scmp.eq.s32.totalorder %s26, 1
      %p75 = por %p73, %p74
      %p77 = scmp.ne.s32.totalorder %s60, %s76
      %p78 = scmp.eq.s32.totalorder %s26, 0
      %p79 = por %p77, %p78
      %s81 = sadd.s32 %s80, 1
      %p84 = scmp.eq.s32.totalorder %s20, 1
      %p85 = scmp.ne.s32.totalorder %s80, %s82
      %p86 = scmp.eq.s32.totalorder %s20, 0
      %p87 = por %p85, %p86
      %p88 = scmp.ne.s32.totalorder %s80, %s82
      %p89 = scmp.eq.s32.totalorder %s25, 1
      %p90 = por %p88, %p89
      %p91 = scmp.ne.s32.totalorder %s82, %s83
      %p92 = scmp.eq.s32.totalorder %s25, 0
      %p93 = por %p91, %p92
      %p94 = scmp.ne.s32.totalorder %s82, %s83
      %p95 = scmp.eq.s32.totalorder %s26, 1
      %p96 = por %p94, %p95
      %p98 = scmp.ne.s32.totalorder %s83, %s97
      %p99 = scmp.eq.s32.totalorder %s26, 0
      %p100 = por %p98, %p99
      %s102 = sadd.s32 %s101, 1
      %p105 = scmp.eq.s32.totalorder %s20, 1
      %p106 = scmp.ne.s32.totalorder %s101, %s103
      %p107 = scmp.eq.s32.totalorder %s20, 0
      %p108 = por %p106, %p107
      %p109 = scmp.ne.s32.totalorder %s101, %s103
      %p110 = scmp.eq.s32.totalorder %s25, 1
      %p111 = por %p109, %p110
      %p112 = scmp.ne.s32.totalorder %s103, %s104
      %p113 = scmp.eq.s32.totalorder %s25, 0
      %p114 = por %p112, %p113
      %p115 = scmp.ne.s32.totalorder %s103, %s104
      %p116 = scmp.eq.s32.totalorder %s26, 1
      %p117 = por %p115, %p116
      %p119 = scmp.ne.s32.totalorder %s104, %s118
      %p120 = scmp.eq.s32.totalorder %s26, 0
      %p121 = por %p119, %p120
      %s122 = ssub.s32 %s20, %s27
      %p123 = scmp.eq.s32.totalorder %s122, 0
      %s125 = sadd.s32 %s124, 1
      %s126 = scalar_select %p123, %s124, %s125
      %p129 = pneg %p123
      %p130 = scmp.eq.s32.totalorder %s20, 1
      %p131 = por %p129, %p130
      %p132 = scmp.ne.s32.totalorder %s124, %s127
      %p133 = scmp.eq.s32.totalorder %s20, 0
      %p134 = por %p132, %p133
      %p135 = scmp.ne.s32.totalorder %s124, %s127
      %p136 = scmp.eq.s32.totalorder %s25, 1
      %p137 = por %p135, %p136
      %p138 = scmp.ne.s32.totalorder %s127, %s128
      %p139 = scmp.eq.s32.totalorder %s25, 0
      %p140 = por %p138, %p139
      %p141 = scmp.ne.s32.totalorder %s127, %s128
      %p142 = scmp.eq.s32.totalorder %s26, 1
      %p143 = por %p141, %p142
      %p145 = scmp.ne.s32.totalorder %s128, %s144
      %p146 = scmp.eq.s32.totalorder %s26, 0
      %p147 = por %p145, %p146
      %p148 = scmp.le.s32.totalorder 1, %s20
      %p149 = scmp.lt.s32.totalorder %s20, 3
      %p150 = pnand %p148, %p149
      %p151 = pneg %p150
      // Predicated region
      $region9: #{tpu_custom_call.1} parent=5 // pred_check
        _
      $region10: #{tpu_custom_call.1} parent=5 // pred_check_branch
        %153 = sbr.rel (%p150) target = $region12
      $region11: #{tpu_custom_call.1} parent=5 // pred_region
        %s154 = ssub.s32 %s20, 1
        // Predicated region
        $region13: #{tpu_custom_call.1} parent=11 // pred_check
          %p155 = pneg %p93
        $region14: #{tpu_custom_call.1} parent=11 // pred_check_branch
          %157 = sbr.rel (%p155) target = $region16
        $region15: #{tpu_custom_call.1} parent=11 // pred_region
          %s159 = ssub.s32 8192, 8192
          %160 = vsyncadd [#allocation6], %s159
          %s161 = sshll.u32 [#allocation7], 4
          %s162 = int_to_ptr.vmem [resolvable:$true] %s161
          %167 = dma.hbm_to_vmem [thread:$0]  %s2, 8192, %s162, [#allocation6], 512, 512, 32
        $region16: #{tpu_custom_call.1} parent=11 // pred_fallthru
          _
        // Predicated region
        $region17: #{tpu_custom_call.1} parent=11 // pred_check
          %p168 = pneg %p114
        $region18: #{tpu_custom_call.1} parent=11 // pred_check_branch
          %170 = sbr.rel (%p168) target = $region20
        $region19: #{tpu_custom_call.1} parent=11 // pred_region
          %s172 = ssub.s32 384, 384
          %173 = vsyncadd [#allocation9], %s172
          %s174 = sshll.u32 [#allocation8], 4
          %s175 = int_to_ptr.vmem [resolvable:$true] %s174
          %180 = dma.hbm_to_vmem [thread:$0]  %s3, 384, %s175, [#allocation9], 128, 128, 8
        $region20: #{tpu_custom_call.1} parent=11 // pred_fallthru
          _
      $region12: #{tpu_custom_call.1} parent=5 // pred_fallthru
        _
      %p181 = scmp.lt.s32.totalorder %s20, 2
      // Predicated region
      $region21: #{tpu_custom_call.1} parent=5 // pred_check
        %p182 = pneg %p181
      $region22: #{tpu_custom_call.1} parent=5 // pred_check_branch
        %184 = sbr.rel (%p182) target = $region24
      $region23: #{tpu_custom_call.1} parent=5 // pred_region
        // Predicated region
        $region25: #{tpu_custom_call.1} parent=23 // pred_check
          %p185 = pneg %p40
        $region26: #{tpu_custom_call.1} parent=23 // pred_check_branch
          %187 = sbr.rel (%p185) target = $region28
        $region27: #{tpu_custom_call.1} parent=23 // pred_region
          %s188 = sand.u32 %s30, 1
          %s189 = scalar_lea.sflag [#allocation3], %s188
          %s190 = sand.u32 %s30, 1
          %s191 = smul.addr %s190, 128
          %s192 = scalar_lea.vmem [#allocation2], %s191
          %s193 = smul.u32 8, %s20
          %s195 = ssub.s32 2048, 2048
          %196 = vsyncadd %s189, %s195
          %s197 = smul.addr %s193, 2
          %s198 = smul.addr %s197, 128
          %s199 = scalar_lea.hbm %s0, %s198
          %s200 = sshll.u32 %s192, 4
          %s201 = int_to_ptr.vmem [resolvable:$true] %s200
          %206 = dma.hbm_to_vmem [thread:$0]  %s199, 2048, %s201, %s189, 128, 128, 8
        $region28: #{tpu_custom_call.1} parent=23 // pred_fallthru
          _
        // Predicated region
        $region29: #{tpu_custom_call.1} parent=23 // pred_check
          %p207 = pneg %p66
        $region30: #{tpu_custom_call.1} parent=23 // pred_check_branch
          %209 = sbr.rel (%p207) target = $region32
        $region31: #{tpu_custom_call.1} parent=23 // pred_region
          %s210 = sand.u32 %s20, 1
          %s211 = scalar_lea.sflag [#allocation6], %s210
          %s212 = sand.u32 %s56, 1
          %s213 = smul.addr %s212, 32
          %s214 = scalar_lea.vmem [#allocation5], %s213
          %s216 = ssub.s32 512, 512
          %217 = vsyncadd %s211, %s216
          %s218 = smul.addr %s20, 4
          %s219 = smul.addr %s218, 128
          %s220 = scalar_lea.hbm %s1, %s219
          %s221 = sshll.u32 %s214, 4
          %s222 = int_to_ptr.vmem [resolvable:$true] %s221
          %227 = dma.hbm_to_vmem [thread:$0]  %s220, 512, %s222, %s211, 128, 128, 8
        $region32: #{tpu_custom_call.1} parent=23 // pred_fallthru
          _
      $region24: #{tpu_custom_call.1} parent=5 // pred_fallthru
        _
      %p228 = scmp.le.s32.totalorder 1, %s20
      %p229 = scmp.lt.s32.totalorder %s20, 3
      %p230 = pnand %p228, %p229
      %p231 = pneg %p230
      // Predicated region
      $region33: #{tpu_custom_call.1} parent=5 // pred_check
        _
      $region34: #{tpu_custom_call.1} parent=5 // pred_check_branch
        %233 = sbr.rel (%p230) target = $region36
      $region35: #{tpu_custom_call.1} parent=5 // pred_region
        %s234 = ssub.s32 %s20, 1
        %s235 = sand.u32 %s33, 1
        %s236 = scalar_lea.sflag [#allocation3], %s235
        %s237 = sand.u32 %s33, 1
        %s238 = smul.addr %s237, 128
        %s239 = scalar_lea.vmem [#allocation2], %s238
        // Predicated region
        $region37: #{tpu_custom_call.1} parent=35 // pred_check
          %p240 = pneg %p46
        $region38: #{tpu_custom_call.1} parent=35 // pred_check_branch
          %242 = sbr.rel (%p240) target = $region40
        $region39: #{tpu_custom_call.1} parent=35 // pred_region
          %243 = dma.done %s236, 2048
        $region40: #{tpu_custom_call.1} parent=35 // pred_fallthru
          _
        %s244 = sand.u32 %s25, 1
        %s245 = scalar_lea.sflag [#allocation6], %s244
        %s246 = sand.u32 %s59, 1
        %s247 = smul.addr %s246, 32
        %s248 = scalar_lea.vmem [#allocation5], %s247
        // Predicated region
        $region41: #{tpu_custom_call.1} parent=35 // pred_check
          %p249 = pneg %p72
        $region42: #{tpu_custom_call.1} parent=35 // pred_check_branch
          %251 = sbr.rel (%p249) target = $region44
        $region43: #{tpu_custom_call.1} parent=35 // pred_region
          %252 = dma.done %s245, 512
        $region44: #{tpu_custom_call.1} parent=35 // pred_fallthru
          _
        // Predicated region
        $region45: #{tpu_custom_call.1} parent=35 // pred_check
          %p253 = pneg %p93
        $region46: #{tpu_custom_call.1} parent=35 // pred_check_branch
          %255 = sbr.rel (%p253) target = $region48
        $region47: #{tpu_custom_call.1} parent=35 // pred_region
          %256 = dma.done [#allocation6], 8192
        $region48: #{tpu_custom_call.1} parent=35 // pred_fallthru
          _
        // Predicated region
        $region49: #{tpu_custom_call.1} parent=35 // pred_check
          %p257 = pneg %p114
        $region50: #{tpu_custom_call.1} parent=35 // pred_check_branch
          %259 = sbr.rel (%p257) target = $region52
        $region51: #{tpu_custom_call.1} parent=35 // pred_region
          %260 = dma.done [#allocation9], 384
        $region52: #{tpu_custom_call.1} parent=35 // pred_fallthru
          _
        %s261 = sand.u32 %s33, 1
        %s262 = scalar_lea.sflag [#allocation3], %s261
        %s263 = sand.u32 %s33, 1
        %s264 = smul.addr %s263, 128
        %s265 = scalar_lea.vmem [#allocation2], %s264
        %p266 = pneg %p46
        %p267 = pneg %p43
        %s268 = sand.u32 %s25, 1
        %s269 = scalar_lea.sflag [#allocation6], %s268
        %s270 = sand.u32 %s59, 1
        %s271 = smul.addr %s270, 32
        %s272 = scalar_lea.vmem [#allocation5], %s271
        %p273 = pneg %p72
        %p274 = pneg %p69
        %p275 = pneg %p93
        %p276 = pneg %p90
        %p277 = pneg %p114
        %p278 = pneg %p111
        %p279 = pneg %p140
        %p280 = pneg %p137
        %s281 = sand.u32 %s127, 1
        %s282 = scalar_lea.sflag [#allocation4], %s281
        %s283 = sand.u32 %s127, 1
        %s284 = smul.addr %s283, 128
        %s285 = scalar_lea.vmem [#allocation10], %s284
        %s286 = smul.u32 8, %s25
        %s287 = smul.u32 8, %s25
        %p289 = scmp.gt.s32.totalorder %s25, 0
        %s290 = scalar_select %p289, 1.0, 0.0
        %p291 = scmp.lt.s32.totalorder %s25, 1
        %s292 = scalar_select %p291, 1.0, 0.0
        %v293 = vld [vmem:[%s239] sm:$0xff]
        %v294 = vld [vmem:[%s239 + $0x8] sm:$0xff]
        %v295 = vld [vmem:[%s239 + $0x10] sm:$0xff]
        %v296 = vld [vmem:[%s239 + $0x18] sm:$0xff]
        %v297 = vld [vmem:[%s239 + $0x20] sm:$0xff]
        %v298 = vld [vmem:[%s239 + $0x28] sm:$0xff]
        %v299 = vld [vmem:[%s239 + $0x30] sm:$0xff]
        %v300 = vld [vmem:[%s239 + $0x38] sm:$0xff]
        %v301 = vld [vmem:[%s239 + $0x40] sm:$0xff]
        %v302 = vld [vmem:[%s239 + $0x48] sm:$0xff]
        %v303 = vld [vmem:[%s239 + $0x50] sm:$0xff]
        %v304 = vld [vmem:[%s239 + $0x58] sm:$0xff]
        %v305 = vld [vmem:[%s239 + $0x60] sm:$0xff]
        %v306 = vld [vmem:[%s239 + $0x68] sm:$0xff]
        %v307 = vld [vmem:[%s239 + $0x70] sm:$0xff]
        %v308 = vld [vmem:[%s239 + $0x78] sm:$0xff]
        %v309 = vld [vmem:[%s248] sm:$0xff]
        %v310 = vld [vmem:[%s248 + $0x8] sm:$0xff]
        %v311 = vld [vmem:[%s248 + $0x10] sm:$0xff]
        %v312 = vld [vmem:[%s248 + $0x18] sm:$0xff]
        %v313 = vld [vmem:[#allocation7] sm:$0xff]
        %v314 = vld [vmem:[#allocation7 + $0x8] sm:$0xff]
        %v315 = vld [vmem:[#allocation7 + $0x10] sm:$0xff]
        %v316 = vld [vmem:[#allocation7 + $0x18] sm:$0xff]
        %v317 = vld [vmem:[#allocation7 + $0x20] sm:$0xff]
        %v318 = vld [vmem:[#allocation7 + $0x28] sm:$0xff]
        %v319 = vld [vmem:[#allocation7 + $0x30] sm:$0xff]
        %v320 = vld [vmem:[#allocation7 + $0x38] sm:$0xff]
        %v321 = vld [vmem:[#allocation7 + $0x40] sm:$0xff]
        %v322 = vld [vmem:[#allocation7 + $0x48] sm:$0xff]
        %v323 = vld [vmem:[#allocation7 + $0x50] sm:$0xff]
        %v324 = vld [vmem:[#allocation7 + $0x58] sm:$0xff]
        %v325 = vld [vmem:[#allocation7 + $0x60] sm:$0xff]
        %v326 = vld [vmem:[#allocation7 + $0x68] sm:$0xff]
        %v327 = vld [vmem:[#allocation7 + $0x70] sm:$0xff]
        %v328 = vld [vmem:[#allocation7 + $0x78] sm:$0xff]
        %v329 = vld [vmem:[#allocation7 + $0x80] sm:$0xff]
        %v330 = vld [vmem:[#allocation7 + $0x88] sm:$0xff]
        %v331 = vld [vmem:[#allocation7 + $0x90] sm:$0xff]
        %v332 = vld [vmem:[#allocation7 + $0x98] sm:$0xff]
        %v333 = vld [vmem:[#allocation7 + $0xa0] sm:$0xff]
        %v334 = vld [vmem:[#allocation7 + $0xa8] sm:$0xff]
        %v335 = vld [vmem:[#allocation7 + $0xb0] sm:$0xff]
        %v336 = vld [vmem:[#allocation7 + $0xb8] sm:$0xff]
        %v337 = vld [vmem:[#allocation7 + $0xc0] sm:$0xff]
        %v338 = vld [vmem:[#allocation7 + $0xc8] sm:$0xff]
        %v339 = vld [vmem:[#allocation7 + $0xd0] sm:$0xff]
        %v340 = vld [vmem:[#allocation7 + $0xd8] sm:$0xff]
        %v341 = vld [vmem:[#allocation7 + $0xe0] sm:$0xff]
        %v342 = vld [vmem:[#allocation7 + $0xe8] sm:$0xff]
        %v343 = vld [vmem:[#allocation7 + $0xf0] sm:$0xff]
        %v344 = vld [vmem:[#allocation7 + $0xf8] sm:$0xff]
        %v345 = vld [vmem:[#allocation7 + $0x100] sm:$0xff]
        %v346 = vld [vmem:[#allocation7 + $0x108] sm:$0xff]
        %v347 = vld [vmem:[#allocation7 + $0x110] sm:$0xff]
        %v348 = vld [vmem:[#allocation7 + $0x118] sm:$0xff]
        %v349 = vld [vmem:[#allocation7 + $0x120] sm:$0xff]
        %v350 = vld [vmem:[#allocation7 + $0x128] sm:$0xff]
        %v351 = vld [vmem:[#allocation7 + $0x130] sm:$0xff]
        %v352 = vld [vmem:[#allocation7 + $0x138] sm:$0xff]
        %v353 = vld [vmem:[#allocation7 + $0x140] sm:$0xff]
        %v354 = vld [vmem:[#allocation7 + $0x148] sm:$0xff]
        %v355 = vld [vmem:[#allocation7 + $0x150] sm:$0xff]
        %v356 = vld [vmem:[#allocation7 + $0x158] sm:$0xff]
        %v357 = vld [vmem:[#allocation7 + $0x160] sm:$0xff]
        %v358 = vld [vmem:[#allocation7 + $0x168] sm:$0xff]
        %v359 = vld [vmem:[#allocation7 + $0x170] sm:$0xff]
        %v360 = vld [vmem:[#allocation7 + $0x178] sm:$0xff]
        %v361 = vld [vmem:[#allocation7 + $0x180] sm:$0xff]
        %v362 = vld [vmem:[#allocation7 + $0x188] sm:$0xff]
        %v363 = vld [vmem:[#allocation7 + $0x190] sm:$0xff]
        %v364 = vld [vmem:[#allocation7 + $0x198] sm:$0xff]
        %v365 = vld [vmem:[#allocation7 + $0x1a0] sm:$0xff]
        %v366 = vld [vmem:[#allocation7 + $0x1a8] sm:$0xff]
        %v367 = vld [vmem:[#allocation7 + $0x1b0] sm:$0xff]
        %v368 = vld [vmem:[#allocation7 + $0x1b8] sm:$0xff]
        %v369 = vld [vmem:[#allocation7 + $0x1c0] sm:$0xff]
        %v370 = vld [vmem:[#allocation7 + $0x1c8] sm:$0xff]
        %v371 = vld [vmem:[#allocation7 + $0x1d0] sm:$0xff]
        %v372 = vld [vmem:[#allocation7 + $0x1d8] sm:$0xff]
        %v373 = vld [vmem:[#allocation7 + $0x1e0] sm:$0xff]
        %v374 = vld [vmem:[#allocation7 + $0x1e8] sm:$0xff]
        %v375 = vld [vmem:[#allocation7 + $0x1f0] sm:$0xff]
        %v376 = vld [vmem:[#allocation7 + $0x1f8] sm:$0xff]
        %v377 = vld [vmem:[#allocation8] sm:$0xff]
        %v378 = vld [vmem:[#allocation8 + $0x8] sm:$0xff]
        %v379 = vld [vmem:[#allocation8 + $0x10] sm:$0x3]
        %v380 = vpack.c.bf16 %v310, %v309
        %v381 = vpack.c.bf16 %v294, %v293
        %v382 = vpack.c.bf16 %v296, %v295
        %v383 = vpack.c.bf16 %v298, %v297
        %v384 = vpack.c.bf16 %v300, %v299
        %v385 = vpack.c.bf16 %v302, %v301
        %v386 = vpack.c.bf16 %v304, %v303
        %v387 = vpack.c.bf16 %v306, %v305
        %v388 = vpack.c.bf16 %v308, %v307
        %v389 = vpack.c.bf16 %v312, %v311
        %v406 = vunpack.c.l.b16 %v313
        %v407 = vunpack.c.l.b16 %v317
        %v408 = vunpack.c.l.b16 %v321
        %v409 = vunpack.c.l.b16 %v325
        %v410 = vunpack.c.l.b16 %v329
        %v411 = vunpack.c.l.b16 %v333
        %v412 = vunpack.c.l.b16 %v337
        %v413 = vunpack.c.l.b16 %v341
        %v414 = vunpack.c.l.b16 %v345
        %v415 = vunpack.c.l.b16 %v349
        %v416 = vunpack.c.l.b16 %v353
        %v417 = vunpack.c.l.b16 %v357
        %v418 = vunpack.c.l.b16 %v361
        %v419 = vunpack.c.l.b16 %v365
        %v420 = vunpack.c.l.b16 %v369
        %v421 = vunpack.c.l.b16 %v373
        %v422 = vpack.c.b16 %v407, %v406
        %v423 = vpack.c.b16 %v409, %v408
        %v424 = vpack.c.b16 %v411, %v410
        %v425 = vpack.c.b16 %v413, %v412
        %v426 = vpack.c.b16 %v415, %v414
        %v427 = vpack.c.b16 %v417, %v416
        %v428 = vpack.c.b16 %v419, %v418
        %v429 = vpack.c.b16 %v421, %v420
        %438 = vmatprep.subr.bf16.mxu0 0
        %439 = vmatpush1.bf16.msra.mxu0 %v422
        %440 = vmatprep.subr.bf16.mxu0 0
        %441 = vmatpush1.bf16.msra.mxu0 %v423
        %442 = vmatprep.subr.bf16.mxu0 0
        %443 = vmatpush1.bf16.msra.mxu0 %v424
        %444 = vmatprep.subr.bf16.mxu0 0
        %445 = vmatpush1.bf16.msra.mxu0 %v425
        %446 = vmatprep.subr.bf16.mxu0 0
        %447 = vmatpush1.bf16.msra.mxu0 %v426
        %448 = vmatprep.subr.bf16.mxu0 0
        %449 = vmatpush1.bf16.msra.mxu0 %v427
        %450 = vmatprep.subr.bf16.mxu0 0
        %451 = vmatpush1.bf16.msra.mxu0 %v428
        %452 = vmatprep.subr.bf16.mxu0 0
        %453 = vmatpush1.bf16.msra.mxu0 %v429
        %454 = vmatprep.subr.bf16.mxu0 0
        %455 = vmatpush1.bf16.msra.mxu0 0
        %456 = vmatprep.subr.bf16.mxu0 0
        %457 = vmatpush1.bf16.msra.mxu0 0
        %458 = vmatprep.subr.bf16.mxu0 0
        %459 = vmatpush1.bf16.msra.mxu0 0
        %460 = vmatprep.subr.bf16.mxu0 0
        %461 = vmatpush1.bf16.msra.mxu0 0
        %462 = vmatprep.subr.bf16.mxu0 0
        %463 = vmatpush1.bf16.msra.mxu0 0
        %464 = vmatprep.subr.bf16.mxu0 0
        %465 = vmatpush1.bf16.msra.mxu0 0
        %466 = vmatprep.subr.bf16.mxu0 0
        %467 = vmatpush1.bf16.msra.mxu0 0
        %468 = vmatprep.subr.bf16.mxu0 0
        %469 = vmatpush1.bf16.msra.mxu0 0
        %470 = vmatprep.mubr.bf16.mxu0 0
        %471 = vmatmul.mubr.bf16.gmra.mrb[0].mxu0 %v380
        %v472 = vpop.f32.mrb[0].mxu0
        %v473 = vadd.f32 0.0, %v472
        %v474 = vpop.f32.mrb[0].mxu0
        %v475 = vpop.f32.mrb[0].mxu0
        %v476 = vadd.f32 0.0, %v475
        %v477 = vpop.f32.mrb[0].mxu0
        %478 = vmatprep.mubr.bf16.mxu0 0
        %479 = vmatmul.mubr.bf16.gmra.mrb[0].mxu0 %v381
        %v480 = vpop.f32.mrb[0].mxu0
        %v481 = vadd.f32 0.0, %v480
        %v482 = vpop.f32.mrb[0].mxu0
        %v483 = vpop.f32.mrb[0].mxu0
        %v484 = vadd.f32 0.0, %v483
        %v485 = vpop.f32.mrb[0].mxu0
        %486 = vmatprep.mubr.bf16.mxu0 0
        %487 = vmatmul.mubr.bf16.gmra.mrb[0].mxu0 %v382
        %v488 = vpop.f32.mrb[0].mxu0
        %v489 = vadd.f32 0.0, %v488
        %v490 = vpop.f32.mrb[0].mxu0
        %v491 = vpop.f32.mrb[0].mxu0
        %v492 = vadd.f32 0.0, %v491
        %v493 = vpop.f32.mrb[0].mxu0
        %494 = vmatprep.mubr.bf16.mxu0 0
        %495 = vmatmul.mubr.bf16.gmra.mrb[0].mxu0 %v383
        %v496 = vpop.f32.mrb[0].mxu0
        %v497 = vadd.f32 0.0, %v496
        %v498 = vpop.f32.mrb[0].mxu0
        %v499 = vpop.f32.mrb[0].mxu0
        %v500 = vadd.f32 0.0, %v499
        %v501 = vpop.f32.mrb[0].mxu0
        %502 = vmatprep.mubr.bf16.mxu0 0
        %503 = vmatmul.mubr.bf16.gmra.mrb[0].mxu0 %v384
        %v504 = vpop.f32.mrb[0].mxu0
        %v505 = vadd.f32 0.0, %v504
        %v506 = vpop.f32.mrb[0].mxu0
        %v507 = vpop.f32.mrb[0].mxu0
        %v508 = vadd.f32 0.0, %v507
        %v509 = vpop.f32.mrb[0].mxu0
        %510 = vmatprep.mubr.bf16.mxu0 0
        %511 = vmatmul.mubr.bf16.gmra.mrb[0].mxu0 %v385
        %v512 = vpop.f32.mrb[0].mxu0
        %v513 = vadd.f32 0.0, %v512
        %v514 = vpop.f32.mrb[0].mxu0
        %v515 = vpop.f32.mrb[0].mxu0
        %v516 = vadd.f32 0.0, %v515
        %v517 = vpop.f32.mrb[0].mxu0
        %518 = vmatprep.mubr.bf16.mxu0 0
        %519 = vmatmul.mubr.bf16.gmra.mrb[0].mxu0 %v386
        %v520 = vpop.f32.mrb[0].mxu0
        %v521 = vadd.f32 0.0, %v520
        %v522 = vpop.f32.mrb[0].mxu0
        %v523 = vpop.f32.mrb[0].mxu0
        %v524 = vadd.f32 0.0, %v523
        %v525 = vpop.f32.mrb[0].mxu0
        %526 = vmatprep.mubr.bf16.mxu0 0
        %527 = vmatmul.mubr.bf16.gmra.mrb[0].mxu0 %v387
        %v528 = vpop.f32.mrb[0].mxu0
        %v529 = vadd.f32 0.0, %v528
        %v530 = vpop.f32.mrb[0].mxu0
        %v531 = vpop.f32.mrb[0].mxu0
        %v532 = vadd.f32 0.0, %v531
        %v533 = vpop.f32.mrb[0].mxu0
        %534 = vmatprep.mubr.bf16.mxu0 0
        %535 = vmatmul.mubr.bf16.gmra.mrb[0].mxu0 %v388
        %v536 = vpop.f32.mrb[0].mxu0
        %v537 = vadd.f32 0.0, %v536
        %v538 = vpop.f32.mrb[0].mxu0
        %v539 = vpop.f32.mrb[0].mxu0
        %v540 = vadd.f32 0.0, %v539
        %v541 = vpop.f32.mrb[0].mxu0
        %542 = vmatprep.mubr.bf16.mxu0 0
        %543 = vmatmul.mubr.bf16.gmra.mrb[0].mxu0 %v389
        %v544 = vpop.f32.mrb[0].mxu0
        %v545 = vadd.f32 0.0, %v544
        %v546 = vpop.f32.mrb[0].mxu0
        %v547 = vpop.f32.mrb[0].mxu0
        %v548 = vadd.f32 0.0, %v547
        %v549 = vpop.f32.mrb[0].mxu0
        %550 = vdwg.mxu0
        %v551 = vadd.f32 %v309, %v473
        %v552 = vadd.f32 %v310, %v476
        %v553 = vadd.f32 %v293, %v481
        %v554 = vadd.f32 %v294, %v484
        %v555 = vadd.f32 %v295, %v489
        %v556 = vadd.f32 %v296, %v492
        %v557 = vadd.f32 %v297, %v497
        %v558 = vadd.f32 %v298, %v500
        %v559 = vadd.f32 %v299, %v505
        %v560 = vadd.f32 %v300, %v508
        %v561 = vadd.f32 %v301, %v513
        %v562 = vadd.f32 %v302, %v516
        %v563 = vadd.f32 %v303, %v521
        %v564 = vadd.f32 %v304, %v524
        %v565 = vadd.f32 %v305, %v529
        %v566 = vadd.f32 %v306, %v532
        %v567 = vadd.f32 %v307, %v537
        %v568 = vadd.f32 %v308, %v540
        %v569 = vadd.f32 %v311, %v545
        %v570 = vadd.f32 %v312, %v548
        %v571 = vlaneseq
        %v572 = vshrl.u32 %v571, 7
        %v573 = vsub.s32 0, %v572
        %v574 = vrot.slane %v377, %v573
        %v575 = vadd.f32 %v551, %v574
        %v576 = vadd.f32 %v552, %v574
        %v577 = vadd.f32 %v553, %v574
        %v578 = vadd.f32 %v554, %v574
        %v579 = vadd.f32 %v555, %v574
        %v580 = vadd.f32 %v556, %v574
        %v581 = vadd.f32 %v557, %v574
        %v582 = vadd.f32 %v558, %v574
        %v583 = vadd.f32 %v559, %v574
        %v584 = vadd.f32 %v560, %v574
        %v585 = vadd.f32 %v561, %v574
        %v586 = vadd.f32 %v562, %v574
        %v587 = vadd.f32 %v563, %v574
        %v588 = vadd.f32 %v564, %v574
        %v589 = vadd.f32 %v565, %v574
        %v590 = vadd.f32 %v566, %v574
        %v591 = vadd.f32 %v567, %v574
        %v592 = vadd.f32 %v568, %v574
        %v593 = vadd.f32 %v569, %v574
        %v594 = vadd.f32 %v570, %v574
        %595 = vadd.xlane.f32.xlu0 %v575
        %v596 = vpop.xlane.xlu0 %595
        %597 = vadd.xlane.f32.xlu0 %v576
        %v598 = vpop.xlane.xlu0 %597
        %599 = vadd.xlane.f32.xlu0 %v577
        %v600 = vpop.xlane.xlu0 %599
        %601 = vadd.xlane.f32.xlu0 %v578
        %v602 = vpop.xlane.xlu0 %601
        %603 = vadd.xlane.f32.xlu0 %v579
        %v604 = vpop.xlane.xlu0 %603
        %605 = vadd.xlane.f32.xlu0 %v580
        %v606 = vpop.xlane.xlu0 %605
        %607 = vadd.xlane.f32.xlu0 %v581
        %v608 = vpop.xlane.xlu0 %607
        %609 = vadd.xlane.f32.xlu0 %v582
        %v610 = vpop.xlane.xlu0 %609
        %611 = vadd.xlane.f32.xlu0 %v583
        %v612 = vpop.xlane.xlu0 %611
        %613 = vadd.xlane.f32.xlu0 %v584
        %v614 = vpop.xlane.xlu0 %613
        %615 = vadd.xlane.f32.xlu0 %v585
        %v616 = vpop.xlane.xlu0 %615
        %617 = vadd.xlane.f32.xlu0 %v586
        %v618 = vpop.xlane.xlu0 %617
        %619 = vadd.xlane.f32.xlu0 %v587
        %v620 = vpop.xlane.xlu0 %619
        %621 = vadd.xlane.f32.xlu0 %v588
        %v622 = vpop.xlane.xlu0 %621
        %623 = vadd.xlane.f32.xlu0 %v589
        %v624 = vpop.xlane.xlu0 %623
        %625 = vadd.xlane.f32.xlu0 %v590
        %v626 = vpop.xlane.xlu0 %625
        %627 = vadd.xlane.f32.xlu0 %v591
        %v628 = vpop.xlane.xlu0 %627
        %629 = vadd.xlane.f32.xlu0 %v592
        %v630 = vpop.xlane.xlu0 %629
        %631 = vadd.xlane.f32.xlu0 %v593
        %v632 = vpop.xlane.xlu0 %631
        %633 = vadd.xlane.f32.xlu0 %v594
        %v634 = vpop.xlane.xlu0 %633
        %v635 = vrcp.pop 128.0
        %v636 = vmul.f32 %v596, %v635
        %v637 = vmul.f32 %v598, %v635
        %v638 = vmul.f32 %v600, %v635
        %v639 = vmul.f32 %v602, %v635
        %v640 = vmul.f32 %v604, %v635
        %v641 = vmul.f32 %v606, %v635
        %v642 = vmul.f32 %v608, %v635
        %v643 = vmul.f32 %v610, %v635
        %v644 = vmul.f32 %v612, %v635
        %v645 = vmul.f32 %v614, %v635
        %v646 = vmul.f32 %v616, %v635
        %v647 = vmul.f32 %v618, %v635
        %v648 = vmul.f32 %v620, %v635
        %v649 = vmul.f32 %v622, %v635
        %v650 = vmul.f32 %v624, %v635
        %v651 = vmul.f32 %v626, %v635
        %v652 = vmul.f32 %v628, %v635
        %v653 = vmul.f32 %v630, %v635
        %v654 = vmul.f32 %v632, %v635
        %v655 = vmul.f32 %v634, %v635
        %v656 = vsub.f32 %v575, %v636
        %v657 = vsub.f32 %v576, %v637
        %v658 = vsub.f32 %v577, %v638
        %v659 = vsub.f32 %v578, %v639
        %v660 = vsub.f32 %v579, %v640
        %v661 = vsub.f32 %v580, %v641
        %v662 = vsub.f32 %v581, %v642
        %v663 = vsub.f32 %v582, %v643
        %v664 = vsub.f32 %v583, %v644
        %v665 = vsub.f32 %v584, %v645
        %v666 = vsub.f32 %v585, %v646
        %v667 = vsub.f32 %v586, %v647
        %v668 = vsub.f32 %v587, %v648
        %v669 = vsub.f32 %v588, %v649
        %v670 = vsub.f32 %v589, %v650
        %v671 = vsub.f32 %v590, %v651
        %v672 = vsub.f32 %v591, %v652
        %v673 = vsub.f32 %v592, %v653
        %v674 = vsub.f32 %v593, %v654
        %v675 = vsub.f32 %v594, %v655
        %v676 = vmul.f32 %v656, %v656
        %v677 = vmul.f32 %v657, %v657
        %v678 = vmul.f32 %v658, %v658
        %v679 = vmul.f32 %v659, %v659
        %v680 = vmul.f32 %v660, %v660
        %v681 = vmul.f32 %v661, %v661
        %v682 = vmul.f32 %v662, %v662
        %v683 = vmul.f32 %v663, %v663
        %v684 = vmul.f32 %v664, %v664
        %v685 = vmul.f32 %v665, %v665
        %v686 = vmul.f32 %v666, %v666
        %v687 = vmul.f32 %v667, %v667
        %v688 = vmul.f32 %v668, %v668
        %v689 = vmul.f32 %v669, %v669
        %v690 = vmul.f32 %v670, %v670
        %v691 = vmul.f32 %v671, %v671
        %v692 = vmul.f32 %v672, %v672
        %v693 = vmul.f32 %v673, %v673
        %v694 = vmul.f32 %v674, %v674
        %v695 = vmul.f32 %v675, %v675
        %696 = vadd.xlane.f32.xlu0 %v676
        %v697 = vpop.xlane.xlu0 %696
        %698 = vadd.xlane.f32.xlu0 %v677
        %v699 = vpop.xlane.xlu0 %698
        %700 = vadd.xlane.f32.xlu0 %v678
        %v701 = vpop.xlane.xlu0 %700
        %702 = vadd.xlane.f32.xlu0 %v679
        %v703 = vpop.xlane.xlu0 %702
        %704 = vadd.xlane.f32.xlu0 %v680
        %v705 = vpop.xlane.xlu0 %704
        %706 = vadd.xlane.f32.xlu0 %v681
        %v707 = vpop.xlane.xlu0 %706
        %708 = vadd.xlane.f32.xlu0 %v682
        %v709 = vpop.xlane.xlu0 %708
        %710 = vadd.xlane.f32.xlu0 %v683
        %v711 = vpop.xlane.xlu0 %710
        %712 = vadd.xlane.f32.xlu0 %v684
        %v713 = vpop.xlane.xlu0 %712
        %714 = vadd.xlane.f32.xlu0 %v685
        %v715 = vpop.xlane.xlu0 %714
        %716 = vadd.xlane.f32.xlu0 %v686
        %v717 = vpop.xlane.xlu0 %716
        %718 = vadd.xlane.f32.xlu0 %v687
        %v719 = vpop.xlane.xlu0 %718
        %720 = vadd.xlane.f32.xlu0 %v688
        %v721 = vpop.xlane.xlu0 %720
        %722 = vadd.xlane.f32.xlu0 %v689
        %v723 = vpop.xlane.xlu0 %722
        %724 = vadd.xlane.f32.xlu0 %v690
        %v725 = vpop.xlane.xlu0 %724
        %726 = vadd.xlane.f32.xlu0 %v691
        %v727 = vpop.xlane.xlu0 %726
        %728 = vadd.xlane.f32.xlu0 %v692
        %v729 = vpop.xlane.xlu0 %728
        %730 = vadd.xlane.f32.xlu0 %v693
        %v731 = vpop.xlane.xlu0 %730
        %732 = vadd.xlane.f32.xlu0 %v694
        %v733 = vpop.xlane.xlu0 %732
        %734 = vadd.xlane.f32.xlu0 %v695
        %v735 = vpop.xlane.xlu0 %734
        %v736 = vmul.f32 %v697, %v635
        %v737 = vmul.f32 %v699, %v635
        %v738 = vmul.f32 %v701, %v635
        %v739 = vmul.f32 %v703, %v635
        %v740 = vmul.f32 %v705, %v635
        %v741 = vmul.f32 %v707, %v635
        %v742 = vmul.f32 %v709, %v635
        %v743 = vmul.f32 %v711, %v635
        %v744 = vmul.f32 %v713, %v635
        %v745 = vmul.f32 %v715, %v635
        %v746 = vmul.f32 %v717, %v635
        %v747 = vmul.f32 %v719, %v635
        %v748 = vmul.f32 %v721, %v635
        %v749 = vmul.f32 %v723, %v635
        %v750 = vmul.f32 %v725, %v635
        %v751 = vmul.f32 %v727, %v635
        %v752 = vmul.f32 %v729, %v635
        %v753 = vmul.f32 %v731, %v635
        %v754 = vmul.f32 %v733, %v635
        %v755 = vmul.f32 %v735, %v635
        %v756 = vadd.f32 %v736, 1e-05
        %v757 = vadd.f32 %v737, 1e-05
        %v758 = vadd.f32 %v738, 1e-05
        %v759 = vadd.f32 %v739, 1e-05
        %v760 = vadd.f32 %v740, 1e-05
        %v761 = vadd.f32 %v741, 1e-05
        %v762 = vadd.f32 %v742, 1e-05
        %v763 = vadd.f32 %v743, 1e-05
        %v764 = vadd.f32 %v744, 1e-05
        %v765 = vadd.f32 %v745, 1e-05
        %v766 = vadd.f32 %v746, 1e-05
        %v767 = vadd.f32 %v747, 1e-05
        %v768 = vadd.f32 %v748, 1e-05
        %v769 = vadd.f32 %v749, 1e-05
        %v770 = vadd.f32 %v750, 1e-05
        %v771 = vadd.f32 %v751, 1e-05
        %v772 = vadd.f32 %v752, 1e-05
        %v773 = vadd.f32 %v753, 1e-05
        %v774 = vadd.f32 %v754, 1e-05
        %v775 = vadd.f32 %v755, 1e-05
        %v776 = vrsqrt.pop %v756
        %v777 = vrsqrt.pop %v757
        %v778 = vrsqrt.pop %v758
        %v779 = vrsqrt.pop %v759
        %v780 = vrsqrt.pop %v760
        %v781 = vrsqrt.pop %v761
        %v782 = vrsqrt.pop %v762
        %v783 = vrsqrt.pop %v763
        %v784 = vrsqrt.pop %v764
        %v785 = vrsqrt.pop %v765
        %v786 = vrsqrt.pop %v766
        %v787 = vrsqrt.pop %v767
        %v788 = vrsqrt.pop %v768
        %v789 = vrsqrt.pop %v769
        %v790 = vrsqrt.pop %v770
        %v791 = vrsqrt.pop %v771
        %v792 = vrsqrt.pop %v772
        %v793 = vrsqrt.pop %v773
        %v794 = vrsqrt.pop %v774
        %v795 = vrsqrt.pop %v775
        %v796 = vmul.f32 %v656, %v776
        %v797 = vmul.f32 %v657, %v777
        %v798 = vmul.f32 %v658, %v778
        %v799 = vmul.f32 %v659, %v779
        %v800 = vmul.f32 %v660, %v780
        %v801 = vmul.f32 %v661, %v781
        %v802 = vmul.f32 %v662, %v782
        %v803 = vmul.f32 %v663, %v783
        %v804 = vmul.f32 %v664, %v784
        %v805 = vmul.f32 %v665, %v785
        %v806 = vmul.f32 %v666, %v786
        %v807 = vmul.f32 %v667, %v787
        %v808 = vmul.f32 %v668, %v788
        %v809 = vmul.f32 %v669, %v789
        %v810 = vmul.f32 %v670, %v790
        %v811 = vmul.f32 %v671, %v791
        %v812 = vmul.f32 %v672, %v792
        %v813 = vmul.f32 %v673, %v793
        %v814 = vmul.f32 %v674, %v794
        %v815 = vmul.f32 %v675, %v795
        %v816 = vlaneseq
        %v817 = vshrl.u32 %v816, 7
        %v818 = vsub.s32 1, %v817
        %v819 = vrot.slane %v377, %v818
        %v820 = vmul.f32 %v796, %v819
        %v821 = vmul.f32 %v797, %v819
        %v822 = vmul.f32 %v798, %v819
        %v823 = vmul.f32 %v799, %v819
        %v824 = vmul.f32 %v800, %v819
        %v825 = vmul.f32 %v801, %v819
        %v826 = vmul.f32 %v802, %v819
        %v827 = vmul.f32 %v803, %v819
        %v828 = vmul.f32 %v804, %v819
        %v829 = vmul.f32 %v805, %v819
        %v830 = vmul.f32 %v806, %v819
        %v831 = vmul.f32 %v807, %v819
        %v832 = vmul.f32 %v808, %v819
        %v833 = vmul.f32 %v809, %v819
        %v834 = vmul.f32 %v810, %v819
        %v835 = vmul.f32 %v811, %v819
        %v836 = vmul.f32 %v812, %v819
        %v837 = vmul.f32 %v813, %v819
        %v838 = vmul.f32 %v814, %v819
        %v839 = vmul.f32 %v815, %v819
        %v840 = vlaneseq
        %v841 = vshrl.u32 %v840, 7
        %v842 = vsub.s32 2, %v841
        %v843 = vrot.slane %v377, %v842
        %v844 = vadd.f32 %v820, %v843
        %v845 = vadd.f32 %v821, %v843
        %v846 = vadd.f32 %v822, %v843
        %v847 = vadd.f32 %v823, %v843
        %v848 = vadd.f32 %v824, %v843
        %v849 = vadd.f32 %v825, %v843
        %v850 = vadd.f32 %v826, %v843
        %v851 = vadd.f32 %v827, %v843
        %v852 = vadd.f32 %v828, %v843
        %v853 = vadd.f32 %v829, %v843
        %v854 = vadd.f32 %v830, %v843
        %v855 = vadd.f32 %v831, %v843
        %v856 = vadd.f32 %v832, %v843
        %v857 = vadd.f32 %v833, %v843
        %v858 = vadd.f32 %v834, %v843
        %v859 = vadd.f32 %v835, %v843
        %v860 = vadd.f32 %v836, %v843
        %v861 = vadd.f32 %v837, %v843
        %v862 = vadd.f32 %v838, %v843
        %v863 = vadd.f32 %v839, %v843
        %v864 = vpack.c.bf16 %v845, %v844
        %v865 = vpack.c.bf16 %v847, %v846
        %v866 = vpack.c.bf16 %v849, %v848
        %v867 = vpack.c.bf16 %v851, %v850
        %v868 = vpack.c.bf16 %v853, %v852
        %v869 = vpack.c.bf16 %v855, %v854
        %v870 = vpack.c.bf16 %v857, %v856
        %v871 = vpack.c.bf16 %v859, %v858
        %v872 = vpack.c.bf16 %v861, %v860
        %v873 = vpack.c.bf16 %v863, %v862
        %v890 = vunpack.c.h.b16 %v313
        %v891 = vunpack.c.l.b16 %v314
        %v892 = vunpack.c.h.b16 %v314
        %v893 = vunpack.c.h.b16 %v317
        %v894 = vunpack.c.l.b16 %v318
        %v895 = vunpack.c.h.b16 %v318
        %v896 = vunpack.c.h.b16 %v321
        %v897 = vunpack.c.l.b16 %v322
        %v898 = vunpack.c.h.b16 %v322
        %v899 = vunpack.c.h.b16 %v325
        %v900 = vunpack.c.l.b16 %v326
        %v901 = vunpack.c.h.b16 %v326
        %v902 = vunpack.c.h.b16 %v329
        %v903 = vunpack.c.l.b16 %v330
        %v904 = vunpack.c.h.b16 %v330
        %v905 = vunpack.c.h.b16 %v333
        %v906 = vunpack.c.l.b16 %v334
        %v907 = vunpack.c.h.b16 %v334
        %v908 = vunpack.c.h.b16 %v337
        %v909 = vunpack.c.l.b16 %v338
        %v910 = vunpack.c.h.b16 %v338
        %v911 = vunpack.c.h.b16 %v341
        %v912 = vunpack.c.l.b16 %v342
        %v913 = vunpack.c.h.b16 %v342
        %v914 = vunpack.c.h.b16 %v345
        %v915 = vunpack.c.l.b16 %v346
        %v916 = vunpack.c.h.b16 %v346
        %v917 = vunpack.c.h.b16 %v349
        %v918 = vunpack.c.l.b16 %v350
        %v919 = vunpack.c.h.b16 %v350
        %v920 = vunpack.c.h.b16 %v353
        %v921 = vunpack.c.l.b16 %v354
        %v922 = vunpack.c.h.b16 %v354
        %v923 = vunpack.c.h.b16 %v357
        %v924 = vunpack.c.l.b16 %v358
        %v925 = vunpack.c.h.b16 %v358
        %v926 = vunpack.c.h.b16 %v361
        %v927 = vunpack.c.l.b16 %v362
        %v928 = vunpack.c.h.b16 %v362
        %v929 = vunpack.c.h.b16 %v365
        %v930 = vunpack.c.l.b16 %v366
        %v931 = vunpack.c.h.b16 %v366
        %v932 = vunpack.c.h.b16 %v369
        %v933 = vunpack.c.l.b16 %v370
        %v934 = vunpack.c.h.b16 %v370
        %v935 = vunpack.c.h.b16 %v373
        %v936 = vunpack.c.l.b16 %v374
        %v937 = vunpack.c.h.b16 %v374
        %v938 = vpack.c.b16 %v893, %v890
        %v939 = vpack.c.b16 %v894, %v891
        %v940 = vpack.c.b16 %v895, %v892
        %v941 = vpack.c.b16 %v899, %v896
        %v942 = vpack.c.b16 %v900, %v897
        %v943 = vpack.c.b16 %v901, %v898
        %v944 = vpack.c.b16 %v905, %v902
        %v945 = vpack.c.b16 %v906, %v903
        %v946 = vpack.c.b16 %v907, %v904
        %v947 = vpack.c.b16 %v911, %v908
        %v948 = vpack.c.b16 %v912, %v909
        %v949 = vpack.c.b16 %v913, %v910
        %v950 = vpack.c.b16 %v917, %v914
        %v951 = vpack.c.b16 %v918, %v915
        %v952 = vpack.c.b16 %v919, %v916
        %v953 = vpack.c.b16 %v923, %v920
        %v954 = vpack.c.b16 %v924, %v921
        %v955 = vpack.c.b16 %v925, %v922
        %v956 = vpack.c.b16 %v929, %v926
        %v957 = vpack.c.b16 %v930, %v927
        %v958 = vpack.c.b16 %v931, %v928
        %v959 = vpack.c.b16 %v935, %v932
        %v960 = vpack.c.b16 %v936, %v933
        %v961 = vpack.c.b16 %v937, %v934
        %986 = vmatprep.subr.bf16.mxu0 %v939
        %987 = vmatpush1.bf16.msra.mxu0 %v938
        %988 = vmatprep.subr.bf16.mxu0 %v942
        %989 = vmatpush1.bf16.msra.mxu0 %v941
        %990 = vmatprep.subr.bf16.mxu0 %v945
        %991 = vmatpush1.bf16.msra.mxu0 %v944
        %992 = vmatprep.subr.bf16.mxu0 %v948
        %993 = vmatpush1.bf16.msra.mxu0 %v947
        %994 = vmatprep.subr.bf16.mxu0 %v951
        %995 = vmatpush1.bf16.msra.mxu0 %v950
        %996 = vmatprep.subr.bf16.mxu0 %v954
        %997 = vmatpush1.bf16.msra.mxu0 %v953
        %998 = vmatprep.subr.bf16.mxu0 %v957
        %999 = vmatpush1.bf16.msra.mxu0 %v956
        %1000 = vmatprep.subr.bf16.mxu0 %v960
        %1001 = vmatpush1.bf16.msra.mxu0 %v959
        %1002 = vmatprep.subr.bf16.mxu0 0
        %1003 = vmatpush1.bf16.msra.mxu0 0
        %1004 = vmatprep.subr.bf16.mxu0 0
        %1005 = vmatpush1.bf16.msra.mxu0 0
        %1006 = vmatprep.subr.bf16.mxu0 0
        %1007 = vmatpush1.bf16.msra.mxu0 0
        %1008 = vmatprep.subr.bf16.mxu0 0
        %1009 = vmatpush1.bf16.msra.mxu0 0
        %1010 = vmatprep.subr.bf16.mxu0 0
        %1011 = vmatpush1.bf16.msra.mxu0 0
        %1012 = vmatprep.subr.bf16.mxu0 0
        %1013 = vmatpush1.bf16.msra.mxu0 0
        %1014 = vmatprep.subr.bf16.mxu0 0
        %1015 = vmatpush1.bf16.msra.mxu0 0
        %1016 = vmatprep.subr.bf16.mxu0 0
        %1017 = vmatpush1.bf16.msra.mxu0 0
        %1018 = vmatprep.mubr.bf16.mxu0 0
        %1019 = vmatmul.mubr.bf16.gmra.mrb[0].mxu0 %v864
        %v1020 = vpop.f32.mrb[0].mxu0
        %v1021 = vadd.f32 0.0, %v1020
        %v1022 = vpop.f32.mrb[0].mxu0
        %v1023 = vadd.f32 0.0, %v1022
        %v1024 = vpop.f32.mrb[0].mxu0
        %v1025 = vadd.f32 0.0, %v1024
        %v1026 = vpop.f32.mrb[0].mxu0
        %v1027 = vadd.f32 0.0, %v1026
        %1028 = vmatprep.mubr.bf16.mxu0 0
        %1029 = vmatmul.mubr.bf16.gmra.mrb[0].mxu0 %v865
        %v1030 = vpop.f32.mrb[0].mxu0
        %v1031 = vadd.f32 0.0, %v1030
        %v1032 = vpop.f32.mrb[0].mxu0
        %v1033 = vadd.f32 0.0, %v1032
        %v1034 = vpop.f32.mrb[0].mxu0
        %v1035 = vadd.f32 0.0, %v1034
        %v1036 = vpop.f32.mrb[0].mxu0
        %v1037 = vadd.f32 0.0, %v1036
        %1038 = vmatprep.mubr.bf16.mxu0 0
        %1039 = vmatmul.mubr.bf16.gmra.mrb[0].mxu0 %v866
        %v1040 = vpop.f32.mrb[0].mxu0
        %v1041 = vadd.f32 0.0, %v1040
        %v1042 = vpop.f32.mrb[0].mxu0
        %v1043 = vadd.f32 0.0, %v1042
        %v1044 = vpop.f32.mrb[0].mxu0
        %v1045 = vadd.f32 0.0, %v1044
        %v1046 = vpop.f32.mrb[0].mxu0
        %v1047 = vadd.f32 0.0, %v1046
        %1048 = vmatprep.mubr.bf16.mxu0 0
        %1049 = vmatmul.mubr.bf16.gmra.mrb[0].mxu0 %v867
        %v1050 = vpop.f32.mrb[0].mxu0
        %v1051 = vadd.f32 0.0, %v1050
        %v1052 = vpop.f32.mrb[0].mxu0
        %v1053 = vadd.f32 0.0, %v1052
        %v1054 = vpop.f32.mrb[0].mxu0
        %v1055 = vadd.f32 0.0, %v1054
        %v1056 = vpop.f32.mrb[0].mxu0
        %v1057 = vadd.f32 0.0, %v1056
        %1058 = vmatprep.mubr.bf16.mxu0 0
        %1059 = vmatmul.mubr.bf16.gmra.mrb[0].mxu0 %v868
        %v1060 = vpop.f32.mrb[0].mxu0
        %v1061 = vadd.f32 0.0, %v1060
        %v1062 = vpop.f32.mrb[0].mxu0
        %v1063 = vadd.f32 0.0, %v1062
        %v1064 = vpop.f32.mrb[0].mxu0
        %v1065 = vadd.f32 0.0, %v1064
        %v1066 = vpop.f32.mrb[0].mxu0
        %v1067 = vadd.f32 0.0, %v1066
        %1068 = vmatprep.mubr.bf16.mxu0 0
        %1069 = vmatmul.mubr.bf16.gmra.mrb[0].mxu0 %v869
        %v1070 = vpop.f32.mrb[0].mxu0
        %v1071 = vadd.f32 0.0, %v1070
        %v1072 = vpop.f32.mrb[0].mxu0
        %v1073 = vadd.f32 0.0, %v1072
        %v1074 = vpop.f32.mrb[0].mxu0
        %v1075 = vadd.f32 0.0, %v1074
        %v1076 = vpop.f32.mrb[0].mxu0
        %v1077 = vadd.f32 0.0, %v1076
        %1078 = vmatprep.mubr.bf16.mxu0 0
        %1079 = vmatmul.mubr.bf16.gmra.mrb[0].mxu0 %v870
        %v1080 = vpop.f32.mrb[0].mxu0
        %v1081 = vadd.f32 0.0, %v1080
        %v1082 = vpop.f32.mrb[0].mxu0
        %v1083 = vadd.f32 0.0, %v1082
        %v1084 = vpop.f32.mrb[0].mxu0
        %v1085 = vadd.f32 0.0, %v1084
        %v1086 = vpop.f32.mrb[0].mxu0
        %v1087 = vadd.f32 0.0, %v1086
        %1088 = vmatprep.mubr.bf16.mxu0 0
        %1089 = vmatmul.mubr.bf16.gmra.mrb[0].mxu0 %v871
        %v1090 = vpop.f32.mrb[0].mxu0
        %v1091 = vadd.f32 0.0, %v1090
        %v1092 = vpop.f32.mrb[0].mxu0
        %v1093 = vadd.f32 0.0, %v1092
        %v1094 = vpop.f32.mrb[0].mxu0
        %v1095 = vadd.f32 0.0, %v1094
        %v1096 = vpop.f32.mrb[0].mxu0
        %v1097 = vadd.f32 0.0, %v1096
        %1098 = vmatprep.mubr.bf16.mxu0 0
        %1099 = vmatmul.mubr.bf16.gmra.mrb[0].mxu0 %v872
        %v1100 = vpop.f32.mrb[0].mxu0
        %v1101 = vadd.f32 0.0, %v1100
        %v1102 = vpop.f32.mrb[0].mxu0
        %v1103 = vadd.f32 0.0, %v1102
        %v1104 = vpop.f32.mrb[0].mxu0
        %v1105 = vadd.f32 0.0, %v1104
        %v1106 = vpop.f32.mrb[0].mxu0
        %v1107 = vadd.f32 0.0, %v1106
        %1108 = vmatprep.mubr.bf16.mxu0 0
        %1109 = vmatmul.mubr.bf16.gmra.mrb[0].mxu0 %v873
        %v1110 = vpop.f32.mrb[0].mxu0
        %v1111 = vadd.f32 0.0, %v1110
        %v1112 = vpop.f32.mrb[0].mxu0
        %v1113 = vadd.f32 0.0, %v1112
        %v1114 = vpop.f32.mrb[0].mxu0
        %v1115 = vadd.f32 0.0, %v1114
        %v1116 = vpop.f32.mrb[0].mxu0
        %v1117 = vadd.f32 0.0, %v1116
        %1118 = vdwg.mxu0
        %1119 = vmatprep.subr.bf16.mxu0 0
        %1120 = vmatpush1.bf16.msra.mxu0 %v940
        %1121 = vmatprep.subr.bf16.mxu0 0
        %1122 = vmatpush1.bf16.msra.mxu0 %v943
        %1123 = vmatprep.subr.bf16.mxu0 0
        %1124 = vmatpush1.bf16.msra.mxu0 %v946
        %1125 = vmatprep.subr.bf16.mxu0 0
        %1126 = vmatpush1.bf16.msra.mxu0 %v949
        %1127 = vmatprep.subr.bf16.mxu0 0
        %1128 = vmatpush1.bf16.msra.mxu0 %v952
        %1129 = vmatprep.subr.bf16.mxu0 0
        %1130 = vmatpush1.bf16.msra.mxu0 %v955
        %1131 = vmatprep.subr.bf16.mxu0 0
        %1132 = vmatpush1.bf16.msra.mxu0 %v958
        %1133 = vmatprep.subr.bf16.mxu0 0
        %1134 = vmatpush1.bf16.msra.mxu0 %v961
        %1135 = vmatprep.subr.bf16.mxu0 0
        %1136 = vmatpush1.bf16.msra.mxu0 0
        %1137 = vmatprep.subr.bf16.mxu0 0
        %1138 = vmatpush1.bf16.msra.mxu0 0
        %1139 = vmatprep.subr.bf16.mxu0 0
        %1140 = vmatpush1.bf16.msra.mxu0 0
        %1141 = vmatprep.subr.bf16.mxu0 0
        %1142 = vmatpush1.bf16.msra.mxu0 0
        %1143 = vmatprep.subr.bf16.mxu0 0
        %1144 = vmatpush1.bf16.msra.mxu0 0
        %1145 = vmatprep.subr.bf16.mxu0 0
        %1146 = vmatpush1.bf16.msra.mxu0 0
        %1147 = vmatprep.subr.bf16.mxu0 0
        %1148 = vmatpush1.bf16.msra.mxu0 0
        %1149 = vmatprep.subr.bf16.mxu0 0
        %1150 = vmatpush1.bf16.msra.mxu0 0
        %1151 = vmatprep.mubr.bf16.mxu0 0
        %1152 = vmatmul.mubr.bf16.gmra.mrb[0].mxu0 %v864
        %v1153 = vpop.f32.mrb[0].mxu0
        %v1154 = vadd.f32 0.0, %v1153
        %v1155 = vpop.f32.mrb[0].mxu0
        %v1156 = vpop.f32.mrb[0].mxu0
        %v1157 = vadd.f32 0.0, %v1156
        %v1158 = vpop.f32.mrb[0].mxu0
        %1159 = vmatprep.mubr.bf16.mxu0 0
        %1160 = vmatmul.mubr.bf16.gmra.mrb[0].mxu0 %v865
        %v1161 = vpop.f32.mrb[0].mxu0
        %v1162 = vadd.f32 0.0, %v1161
        %v1163 = vpop.f32.mrb[0].mxu0
        %v1164 = vpop.f32.mrb[0].mxu0
        %v1165 = vadd.f32 0.0, %v1164
        %v1166 = vpop.f32.mrb[0].mxu0
        %1167 = vmatprep.mubr.bf16.mxu0 0
        %1168 = vmatmul.mubr.bf16.gmra.mrb[0].mxu0 %v866
        %v1169 = vpop.f32.mrb[0].mxu0
        %v1170 = vadd.f32 0.0, %v1169
        %v1171 = vpop.f32.mrb[0].mxu0
        %v1172 = vpop.f32.mrb[0].mxu0
        %v1173 = vadd.f32 0.0, %v1172
        %v1174 = vpop.f32.mrb[0].mxu0
        %1175 = vmatprep.mubr.bf16.mxu0 0
        %1176 = vmatmul.mubr.bf16.gmra.mrb[0].mxu0 %v867
        %v1177 = vpop.f32.mrb[0].mxu0
        %v1178 = vadd.f32 0.0, %v1177
        %v1179 = vpop.f32.mrb[0].mxu0
        %v1180 = vpop.f32.mrb[0].mxu0
        %v1181 = vadd.f32 0.0, %v1180
        %v1182 = vpop.f32.mrb[0].mxu0
        %1183 = vmatprep.mubr.bf16.mxu0 0
        %1184 = vmatmul.mubr.bf16.gmra.mrb[0].mxu0 %v868
        %v1185 = vpop.f32.mrb[0].mxu0
        %v1186 = vadd.f32 0.0, %v1185
        %v1187 = vpop.f32.mrb[0].mxu0
        %v1188 = vpop.f32.mrb[0].mxu0
        %v1189 = vadd.f32 0.0, %v1188
        %v1190 = vpop.f32.mrb[0].mxu0
        %1191 = vmatprep.mubr.bf16.mxu0 0
        %1192 = vmatmul.mubr.bf16.gmra.mrb[0].mxu0 %v869
        %v1193 = vpop.f32.mrb[0].mxu0
        %v1194 = vadd.f32 0.0, %v1193
        %v1195 = vpop.f32.mrb[0].mxu0
        %v1196 = vpop.f32.mrb[0].mxu0
        %v1197 = vadd.f32 0.0, %v1196
        %v1198 = vpop.f32.mrb[0].mxu0
        %1199 = vmatprep.mubr.bf16.mxu0 0
        %1200 = vmatmul.mubr.bf16.gmra.mrb[0].mxu0 %v870
        %v1201 = vpop.f32.mrb[0].mxu0
        %v1202 = vadd.f32 0.0, %v1201
        %v1203 = vpop.f32.mrb[0].mxu0
        %v1204 = vpop.f32.mrb[0].mxu0
        %v1205 = vadd.f32 0.0, %v1204
        %v1206 = vpop.f32.mrb[0].mxu0
        %1207 = vmatprep.mubr.bf16.mxu0 0
        %1208 = vmatmul.mubr.bf16.gmra.mrb[0].mxu0 %v871
        %v1209 = vpop.f32.mrb[0].mxu0
        %v1210 = vadd.f32 0.0, %v1209
        %v1211 = vpop.f32.mrb[0].mxu0
        %v1212 = vpop.f32.mrb[0].mxu0
        %v1213 = vadd.f32 0.0, %v1212
        %v1214 = vpop.f32.mrb[0].mxu0
        %1215 = vmatprep.mubr.bf16.mxu0 0
        %1216 = vmatmul.mubr.bf16.gmra.mrb[0].mxu0 %v872
        %v1217 = vpop.f32.mrb[0].mxu0
        %v1218 = vadd.f32 0.0, %v1217
        %v1219 = vpop.f32.mrb[0].mxu0
        %v1220 = vpop.f32.mrb[0].mxu0
        %v1221 = vadd.f32 0.0, %v1220
        %v1222 = vpop.f32.mrb[0].mxu0
        %1223 = vmatprep.mubr.bf16.mxu0 0
        %1224 = vmatmul.mubr.bf16.gmra.mrb[0].mxu0 %v873
        %v1225 = vpop.f32.mrb[0].mxu0
        %v1226 = vadd.f32 0.0, %v1225
        %v1227 = vpop.f32.mrb[0].mxu0
        %v1228 = vpop.f32.mrb[0].mxu0
        %v1229 = vadd.f32 0.0, %v1228
        %v1230 = vpop.f32.mrb[0].mxu0
        %1231 = vdwg.mxu0
        %v1232 = vlaneseq
        %v1233 = vshrl.u32 %v1232, 7
        %v1234 = vsub.s32 3, %v1233
        %v1235 = vrot.slane %v377, %v1234
        %v1236 = vadd.f32 %v1021, %v1235
        %v1237 = vadd.f32 %v1025, %v1235
        %v1238 = vadd.f32 %v1031, %v1235
        %v1239 = vadd.f32 %v1035, %v1235
        %v1240 = vadd.f32 %v1041, %v1235
        %v1241 = vadd.f32 %v1045, %v1235
        %v1242 = vadd.f32 %v1051, %v1235
        %v1243 = vadd.f32 %v1055, %v1235
        %v1244 = vadd.f32 %v1061, %v1235
        %v1245 = vadd.f32 %v1065, %v1235
        %v1246 = vadd.f32 %v1071, %v1235
        %v1247 = vadd.f32 %v1075, %v1235
        %v1248 = vadd.f32 %v1081, %v1235
        %v1249 = vadd.f32 %v1085, %v1235
        %v1250 = vadd.f32 %v1091, %v1235
        %v1251 = vadd.f32 %v1095, %v1235
        %v1252 = vadd.f32 %v1101, %v1235
        %v1253 = vadd.f32 %v1105, %v1235
        %v1254 = vadd.f32 %v1111, %v1235
        %v1255 = vadd.f32 %v1115, %v1235
        %v1256 = vpack.c.bf16 %v1237, %v1236
        %v1257 = vpack.c.bf16 %v1239, %v1238
        %v1258 = vpack.c.bf16 %v1241, %v1240
        %v1259 = vpack.c.bf16 %v1243, %v1242
        %v1260 = vpack.c.bf16 %v1245, %v1244
        %v1261 = vpack.c.bf16 %v1247, %v1246
        %v1262 = vpack.c.bf16 %v1249, %v1248
        %v1263 = vpack.c.bf16 %v1251, %v1250
        %v1264 = vpack.c.bf16 %v1253, %v1252
        %v1265 = vpack.c.bf16 %v1255, %v1254
        %v1266 = vlaneseq
        %v1267 = vshrl.u32 %v1266, 7
        %v1268 = vsub.s32 4, %v1267
        %v1269 = vrot.slane %v377, %v1268
        %v1270 = vadd.f32 %v1023, %v1269
        %v1271 = vadd.f32 %v1027, %v1269
        %v1272 = vadd.f32 %v1033, %v1269
        %v1273 = vadd.f32 %v1037, %v1269
        %v1274 = vadd.f32 %v1043, %v1269
        %v1275 = vadd.f32 %v1047, %v1269
        %v1276 = vadd.f32 %v1053, %v1269
        %v1277 = vadd.f32 %v1057, %v1269
        %v1278 = vadd.f32 %v1063, %v1269
        %v1279 = vadd.f32 %v1067, %v1269
        %v1280 = vadd.f32 %v1073, %v1269
        %v1281 = vadd.f32 %v1077, %v1269
        %v1282 = vadd.f32 %v1083, %v1269
        %v1283 = vadd.f32 %v1087, %v1269
        %v1284 = vadd.f32 %v1093, %v1269
        %v1285 = vadd.f32 %v1097, %v1269
        %v1286 = vadd.f32 %v1103, %v1269
        %v1287 = vadd.f32 %v1107, %v1269
        %v1288 = vadd.f32 %v1113, %v1269
        %v1289 = vadd.f32 %v1117, %v1269
        %v1290 = vpack.c.bf16 %v1271, %v1270
        %v1291 = vpack.c.bf16 %v1273, %v1272
        %v1292 = vpack.c.bf16 %v1275, %v1274
        %v1293 = vpack.c.bf16 %v1277, %v1276
        %v1294 = vpack.c.bf16 %v1279, %v1278
        %v1295 = vpack.c.bf16 %v1281, %v1280
        %v1296 = vpack.c.bf16 %v1283, %v1282
        %v1297 = vpack.c.bf16 %v1285, %v1284
        %v1298 = vpack.c.bf16 %v1287, %v1286
        %v1299 = vpack.c.bf16 %v1289, %v1288
        %v1300 = vlaneseq
        %v1301 = vshrl.u32 %v1300, 7
        %v1302 = vsub.s32 5, %v1301
        %v1303 = vrot.slane %v377, %v1302
        %v1304 = vadd.f32 %v1154, %v1303
        %v1305 = vadd.f32 %v1157, %v1303
        %v1306 = vadd.f32 %v1162, %v1303
        %v1307 = vadd.f32 %v1165, %v1303
        %v1308 = vadd.f32 %v1170, %v1303
        %v1309 = vadd.f32 %v1173, %v1303
        %v1310 = vadd.f32 %v1178, %v1303
        %v1311 = vadd.f32 %v1181, %v1303
        %v1312 = vadd.f32 %v1186, %v1303
        %v1313 = vadd.f32 %v1189, %v1303
        %v1314 = vadd.f32 %v1194, %v1303
        %v1315 = vadd.f32 %v1197, %v1303
        %v1316 = vadd.f32 %v1202, %v1303
        %v1317 = vadd.f32 %v1205, %v1303
        %v1318 = vadd.f32 %v1210, %v1303
        %v1319 = vadd.f32 %v1213, %v1303
        %v1320 = vadd.f32 %v1218, %v1303
        %v1321 = vadd.f32 %v1221, %v1303
        %v1322 = vadd.f32 %v1226, %v1303
        %v1323 = vadd.f32 %v1229, %v1303
        %v1324 = vpack.c.bf16 %v1305, %v1304
        %v1325 = vpack.c.bf16 %v1307, %v1306
        %v1326 = vpack.c.bf16 %v1309, %v1308
        %v1327 = vpack.c.bf16 %v1311, %v1310
        %v1328 = vpack.c.bf16 %v1313, %v1312
        %v1329 = vpack.c.bf16 %v1315, %v1314
        %v1330 = vpack.c.bf16 %v1317, %v1316
        %v1331 = vpack.c.bf16 %v1319, %v1318
        %v1332 = vpack.c.bf16 %v1321, %v1320
        %v1333 = vpack.c.bf16 %v1323, %v1322
        %1334 = vmatprep.subr.bf16.mxu0 0
        %1335 = vmatpush1.bf16.xpose.msra.mxu0 %v1290
        %1336 = vmatprep.subr.bf16.mxu0 0
        %1337 = vmatpush1.bf16.xpose.msra.mxu0 0
        %1338 = vmatprep.subr.bf16.mxu0 0
        %1339 = vmatpush1.bf16.xpose.msra.mxu0 0
        %1340 = vmatprep.subr.bf16.mxu0 0
        %1341 = vmatpush1.bf16.xpose.msra.mxu0 0
        %1342 = vmatprep.subr.bf16.mxu0 0
        %1343 = vmatpush1.bf16.xpose.msra.mxu0 0
        %1344 = vmatprep.subr.bf16.mxu0 0
        %1345 = vmatpush1.bf16.xpose.msra.mxu0 0
        %1346 = vmatprep.subr.bf16.mxu0 0
        %1347 = vmatpush1.bf16.xpose.msra.mxu0 0
        %1348 = vmatprep.subr.bf16.mxu0 0
        %1349 = vmatpush1.bf16.xpose.msra.mxu0 0
        %1350 = vmatprep.subr.bf16.mxu0 0
        %1351 = vmatpush1.bf16.xpose.msra.mxu0 0
        %1352 = vmatprep.subr.bf16.mxu0 0
        %1353 = vmatpush1.bf16.xpose.msra.mxu0 0
        %1354 = vmatprep.subr.bf16.mxu0 0
        %1355 = vmatpush1.bf16.xpose.msra.mxu0 0
        %1356 = vmatprep.subr.bf16.mxu0 0
        %1357 = vmatpush1.bf16.xpose.msra.mxu0 0
        %1358 = vmatprep.subr.bf16.mxu0 0
        %1359 = vmatpush1.bf16.xpose.msra.mxu0 0
        %1360 = vmatprep.subr.bf16.mxu0 0
        %1361 = vmatpush1.bf16.xpose.msra.mxu0 0
        %1362 = vmatprep.subr.bf16.mxu0 0
        %1363 = vmatpush1.bf16.xpose.msra.mxu0 0
        %1364 = vmatprep.subr.bf16.mxu0 0
        %1365 = vmatpush1.bf16.xpose.msra.mxu0 0
        %1366 = vmatprep.mubr.bf16.mxu0 0
        %1367 = vmatmul.mubr.bf16.gmra.mrb[0].mxu0 %v1256
        %v1368 = vpop.f32.mrb[0].mxu0
        %v1369 = vadd.f32 0.0, %v1368
        %v1370 = vpop.f32.mrb[0].mxu0
        %v1371 = vpop.f32.mrb[0].mxu0
        %v1372 = vadd.f32 0.0, %v1371
        %v1373 = vpop.f32.mrb[0].mxu0
        %1374 = vdwg.mxu0
        %1375 = vmatprep.subr.bf16.mxu0 0
        %1376 = vmatpush1.bf16.xpose.msra.mxu0 %v1291
        %1377 = vmatprep.subr.bf16.mxu0 0
        %1378 = vmatpush1.bf16.xpose.msra.mxu0 0
        %1379 = vmatprep.subr.bf16.mxu0 0
        %1380 = vmatpush1.bf16.xpose.msra.mxu0 0
        %1381 = vmatprep.subr.bf16.mxu0 0
        %1382 = vmatpush1.bf16.xpose.msra.mxu0 0
        %1383 = vmatprep.subr.bf16.mxu0 0
        %1384 = vmatpush1.bf16.xpose.msra.mxu0 0
        %1385 = vmatprep.subr.bf16.mxu0 0
        %1386 = vmatpush1.bf16.xpose.msra.mxu0 0
        %1387 = vmatprep.subr.bf16.mxu0 0
        %1388 = vmatpush1.bf16.xpose.msra.mxu0 0
        %1389 = vmatprep.subr.bf16.mxu0 0
        %1390 = vmatpush1.bf16.xpose.msra.mxu0 0
        %1391 = vmatprep.subr.bf16.mxu0 0
        %1392 = vmatpush1.bf16.xpose.msra.mxu0 0
        %1393 = vmatprep.subr.bf16.mxu0 0
        %1394 = vmatpush1.bf16.xpose.msra.mxu0 0
        %1395 = vmatprep.subr.bf16.mxu0 0
        %1396 = vmatpush1.bf16.xpose.msra.mxu0 0
        %1397 = vmatprep.subr.bf16.mxu0 0
        %1398 = vmatpush1.bf16.xpose.msra.mxu0 0
        %1399 = vmatprep.subr.bf16.mxu0 0
        %1400 = vmatpush1.bf16.xpose.msra.mxu0 0
        %1401 = vmatprep.subr.bf16.mxu0 0
        %1402 = vmatpush1.bf16.xpose.msra.mxu0 0
        %1403 = vmatprep.subr.bf16.mxu0 0
        %1404 = vmatpush1.bf16.xpose.msra.mxu0 0
        %1405 = vmatprep.subr.bf16.mxu0 0
        %1406 = vmatpush1.bf16.xpose.msra.mxu0 0
        %1407 = vmatprep.mubr.bf16.mxu0 0
        %1408 = vmatmul.mubr.bf16.gmra.mrb[0].mxu0 %v1257
        %v1409 = vpop.f32.mrb[0].mxu0
        %v1410 = vadd.f32 0.0, %v1409
        %v1411 = vpop.f32.mrb[0].mxu0
        %v1412 = vpop.f32.mrb[0].mxu0
        %v1413 = vadd.f32 0.0, %v1412
        %v1414 = vpop.f32.mrb[0].mxu0
        %1415 = vdwg.mxu0
        %1416 = vmatprep.subr.bf16.mxu0 0
        %1417 = vmatpush1.bf16.xpose.msra.mxu0 %v1292
        %1418 = vmatprep.subr.bf16.mxu0 0
        %1419 = vmatpush1.bf16.xpose.msra.mxu0 0
        %1420 = vmatprep.subr.bf16.mxu0 0
        %1421 = vmatpush1.bf16.xpose.msra.mxu0 0
        %1422 = vmatprep.subr.bf16.mxu0 0
        %1423 = vmatpush1.bf16.xpose.msra.mxu0 0
        %1424 = vmatprep.subr.bf16.mxu0 0
        %1425 = vmatpush1.bf16.xpose.msra.mxu0 0
        %1426 = vmatprep.subr.bf16.mxu0 0
        %1427 = vmatpush1.bf16.xpose.msra.mxu0 0
        %1428 = vmatprep.subr.bf16.mxu0 0
        %1429 = vmatpush1.bf16.xpose.msra.mxu0 0
        %1430 = vmatprep.subr.bf16.mxu0 0
        %1431 = vmatpush1.bf16.xpose.msra.mxu0 0
        %1432 = vmatprep.subr.bf16.mxu0 0
        %1433 = vmatpush1.bf16.xpose.msra.mxu0 0
        %1434 = vmatprep.subr.bf16.mxu0 0
        %1435 = vmatpush1.bf16.xpose.msra.mxu0 0
        %1436 = vmatprep.subr.bf16.mxu0 0
        %1437 = vmatpush1.bf16.xpose.msra.mxu0 0
        %1438 = vmatprep.subr.bf16.mxu0 0
        %1439 = vmatpush1.bf16.xpose.msra.mxu0 0
        %1440 = vmatprep.subr.bf16.mxu0 0
        %1441 = vmatpush1.bf16.xpose.msra.mxu0 0
        %1442 = vmatprep.subr.bf16.mxu0 0
        %1443 = vmatpush1.bf16.xpose.msra.mxu0 0
        %1444 = vmatprep.subr.bf16.mxu0 0
        %1445 = vmatpush1.bf16.xpose.msra.mxu0 0
        %1446 = vmatprep.subr.bf16.mxu0 0
        %1447 = vmatpush1.bf16.xpose.msra.mxu0 0
        %1448 = vmatprep.mubr.bf16.mxu0 0
        %1449 = vmatmul.mubr.bf16.gmra.mrb[0].mxu0 %v1258
        %v1450 = vpop.f32.mrb[0].mxu0
        %v1451 = vadd.f32 0.0, %v1450
        %v1452 = vpop.f32.mrb[0].mxu0
        %v1453 = vpop.f32.mrb[0].mxu0
        %v1454 = vadd.f32 0.0, %v1453
        %v1455 = vpop.f32.mrb[0].mxu0
        %1456 = vdwg.mxu0
        %1457 = vmatprep.subr.bf16.mxu0 0
        %1458 = vmatpush1.bf16.xpose.msra.mxu0 %v1293
        %1459 = vmatprep.subr.bf16.mxu0 0
        %1460 = vmatpush1.bf16.xpose.msra.mxu0 0
        %1461 = vmatprep.subr.bf16.mxu0 0
        %1462 = vmatpush1.bf16.xpose.msra.mxu0 0
        %1463 = vmatprep.subr.bf16.mxu0 0
        %1464 = vmatpush1.bf16.xpose.msra.mxu0 0
        %1465 = vmatprep.subr.bf16.mxu0 0
        %1466 = vmatpush1.bf16.xpose.msra.mxu0 0
        %1467 = vmatprep.subr.bf16.mxu0 0
        %1468 = vmatpush1.bf16.xpose.msra.mxu0 0
        %1469 = vmatprep.subr.bf16.mxu0 0
        %1470 = vmatpush1.bf16.xpose.msra.mxu0 0
        %1471 = vmatprep.subr.bf16.mxu0 0
        %1472 = vmatpush1.bf16.xpose.msra.mxu0 0
        %1473 = vmatprep.subr.bf16.mxu0 0
        %1474 = vmatpush1.bf16.xpose.msra.mxu0 0
        %1475 = vmatprep.subr.bf16.mxu0 0
        %1476 = vmatpush1.bf16.xpose.msra.mxu0 0
        %1477 = vmatprep.subr.bf16.mxu0 0
        %1478 = vmatpush1.bf16.xpose.msra.mxu0 0
        %1479 = vmatprep.subr.bf16.mxu0 0
        %1480 = vmatpush1.bf16.xpose.msra.mxu0 0
        %1481 = vmatprep.subr.bf16.mxu0 0
        %1482 = vmatpush1.bf16.xpose.msra.mxu0 0
        %1483 = vmatprep.subr.bf16.mxu0 0
        %1484 = vmatpush1.bf16.xpose.msra.mxu0 0
        %1485 = vmatprep.subr.bf16.mxu0 0
        %1486 = vmatpush1.bf16.xpose.msra.mxu0 0
        %1487 = vmatprep.subr.bf16.mxu0 0
        %1488 = vmatpush1.bf16.xpose.msra.mxu0 0
        %1489 = vmatprep.mubr.bf16.mxu0 0
        %1490 = vmatmul.mubr.bf16.gmra.mrb[0].mxu0 %v1259
        %v1491 = vpop.f32.mrb[0].mxu0
        %v1492 = vadd.f32 0.0, %v1491
        %v1493 = vpop.f32.mrb[0].mxu0
        %v1494 = vpop.f32.mrb[0].mxu0
        %v1495 = vadd.f32 0.0, %v1494
        %v1496 = vpop.f32.mrb[0].mxu0
        %1497 = vdwg.mxu0
        %1498 = vmatprep.subr.bf16.mxu0 0
        %1499 = vmatpush1.bf16.xpose.msra.mxu0 %v1294
        %1500 = vmatprep.subr.bf16.mxu0 0
        %1501 = vmatpush1.bf16.xpose.msra.mxu0 0
        %1502 = vmatprep.subr.bf16.mxu0 0
        %1503 = vmatpush1.bf16.xpose.msra.mxu0 0
        %1504 = vmatprep.subr.bf16.mxu0 0
        %1505 = vmatpush1.bf16.xpose.msra.mxu0 0
        %1506 = vmatprep.subr.bf16.mxu0 0
        %1507 = vmatpush1.bf16.xpose.msra.mxu0 0
        %1508 = vmatprep.subr.bf16.mxu0 0
        %1509 = vmatpush1.bf16.xpose.msra.mxu0 0
        %1510 = vmatprep.subr.bf16.mxu0 0
        %1511 = vmatpush1.bf16.xpose.msra.mxu0 0
        %1512 = vmatprep.subr.bf16.mxu0 0
        %1513 = vmatpush1.bf16.xpose.msra.mxu0 0
        %1514 = vmatprep.subr.bf16.mxu0 0
        %1515 = vmatpush1.bf16.xpose.msra.mxu0 0
        %1516 = vmatprep.subr.bf16.mxu0 0
        %1517 = vmatpush1.bf16.xpose.msra.mxu0 0
        %1518 = vmatprep.subr.bf16.mxu0 0
        %1519 = vmatpush1.bf16.xpose.msra.mxu0 0
        %1520 = vmatprep.subr.bf16.mxu0 0
        %1521 = vmatpush1.bf16.xpose.msra.mxu0 0
        %1522 = vmatprep.subr.bf16.mxu0 0
        %1523 = vmatpush1.bf16.xpose.msra.mxu0 0
        %1524 = vmatprep.subr.bf16.mxu0 0
        %1525 = vmatpush1.bf16.xpose.msra.mxu0 0
        %1526 = vmatprep.subr.bf16.mxu0 0
        %1527 = vmatpush1.bf16.xpose.msra.mxu0 0
        %1528 = vmatprep.subr.bf16.mxu0 0
        %1529 = vmatpush1.bf16.xpose.msra.mxu0 0
        %1530 = vmatprep.mubr.bf16.mxu0 0
        %1531 = vmatmul.mubr.bf16.gmra.mrb[0].mxu0 %v1260
        %v1532 = vpop.f32.mrb[0].mxu0
        %v1533 = vadd.f32 0.0, %v1532
        %v1534 = vpop.f32.mrb[0].mxu0
        %v1535 = vpop.f32.mrb[0].mxu0
        %v1536 = vadd.f32 0.0, %v1535
        %v1537 = vpop.f32.mrb[0].mxu0
        %1538 = vdwg.mxu0
        %1539 = vmatprep.subr.bf16.mxu0 0
        %1540 = vmatpush1.bf16.xpose.msra.mxu0 %v1295
        %1541 = vmatprep.subr.bf16.mxu0 0
        %1542 = vmatpush1.bf16.xpose.msra.mxu0 0
        %1543 = vmatprep.subr.bf16.mxu0 0
        %1544 = vmatpush1.bf16.xpose.msra.mxu0 0
        %1545 = vmatprep.subr.bf16.mxu0 0
        %1546 = vmatpush1.bf16.xpose.msra.mxu0 0
        %1547 = vmatprep.subr.bf16.mxu0 0
        %1548 = vmatpush1.bf16.xpose.msra.mxu0 0
        %1549 = vmatprep.subr.bf16.mxu0 0
        %1550 = vmatpush1.bf16.xpose.msra.mxu0 0
        %1551 = vmatprep.subr.bf16.mxu0 0
        %1552 = vmatpush1.bf16.xpose.msra.mxu0 0
        %1553 = vmatprep.subr.bf16.mxu0 0
        %1554 = vmatpush1.bf16.xpose.msra.mxu0 0
        %1555 = vmatprep.subr.bf16.mxu0 0
        %1556 = vmatpush1.bf16.xpose.msra.mxu0 0
        %1557 = vmatprep.subr.bf16.mxu0 0
        %1558 = vmatpush1.bf16.xpose.msra.mxu0 0
        %1559 = vmatprep.subr.bf16.mxu0 0
        %1560 = vmatpush1.bf16.xpose.msra.mxu0 0
        %1561 = vmatprep.subr.bf16.mxu0 0
        %1562 = vmatpush1.bf16.xpose.msra.mxu0 0
        %1563 = vmatprep.subr.bf16.mxu0 0
        %1564 = vmatpush1.bf16.xpose.msra.mxu0 0
        %1565 = vmatprep.subr.bf16.mxu0 0
        %1566 = vmatpush1.bf16.xpose.msra.mxu0 0
        %1567 = vmatprep.subr.bf16.mxu0 0
        %1568 = vmatpush1.bf16.xpose.msra.mxu0 0
        %1569 = vmatprep.subr.bf16.mxu0 0
        %1570 = vmatpush1.bf16.xpose.msra.mxu0 0
        %1571 = vmatprep.mubr.bf16.mxu0 0
        %1572 = vmatmul.mubr.bf16.gmra.mrb[0].mxu0 %v1261
        %v1573 = vpop.f32.mrb[0].mxu0
        %v1574 = vadd.f32 0.0, %v1573
        %v1575 = vpop.f32.mrb[0].mxu0
        %v1576 = vpop.f32.mrb[0].mxu0
        %v1577 = vadd.f32 0.0, %v1576
        %v1578 = vpop.f32.mrb[0].mxu0
        %1579 = vdwg.mxu0
        %1580 = vmatprep.subr.bf16.mxu0 0
        %1581 = vmatpush1.bf16.xpose.msra.mxu0 %v1296
        %1582 = vmatprep.subr.bf16.mxu0 0
        %1583 = vmatpush1.bf16.xpose.msra.mxu0 0
        %1584 = vmatprep.subr.bf16.mxu0 0
        %1585 = vmatpush1.bf16.xpose.msra.mxu0 0
        %1586 = vmatprep.subr.bf16.mxu0 0
        %1587 = vmatpush1.bf16.xpose.msra.mxu0 0
        %1588 = vmatprep.subr.bf16.mxu0 0
        %1589 = vmatpush1.bf16.xpose.msra.mxu0 0
        %1590 = vmatprep.subr.bf16.mxu0 0
        %1591 = vmatpush1.bf16.xpose.msra.mxu0 0
        %1592 = vmatprep.subr.bf16.mxu0 0
        %1593 = vmatpush1.bf16.xpose.msra.mxu0 0
        %1594 = vmatprep.subr.bf16.mxu0 0
        %1595 = vmatpush1.bf16.xpose.msra.mxu0 0
        %1596 = vmatprep.subr.bf16.mxu0 0
        %1597 = vmatpush1.bf16.xpose.msra.mxu0 0
        %1598 = vmatprep.subr.bf16.mxu0 0
        %1599 = vmatpush1.bf16.xpose.msra.mxu0 0
        %1600 = vmatprep.subr.bf16.mxu0 0
        %1601 = vmatpush1.bf16.xpose.msra.mxu0 0
        %1602 = vmatprep.subr.bf16.mxu0 0
        %1603 = vmatpush1.bf16.xpose.msra.mxu0 0
        %1604 = vmatprep.subr.bf16.mxu0 0
        %1605 = vmatpush1.bf16.xpose.msra.mxu0 0
        %1606 = vmatprep.subr.bf16.mxu0 0
        %1607 = vmatpush1.bf16.xpose.msra.mxu0 0
        %1608 = vmatprep.subr.bf16.mxu0 0
        %1609 = vmatpush1.bf16.xpose.msra.mxu0 0
        %1610 = vmatprep.subr.bf16.mxu0 0
        %1611 = vmatpush1.bf16.xpose.msra.mxu0 0
        %1612 = vmatprep.mubr.bf16.mxu0 0
        %1613 = vmatmul.mubr.bf16.gmra.mrb[0].mxu0 %v1262
        %v1614 = vpop.f32.mrb[0].mxu0
        %v1615 = vadd.f32 0.0, %v1614
        %v1616 = vpop.f32.mrb[0].mxu0
        %v1617 = vpop.f32.mrb[0].mxu0
        %v1618 = vadd.f32 0.0, %v1617
        %v1619 = vpop.f32.mrb[0].mxu0
        %1620 = vdwg.mxu0
        %1621 = vmatprep.subr.bf16.mxu0 0
        %1622 = vmatpush1.bf16.xpose.msra.mxu0 %v1297
        %1623 = vmatprep.subr.bf16.mxu0 0
        %1624 = vmatpush1.bf16.xpose.msra.mxu0 0
        %1625 = vmatprep.subr.bf16.mxu0 0
        %1626 = vmatpush1.bf16.xpose.msra.mxu0 0
        %1627 = vmatprep.subr.bf16.mxu0 0
        %1628 = vmatpush1.bf16.xpose.msra.mxu0 0
        %1629 = vmatprep.subr.bf16.mxu0 0
        %1630 = vmatpush1.bf16.xpose.msra.mxu0 0
        %1631 = vmatprep.subr.bf16.mxu0 0
        %1632 = vmatpush1.bf16.xpose.msra.mxu0 0
        %1633 = vmatprep.subr.bf16.mxu0 0
        %1634 = vmatpush1.bf16.xpose.msra.mxu0 0
        %1635 = vmatprep.subr.bf16.mxu0 0
        %1636 = vmatpush1.bf16.xpose.msra.mxu0 0
        %1637 = vmatprep.subr.bf16.mxu0 0
        %1638 = vmatpush1.bf16.xpose.msra.mxu0 0
        %1639 = vmatprep.subr.bf16.mxu0 0
        %1640 = vmatpush1.bf16.xpose.msra.mxu0 0
        %1641 = vmatprep.subr.bf16.mxu0 0
        %1642 = vmatpush1.bf16.xpose.msra.mxu0 0
        %1643 = vmatprep.subr.bf16.mxu0 0
        %1644 = vmatpush1.bf16.xpose.msra.mxu0 0
        %1645 = vmatprep.subr.bf16.mxu0 0
        %1646 = vmatpush1.bf16.xpose.msra.mxu0 0
        %1647 = vmatprep.subr.bf16.mxu0 0
        %1648 = vmatpush1.bf16.xpose.msra.mxu0 0
        %1649 = vmatprep.subr.bf16.mxu0 0
        %1650 = vmatpush1.bf16.xpose.msra.mxu0 0
        %1651 = vmatprep.subr.bf16.mxu0 0
        %1652 = vmatpush1.bf16.xpose.msra.mxu0 0
        %1653 = vmatprep.mubr.bf16.mxu0 0
        %1654 = vmatmul.mubr.bf16.gmra.mrb[0].mxu0 %v1263
        %v1655 = vpop.f32.mrb[0].mxu0
        %v1656 = vadd.f32 0.0, %v1655
        %v1657 = vpop.f32.mrb[0].mxu0
        %v1658 = vpop.f32.mrb[0].mxu0
        %v1659 = vadd.f32 0.0, %v1658
        %v1660 = vpop.f32.mrb[0].mxu0
        %1661 = vdwg.mxu0
        %1662 = vmatprep.subr.bf16.mxu0 0
        %1663 = vmatpush1.bf16.xpose.msra.mxu0 %v1298
        %1664 = vmatprep.subr.bf16.mxu0 0
        %1665 = vmatpush1.bf16.xpose.msra.mxu0 0
        %1666 = vmatprep.subr.bf16.mxu0 0
        %1667 = vmatpush1.bf16.xpose.msra.mxu0 0
        %1668 = vmatprep.subr.bf16.mxu0 0
        %1669 = vmatpush1.bf16.xpose.msra.mxu0 0
        %1670 = vmatprep.subr.bf16.mxu0 0
        %1671 = vmatpush1.bf16.xpose.msra.mxu0 0
        %1672 = vmatprep.subr.bf16.mxu0 0
        %1673 = vmatpush1.bf16.xpose.msra.mxu0 0
        %1674 = vmatprep.subr.bf16.mxu0 0
        %1675 = vmatpush1.bf16.xpose.msra.mxu0 0
        %1676 = vmatprep.subr.bf16.mxu0 0
        %1677 = vmatpush1.bf16.xpose.msra.mxu0 0
        %1678 = vmatprep.subr.bf16.mxu0 0
        %1679 = vmatpush1.bf16.xpose.msra.mxu0 0
        %1680 = vmatprep.subr.bf16.mxu0 0
        %1681 = vmatpush1.bf16.xpose.msra.mxu0 0
        %1682 = vmatprep.subr.bf16.mxu0 0
        %1683 = vmatpush1.bf16.xpose.msra.mxu0 0
        %1684 = vmatprep.subr.bf16.mxu0 0
        %1685 = vmatpush1.bf16.xpose.msra.mxu0 0
        %1686 = vmatprep.subr.bf16.mxu0 0
        %1687 = vmatpush1.bf16.xpose.msra.mxu0 0
        %1688 = vmatprep.subr.bf16.mxu0 0
        %1689 = vmatpush1.bf16.xpose.msra.mxu0 0
        %1690 = vmatprep.subr.bf16.mxu0 0
        %1691 = vmatpush1.bf16.xpose.msra.mxu0 0
        %1692 = vmatprep.subr.bf16.mxu0 0
        %1693 = vmatpush1.bf16.xpose.msra.mxu0 0
        %1694 = vmatprep.mubr.bf16.mxu0 0
        %1695 = vmatmul.mubr.bf16.gmra.mrb[0].mxu0 %v1264
        %v1696 = vpop.f32.mrb[0].mxu0
        %v1697 = vadd.f32 0.0, %v1696
        %v1698 = vpop.f32.mrb[0].mxu0
        %v1699 = vpop.f32.mrb[0].mxu0
        %v1700 = vadd.f32 0.0, %v1699
        %v1701 = vpop.f32.mrb[0].mxu0
        %1702 = vdwg.mxu0
        %1703 = vmatprep.subr.bf16.mxu0 0
        %1704 = vmatpush1.bf16.xpose.msra.mxu0 %v1299
        %1705 = vmatprep.subr.bf16.mxu0 0
        %1706 = vmatpush1.bf16.xpose.msra.mxu0 0
        %1707 = vmatprep.subr.bf16.mxu0 0
        %1708 = vmatpush1.bf16.xpose.msra.mxu0 0
        %1709 = vmatprep.subr.bf16.mxu0 0
        %1710 = vmatpush1.bf16.xpose.msra.mxu0 0
        %1711 = vmatprep.subr.bf16.mxu0 0
        %1712 = vmatpush1.bf16.xpose.msra.mxu0 0
        %1713 = vmatprep.subr.bf16.mxu0 0
        %1714 = vmatpush1.bf16.xpose.msra.mxu0 0
        %1715 = vmatprep.subr.bf16.mxu0 0
        %1716 = vmatpush1.bf16.xpose.msra.mxu0 0
        %1717 = vmatprep.subr.bf16.mxu0 0
        %1718 = vmatpush1.bf16.xpose.msra.mxu0 0
        %1719 = vmatprep.subr.bf16.mxu0 0
        %1720 = vmatpush1.bf16.xpose.msra.mxu0 0
        %1721 = vmatprep.subr.bf16.mxu0 0
        %1722 = vmatpush1.bf16.xpose.msra.mxu0 0
        %1723 = vmatprep.subr.bf16.mxu0 0
        %1724 = vmatpush1.bf16.xpose.msra.mxu0 0
        %1725 = vmatprep.subr.bf16.mxu0 0
        %1726 = vmatpush1.bf16.xpose.msra.mxu0 0
        %1727 = vmatprep.subr.bf16.mxu0 0
        %1728 = vmatpush1.bf16.xpose.msra.mxu0 0
        %1729 = vmatprep.subr.bf16.mxu0 0
        %1730 = vmatpush1.bf16.xpose.msra.mxu0 0
        %1731 = vmatprep.subr.bf16.mxu0 0
        %1732 = vmatpush1.bf16.xpose.msra.mxu0 0
        %1733 = vmatprep.subr.bf16.mxu0 0
        %1734 = vmatpush1.bf16.xpose.msra.mxu0 0
        %1735 = vmatprep.mubr.bf16.mxu0 0
        %1736 = vmatmul.mubr.bf16.gmra.mrb[0].mxu0 %v1265
        %v1737 = vpop.f32.mrb[0].mxu0
        %v1738 = vadd.f32 0.0, %v1737
        %v1739 = vpop.f32.mrb[0].mxu0
        %v1740 = vpop.f32.mrb[0].mxu0
        %v1741 = vadd.f32 0.0, %v1740
        %v1742 = vpop.f32.mrb[0].mxu0
        %1743 = vdwg.mxu0
        %vm1744 = vcmask 130048
        %v1745 = vsel %vm1744, %v1369, -inf
        %1746 = vmax.xlane.f32.xlu0 %v1745
        %v1747 = vpop.xlane.xlu0 %1746
        %v1748 = vsel %vm1744, %v1372, -inf
        %1749 = vmax.xlane.f32.xlu0 %v1748
        %v1750 = vpop.xlane.xlu0 %1749
        %v1751 = vsel %vm1744, %v1410, -inf
        %1752 = vmax.xlane.f32.xlu0 %v1751
        %v1753 = vpop.xlane.xlu0 %1752
        %v1754 = vsel %vm1744, %v1413, -inf
        %1755 = vmax.xlane.f32.xlu0 %v1754
        %v1756 = vpop.xlane.xlu0 %1755
        %v1757 = vsel %vm1744, %v1451, -inf
        %1758 = vmax.xlane.f32.xlu0 %v1757
        %v1759 = vpop.xlane.xlu0 %1758
        %v1760 = vsel %vm1744, %v1454, -inf
        %1761 = vmax.xlane.f32.xlu0 %v1760
        %v1762 = vpop.xlane.xlu0 %1761
        %v1763 = vsel %vm1744, %v1492, -inf
        %1764 = vmax.xlane.f32.xlu0 %v1763
        %v1765 = vpop.xlane.xlu0 %1764
        %v1766 = vsel %vm1744, %v1495, -inf
        %1767 = vmax.xlane.f32.xlu0 %v1766
        %v1768 = vpop.xlane.xlu0 %1767
        %v1769 = vsel %vm1744, %v1533, -inf
        %1770 = vmax.xlane.f32.xlu0 %v1769
        %v1771 = vpop.xlane.xlu0 %1770
        %v1772 = vsel %vm1744, %v1536, -inf
        %1773 = vmax.xlane.f32.xlu0 %v1772
        %v1774 = vpop.xlane.xlu0 %1773
        %v1775 = vsel %vm1744, %v1574, -inf
        %1776 = vmax.xlane.f32.xlu0 %v1775
        %v1777 = vpop.xlane.xlu0 %1776
        %v1778 = vsel %vm1744, %v1577, -inf
        %1779 = vmax.xlane.f32.xlu0 %v1778
        %v1780 = vpop.xlane.xlu0 %1779
        %v1781 = vsel %vm1744, %v1615, -inf
        %1782 = vmax.xlane.f32.xlu0 %v1781
        %v1783 = vpop.xlane.xlu0 %1782
        %v1784 = vsel %vm1744, %v1618, -inf
        %1785 = vmax.xlane.f32.xlu0 %v1784
        %v1786 = vpop.xlane.xlu0 %1785
        %v1787 = vsel %vm1744, %v1656, -inf
        %1788 = vmax.xlane.f32.xlu0 %v1787
        %v1789 = vpop.xlane.xlu0 %1788
        %v1790 = vsel %vm1744, %v1659, -inf
        %1791 = vmax.xlane.f32.xlu0 %v1790
        %v1792 = vpop.xlane.xlu0 %1791
        %v1793 = vsel %vm1744, %v1697, -inf
        %1794 = vmax.xlane.f32.xlu0 %v1793
        %v1795 = vpop.xlane.xlu0 %1794
        %v1796 = vsel %vm1744, %v1700, -inf
        %1797 = vmax.xlane.f32.xlu0 %v1796
        %v1798 = vpop.xlane.xlu0 %1797
        %v1799 = vsel %vm1744, %v1738, -inf
        %1800 = vmax.xlane.f32.xlu0 %v1799
        %v1801 = vpop.xlane.xlu0 %1800
        %v1802 = vsel %vm1744, %v1741, -inf
        %1803 = vmax.xlane.f32.xlu0 %v1802
        %v1804 = vpop.xlane.xlu0 %1803
        %v1805 = vsub.f32 %v1369, %v1747
        %v1806 = vsub.f32 %v1372, %v1750
        %v1807 = vsub.f32 %v1410, %v1753
        %v1808 = vsub.f32 %v1413, %v1756
        %v1809 = vsub.f32 %v1451, %v1759
        %v1810 = vsub.f32 %v1454, %v1762
        %v1811 = vsub.f32 %v1492, %v1765
        %v1812 = vsub.f32 %v1495, %v1768
        %v1813 = vsub.f32 %v1533, %v1771
        %v1814 = vsub.f32 %v1536, %v1774
        %v1815 = vsub.f32 %v1574, %v1777
        %v1816 = vsub.f32 %v1577, %v1780
        %v1817 = vsub.f32 %v1615, %v1783
        %v1818 = vsub.f32 %v1618, %v1786
        %v1819 = vsub.f32 %v1656, %v1789
        %v1820 = vsub.f32 %v1659, %v1792
        %v1821 = vsub.f32 %v1697, %v1795
        %v1822 = vsub.f32 %v1700, %v1798
        %v1823 = vsub.f32 %v1738, %v1801
        %v1824 = vsub.f32 %v1741, %v1804
        %v1825 = vmul.f32 %v1805, 1.442695
        %v1826 = vpow.pop %v1825
        %v1827 = vmul.f32 %v1806, 1.442695
        %v1828 = vpow.pop %v1827
        %v1829 = vmul.f32 %v1807, 1.442695
        %v1830 = vpow.pop %v1829
        %v1831 = vmul.f32 %v1808, 1.442695
        %v1832 = vpow.pop %v1831
        %v1833 = vmul.f32 %v1809, 1.442695
        %v1834 = vpow.pop %v1833
        %v1835 = vmul.f32 %v1810, 1.442695
        %v1836 = vpow.pop %v1835
        %v1837 = vmul.f32 %v1811, 1.442695
        %v1838 = vpow.pop %v1837
        %v1839 = vmul.f32 %v1812, 1.442695
        %v1840 = vpow.pop %v1839
        %v1841 = vmul.f32 %v1813, 1.442695
        %v1842 = vpow.pop %v1841
        %v1843 = vmul.f32 %v1814, 1.442695
        %v1844 = vpow.pop %v1843
        %v1845 = vmul.f32 %v1815, 1.442695
        %v1846 = vpow.pop %v1845
        %v1847 = vmul.f32 %v1816, 1.442695
        %v1848 = vpow.pop %v1847
        %v1849 = vmul.f32 %v1817, 1.442695
        %v1850 = vpow.pop %v1849
        %v1851 = vmul.f32 %v1818, 1.442695
        %v1852 = vpow.pop %v1851
        %v1853 = vmul.f32 %v1819, 1.442695
        %v1854 = vpow.pop %v1853
        %v1855 = vmul.f32 %v1820, 1.442695
        %v1856 = vpow.pop %v1855
        %v1857 = vmul.f32 %v1821, 1.442695
        %v1858 = vpow.pop %v1857
        %v1859 = vmul.f32 %v1822, 1.442695
        %v1860 = vpow.pop %v1859
        %v1861 = vmul.f32 %v1823, 1.442695
        %v1862 = vpow.pop %v1861
        %v1863 = vmul.f32 %v1824, 1.442695
        %v1864 = vpow.pop %v1863
        %v1865 = vsel %vm1744, %v1826, 0.0
        %1866 = vadd.xlane.f32.xlu0 %v1865
        %v1867 = vpop.xlane.xlu0 %1866
        %v1868 = vsel %vm1744, %v1828, 0.0
        %1869 = vadd.xlane.f32.xlu0 %v1868
        %v1870 = vpop.xlane.xlu0 %1869
        %v1871 = vsel %vm1744, %v1830, 0.0
        %1872 = vadd.xlane.f32.xlu0 %v1871
        %v1873 = vpop.xlane.xlu0 %1872
        %v1874 = vsel %vm1744, %v1832, 0.0
        %1875 = vadd.xlane.f32.xlu0 %v1874
        %v1876 = vpop.xlane.xlu0 %1875
        %v1877 = vsel %vm1744, %v1834, 0.0
        %1878 = vadd.xlane.f32.xlu0 %v1877
        %v1879 = vpop.xlane.xlu0 %1878
        %v1880 = vsel %vm1744, %v1836, 0.0
        %1881 = vadd.xlane.f32.xlu0 %v1880
        %v1882 = vpop.xlane.xlu0 %1881
        %v1883 = vsel %vm1744, %v1838, 0.0
        %1884 = vadd.xlane.f32.xlu0 %v1883
        %v1885 = vpop.xlane.xlu0 %1884
        %v1886 = vsel %vm1744, %v1840, 0.0
        %1887 = vadd.xlane.f32.xlu0 %v1886
        %v1888 = vpop.xlane.xlu0 %1887
        %v1889 = vsel %vm1744, %v1842, 0.0
        %1890 = vadd.xlane.f32.xlu0 %v1889
        %v1891 = vpop.xlane.xlu0 %1890
        %v1892 = vsel %vm1744, %v1844, 0.0
        %1893 = vadd.xlane.f32.xlu0 %v1892
        %v1894 = vpop.xlane.xlu0 %1893
        %v1895 = vsel %vm1744, %v1846, 0.0
        %1896 = vadd.xlane.f32.xlu0 %v1895
        %v1897 = vpop.xlane.xlu0 %1896
        %v1898 = vsel %vm1744, %v1848, 0.0
        %1899 = vadd.xlane.f32.xlu0 %v1898
        %v1900 = vpop.xlane.xlu0 %1899
        %v1901 = vsel %vm1744, %v1850, 0.0
        %1902 = vadd.xlane.f32.xlu0 %v1901
        %v1903 = vpop.xlane.xlu0 %1902
        %v1904 = vsel %vm1744, %v1852, 0.0
        %1905 = vadd.xlane.f32.xlu0 %v1904
        %v1906 = vpop.xlane.xlu0 %1905
        %v1907 = vsel %vm1744, %v1854, 0.0
        %1908 = vadd.xlane.f32.xlu0 %v1907
        %v1909 = vpop.xlane.xlu0 %1908
        %v1910 = vsel %vm1744, %v1856, 0.0
        %1911 = vadd.xlane.f32.xlu0 %v1910
        %v1912 = vpop.xlane.xlu0 %1911
        %v1913 = vsel %vm1744, %v1858, 0.0
        %1914 = vadd.xlane.f32.xlu0 %v1913
        %v1915 = vpop.xlane.xlu0 %1914
        %v1916 = vsel %vm1744, %v1860, 0.0
        %1917 = vadd.xlane.f32.xlu0 %v1916
        %v1918 = vpop.xlane.xlu0 %1917
        %v1919 = vsel %vm1744, %v1862, 0.0
        %1920 = vadd.xlane.f32.xlu0 %v1919
        %v1921 = vpop.xlane.xlu0 %1920
        %v1922 = vsel %vm1744, %v1864, 0.0
        %1923 = vadd.xlane.f32.xlu0 %v1922
        %v1924 = vpop.xlane.xlu0 %1923
        %v1925 = vrcp.pop %v1867
        %v1926 = vrcp.pop %v1870
        %v1927 = vrcp.pop %v1873
        %v1928 = vrcp.pop %v1876
        %v1929 = vrcp.pop %v1879
        %v1930 = vrcp.pop %v1882
        %v1931 = vrcp.pop %v1885
        %v1932 = vrcp.pop %v1888
        %v1933 = vrcp.pop %v1891
        %v1934 = vrcp.pop %v1894
        %v1935 = vrcp.pop %v1897
        %v1936 = vrcp.pop %v1900
        %v1937 = vrcp.pop %v1903
        %v1938 = vrcp.pop %v1906
        %v1939 = vrcp.pop %v1909
        %v1940 = vrcp.pop %v1912
        %v1941 = vrcp.pop %v1915
        %v1942 = vrcp.pop %v1918
        %v1943 = vrcp.pop %v1921
        %v1944 = vrcp.pop %v1924
        %v1945 = vmul.f32 %v1826, %v1925
        %v1946 = vmul.f32 %v1828, %v1926
        %v1947 = vmul.f32 %v1830, %v1927
        %v1948 = vmul.f32 %v1832, %v1928
        %v1949 = vmul.f32 %v1834, %v1929
        %v1950 = vmul.f32 %v1836, %v1930
        %v1951 = vmul.f32 %v1838, %v1931
        %v1952 = vmul.f32 %v1840, %v1932
        %v1953 = vmul.f32 %v1842, %v1933
        %v1954 = vmul.f32 %v1844, %v1934
        %v1955 = vmul.f32 %v1846, %v1935
        %v1956 = vmul.f32 %v1848, %v1936
        %v1957 = vmul.f32 %v1850, %v1937
        %v1958 = vmul.f32 %v1852, %v1938
        %v1959 = vmul.f32 %v1854, %v1939
        %v1960 = vmul.f32 %v1856, %v1940
        %v1961 = vmul.f32 %v1858, %v1941
        %v1962 = vmul.f32 %v1860, %v1942
        %v1963 = vmul.f32 %v1862, %v1943
        %v1964 = vmul.f32 %v1864, %v1944
        %v1965 = vpack.c.bf16 %v1946, %v1945
        %v1966 = vpack.c.bf16 %v1948, %v1947
        %v1967 = vpack.c.bf16 %v1950, %v1949
        %v1968 = vpack.c.bf16 %v1952, %v1951
        %v1969 = vpack.c.bf16 %v1954, %v1953
        %v1970 = vpack.c.bf16 %v1956, %v1955
        %v1971 = vpack.c.bf16 %v1958, %v1957
        %v1972 = vpack.c.bf16 %v1960, %v1959
        %v1973 = vpack.c.bf16 %v1962, %v1961
        %v1974 = vpack.c.bf16 %v1964, %v1963
        %v1976 = vsel %vm1744, %v1965, 0
        %1978 = vmatprep.subr.bf16.mxu0 0
        %1979 = vmatpush1.bf16.msra.mxu0 %v1324
        %1980 = vmatprep.subr.bf16.mxu0 0
        %1981 = vmatpush1.bf16.msra.mxu0 0
        %1982 = vmatprep.subr.bf16.mxu0 0
        %1983 = vmatpush1.bf16.msra.mxu0 0
        %1984 = vmatprep.subr.bf16.mxu0 0
        %1985 = vmatpush1.bf16.msra.mxu0 0
        %1986 = vmatprep.subr.bf16.mxu0 0
        %1987 = vmatpush1.bf16.msra.mxu0 0
        %1988 = vmatprep.subr.bf16.mxu0 0
        %1989 = vmatpush1.bf16.msra.mxu0 0
        %1990 = vmatprep.subr.bf16.mxu0 0
        %1991 = vmatpush1.bf16.msra.mxu0 0
        %1992 = vmatprep.subr.bf16.mxu0 0
        %1993 = vmatpush1.bf16.msra.mxu0 0
        %1994 = vmatprep.subr.bf16.mxu0 0
        %1995 = vmatpush1.bf16.msra.mxu0 0
        %1996 = vmatprep.subr.bf16.mxu0 0
        %1997 = vmatpush1.bf16.msra.mxu0 0
        %1998 = vmatprep.subr.bf16.mxu0 0
        %1999 = vmatpush1.bf16.msra.mxu0 0
        %2000 = vmatprep.subr.bf16.mxu0 0
        %2001 = vmatpush1.bf16.msra.mxu0 0
        %2002 = vmatprep.subr.bf16.mxu0 0
        %2003 = vmatpush1.bf16.msra.mxu0 0
        %2004 = vmatprep.subr.bf16.mxu0 0
        %2005 = vmatpush1.bf16.msra.mxu0 0
        %2006 = vmatprep.subr.bf16.mxu0 0
        %2007 = vmatpush1.bf16.msra.mxu0 0
        %2008 = vmatprep.subr.bf16.mxu0 0
        %2009 = vmatpush1.bf16.msra.mxu0 0
        %2010 = vmatprep.mubr.bf16.mxu0 0
        %2011 = vmatmul.mubr.bf16.gmra.mrb[0].mxu0 %v1976
        %v2012 = vpop.f32.mrb[0].mxu0
        %v2013 = vadd.f32 0.0, %v2012
        %v2014 = vpop.f32.mrb[0].mxu0
        %v2015 = vpop.f32.mrb[0].mxu0
        %v2016 = vadd.f32 0.0, %v2015
        %v2017 = vpop.f32.mrb[0].mxu0
        %2018 = vdwg.mxu0
        %v2020 = vsel %vm1744, %v1966, 0
        %2022 = vmatprep.subr.bf16.mxu0 0
        %2023 = vmatpush1.bf16.msra.mxu0 %v1325
        %2024 = vmatprep.subr.bf16.mxu0 0
        %2025 = vmatpush1.bf16.msra.mxu0 0
        %2026 = vmatprep.subr.bf16.mxu0 0
        %2027 = vmatpush1.bf16.msra.mxu0 0
        %2028 = vmatprep.subr.bf16.mxu0 0
        %2029 = vmatpush1.bf16.msra.mxu0 0
        %2030 = vmatprep.subr.bf16.mxu0 0
        %2031 = vmatpush1.bf16.msra.mxu0 0
        %2032 = vmatprep.subr.bf16.mxu0 0
        %2033 = vmatpush1.bf16.msra.mxu0 0
        %2034 = vmatprep.subr.bf16.mxu0 0
        %2035 = vmatpush1.bf16.msra.mxu0 0
        %2036 = vmatprep.subr.bf16.mxu0 0
        %2037 = vmatpush1.bf16.msra.mxu0 0
        %2038 = vmatprep.subr.bf16.mxu0 0
        %2039 = vmatpush1.bf16.msra.mxu0 0
        %2040 = vmatprep.subr.bf16.mxu0 0
        %2041 = vmatpush1.bf16.msra.mxu0 0
        %2042 = vmatprep.subr.bf16.mxu0 0
        %2043 = vmatpush1.bf16.msra.mxu0 0
        %2044 = vmatprep.subr.bf16.mxu0 0
        %2045 = vmatpush1.bf16.msra.mxu0 0
        %2046 = vmatprep.subr.bf16.mxu0 0
        %2047 = vmatpush1.bf16.msra.mxu0 0
        %2048 = vmatprep.subr.bf16.mxu0 0
        %2049 = vmatpush1.bf16.msra.mxu0 0
        %2050 = vmatprep.subr.bf16.mxu0 0
        %2051 = vmatpush1.bf16.msra.mxu0 0
        %2052 = vmatprep.subr.bf16.mxu0 0
        %2053 = vmatpush1.bf16.msra.mxu0 0
        %2054 = vmatprep.mubr.bf16.mxu0 0
        %2055 = vmatmul.mubr.bf16.gmra.mrb[0].mxu0 %v2020
        %v2056 = vpop.f32.mrb[0].mxu0
        %v2057 = vadd.f32 0.0, %v2056
        %v2058 = vpop.f32.mrb[0].mxu0
        %v2059 = vpop.f32.mrb[0].mxu0
        %v2060 = vadd.f32 0.0, %v2059
        %v2061 = vpop.f32.mrb[0].mxu0
        %2062 = vdwg.mxu0
        %v2064 = vsel %vm1744, %v1967, 0
        %2066 = vmatprep.subr.bf16.mxu0 0
        %2067 = vmatpush1.bf16.msra.mxu0 %v1326
        %2068 = vmatprep.subr.bf16.mxu0 0
        %2069 = vmatpush1.bf16.msra.mxu0 0
        %2070 = vmatprep.subr.bf16.mxu0 0
        %2071 = vmatpush1.bf16.msra.mxu0 0
        %2072 = vmatprep.subr.bf16.mxu0 0
        %2073 = vmatpush1.bf16.msra.mxu0 0
        %2074 = vmatprep.subr.bf16.mxu0 0
        %2075 = vmatpush1.bf16.msra.mxu0 0
        %2076 = vmatprep.subr.bf16.mxu0 0
        %2077 = vmatpush1.bf16.msra.mxu0 0
        %2078 = vmatprep.subr.bf16.mxu0 0
        %2079 = vmatpush1.bf16.msra.mxu0 0
        %2080 = vmatprep.subr.bf16.mxu0 0
        %2081 = vmatpush1.bf16.msra.mxu0 0
        %2082 = vmatprep.subr.bf16.mxu0 0
        %2083 = vmatpush1.bf16.msra.mxu0 0
        %2084 = vmatprep.subr.bf16.mxu0 0
        %2085 = vmatpush1.bf16.msra.mxu0 0
        %2086 = vmatprep.subr.bf16.mxu0 0
        %2087 = vmatpush1.bf16.msra.mxu0 0
        %2088 = vmatprep.subr.bf16.mxu0 0
        %2089 = vmatpush1.bf16.msra.mxu0 0
        %2090 = vmatprep.subr.bf16.mxu0 0
        %2091 = vmatpush1.bf16.msra.mxu0 0
        %2092 = vmatprep.subr.bf16.mxu0 0
        %2093 = vmatpush1.bf16.msra.mxu0 0
        %2094 = vmatprep.subr.bf16.mxu0 0
        %2095 = vmatpush1.bf16.msra.mxu0 0
        %2096 = vmatprep.subr.bf16.mxu0 0
        %2097 = vmatpush1.bf16.msra.mxu0 0
        %2098 = vmatprep.mubr.bf16.mxu0 0
        %2099 = vmatmul.mubr.bf16.gmra.mrb[0].mxu0 %v2064
        %v2100 = vpop.f32.mrb[0].mxu0
        %v2101 = vadd.f32 0.0, %v2100
        %v2102 = vpop.f32.mrb[0].mxu0
        %v2103 = vpop.f32.mrb[0].mxu0
        %v2104 = vadd.f32 0.0, %v2103
        %v2105 = vpop.f32.mrb[0].mxu0
        %2106 = vdwg.mxu0
        %v2108 = vsel %vm1744, %v1968, 0
        %2110 = vmatprep.subr.bf16.mxu0 0
        %2111 = vmatpush1.bf16.msra.mxu0 %v1327
        %2112 = vmatprep.subr.bf16.mxu0 0
        %2113 = vmatpush1.bf16.msra.mxu0 0
        %2114 = vmatprep.subr.bf16.mxu0 0
        %2115 = vmatpush1.bf16.msra.mxu0 0
        %2116 = vmatprep.subr.bf16.mxu0 0
        %2117 = vmatpush1.bf16.msra.mxu0 0
        %2118 = vmatprep.subr.bf16.mxu0 0
        %2119 = vmatpush1.bf16.msra.mxu0 0
        %2120 = vmatprep.subr.bf16.mxu0 0
        %2121 = vmatpush1.bf16.msra.mxu0 0
        %2122 = vmatprep.subr.bf16.mxu0 0
        %2123 = vmatpush1.bf16.msra.mxu0 0
        %2124 = vmatprep.subr.bf16.mxu0 0
        %2125 = vmatpush1.bf16.msra.mxu0 0
        %2126 = vmatprep.subr.bf16.mxu0 0
        %2127 = vmatpush1.bf16.msra.mxu0 0
        %2128 = vmatprep.subr.bf16.mxu0 0
        %2129 = vmatpush1.bf16.msra.mxu0 0
        %2130 = vmatprep.subr.bf16.mxu0 0
        %2131 = vmatpush1.bf16.msra.mxu0 0
        %2132 = vmatprep.subr.bf16.mxu0 0
        %2133 = vmatpush1.bf16.msra.mxu0 0
        %2134 = vmatprep.subr.bf16.mxu0 0
        %2135 = vmatpush1.bf16.msra.mxu0 0
        %2136 = vmatprep.subr.bf16.mxu0 0
        %2137 = vmatpush1.bf16.msra.mxu0 0
        %2138 = vmatprep.subr.bf16.mxu0 0
        %2139 = vmatpush1.bf16.msra.mxu0 0
        %2140 = vmatprep.subr.bf16.mxu0 0
        %2141 = vmatpush1.bf16.msra.mxu0 0
        %2142 = vmatprep.mubr.bf16.mxu0 0
        %2143 = vmatmul.mubr.bf16.gmra.mrb[0].mxu0 %v2108
        %v2144 = vpop.f32.mrb[0].mxu0
        %v2145 = vadd.f32 0.0, %v2144
        %v2146 = vpop.f32.mrb[0].mxu0
        %v2147 = vpop.f32.mrb[0].mxu0
        %v2148 = vadd.f32 0.0, %v2147
        %v2149 = vpop.f32.mrb[0].mxu0
        %2150 = vdwg.mxu0
        %v2152 = vsel %vm1744, %v1969, 0
        %2154 = vmatprep.subr.bf16.mxu0 0
        %2155 = vmatpush1.bf16.msra.mxu0 %v1328
        %2156 = vmatprep.subr.bf16.mxu0 0
        %2157 = vmatpush1.bf16.msra.mxu0 0
        %2158 = vmatprep.subr.bf16.mxu0 0
        %2159 = vmatpush1.bf16.msra.mxu0 0
        %2160 = vmatprep.subr.bf16.mxu0 0
        %2161 = vmatpush1.bf16.msra.mxu0 0
        %2162 = vmatprep.subr.bf16.mxu0 0
        %2163 = vmatpush1.bf16.msra.mxu0 0
        %2164 = vmatprep.subr.bf16.mxu0 0
        %2165 = vmatpush1.bf16.msra.mxu0 0
        %2166 = vmatprep.subr.bf16.mxu0 0
        %2167 = vmatpush1.bf16.msra.mxu0 0
        %2168 = vmatprep.subr.bf16.mxu0 0
        %2169 = vmatpush1.bf16.msra.mxu0 0
        %2170 = vmatprep.subr.bf16.mxu0 0
        %2171 = vmatpush1.bf16.msra.mxu0 0
        %2172 = vmatprep.subr.bf16.mxu0 0
        %2173 = vmatpush1.bf16.msra.mxu0 0
        %2174 = vmatprep.subr.bf16.mxu0 0
        %2175 = vmatpush1.bf16.msra.mxu0 0
        %2176 = vmatprep.subr.bf16.mxu0 0
        %2177 = vmatpush1.bf16.msra.mxu0 0
        %2178 = vmatprep.subr.bf16.mxu0 0
        %2179 = vmatpush1.bf16.msra.mxu0 0
        %2180 = vmatprep.subr.bf16.mxu0 0
        %2181 = vmatpush1.bf16.msra.mxu0 0
        %2182 = vmatprep.subr.bf16.mxu0 0
        %2183 = vmatpush1.bf16.msra.mxu0 0
        %2184 = vmatprep.subr.bf16.mxu0 0
        %2185 = vmatpush1.bf16.msra.mxu0 0
        %2186 = vmatprep.mubr.bf16.mxu0 0
        %2187 = vmatmul.mubr.bf16.gmra.mrb[0].mxu0 %v2152
        %v2188 = vpop.f32.mrb[0].mxu0
        %v2189 = vadd.f32 0.0, %v2188
        %v2190 = vpop.f32.mrb[0].mxu0
        %v2191 = vpop.f32.mrb[0].mxu0
        %v2192 = vadd.f32 0.0, %v2191
        %v2193 = vpop.f32.mrb[0].mxu0
        %2194 = vdwg.mxu0
        %v2196 = vsel %vm1744, %v1970, 0
        %2198 = vmatprep.subr.bf16.mxu0 0
        %2199 = vmatpush1.bf16.msra.mxu0 %v1329
        %2200 = vmatprep.subr.bf16.mxu0 0
        %2201 = vmatpush1.bf16.msra.mxu0 0
        %2202 = vmatprep.subr.bf16.mxu0 0
        %2203 = vmatpush1.bf16.msra.mxu0 0
        %2204 = vmatprep.subr.bf16.mxu0 0
        %2205 = vmatpush1.bf16.msra.mxu0 0
        %2206 = vmatprep.subr.bf16.mxu0 0
        %2207 = vmatpush1.bf16.msra.mxu0 0
        %2208 = vmatprep.subr.bf16.mxu0 0
        %2209 = vmatpush1.bf16.msra.mxu0 0
        %2210 = vmatprep.subr.bf16.mxu0 0
        %2211 = vmatpush1.bf16.msra.mxu0 0
        %2212 = vmatprep.subr.bf16.mxu0 0
        %2213 = vmatpush1.bf16.msra.mxu0 0
        %2214 = vmatprep.subr.bf16.mxu0 0
        %2215 = vmatpush1.bf16.msra.mxu0 0
        %2216 = vmatprep.subr.bf16.mxu0 0
        %2217 = vmatpush1.bf16.msra.mxu0 0
        %2218 = vmatprep.subr.bf16.mxu0 0
        %2219 = vmatpush1.bf16.msra.mxu0 0
        %2220 = vmatprep.subr.bf16.mxu0 0
        %2221 = vmatpush1.bf16.msra.mxu0 0
        %2222 = vmatprep.subr.bf16.mxu0 0
        %2223 = vmatpush1.bf16.msra.mxu0 0
        %2224 = vmatprep.subr.bf16.mxu0 0
        %2225 = vmatpush1.bf16.msra.mxu0 0
        %2226 = vmatprep.subr.bf16.mxu0 0
        %2227 = vmatpush1.bf16.msra.mxu0 0
        %2228 = vmatprep.subr.bf16.mxu0 0
        %2229 = vmatpush1.bf16.msra.mxu0 0
        %2230 = vmatprep.mubr.bf16.mxu0 0
        %2231 = vmatmul.mubr.bf16.gmra.mrb[0].mxu0 %v2196
        %v2232 = vpop.f32.mrb[0].mxu0
        %v2233 = vadd.f32 0.0, %v2232
        %v2234 = vpop.f32.mrb[0].mxu0
        %v2235 = vpop.f32.mrb[0].mxu0
        %v2236 = vadd.f32 0.0, %v2235
        %v2237 = vpop.f32.mrb[0].mxu0
        %2238 = vdwg.mxu0
        %v2240 = vsel %vm1744, %v1971, 0
        %2242 = vmatprep.subr.bf16.mxu0 0
        %2243 = vmatpush1.bf16.msra.mxu0 %v1330
        %2244 = vmatprep.subr.bf16.mxu0 0
        %2245 = vmatpush1.bf16.msra.mxu0 0
        %2246 = vmatprep.subr.bf16.mxu0 0
        %2247 = vmatpush1.bf16.msra.mxu0 0
        %2248 = vmatprep.subr.bf16.mxu0 0
        %2249 = vmatpush1.bf16.msra.mxu0 0
        %2250 = vmatprep.subr.bf16.mxu0 0
        %2251 = vmatpush1.bf16.msra.mxu0 0
        %2252 = vmatprep.subr.bf16.mxu0 0
        %2253 = vmatpush1.bf16.msra.mxu0 0
        %2254 = vmatprep.subr.bf16.mxu0 0
        %2255 = vmatpush1.bf16.msra.mxu0 0
        %2256 = vmatprep.subr.bf16.mxu0 0
        %2257 = vmatpush1.bf16.msra.mxu0 0
        %2258 = vmatprep.subr.bf16.mxu0 0
        %2259 = vmatpush1.bf16.msra.mxu0 0
        %2260 = vmatprep.subr.bf16.mxu0 0
        %2261 = vmatpush1.bf16.msra.mxu0 0
        %2262 = vmatprep.subr.bf16.mxu0 0
        %2263 = vmatpush1.bf16.msra.mxu0 0
        %2264 = vmatprep.subr.bf16.mxu0 0
        %2265 = vmatpush1.bf16.msra.mxu0 0
        %2266 = vmatprep.subr.bf16.mxu0 0
        %2267 = vmatpush1.bf16.msra.mxu0 0
        %2268 = vmatprep.subr.bf16.mxu0 0
        %2269 = vmatpush1.bf16.msra.mxu0 0
        %2270 = vmatprep.subr.bf16.mxu0 0
        %2271 = vmatpush1.bf16.msra.mxu0 0
        %2272 = vmatprep.subr.bf16.mxu0 0
        %2273 = vmatpush1.bf16.msra.mxu0 0
        %2274 = vmatprep.mubr.bf16.mxu0 0
        %2275 = vmatmul.mubr.bf16.gmra.mrb[0].mxu0 %v2240
        %v2276 = vpop.f32.mrb[0].mxu0
        %v2277 = vadd.f32 0.0, %v2276
        %v2278 = vpop.f32.mrb[0].mxu0
        %v2279 = vpop.f32.mrb[0].mxu0
        %v2280 = vadd.f32 0.0, %v2279
        %v2281 = vpop.f32.mrb[0].mxu0
        %2282 = vdwg.mxu0
        %v2284 = vsel %vm1744, %v1972, 0
        %2286 = vmatprep.subr.bf16.mxu0 0
        %2287 = vmatpush1.bf16.msra.mxu0 %v1331
        %2288 = vmatprep.subr.bf16.mxu0 0
        %2289 = vmatpush1.bf16.msra.mxu0 0
        %2290 = vmatprep.subr.bf16.mxu0 0
        %2291 = vmatpush1.bf16.msra.mxu0 0
        %2292 = vmatprep.subr.bf16.mxu0 0
        %2293 = vmatpush1.bf16.msra.mxu0 0
        %2294 = vmatprep.subr.bf16.mxu0 0
        %2295 = vmatpush1.bf16.msra.mxu0 0
        %2296 = vmatprep.subr.bf16.mxu0 0
        %2297 = vmatpush1.bf16.msra.mxu0 0
        %2298 = vmatprep.subr.bf16.mxu0 0
        %2299 = vmatpush1.bf16.msra.mxu0 0
        %2300 = vmatprep.subr.bf16.mxu0 0
        %2301 = vmatpush1.bf16.msra.mxu0 0
        %2302 = vmatprep.subr.bf16.mxu0 0
        %2303 = vmatpush1.bf16.msra.mxu0 0
        %2304 = vmatprep.subr.bf16.mxu0 0
        %2305 = vmatpush1.bf16.msra.mxu0 0
        %2306 = vmatprep.subr.bf16.mxu0 0
        %2307 = vmatpush1.bf16.msra.mxu0 0
        %2308 = vmatprep.subr.bf16.mxu0 0
        %2309 = vmatpush1.bf16.msra.mxu0 0
        %2310 = vmatprep.subr.bf16.mxu0 0
        %2311 = vmatpush1.bf16.msra.mxu0 0
        %2312 = vmatprep.subr.bf16.mxu0 0
        %2313 = vmatpush1.bf16.msra.mxu0 0
        %2314 = vmatprep.subr.bf16.mxu0 0
        %2315 = vmatpush1.bf16.msra.mxu0 0
        %2316 = vmatprep.subr.bf16.mxu0 0
        %2317 = vmatpush1.bf16.msra.mxu0 0
        %2318 = vmatprep.mubr.bf16.mxu0 0
        %2319 = vmatmul.mubr.bf16.gmra.mrb[0].mxu0 %v2284
        %v2320 = vpop.f32.mrb[0].mxu0
        %v2321 = vadd.f32 0.0, %v2320
        %v2322 = vpop.f32.mrb[0].mxu0
        %v2323 = vpop.f32.mrb[0].mxu0
        %v2324 = vadd.f32 0.0, %v2323
        %v2325 = vpop.f32.mrb[0].mxu0
        %2326 = vdwg.mxu0
        %v2328 = vsel %vm1744, %v1973, 0
        %2330 = vmatprep.subr.bf16.mxu0 0
        %2331 = vmatpush1.bf16.msra.mxu0 %v1332
        %2332 = vmatprep.subr.bf16.mxu0 0
        %2333 = vmatpush1.bf16.msra.mxu0 0
        %2334 = vmatprep.subr.bf16.mxu0 0
        %2335 = vmatpush1.bf16.msra.mxu0 0
        %2336 = vmatprep.subr.bf16.mxu0 0
        %2337 = vmatpush1.bf16.msra.mxu0 0
        %2338 = vmatprep.subr.bf16.mxu0 0
        %2339 = vmatpush1.bf16.msra.mxu0 0
        %2340 = vmatprep.subr.bf16.mxu0 0
        %2341 = vmatpush1.bf16.msra.mxu0 0
        %2342 = vmatprep.subr.bf16.mxu0 0
        %2343 = vmatpush1.bf16.msra.mxu0 0
        %2344 = vmatprep.subr.bf16.mxu0 0
        %2345 = vmatpush1.bf16.msra.mxu0 0
        %2346 = vmatprep.subr.bf16.mxu0 0
        %2347 = vmatpush1.bf16.msra.mxu0 0
        %2348 = vmatprep.subr.bf16.mxu0 0
        %2349 = vmatpush1.bf16.msra.mxu0 0
        %2350 = vmatprep.subr.bf16.mxu0 0
        %2351 = vmatpush1.bf16.msra.mxu0 0
        %2352 = vmatprep.subr.bf16.mxu0 0
        %2353 = vmatpush1.bf16.msra.mxu0 0
        %2354 = vmatprep.subr.bf16.mxu0 0
        %2355 = vmatpush1.bf16.msra.mxu0 0
        %2356 = vmatprep.subr.bf16.mxu0 0
        %2357 = vmatpush1.bf16.msra.mxu0 0
        %2358 = vmatprep.subr.bf16.mxu0 0
        %2359 = vmatpush1.bf16.msra.mxu0 0
        %2360 = vmatprep.subr.bf16.mxu0 0
        %2361 = vmatpush1.bf16.msra.mxu0 0
        %2362 = vmatprep.mubr.bf16.mxu0 0
        %2363 = vmatmul.mubr.bf16.gmra.mrb[0].mxu0 %v2328
        %v2364 = vpop.f32.mrb[0].mxu0
        %v2365 = vadd.f32 0.0, %v2364
        %v2366 = vpop.f32.mrb[0].mxu0
        %v2367 = vpop.f32.mrb[0].mxu0
        %v2368 = vadd.f32 0.0, %v2367
        %v2369 = vpop.f32.mrb[0].mxu0
        %2370 = vdwg.mxu0
        %v2372 = vsel %vm1744, %v1974, 0
        %2374 = vmatprep.subr.bf16.mxu0 0
        %2375 = vmatpush1.bf16.msra.mxu0 %v1333
        %2376 = vmatprep.subr.bf16.mxu0 0
        %2377 = vmatpush1.bf16.msra.mxu0 0
        %2378 = vmatprep.subr.bf16.mxu0 0
        %2379 = vmatpush1.bf16.msra.mxu0 0
        %2380 = vmatprep.subr.bf16.mxu0 0
        %2381 = vmatpush1.bf16.msra.mxu0 0
        %2382 = vmatprep.subr.bf16.mxu0 0
        %2383 = vmatpush1.bf16.msra.mxu0 0
        %2384 = vmatprep.subr.bf16.mxu0 0
        %2385 = vmatpush1.bf16.msra.mxu0 0
        %2386 = vmatprep.subr.bf16.mxu0 0
        %2387 = vmatpush1.bf16.msra.mxu0 0
        %2388 = vmatprep.subr.bf16.mxu0 0
        %2389 = vmatpush1.bf16.msra.mxu0 0
        %2390 = vmatprep.subr.bf16.mxu0 0
        %2391 = vmatpush1.bf16.msra.mxu0 0
        %2392 = vmatprep.subr.bf16.mxu0 0
        %2393 = vmatpush1.bf16.msra.mxu0 0
        %2394 = vmatprep.subr.bf16.mxu0 0
        %2395 = vmatpush1.bf16.msra.mxu0 0
        %2396 = vmatprep.subr.bf16.mxu0 0
        %2397 = vmatpush1.bf16.msra.mxu0 0
        %2398 = vmatprep.subr.bf16.mxu0 0
        %2399 = vmatpush1.bf16.msra.mxu0 0
        %2400 = vmatprep.subr.bf16.mxu0 0
        %2401 = vmatpush1.bf16.msra.mxu0 0
        %2402 = vmatprep.subr.bf16.mxu0 0
        %2403 = vmatpush1.bf16.msra.mxu0 0
        %2404 = vmatprep.subr.bf16.mxu0 0
        %2405 = vmatpush1.bf16.msra.mxu0 0
        %2406 = vmatprep.mubr.bf16.mxu0 0
        %2407 = vmatmul.mubr.bf16.gmra.mrb[0].mxu0 %v2372
        %v2408 = vpop.f32.mrb[0].mxu0
        %v2409 = vadd.f32 0.0, %v2408
        %v2410 = vpop.f32.mrb[0].mxu0
        %v2411 = vpop.f32.mrb[0].mxu0
        %v2412 = vadd.f32 0.0, %v2411
        %v2413 = vpop.f32.mrb[0].mxu0
        %2414 = vdwg.mxu0
        %v2415 = vpack.c.bf16 %v2016, %v2013
        %v2416 = vpack.c.bf16 %v2060, %v2057
        %v2417 = vpack.c.bf16 %v2104, %v2101
        %v2418 = vpack.c.bf16 %v2148, %v2145
        %v2419 = vpack.c.bf16 %v2192, %v2189
        %v2420 = vpack.c.bf16 %v2236, %v2233
        %v2421 = vpack.c.bf16 %v2280, %v2277
        %v2422 = vpack.c.bf16 %v2324, %v2321
        %v2423 = vpack.c.bf16 %v2368, %v2365
        %v2424 = vpack.c.bf16 %v2412, %v2409
        %v2441 = vunpack.c.l.b16 %v315
        %v2442 = vunpack.c.l.b16 %v319
        %v2443 = vunpack.c.l.b16 %v323
        %v2444 = vunpack.c.l.b16 %v327
        %v2445 = vunpack.c.l.b16 %v331
        %v2446 = vunpack.c.l.b16 %v335
        %v2447 = vunpack.c.l.b16 %v339
        %v2448 = vunpack.c.l.b16 %v343
        %v2449 = vunpack.c.l.b16 %v347
        %v2450 = vunpack.c.l.b16 %v351
        %v2451 = vunpack.c.l.b16 %v355
        %v2452 = vunpack.c.l.b16 %v359
        %v2453 = vunpack.c.l.b16 %v363
        %v2454 = vunpack.c.l.b16 %v367
        %v2455 = vunpack.c.l.b16 %v371
        %v2456 = vunpack.c.l.b16 %v375
        %v2457 = vpack.c.b16 %v2442, %v2441
        %v2458 = vpack.c.b16 %v2444, %v2443
        %v2459 = vpack.c.b16 %v2446, %v2445
        %v2460 = vpack.c.b16 %v2448, %v2447
        %v2461 = vpack.c.b16 %v2450, %v2449
        %v2462 = vpack.c.b16 %v2452, %v2451
        %v2463 = vpack.c.b16 %v2454, %v2453
        %v2464 = vpack.c.b16 %v2456, %v2455
        %2473 = vmatprep.subr.bf16.mxu0 0
        %2474 = vmatpush1.bf16.msra.mxu0 %v2457
        %2475 = vmatprep.subr.bf16.mxu0 0
        %2476 = vmatpush1.bf16.msra.mxu0 %v2458
        %2477 = vmatprep.subr.bf16.mxu0 0
        %2478 = vmatpush1.bf16.msra.mxu0 %v2459
        %2479 = vmatprep.subr.bf16.mxu0 0
        %2480 = vmatpush1.bf16.msra.mxu0 %v2460
        %2481 = vmatprep.subr.bf16.mxu0 0
        %2482 = vmatpush1.bf16.msra.mxu0 %v2461
        %2483 = vmatprep.subr.bf16.mxu0 0
        %2484 = vmatpush1.bf16.msra.mxu0 %v2462
        %2485 = vmatprep.subr.bf16.mxu0 0
        %2486 = vmatpush1.bf16.msra.mxu0 %v2463
        %2487 = vmatprep.subr.bf16.mxu0 0
        %2488 = vmatpush1.bf16.msra.mxu0 %v2464
        %2489 = vmatprep.subr.bf16.mxu0 0
        %2490 = vmatpush1.bf16.msra.mxu0 0
        %2491 = vmatprep.subr.bf16.mxu0 0
        %2492 = vmatpush1.bf16.msra.mxu0 0
        %2493 = vmatprep.subr.bf16.mxu0 0
        %2494 = vmatpush1.bf16.msra.mxu0 0
        %2495 = vmatprep.subr.bf16.mxu0 0
        %2496 = vmatpush1.bf16.msra.mxu0 0
        %2497 = vmatprep.subr.bf16.mxu0 0
        %2498 = vmatpush1.bf16.msra.mxu0 0
        %2499 = vmatprep.subr.bf16.mxu0 0
        %2500 = vmatpush1.bf16.msra.mxu0 0
        %2501 = vmatprep.subr.bf16.mxu0 0
        %2502 = vmatpush1.bf16.msra.mxu0 0
        %2503 = vmatprep.subr.bf16.mxu0 0
        %2504 = vmatpush1.bf16.msra.mxu0 0
        %2505 = vmatprep.mubr.bf16.mxu0 0
        %2506 = vmatmul.mubr.bf16.gmra.mrb[0].mxu0 %v2415
        %v2507 = vpop.f32.mrb[0].mxu0
        %v2508 = vadd.f32 0.0, %v2507
        %v2509 = vpop.f32.mrb[0].mxu0
        %v2510 = vpop.f32.mrb[0].mxu0
        %v2511 = vadd.f32 0.0, %v2510
        %v2512 = vpop.f32.mrb[0].mxu0
        %2513 = vmatprep.mubr.bf16.mxu0 0
        %2514 = vmatmul.mubr.bf16.gmra.mrb[0].mxu0 %v2416
        %v2515 = vpop.f32.mrb[0].mxu0
        %v2516 = vadd.f32 0.0, %v2515
        %v2517 = vpop.f32.mrb[0].mxu0
        %v2518 = vpop.f32.mrb[0].mxu0
        %v2519 = vadd.f32 0.0, %v2518
        %v2520 = vpop.f32.mrb[0].mxu0
        %2521 = vmatprep.mubr.bf16.mxu0 0
        %2522 = vmatmul.mubr.bf16.gmra.mrb[0].mxu0 %v2417
        %v2523 = vpop.f32.mrb[0].mxu0
        %v2524 = vadd.f32 0.0, %v2523
        %v2525 = vpop.f32.mrb[0].mxu0
        %v2526 = vpop.f32.mrb[0].mxu0
        %v2527 = vadd.f32 0.0, %v2526
        %v2528 = vpop.f32.mrb[0].mxu0
        %2529 = vmatprep.mubr.bf16.mxu0 0
        %2530 = vmatmul.mubr.bf16.gmra.mrb[0].mxu0 %v2418
        %v2531 = vpop.f32.mrb[0].mxu0
        %v2532 = vadd.f32 0.0, %v2531
        %v2533 = vpop.f32.mrb[0].mxu0
        %v2534 = vpop.f32.mrb[0].mxu0
        %v2535 = vadd.f32 0.0, %v2534
        %v2536 = vpop.f32.mrb[0].mxu0
        %2537 = vmatprep.mubr.bf16.mxu0 0
        %2538 = vmatmul.mubr.bf16.gmra.mrb[0].mxu0 %v2419
        %v2539 = vpop.f32.mrb[0].mxu0
        %v2540 = vadd.f32 0.0, %v2539
        %v2541 = vpop.f32.mrb[0].mxu0
        %v2542 = vpop.f32.mrb[0].mxu0
        %v2543 = vadd.f32 0.0, %v2542
        %v2544 = vpop.f32.mrb[0].mxu0
        %2545 = vmatprep.mubr.bf16.mxu0 0
        %2546 = vmatmul.mubr.bf16.gmra.mrb[0].mxu0 %v2420
        %v2547 = vpop.f32.mrb[0].mxu0
        %v2548 = vadd.f32 0.0, %v2547
        %v2549 = vpop.f32.mrb[0].mxu0
        %v2550 = vpop.f32.mrb[0].mxu0
        %v2551 = vadd.f32 0.0, %v2550
        %v2552 = vpop.f32.mrb[0].mxu0
        %2553 = vmatprep.mubr.bf16.mxu0 0
        %2554 = vmatmul.mubr.bf16.gmra.mrb[0].mxu0 %v2421
        %v2555 = vpop.f32.mrb[0].mxu0
        %v2556 = vadd.f32 0.0, %v2555
        %v2557 = vpop.f32.mrb[0].mxu0
        %v2558 = vpop.f32.mrb[0].mxu0
        %v2559 = vadd.f32 0.0, %v2558
        %v2560 = vpop.f32.mrb[0].mxu0
        %2561 = vmatprep.mubr.bf16.mxu0 0
        %2562 = vmatmul.mubr.bf16.gmra.mrb[0].mxu0 %v2422
        %v2563 = vpop.f32.mrb[0].mxu0
        %v2564 = vadd.f32 0.0, %v2563
        %v2565 = vpop.f32.mrb[0].mxu0
        %v2566 = vpop.f32.mrb[0].mxu0
        %v2567 = vadd.f32 0.0, %v2566
        %v2568 = vpop.f32.mrb[0].mxu0
        %2569 = vmatprep.mubr.bf16.mxu0 0
        %2570 = vmatmul.mubr.bf16.gmra.mrb[0].mxu0 %v2423
        %v2571 = vpop.f32.mrb[0].mxu0
        %v2572 = vadd.f32 0.0, %v2571
        %v2573 = vpop.f32.mrb[0].mxu0
        %v2574 = vpop.f32.mrb[0].mxu0
        %v2575 = vadd.f32 0.0, %v2574
        %v2576 = vpop.f32.mrb[0].mxu0
        %2577 = vmatprep.mubr.bf16.mxu0 0
        %2578 = vmatmul.mubr.bf16.gmra.mrb[0].mxu0 %v2424
        %v2579 = vpop.f32.mrb[0].mxu0
        %v2580 = vadd.f32 0.0, %v2579
        %v2581 = vpop.f32.mrb[0].mxu0
        %v2582 = vpop.f32.mrb[0].mxu0
        %v2583 = vadd.f32 0.0, %v2582
        %v2584 = vpop.f32.mrb[0].mxu0
        %2585 = vdwg.mxu0
        %v2586 = vadd.f32 %v575, %v2508
        %v2587 = vadd.f32 %v576, %v2511
        %v2588 = vadd.f32 %v577, %v2516
        %v2589 = vadd.f32 %v578, %v2519
        %v2590 = vadd.f32 %v579, %v2524
        %v2591 = vadd.f32 %v580, %v2527
        %v2592 = vadd.f32 %v581, %v2532
        %v2593 = vadd.f32 %v582, %v2535
        %v2594 = vadd.f32 %v583, %v2540
        %v2595 = vadd.f32 %v584, %v2543
        %v2596 = vadd.f32 %v585, %v2548
        %v2597 = vadd.f32 %v586, %v2551
        %v2598 = vadd.f32 %v587, %v2556
        %v2599 = vadd.f32 %v588, %v2559
        %v2600 = vadd.f32 %v589, %v2564
        %v2601 = vadd.f32 %v590, %v2567
        %v2602 = vadd.f32 %v591, %v2572
        %v2603 = vadd.f32 %v592, %v2575
        %v2604 = vadd.f32 %v593, %v2580
        %v2605 = vadd.f32 %v594, %v2583
        %v2606 = vlaneseq
        %v2607 = vshrl.u32 %v2606, 7
        %v2608 = vsub.s32 6, %v2607
        %v2609 = vrot.slane %v377, %v2608
        %v2610 = vadd.f32 %v2586, %v2609
        %v2611 = vadd.f32 %v2587, %v2609
        %v2612 = vadd.f32 %v2588, %v2609
        %v2613 = vadd.f32 %v2589, %v2609
        %v2614 = vadd.f32 %v2590, %v2609
        %v2615 = vadd.f32 %v2591, %v2609
        %v2616 = vadd.f32 %v2592, %v2609
        %v2617 = vadd.f32 %v2593, %v2609
        %v2618 = vadd.f32 %v2594, %v2609
        %v2619 = vadd.f32 %v2595, %v2609
        %v2620 = vadd.f32 %v2596, %v2609
        %v2621 = vadd.f32 %v2597, %v2609
        %v2622 = vadd.f32 %v2598, %v2609
        %v2623 = vadd.f32 %v2599, %v2609
        %v2624 = vadd.f32 %v2600, %v2609
        %v2625 = vadd.f32 %v2601, %v2609
        %v2626 = vadd.f32 %v2602, %v2609
        %v2627 = vadd.f32 %v2603, %v2609
        %v2628 = vadd.f32 %v2604, %v2609
        %v2629 = vadd.f32 %v2605, %v2609
        %2630 = vadd.xlane.f32.xlu0 %v2610
        %v2631 = vpop.xlane.xlu0 %2630
        %2632 = vadd.xlane.f32.xlu0 %v2611
        %v2633 = vpop.xlane.xlu0 %2632
        %2634 = vadd.xlane.f32.xlu0 %v2612
        %v2635 = vpop.xlane.xlu0 %2634
        %2636 = vadd.xlane.f32.xlu0 %v2613
        %v2637 = vpop.xlane.xlu0 %2636
        %2638 = vadd.xlane.f32.xlu0 %v2614
        %v2639 = vpop.xlane.xlu0 %2638
        %2640 = vadd.xlane.f32.xlu0 %v2615
        %v2641 = vpop.xlane.xlu0 %2640
        %2642 = vadd.xlane.f32.xlu0 %v2616
        %v2643 = vpop.xlane.xlu0 %2642
        %2644 = vadd.xlane.f32.xlu0 %v2617
        %v2645 = vpop.xlane.xlu0 %2644
        %2646 = vadd.xlane.f32.xlu0 %v2618
        %v2647 = vpop.xlane.xlu0 %2646
        %2648 = vadd.xlane.f32.xlu0 %v2619
        %v2649 = vpop.xlane.xlu0 %2648
        %2650 = vadd.xlane.f32.xlu0 %v2620
        %v2651 = vpop.xlane.xlu0 %2650
        %2652 = vadd.xlane.f32.xlu0 %v2621
        %v2653 = vpop.xlane.xlu0 %2652
        %2654 = vadd.xlane.f32.xlu0 %v2622
        %v2655 = vpop.xlane.xlu0 %2654
        %2656 = vadd.xlane.f32.xlu0 %v2623
        %v2657 = vpop.xlane.xlu0 %2656
        %2658 = vadd.xlane.f32.xlu0 %v2624
        %v2659 = vpop.xlane.xlu0 %2658
        %2660 = vadd.xlane.f32.xlu0 %v2625
        %v2661 = vpop.xlane.xlu0 %2660
        %2662 = vadd.xlane.f32.xlu0 %v2626
        %v2663 = vpop.xlane.xlu0 %2662
        %2664 = vadd.xlane.f32.xlu0 %v2627
        %v2665 = vpop.xlane.xlu0 %2664
        %2666 = vadd.xlane.f32.xlu0 %v2628
        %v2667 = vpop.xlane.xlu0 %2666
        %2668 = vadd.xlane.f32.xlu0 %v2629
        %v2669 = vpop.xlane.xlu0 %2668
        %v2670 = vmul.f32 %v2631, %v635
        %v2671 = vmul.f32 %v2633, %v635
        %v2672 = vmul.f32 %v2635, %v635
        %v2673 = vmul.f32 %v2637, %v635
        %v2674 = vmul.f32 %v2639, %v635
        %v2675 = vmul.f32 %v2641, %v635
        %v2676 = vmul.f32 %v2643, %v635
        %v2677 = vmul.f32 %v2645, %v635
        %v2678 = vmul.f32 %v2647, %v635
        %v2679 = vmul.f32 %v2649, %v635
        %v2680 = vmul.f32 %v2651, %v635
        %v2681 = vmul.f32 %v2653, %v635
        %v2682 = vmul.f32 %v2655, %v635
        %v2683 = vmul.f32 %v2657, %v635
        %v2684 = vmul.f32 %v2659, %v635
        %v2685 = vmul.f32 %v2661, %v635
        %v2686 = vmul.f32 %v2663, %v635
        %v2687 = vmul.f32 %v2665, %v635
        %v2688 = vmul.f32 %v2667, %v635
        %v2689 = vmul.f32 %v2669, %v635
        %v2690 = vsub.f32 %v2610, %v2670
        %v2691 = vsub.f32 %v2611, %v2671
        %v2692 = vsub.f32 %v2612, %v2672
        %v2693 = vsub.f32 %v2613, %v2673
        %v2694 = vsub.f32 %v2614, %v2674
        %v2695 = vsub.f32 %v2615, %v2675
        %v2696 = vsub.f32 %v2616, %v2676
        %v2697 = vsub.f32 %v2617, %v2677
        %v2698 = vsub.f32 %v2618, %v2678
        %v2699 = vsub.f32 %v2619, %v2679
        %v2700 = vsub.f32 %v2620, %v2680
        %v2701 = vsub.f32 %v2621, %v2681
        %v2702 = vsub.f32 %v2622, %v2682
        %v2703 = vsub.f32 %v2623, %v2683
        %v2704 = vsub.f32 %v2624, %v2684
        %v2705 = vsub.f32 %v2625, %v2685
        %v2706 = vsub.f32 %v2626, %v2686
        %v2707 = vsub.f32 %v2627, %v2687
        %v2708 = vsub.f32 %v2628, %v2688
        %v2709 = vsub.f32 %v2629, %v2689
        %v2710 = vmul.f32 %v2690, %v2690
        %v2711 = vmul.f32 %v2691, %v2691
        %v2712 = vmul.f32 %v2692, %v2692
        %v2713 = vmul.f32 %v2693, %v2693
        %v2714 = vmul.f32 %v2694, %v2694
        %v2715 = vmul.f32 %v2695, %v2695
        %v2716 = vmul.f32 %v2696, %v2696
        %v2717 = vmul.f32 %v2697, %v2697
        %v2718 = vmul.f32 %v2698, %v2698
        %v2719 = vmul.f32 %v2699, %v2699
        %v2720 = vmul.f32 %v2700, %v2700
        %v2721 = vmul.f32 %v2701, %v2701
        %v2722 = vmul.f32 %v2702, %v2702
        %v2723 = vmul.f32 %v2703, %v2703
        %v2724 = vmul.f32 %v2704, %v2704
        %v2725 = vmul.f32 %v2705, %v2705
        %v2726 = vmul.f32 %v2706, %v2706
        %v2727 = vmul.f32 %v2707, %v2707
        %v2728 = vmul.f32 %v2708, %v2708
        %v2729 = vmul.f32 %v2709, %v2709
        %2730 = vadd.xlane.f32.xlu0 %v2710
        %v2731 = vpop.xlane.xlu0 %2730
        %2732 = vadd.xlane.f32.xlu0 %v2711
        %v2733 = vpop.xlane.xlu0 %2732
        %2734 = vadd.xlane.f32.xlu0 %v2712
        %v2735 = vpop.xlane.xlu0 %2734
        %2736 = vadd.xlane.f32.xlu0 %v2713
        %v2737 = vpop.xlane.xlu0 %2736
        %2738 = vadd.xlane.f32.xlu0 %v2714
        %v2739 = vpop.xlane.xlu0 %2738
        %2740 = vadd.xlane.f32.xlu0 %v2715
        %v2741 = vpop.xlane.xlu0 %2740
        %2742 = vadd.xlane.f32.xlu0 %v2716
        %v2743 = vpop.xlane.xlu0 %2742
        %2744 = vadd.xlane.f32.xlu0 %v2717
        %v2745 = vpop.xlane.xlu0 %2744
        %2746 = vadd.xlane.f32.xlu0 %v2718
        %v2747 = vpop.xlane.xlu0 %2746
        %2748 = vadd.xlane.f32.xlu0 %v2719
        %v2749 = vpop.xlane.xlu0 %2748
        %2750 = vadd.xlane.f32.xlu0 %v2720
        %v2751 = vpop.xlane.xlu0 %2750
        %2752 = vadd.xlane.f32.xlu0 %v2721
        %v2753 = vpop.xlane.xlu0 %2752
        %2754 = vadd.xlane.f32.xlu0 %v2722
        %v2755 = vpop.xlane.xlu0 %2754
        %2756 = vadd.xlane.f32.xlu0 %v2723
        %v2757 = vpop.xlane.xlu0 %2756
        %2758 = vadd.xlane.f32.xlu0 %v2724
        %v2759 = vpop.xlane.xlu0 %2758
        %2760 = vadd.xlane.f32.xlu0 %v2725
        %v2761 = vpop.xlane.xlu0 %2760
        %2762 = vadd.xlane.f32.xlu0 %v2726
        %v2763 = vpop.xlane.xlu0 %2762
        %2764 = vadd.xlane.f32.xlu0 %v2727
        %v2765 = vpop.xlane.xlu0 %2764
        %2766 = vadd.xlane.f32.xlu0 %v2728
        %v2767 = vpop.xlane.xlu0 %2766
        %2768 = vadd.xlane.f32.xlu0 %v2729
        %v2769 = vpop.xlane.xlu0 %2768
        %v2770 = vmul.f32 %v2731, %v635
        %v2771 = vmul.f32 %v2733, %v635
        %v2772 = vmul.f32 %v2735, %v635
        %v2773 = vmul.f32 %v2737, %v635
        %v2774 = vmul.f32 %v2739, %v635
        %v2775 = vmul.f32 %v2741, %v635
        %v2776 = vmul.f32 %v2743, %v635
        %v2777 = vmul.f32 %v2745, %v635
        %v2778 = vmul.f32 %v2747, %v635
        %v2779 = vmul.f32 %v2749, %v635
        %v2780 = vmul.f32 %v2751, %v635
        %v2781 = vmul.f32 %v2753, %v635
        %v2782 = vmul.f32 %v2755, %v635
        %v2783 = vmul.f32 %v2757, %v635
        %v2784 = vmul.f32 %v2759, %v635
        %v2785 = vmul.f32 %v2761, %v635
        %v2786 = vmul.f32 %v2763, %v635
        %v2787 = vmul.f32 %v2765, %v635
        %v2788 = vmul.f32 %v2767, %v635
        %v2789 = vmul.f32 %v2769, %v635
        %v2790 = vadd.f32 %v2770, 1e-05
        %v2791 = vadd.f32 %v2771, 1e-05
        %v2792 = vadd.f32 %v2772, 1e-05
        %v2793 = vadd.f32 %v2773, 1e-05
        %v2794 = vadd.f32 %v2774, 1e-05
        %v2795 = vadd.f32 %v2775, 1e-05
        %v2796 = vadd.f32 %v2776, 1e-05
        %v2797 = vadd.f32 %v2777, 1e-05
        %v2798 = vadd.f32 %v2778, 1e-05
        %v2799 = vadd.f32 %v2779, 1e-05
        %v2800 = vadd.f32 %v2780, 1e-05
        %v2801 = vadd.f32 %v2781, 1e-05
        %v2802 = vadd.f32 %v2782, 1e-05
        %v2803 = vadd.f32 %v2783, 1e-05
        %v2804 = vadd.f32 %v2784, 1e-05
        %v2805 = vadd.f32 %v2785, 1e-05
        %v2806 = vadd.f32 %v2786, 1e-05
        %v2807 = vadd.f32 %v2787, 1e-05
        %v2808 = vadd.f32 %v2788, 1e-05
        %v2809 = vadd.f32 %v2789, 1e-05
        %v2810 = vrsqrt.pop %v2790
        %v2811 = vrsqrt.pop %v2791
        %v2812 = vrsqrt.pop %v2792
        %v2813 = vrsqrt.pop %v2793
        %v2814 = vrsqrt.pop %v2794
        %v2815 = vrsqrt.pop %v2795
        %v2816 = vrsqrt.pop %v2796
        %v2817 = vrsqrt.pop %v2797
        %v2818 = vrsqrt.pop %v2798
        %v2819 = vrsqrt.pop %v2799
        %v2820 = vrsqrt.pop %v2800
        %v2821 = vrsqrt.pop %v2801
        %v2822 = vrsqrt.pop %v2802
        %v2823 = vrsqrt.pop %v2803
        %v2824 = vrsqrt.pop %v2804
        %v2825 = vrsqrt.pop %v2805
        %v2826 = vrsqrt.pop %v2806
        %v2827 = vrsqrt.pop %v2807
        %v2828 = vrsqrt.pop %v2808
        %v2829 = vrsqrt.pop %v2809
        %v2830 = vmul.f32 %v2690, %v2810
        %v2831 = vmul.f32 %v2691, %v2811
        %v2832 = vmul.f32 %v2692, %v2812
        %v2833 = vmul.f32 %v2693, %v2813
        %v2834 = vmul.f32 %v2694, %v2814
        %v2835 = vmul.f32 %v2695, %v2815
        %v2836 = vmul.f32 %v2696, %v2816
        %v2837 = vmul.f32 %v2697, %v2817
        %v2838 = vmul.f32 %v2698, %v2818
        %v2839 = vmul.f32 %v2699, %v2819
        %v2840 = vmul.f32 %v2700, %v2820
        %v2841 = vmul.f32 %v2701, %v2821
        %v2842 = vmul.f32 %v2702, %v2822
        %v2843 = vmul.f32 %v2703, %v2823
        %v2844 = vmul.f32 %v2704, %v2824
        %v2845 = vmul.f32 %v2705, %v2825
        %v2846 = vmul.f32 %v2706, %v2826
        %v2847 = vmul.f32 %v2707, %v2827
        %v2848 = vmul.f32 %v2708, %v2828
        %v2849 = vmul.f32 %v2709, %v2829
        %v2850 = vlaneseq
        %v2851 = vshrl.u32 %v2850, 7
        %v2852 = vsub.s32 7, %v2851
        %v2853 = vrot.slane %v377, %v2852
        %v2854 = vmul.f32 %v2830, %v2853
        %v2855 = vmul.f32 %v2831, %v2853
        %v2856 = vmul.f32 %v2832, %v2853
        %v2857 = vmul.f32 %v2833, %v2853
        %v2858 = vmul.f32 %v2834, %v2853
        %v2859 = vmul.f32 %v2835, %v2853
        %v2860 = vmul.f32 %v2836, %v2853
        %v2861 = vmul.f32 %v2837, %v2853
        %v2862 = vmul.f32 %v2838, %v2853
        %v2863 = vmul.f32 %v2839, %v2853
        %v2864 = vmul.f32 %v2840, %v2853
        %v2865 = vmul.f32 %v2841, %v2853
        %v2866 = vmul.f32 %v2842, %v2853
        %v2867 = vmul.f32 %v2843, %v2853
        %v2868 = vmul.f32 %v2844, %v2853
        %v2869 = vmul.f32 %v2845, %v2853
        %v2870 = vmul.f32 %v2846, %v2853
        %v2871 = vmul.f32 %v2847, %v2853
        %v2872 = vmul.f32 %v2848, %v2853
        %v2873 = vmul.f32 %v2849, %v2853
        %v2874 = vlaneseq
        %v2875 = vshrl.u32 %v2874, 7
        %v2876 = vsub.s32 0, %v2875
        %v2877 = vrot.slane %v378, %v2876
        %v2878 = vadd.f32 %v2854, %v2877
        %v2879 = vadd.f32 %v2855, %v2877
        %v2880 = vadd.f32 %v2856, %v2877
        %v2881 = vadd.f32 %v2857, %v2877
        %v2882 = vadd.f32 %v2858, %v2877
        %v2883 = vadd.f32 %v2859, %v2877
        %v2884 = vadd.f32 %v2860, %v2877
        %v2885 = vadd.f32 %v2861, %v2877
        %v2886 = vadd.f32 %v2862, %v2877
        %v2887 = vadd.f32 %v2863, %v2877
        %v2888 = vadd.f32 %v2864, %v2877
        %v2889 = vadd.f32 %v2865, %v2877
        %v2890 = vadd.f32 %v2866, %v2877
        %v2891 = vadd.f32 %v2867, %v2877
        %v2892 = vadd.f32 %v2868, %v2877
        %v2893 = vadd.f32 %v2869, %v2877
        %v2894 = vadd.f32 %v2870, %v2877
        %v2895 = vadd.f32 %v2871, %v2877
        %v2896 = vadd.f32 %v2872, %v2877
        %v2897 = vadd.f32 %v2873, %v2877
        %v2898 = vpack.c.bf16 %v2879, %v2878
        %v2899 = vpack.c.bf16 %v2881, %v2880
        %v2900 = vpack.c.bf16 %v2883, %v2882
        %v2901 = vpack.c.bf16 %v2885, %v2884
        %v2902 = vpack.c.bf16 %v2887, %v2886
        %v2903 = vpack.c.bf16 %v2889, %v2888
        %v2904 = vpack.c.bf16 %v2891, %v2890
        %v2905 = vpack.c.bf16 %v2893, %v2892
        %v2906 = vpack.c.bf16 %v2895, %v2894
        %v2907 = vpack.c.bf16 %v2897, %v2896
        %v2924 = vunpack.c.h.b16 %v315
        %v2925 = vunpack.c.l.b16 %v316
        %v2926 = vunpack.c.h.b16 %v319
        %v2927 = vunpack.c.l.b16 %v320
        %v2928 = vunpack.c.h.b16 %v323
        %v2929 = vunpack.c.l.b16 %v324
        %v2930 = vunpack.c.h.b16 %v327
        %v2931 = vunpack.c.l.b16 %v328
        %v2932 = vunpack.c.h.b16 %v331
        %v2933 = vunpack.c.l.b16 %v332
        %v2934 = vunpack.c.h.b16 %v335
        %v2935 = vunpack.c.l.b16 %v336
        %v2936 = vunpack.c.h.b16 %v339
        %v2937 = vunpack.c.l.b16 %v340
        %v2938 = vunpack.c.h.b16 %v343
        %v2939 = vunpack.c.l.b16 %v344
        %v2940 = vunpack.c.h.b16 %v347
        %v2941 = vunpack.c.l.b16 %v348
        %v2942 = vunpack.c.h.b16 %v351
        %v2943 = vunpack.c.l.b16 %v352
        %v2944 = vunpack.c.h.b16 %v355
        %v2945 = vunpack.c.l.b16 %v356
        %v2946 = vunpack.c.h.b16 %v359
        %v2947 = vunpack.c.l.b16 %v360
        %v2948 = vunpack.c.h.b16 %v363
        %v2949 = vunpack.c.l.b16 %v364
        %v2950 = vunpack.c.h.b16 %v367
        %v2951 = vunpack.c.l.b16 %v368
        %v2952 = vunpack.c.h.b16 %v371
        %v2953 = vunpack.c.l.b16 %v372
        %v2954 = vunpack.c.h.b16 %v375
        %v2955 = vunpack.c.l.b16 %v376
        %v2956 = vpack.c.b16 %v2926, %v2924
        %v2957 = vpack.c.b16 %v2927, %v2925
        %v2958 = vpack.c.b16 %v2930, %v2928
        %v2959 = vpack.c.b16 %v2931, %v2929
        %v2960 = vpack.c.b16 %v2934, %v2932
        %v2961 = vpack.c.b16 %v2935, %v2933
        %v2962 = vpack.c.b16 %v2938, %v2936
        %v2963 = vpack.c.b16 %v2939, %v2937
        %v2964 = vpack.c.b16 %v2942, %v2940
        %v2965 = vpack.c.b16 %v2943, %v2941
        %v2966 = vpack.c.b16 %v2946, %v2944
        %v2967 = vpack.c.b16 %v2947, %v2945
        %v2968 = vpack.c.b16 %v2950, %v2948
        %v2969 = vpack.c.b16 %v2951, %v2949
        %v2970 = vpack.c.b16 %v2954, %v2952
        %v2971 = vpack.c.b16 %v2955, %v2953
        %2988 = vmatprep.subr.bf16.mxu0 %v2957
        %2989 = vmatpush1.bf16.msra.mxu0 %v2956
        %2990 = vmatprep.subr.bf16.mxu0 %v2959
        %2991 = vmatpush1.bf16.msra.mxu0 %v2958
        %2992 = vmatprep.subr.bf16.mxu0 %v2961
        %2993 = vmatpush1.bf16.msra.mxu0 %v2960
        %2994 = vmatprep.subr.bf16.mxu0 %v2963
        %2995 = vmatpush1.bf16.msra.mxu0 %v2962
        %2996 = vmatprep.subr.bf16.mxu0 %v2965
        %2997 = vmatpush1.bf16.msra.mxu0 %v2964
        %2998 = vmatprep.subr.bf16.mxu0 %v2967
        %2999 = vmatpush1.bf16.msra.mxu0 %v2966
        %3000 = vmatprep.subr.bf16.mxu0 %v2969
        %3001 = vmatpush1.bf16.msra.mxu0 %v2968
        %3002 = vmatprep.subr.bf16.mxu0 %v2971
        %3003 = vmatpush1.bf16.msra.mxu0 %v2970
        %3004 = vmatprep.subr.bf16.mxu0 0
        %3005 = vmatpush1.bf16.msra.mxu0 0
        %3006 = vmatprep.subr.bf16.mxu0 0
        %3007 = vmatpush1.bf16.msra.mxu0 0
        %3008 = vmatprep.subr.bf16.mxu0 0
        %3009 = vmatpush1.bf16.msra.mxu0 0
        %3010 = vmatprep.subr.bf16.mxu0 0
        %3011 = vmatpush1.bf16.msra.mxu0 0
        %3012 = vmatprep.subr.bf16.mxu0 0
        %3013 = vmatpush1.bf16.msra.mxu0 0
        %3014 = vmatprep.subr.bf16.mxu0 0
        %3015 = vmatpush1.bf16.msra.mxu0 0
        %3016 = vmatprep.subr.bf16.mxu0 0
        %3017 = vmatpush1.bf16.msra.mxu0 0
        %3018 = vmatprep.subr.bf16.mxu0 0
        %3019 = vmatpush1.bf16.msra.mxu0 0
        %3020 = vmatprep.mubr.bf16.mxu0 0
        %3021 = vmatmul.mubr.bf16.gmra.mrb[0].mxu0 %v2898
        %v3022 = vpop.f32.mrb[0].mxu0
        %v3023 = vadd.f32 0.0, %v3022
        %v3024 = vpop.f32.mrb[0].mxu0
        %v3025 = vadd.f32 0.0, %v3024
        %v3026 = vpop.f32.mrb[0].mxu0
        %v3027 = vadd.f32 0.0, %v3026
        %v3028 = vpop.f32.mrb[0].mxu0
        %v3029 = vadd.f32 0.0, %v3028
        %3030 = vmatprep.mubr.bf16.mxu0 0
        %3031 = vmatmul.mubr.bf16.gmra.mrb[0].mxu0 %v2899
        %v3032 = vpop.f32.mrb[0].mxu0
        %v3033 = vadd.f32 0.0, %v3032
        %v3034 = vpop.f32.mrb[0].mxu0
        %v3035 = vadd.f32 0.0, %v3034
        %v3036 = vpop.f32.mrb[0].mxu0
        %v3037 = vadd.f32 0.0, %v3036
        %v3038 = vpop.f32.mrb[0].mxu0
        %v3039 = vadd.f32 0.0, %v3038
        %3040 = vmatprep.mubr.bf16.mxu0 0
        %3041 = vmatmul.mubr.bf16.gmra.mrb[0].mxu0 %v2900
        %v3042 = vpop.f32.mrb[0].mxu0
        %v3043 = vadd.f32 0.0, %v3042
        %v3044 = vpop.f32.mrb[0].mxu0
        %v3045 = vadd.f32 0.0, %v3044
        %v3046 = vpop.f32.mrb[0].mxu0
        %v3047 = vadd.f32 0.0, %v3046
        %v3048 = vpop.f32.mrb[0].mxu0
        %v3049 = vadd.f32 0.0, %v3048
        %3050 = vmatprep.mubr.bf16.mxu0 0
        %3051 = vmatmul.mubr.bf16.gmra.mrb[0].mxu0 %v2901
        %v3052 = vpop.f32.mrb[0].mxu0
        %v3053 = vadd.f32 0.0, %v3052
        %v3054 = vpop.f32.mrb[0].mxu0
        %v3055 = vadd.f32 0.0, %v3054
        %v3056 = vpop.f32.mrb[0].mxu0
        %v3057 = vadd.f32 0.0, %v3056
        %v3058 = vpop.f32.mrb[0].mxu0
        %v3059 = vadd.f32 0.0, %v3058
        %3060 = vmatprep.mubr.bf16.mxu0 0
        %3061 = vmatmul.mubr.bf16.gmra.mrb[0].mxu0 %v2902
        %v3062 = vpop.f32.mrb[0].mxu0
        %v3063 = vadd.f32 0.0, %v3062
        %v3064 = vpop.f32.mrb[0].mxu0
        %v3065 = vadd.f32 0.0, %v3064
        %v3066 = vpop.f32.mrb[0].mxu0
        %v3067 = vadd.f32 0.0, %v3066
        %v3068 = vpop.f32.mrb[0].mxu0
        %v3069 = vadd.f32 0.0, %v3068
        %3070 = vmatprep.mubr.bf16.mxu0 0
        %3071 = vmatmul.mubr.bf16.gmra.mrb[0].mxu0 %v2903
        %v3072 = vpop.f32.mrb[0].mxu0
        %v3073 = vadd.f32 0.0, %v3072
        %v3074 = vpop.f32.mrb[0].mxu0
        %v3075 = vadd.f32 0.0, %v3074
        %v3076 = vpop.f32.mrb[0].mxu0
        %v3077 = vadd.f32 0.0, %v3076
        %v3078 = vpop.f32.mrb[0].mxu0
        %v3079 = vadd.f32 0.0, %v3078
        %3080 = vmatprep.mubr.bf16.mxu0 0
        %3081 = vmatmul.mubr.bf16.gmra.mrb[0].mxu0 %v2904
        %v3082 = vpop.f32.mrb[0].mxu0
        %v3083 = vadd.f32 0.0, %v3082
        %v3084 = vpop.f32.mrb[0].mxu0
        %v3085 = vadd.f32 0.0, %v3084
        %v3086 = vpop.f32.mrb[0].mxu0
        %v3087 = vadd.f32 0.0, %v3086
        %v3088 = vpop.f32.mrb[0].mxu0
        %v3089 = vadd.f32 0.0, %v3088
        %3090 = vmatprep.mubr.bf16.mxu0 0
        %3091 = vmatmul.mubr.bf16.gmra.mrb[0].mxu0 %v2905
        %v3092 = vpop.f32.mrb[0].mxu0
        %v3093 = vadd.f32 0.0, %v3092
        %v3094 = vpop.f32.mrb[0].mxu0
        %v3095 = vadd.f32 0.0, %v3094
        %v3096 = vpop.f32.mrb[0].mxu0
        %v3097 = vadd.f32 0.0, %v3096
        %v3098 = vpop.f32.mrb[0].mxu0
        %v3099 = vadd.f32 0.0, %v3098
        %3100 = vmatprep.mubr.bf16.mxu0 0
        %3101 = vmatmul.mubr.bf16.gmra.mrb[0].mxu0 %v2906
        %v3102 = vpop.f32.mrb[0].mxu0
        %v3103 = vadd.f32 0.0, %v3102
        %v3104 = vpop.f32.mrb[0].mxu0
        %v3105 = vadd.f32 0.0, %v3104
        %v3106 = vpop.f32.mrb[0].mxu0
        %v3107 = vadd.f32 0.0, %v3106
        %v3108 = vpop.f32.mrb[0].mxu0
        %v3109 = vadd.f32 0.0, %v3108
        %3110 = vmatprep.mubr.bf16.mxu0 0
        %3111 = vmatmul.mubr.bf16.gmra.mrb[0].mxu0 %v2907
        %v3112 = vpop.f32.mrb[0].mxu0
        %v3113 = vadd.f32 0.0, %v3112
        %v3114 = vpop.f32.mrb[0].mxu0
        %v3115 = vadd.f32 0.0, %v3114
        %v3116 = vpop.f32.mrb[0].mxu0
        %v3117 = vadd.f32 0.0, %v3116
        %v3118 = vpop.f32.mrb[0].mxu0
        %v3119 = vadd.f32 0.0, %v3118
        %3120 = vdwg.mxu0
        %v3121 = vlaneseq
        %v3122 = vshrl.u32 %v3121, 7
        %v3123 = vsub.s32 1, %v3122
        %v3124 = vrot.slane %v378, %v3123
        %v3125 = vadd.f32 %v3023, %v3124
        %v3126 = vadd.f32 %v3027, %v3124
        %v3127 = vadd.f32 %v3033, %v3124
        %v3128 = vadd.f32 %v3037, %v3124
        %v3129 = vadd.f32 %v3043, %v3124
        %v3130 = vadd.f32 %v3047, %v3124
        %v3131 = vadd.f32 %v3053, %v3124
        %v3132 = vadd.f32 %v3057, %v3124
        %v3133 = vadd.f32 %v3063, %v3124
        %v3134 = vadd.f32 %v3067, %v3124
        %v3135 = vadd.f32 %v3073, %v3124
        %v3136 = vadd.f32 %v3077, %v3124
        %v3137 = vadd.f32 %v3083, %v3124
        %v3138 = vadd.f32 %v3087, %v3124
        %v3139 = vadd.f32 %v3093, %v3124
        %v3140 = vadd.f32 %v3097, %v3124
        %v3141 = vadd.f32 %v3103, %v3124
        %v3142 = vadd.f32 %v3107, %v3124
        %v3143 = vadd.f32 %v3113, %v3124
        %v3144 = vadd.f32 %v3117, %v3124
        %v3145 = vlaneseq
        %v3146 = vshrl.u32 %v3145, 7
        %v3147 = vsub.s32 2, %v3146
        %v3148 = vrot.slane %v378, %v3147
        %v3149 = vadd.f32 %v3025, %v3148
        %v3150 = vadd.f32 %v3029, %v3148
        %v3151 = vadd.f32 %v3035, %v3148
        %v3152 = vadd.f32 %v3039, %v3148
        %v3153 = vadd.f32 %v3045, %v3148
        %v3154 = vadd.f32 %v3049, %v3148
        %v3155 = vadd.f32 %v3055, %v3148
        %v3156 = vadd.f32 %v3059, %v3148
        %v3157 = vadd.f32 %v3065, %v3148
        %v3158 = vadd.f32 %v3069, %v3148
        %v3159 = vadd.f32 %v3075, %v3148
        %v3160 = vadd.f32 %v3079, %v3148
        %v3161 = vadd.f32 %v3085, %v3148
        %v3162 = vadd.f32 %v3089, %v3148
        %v3163 = vadd.f32 %v3095, %v3148
        %v3164 = vadd.f32 %v3099, %v3148
        %v3165 = vadd.f32 %v3105, %v3148
        %v3166 = vadd.f32 %v3109, %v3148
        %v3167 = vadd.f32 %v3115, %v3148
        %v3168 = vadd.f32 %v3119, %v3148
        %v3169 = vxor.u32 %v3149, 2147483648
        %v3170 = vxor.u32 %v3150, 2147483648
        %v3171 = vxor.u32 %v3151, 2147483648
        %v3172 = vxor.u32 %v3152, 2147483648
        %v3173 = vxor.u32 %v3153, 2147483648
        %v3174 = vxor.u32 %v3154, 2147483648
        %v3175 = vxor.u32 %v3155, 2147483648
        %v3176 = vxor.u32 %v3156, 2147483648
        %v3177 = vxor.u32 %v3157, 2147483648
        %v3178 = vxor.u32 %v3158, 2147483648
        %v3179 = vxor.u32 %v3159, 2147483648
        %v3180 = vxor.u32 %v3160, 2147483648
        %v3181 = vxor.u32 %v3161, 2147483648
        %v3182 = vxor.u32 %v3162, 2147483648
        %v3183 = vxor.u32 %v3163, 2147483648
        %v3184 = vxor.u32 %v3164, 2147483648
        %v3185 = vxor.u32 %v3165, 2147483648
        %v3186 = vxor.u32 %v3166, 2147483648
        %v3187 = vxor.u32 %v3167, 2147483648
        %v3188 = vxor.u32 %v3168, 2147483648
        %v3189 = vmul.f32 %v3169, 1.442695
        %v3190 = vpow.pop %v3189
        %v3191 = vmul.f32 %v3170, 1.442695
        %v3192 = vpow.pop %v3191
        %v3193 = vmul.f32 %v3171, 1.442695
        %v3194 = vpow.pop %v3193
        %v3195 = vmul.f32 %v3172, 1.442695
        %v3196 = vpow.pop %v3195
        %v3197 = vmul.f32 %v3173, 1.442695
        %v3198 = vpow.pop %v3197
        %v3199 = vmul.f32 %v3174, 1.442695
        %v3200 = vpow.pop %v3199
        %v3201 = vmul.f32 %v3175, 1.442695
        %v3202 = vpow.pop %v3201
        %v3203 = vmul.f32 %v3176, 1.442695
        %v3204 = vpow.pop %v3203
        %v3205 = vmul.f32 %v3177, 1.442695
        %v3206 = vpow.pop %v3205
        %v3207 = vmul.f32 %v3178, 1.442695
        %v3208 = vpow.pop %v3207
        %v3209 = vmul.f32 %v3179, 1.442695
        %v3210 = vpow.pop %v3209
        %v3211 = vmul.f32 %v3180, 1.442695
        %v3212 = vpow.pop %v3211
        %v3213 = vmul.f32 %v3181, 1.442695
        %v3214 = vpow.pop %v3213
        %v3215 = vmul.f32 %v3182, 1.442695
        %v3216 = vpow.pop %v3215
        %v3217 = vmul.f32 %v3183, 1.442695
        %v3218 = vpow.pop %v3217
        %v3219 = vmul.f32 %v3184, 1.442695
        %v3220 = vpow.pop %v3219
        %v3221 = vmul.f32 %v3185, 1.442695
        %v3222 = vpow.pop %v3221
        %v3223 = vmul.f32 %v3186, 1.442695
        %v3224 = vpow.pop %v3223
        %v3225 = vmul.f32 %v3187, 1.442695
        %v3226 = vpow.pop %v3225
        %v3227 = vmul.f32 %v3188, 1.442695
        %v3228 = vpow.pop %v3227
        %v3229 = vadd.f32 %v3190, 1.0
        %v3230 = vadd.f32 %v3192, 1.0
        %v3231 = vadd.f32 %v3194, 1.0
        %v3232 = vadd.f32 %v3196, 1.0
        %v3233 = vadd.f32 %v3198, 1.0
        %v3234 = vadd.f32 %v3200, 1.0
        %v3235 = vadd.f32 %v3202, 1.0
        %v3236 = vadd.f32 %v3204, 1.0
        %v3237 = vadd.f32 %v3206, 1.0
        %v3238 = vadd.f32 %v3208, 1.0
        %v3239 = vadd.f32 %v3210, 1.0
        %v3240 = vadd.f32 %v3212, 1.0
        %v3241 = vadd.f32 %v3214, 1.0
        %v3242 = vadd.f32 %v3216, 1.0
        %v3243 = vadd.f32 %v3218, 1.0
        %v3244 = vadd.f32 %v3220, 1.0
        %v3245 = vadd.f32 %v3222, 1.0
        %v3246 = vadd.f32 %v3224, 1.0
        %v3247 = vadd.f32 %v3226, 1.0
        %v3248 = vadd.f32 %v3228, 1.0
        %v3249 = vrcp.pop %v3229
        %v3250 = vmul.f32 1.0, %v3249
        %v3251 = vrcp.pop %v3230
        %v3252 = vmul.f32 1.0, %v3251
        %v3253 = vrcp.pop %v3231
        %v3254 = vmul.f32 1.0, %v3253
        %v3255 = vrcp.pop %v3232
        %v3256 = vmul.f32 1.0, %v3255
        %v3257 = vrcp.pop %v3233
        %v3258 = vmul.f32 1.0, %v3257
        %v3259 = vrcp.pop %v3234
        %v3260 = vmul.f32 1.0, %v3259
        %v3261 = vrcp.pop %v3235
        %v3262 = vmul.f32 1.0, %v3261
        %v3263 = vrcp.pop %v3236
        %v3264 = vmul.f32 1.0, %v3263
        %v3265 = vrcp.pop %v3237
        %v3266 = vmul.f32 1.0, %v3265
        %v3267 = vrcp.pop %v3238
        %v3268 = vmul.f32 1.0, %v3267
        %v3269 = vrcp.pop %v3239
        %v3270 = vmul.f32 1.0, %v3269
        %v3271 = vrcp.pop %v3240
        %v3272 = vmul.f32 1.0, %v3271
        %v3273 = vrcp.pop %v3241
        %v3274 = vmul.f32 1.0, %v3273
        %v3275 = vrcp.pop %v3242
        %v3276 = vmul.f32 1.0, %v3275
        %v3277 = vrcp.pop %v3243
        %v3278 = vmul.f32 1.0, %v3277
        %v3279 = vrcp.pop %v3244
        %v3280 = vmul.f32 1.0, %v3279
        %v3281 = vrcp.pop %v3245
        %v3282 = vmul.f32 1.0, %v3281
        %v3283 = vrcp.pop %v3246
        %v3284 = vmul.f32 1.0, %v3283
        %v3285 = vrcp.pop %v3247
        %v3286 = vmul.f32 1.0, %v3285
        %v3287 = vrcp.pop %v3248
        %v3288 = vmul.f32 1.0, %v3287
        %v3289 = vmul.f32 %v3125, %v3250
        %v3290 = vmul.f32 %v3126, %v3252
        %v3291 = vmul.f32 %v3127, %v3254
        %v3292 = vmul.f32 %v3128, %v3256
        %v3293 = vmul.f32 %v3129, %v3258
        %v3294 = vmul.f32 %v3130, %v3260
        %v3295 = vmul.f32 %v3131, %v3262
        %v3296 = vmul.f32 %v3132, %v3264
        %v3297 = vmul.f32 %v3133, %v3266
        %v3298 = vmul.f32 %v3134, %v3268
        %v3299 = vmul.f32 %v3135, %v3270
        %v3300 = vmul.f32 %v3136, %v3272
        %v3301 = vmul.f32 %v3137, %v3274
        %v3302 = vmul.f32 %v3138, %v3276
        %v3303 = vmul.f32 %v3139, %v3278
        %v3304 = vmul.f32 %v3140, %v3280
        %v3305 = vmul.f32 %v3141, %v3282
        %v3306 = vmul.f32 %v3142, %v3284
        %v3307 = vmul.f32 %v3143, %v3286
        %v3308 = vmul.f32 %v3144, %v3288
        %v3309 = vstv %s290
        %v3310 = vmul.f32 %v3289, %v3309
        %v3311 = vmul.f32 %v3290, %v3309
        %v3312 = vstv %s292
        %v3313 = vmul.f32 %v3307, %v3312
        %v3314 = vmul.f32 %v3308, %v3312
        %v3315 = vlaneseq
        %v3316 = vshrl.u32 %v3315, 7
        %v3317 = vsub.s32 3, %v3316
        %v3318 = vrot.slane %v378, %v3317
        %v3319 = vmul.f32 %v3310, %v3318
        %v3320 = vmul.f32 %v3311, %v3318
        %v3321 = vmul.f32 %v3291, %v3318
        %v3322 = vmul.f32 %v3292, %v3318
        %v3323 = vmul.f32 %v3293, %v3318
        %v3324 = vmul.f32 %v3294, %v3318
        %v3325 = vmul.f32 %v3295, %v3318
        %v3326 = vmul.f32 %v3296, %v3318
        %v3327 = vmul.f32 %v3297, %v3318
        %v3328 = vmul.f32 %v3298, %v3318
        %v3329 = vmul.f32 %v3299, %v3318
        %v3330 = vmul.f32 %v3300, %v3318
        %v3331 = vmul.f32 %v3301, %v3318
        %v3332 = vmul.f32 %v3302, %v3318
        %v3333 = vmul.f32 %v3303, %v3318
        %v3334 = vmul.f32 %v3304, %v3318
        %v3335 = vlaneseq
        %v3336 = vshrl.u32 %v3335, 7
        %v3337 = vsub.s32 4, %v3336
        %v3338 = vrot.slane %v378, %v3337
        %v3339 = vmul.f32 %v3291, %v3338
        %v3340 = vmul.f32 %v3292, %v3338
        %v3341 = vmul.f32 %v3293, %v3338
        %v3342 = vmul.f32 %v3294, %v3338
        %v3343 = vmul.f32 %v3295, %v3338
        %v3344 = vmul.f32 %v3296, %v3338
        %v3345 = vmul.f32 %v3297, %v3338
        %v3346 = vmul.f32 %v3298, %v3338
        %v3347 = vmul.f32 %v3299, %v3338
        %v3348 = vmul.f32 %v3300, %v3338
        %v3349 = vmul.f32 %v3301, %v3338
        %v3350 = vmul.f32 %v3302, %v3338
        %v3351 = vmul.f32 %v3303, %v3338
        %v3352 = vmul.f32 %v3304, %v3338
        %v3353 = vmul.f32 %v3305, %v3338
        %v3354 = vmul.f32 %v3306, %v3338
        %v3355 = vadd.f32 %v3319, %v3339
        %v3356 = vadd.f32 %v3320, %v3340
        %v3357 = vadd.f32 %v3321, %v3341
        %v3358 = vadd.f32 %v3322, %v3342
        %v3359 = vadd.f32 %v3323, %v3343
        %v3360 = vadd.f32 %v3324, %v3344
        %v3361 = vadd.f32 %v3325, %v3345
        %v3362 = vadd.f32 %v3326, %v3346
        %v3363 = vadd.f32 %v3327, %v3347
        %v3364 = vadd.f32 %v3328, %v3348
        %v3365 = vadd.f32 %v3329, %v3349
        %v3366 = vadd.f32 %v3330, %v3350
        %v3367 = vadd.f32 %v3331, %v3351
        %v3368 = vadd.f32 %v3332, %v3352
        %v3369 = vadd.f32 %v3333, %v3353
        %v3370 = vadd.f32 %v3334, %v3354
        %v3371 = vlaneseq
        %v3372 = vshrl.u32 %v3371, 7
        %v3373 = vsub.s32 5, %v3372
        %v3374 = vrot.slane %v378, %v3373
        %v3375 = vmul.f32 %v3293, %v3374
        %v3376 = vmul.f32 %v3294, %v3374
        %v3377 = vmul.f32 %v3295, %v3374
        %v3378 = vmul.f32 %v3296, %v3374
        %v3379 = vmul.f32 %v3297, %v3374
        %v3380 = vmul.f32 %v3298, %v3374
        %v3381 = vmul.f32 %v3299, %v3374
        %v3382 = vmul.f32 %v3300, %v3374
        %v3383 = vmul.f32 %v3301, %v3374
        %v3384 = vmul.f32 %v3302, %v3374
        %v3385 = vmul.f32 %v3303, %v3374
        %v3386 = vmul.f32 %v3304, %v3374
        %v3387 = vmul.f32 %v3305, %v3374
        %v3388 = vmul.f32 %v3306, %v3374
        %v3389 = vmul.f32 %v3313, %v3374
        %v3390 = vmul.f32 %v3314, %v3374
        %v3391 = vadd.f32 %v3355, %v3375
        %v3392 = vadd.f32 %v3356, %v3376
        %v3393 = vadd.f32 %v3357, %v3377
        %v3394 = vadd.f32 %v3358, %v3378
        %v3395 = vadd.f32 %v3359, %v3379
        %v3396 = vadd.f32 %v3360, %v3380
        %v3397 = vadd.f32 %v3361, %v3381
        %v3398 = vadd.f32 %v3362, %v3382
        %v3399 = vadd.f32 %v3363, %v3383
        %v3400 = vadd.f32 %v3364, %v3384
        %v3401 = vadd.f32 %v3365, %v3385
        %v3402 = vadd.f32 %v3366, %v3386
        %v3403 = vadd.f32 %v3367, %v3387
        %v3404 = vadd.f32 %v3368, %v3388
        %v3405 = vadd.f32 %v3369, %v3389
        %v3406 = vadd.f32 %v3370, %v3390
        %v3407 = vlaneseq
        %v3408 = vshrl.u32 %v3407, 7
        %v3409 = vsub.s32 6, %v3408
        %v3410 = vrot.slane %v378, %v3409
        %v3411 = vadd.f32 %v3391, %v3410
        %v3412 = vadd.f32 %v3392, %v3410
        %v3413 = vadd.f32 %v3393, %v3410
        %v3414 = vadd.f32 %v3394, %v3410
        %v3415 = vadd.f32 %v3395, %v3410
        %v3416 = vadd.f32 %v3396, %v3410
        %v3417 = vadd.f32 %v3397, %v3410
        %v3418 = vadd.f32 %v3398, %v3410
        %v3419 = vadd.f32 %v3399, %v3410
        %v3420 = vadd.f32 %v3400, %v3410
        %v3421 = vadd.f32 %v3401, %v3410
        %v3422 = vadd.f32 %v3402, %v3410
        %v3423 = vadd.f32 %v3403, %v3410
        %v3424 = vadd.f32 %v3404, %v3410
        %v3425 = vadd.f32 %v3405, %v3410
        %v3426 = vadd.f32 %v3406, %v3410
        %v3427 = vxor.u32 %v3411, 2147483648
        %v3428 = vxor.u32 %v3412, 2147483648
        %v3429 = vxor.u32 %v3413, 2147483648
        %v3430 = vxor.u32 %v3414, 2147483648
        %v3431 = vxor.u32 %v3415, 2147483648
        %v3432 = vxor.u32 %v3416, 2147483648
        %v3433 = vxor.u32 %v3417, 2147483648
        %v3434 = vxor.u32 %v3418, 2147483648
        %v3435 = vxor.u32 %v3419, 2147483648
        %v3436 = vxor.u32 %v3420, 2147483648
        %v3437 = vxor.u32 %v3421, 2147483648
        %v3438 = vxor.u32 %v3422, 2147483648
        %v3439 = vxor.u32 %v3423, 2147483648
        %v3440 = vxor.u32 %v3424, 2147483648
        %v3441 = vxor.u32 %v3425, 2147483648
        %v3442 = vxor.u32 %v3426, 2147483648
        %v3443 = vmul.f32 %v3427, 1.442695
        %v3444 = vpow.pop %v3443
        %v3445 = vmul.f32 %v3428, 1.442695
        %v3446 = vpow.pop %v3445
        %v3447 = vmul.f32 %v3429, 1.442695
        %v3448 = vpow.pop %v3447
        %v3449 = vmul.f32 %v3430, 1.442695
        %v3450 = vpow.pop %v3449
        %v3451 = vmul.f32 %v3431, 1.442695
        %v3452 = vpow.pop %v3451
        %v3453 = vmul.f32 %v3432, 1.442695
        %v3454 = vpow.pop %v3453
        %v3455 = vmul.f32 %v3433, 1.442695
        %v3456 = vpow.pop %v3455
        %v3457 = vmul.f32 %v3434, 1.442695
        %v3458 = vpow.pop %v3457
        %v3459 = vmul.f32 %v3435, 1.442695
        %v3460 = vpow.pop %v3459
        %v3461 = vmul.f32 %v3436, 1.442695
        %v3462 = vpow.pop %v3461
        %v3463 = vmul.f32 %v3437, 1.442695
        %v3464 = vpow.pop %v3463
        %v3465 = vmul.f32 %v3438, 1.442695
        %v3466 = vpow.pop %v3465
        %v3467 = vmul.f32 %v3439, 1.442695
        %v3468 = vpow.pop %v3467
        %v3469 = vmul.f32 %v3440, 1.442695
        %v3470 = vpow.pop %v3469
        %v3471 = vmul.f32 %v3441, 1.442695
        %v3472 = vpow.pop %v3471
        %v3473 = vmul.f32 %v3442, 1.442695
        %v3474 = vpow.pop %v3473
        %v3475 = vadd.f32 %v3444, 1.0
        %v3476 = vadd.f32 %v3446, 1.0
        %v3477 = vadd.f32 %v3448, 1.0
        %v3478 = vadd.f32 %v3450, 1.0
        %v3479 = vadd.f32 %v3452, 1.0
        %v3480 = vadd.f32 %v3454, 1.0
        %v3481 = vadd.f32 %v3456, 1.0
        %v3482 = vadd.f32 %v3458, 1.0
        %v3483 = vadd.f32 %v3460, 1.0
        %v3484 = vadd.f32 %v3462, 1.0
        %v3485 = vadd.f32 %v3464, 1.0
        %v3486 = vadd.f32 %v3466, 1.0
        %v3487 = vadd.f32 %v3468, 1.0
        %v3488 = vadd.f32 %v3470, 1.0
        %v3489 = vadd.f32 %v3472, 1.0
        %v3490 = vadd.f32 %v3474, 1.0
        %v3491 = vrcp.pop %v3475
        %v3492 = vmul.f32 1.0, %v3491
        %v3493 = vrcp.pop %v3476
        %v3494 = vmul.f32 1.0, %v3493
        %v3495 = vrcp.pop %v3477
        %v3496 = vmul.f32 1.0, %v3495
        %v3497 = vrcp.pop %v3478
        %v3498 = vmul.f32 1.0, %v3497
        %v3499 = vrcp.pop %v3479
        %v3500 = vmul.f32 1.0, %v3499
        %v3501 = vrcp.pop %v3480
        %v3502 = vmul.f32 1.0, %v3501
        %v3503 = vrcp.pop %v3481
        %v3504 = vmul.f32 1.0, %v3503
        %v3505 = vrcp.pop %v3482
        %v3506 = vmul.f32 1.0, %v3505
        %v3507 = vrcp.pop %v3483
        %v3508 = vmul.f32 1.0, %v3507
        %v3509 = vrcp.pop %v3484
        %v3510 = vmul.f32 1.0, %v3509
        %v3511 = vrcp.pop %v3485
        %v3512 = vmul.f32 1.0, %v3511
        %v3513 = vrcp.pop %v3486
        %v3514 = vmul.f32 1.0, %v3513
        %v3515 = vrcp.pop %v3487
        %v3516 = vmul.f32 1.0, %v3515
        %v3517 = vrcp.pop %v3488
        %v3518 = vmul.f32 1.0, %v3517
        %v3519 = vrcp.pop %v3489
        %v3520 = vmul.f32 1.0, %v3519
        %v3521 = vrcp.pop %v3490
        %v3522 = vmul.f32 1.0, %v3521
        %v3523 = vmul.f32 %v3411, %v3492
        %v3524 = vmul.f32 %v3412, %v3494
        %v3525 = vmul.f32 %v3413, %v3496
        %v3526 = vmul.f32 %v3414, %v3498
        %v3527 = vmul.f32 %v3415, %v3500
        %v3528 = vmul.f32 %v3416, %v3502
        %v3529 = vmul.f32 %v3417, %v3504
        %v3530 = vmul.f32 %v3418, %v3506
        %v3531 = vmul.f32 %v3419, %v3508
        %v3532 = vmul.f32 %v3420, %v3510
        %v3533 = vmul.f32 %v3421, %v3512
        %v3534 = vmul.f32 %v3422, %v3514
        %v3535 = vmul.f32 %v3423, %v3516
        %v3536 = vmul.f32 %v3424, %v3518
        %v3537 = vmul.f32 %v3425, %v3520
        %v3538 = vmul.f32 %v3426, %v3522
        %v3539 = vpack.c.bf16 %v3524, %v3523
        %v3540 = vpack.c.bf16 %v3526, %v3525
        %v3541 = vpack.c.bf16 %v3528, %v3527
        %v3542 = vpack.c.bf16 %v3530, %v3529
        %v3543 = vpack.c.bf16 %v3532, %v3531
        %v3544 = vpack.c.bf16 %v3534, %v3533
        %v3545 = vpack.c.bf16 %v3536, %v3535
        %v3546 = vpack.c.bf16 %v3538, %v3537
        %v3547 = vunpack.c.h.b16 %v316
        %v3548 = vunpack.c.h.b16 %v320
        %v3549 = vunpack.c.h.b16 %v324
        %v3550 = vunpack.c.h.b16 %v328
        %v3551 = vunpack.c.h.b16 %v332
        %v3552 = vunpack.c.h.b16 %v336
        %v3553 = vunpack.c.h.b16 %v340
        %v3554 = vunpack.c.h.b16 %v344
        %v3555 = vunpack.c.h.b16 %v348
        %v3556 = vunpack.c.h.b16 %v352
        %v3557 = vunpack.c.h.b16 %v356
        %v3558 = vunpack.c.h.b16 %v360
        %v3559 = vunpack.c.h.b16 %v364
        %v3560 = vunpack.c.h.b16 %v368
        %v3561 = vunpack.c.h.b16 %v372
        %v3562 = vunpack.c.h.b16 %v376
        %v3563 = vpack.c.b16 %v3548, %v3547
        %v3564 = vpack.c.b16 %v3550, %v3549
        %v3565 = vpack.c.b16 %v3552, %v3551
        %v3566 = vpack.c.b16 %v3554, %v3553
        %v3567 = vpack.c.b16 %v3556, %v3555
        %v3568 = vpack.c.b16 %v3558, %v3557
        %v3569 = vpack.c.b16 %v3560, %v3559
        %v3570 = vpack.c.b16 %v3562, %v3561
        %3579 = vmatprep.subr.bf16.mxu0 0
        %3580 = vmatpush1.bf16.msra.mxu0 %v3563
        %3581 = vmatprep.subr.bf16.mxu0 0
        %3582 = vmatpush1.bf16.msra.mxu0 %v3564
        %3583 = vmatprep.subr.bf16.mxu0 0
        %3584 = vmatpush1.bf16.msra.mxu0 %v3565
        %3585 = vmatprep.subr.bf16.mxu0 0
        %3586 = vmatpush1.bf16.msra.mxu0 %v3566
        %3587 = vmatprep.subr.bf16.mxu0 0
        %3588 = vmatpush1.bf16.msra.mxu0 %v3567
        %3589 = vmatprep.subr.bf16.mxu0 0
        %3590 = vmatpush1.bf16.msra.mxu0 %v3568
        %3591 = vmatprep.subr.bf16.mxu0 0
        %3592 = vmatpush1.bf16.msra.mxu0 %v3569
        %3593 = vmatprep.subr.bf16.mxu0 0
        %3594 = vmatpush1.bf16.msra.mxu0 %v3570
        %3595 = vmatprep.subr.bf16.mxu0 0
        %3596 = vmatpush1.bf16.msra.mxu0 0
        %3597 = vmatprep.subr.bf16.mxu0 0
        %3598 = vmatpush1.bf16.msra.mxu0 0
        %3599 = vmatprep.subr.bf16.mxu0 0
        %3600 = vmatpush1.bf16.msra.mxu0 0
        %3601 = vmatprep.subr.bf16.mxu0 0
        %3602 = vmatpush1.bf16.msra.mxu0 0
        %3603 = vmatprep.subr.bf16.mxu0 0
        %3604 = vmatpush1.bf16.msra.mxu0 0
        %3605 = vmatprep.subr.bf16.mxu0 0
        %3606 = vmatpush1.bf16.msra.mxu0 0
        %3607 = vmatprep.subr.bf16.mxu0 0
        %3608 = vmatpush1.bf16.msra.mxu0 0
        %3609 = vmatprep.subr.bf16.mxu0 0
        %3610 = vmatpush1.bf16.msra.mxu0 0
        %3611 = vmatprep.mubr.bf16.mxu0 0
        %3612 = vmatmul.mubr.bf16.gmra.mrb[0].mxu0 %v3539
        %v3613 = vpop.f32.mrb[0].mxu0
        %v3614 = vadd.f32 0.0, %v3613
        %v3615 = vpop.f32.mrb[0].mxu0
        %v3616 = vpop.f32.mrb[0].mxu0
        %v3617 = vadd.f32 0.0, %v3616
        %v3618 = vpop.f32.mrb[0].mxu0
        %3619 = vmatprep.mubr.bf16.mxu0 0
        %3620 = vmatmul.mubr.bf16.gmra.mrb[0].mxu0 %v3540
        %v3621 = vpop.f32.mrb[0].mxu0
        %v3622 = vadd.f32 0.0, %v3621
        %v3623 = vpop.f32.mrb[0].mxu0
        %v3624 = vpop.f32.mrb[0].mxu0
        %v3625 = vadd.f32 0.0, %v3624
        %v3626 = vpop.f32.mrb[0].mxu0
        %3627 = vmatprep.mubr.bf16.mxu0 0
        %3628 = vmatmul.mubr.bf16.gmra.mrb[0].mxu0 %v3541
        %v3629 = vpop.f32.mrb[0].mxu0
        %v3630 = vadd.f32 0.0, %v3629
        %v3631 = vpop.f32.mrb[0].mxu0
        %v3632 = vpop.f32.mrb[0].mxu0
        %v3633 = vadd.f32 0.0, %v3632
        %v3634 = vpop.f32.mrb[0].mxu0
        %3635 = vmatprep.mubr.bf16.mxu0 0
        %3636 = vmatmul.mubr.bf16.gmra.mrb[0].mxu0 %v3542
        %v3637 = vpop.f32.mrb[0].mxu0
        %v3638 = vadd.f32 0.0, %v3637
        %v3639 = vpop.f32.mrb[0].mxu0
        %v3640 = vpop.f32.mrb[0].mxu0
        %v3641 = vadd.f32 0.0, %v3640
        %v3642 = vpop.f32.mrb[0].mxu0
        %3643 = vmatprep.mubr.bf16.mxu0 0
        %3644 = vmatmul.mubr.bf16.gmra.mrb[0].mxu0 %v3543
        %v3645 = vpop.f32.mrb[0].mxu0
        %v3646 = vadd.f32 0.0, %v3645
        %v3647 = vpop.f32.mrb[0].mxu0
        %v3648 = vpop.f32.mrb[0].mxu0
        %v3649 = vadd.f32 0.0, %v3648
        %v3650 = vpop.f32.mrb[0].mxu0
        %3651 = vmatprep.mubr.bf16.mxu0 0
        %3652 = vmatmul.mubr.bf16.gmra.mrb[0].mxu0 %v3544
        %v3653 = vpop.f32.mrb[0].mxu0
        %v3654 = vadd.f32 0.0, %v3653
        %v3655 = vpop.f32.mrb[0].mxu0
        %v3656 = vpop.f32.mrb[0].mxu0
        %v3657 = vadd.f32 0.0, %v3656
        %v3658 = vpop.f32.mrb[0].mxu0
        %3659 = vmatprep.mubr.bf16.mxu0 0
        %3660 = vmatmul.mubr.bf16.gmra.mrb[0].mxu0 %v3545
        %v3661 = vpop.f32.mrb[0].mxu0
        %v3662 = vadd.f32 0.0, %v3661
        %v3663 = vpop.f32.mrb[0].mxu0
        %v3664 = vpop.f32.mrb[0].mxu0
        %v3665 = vadd.f32 0.0, %v3664
        %v3666 = vpop.f32.mrb[0].mxu0
        %3667 = vmatprep.mubr.bf16.mxu0 0
        %3668 = vmatmul.mubr.bf16.gmra.mrb[0].mxu0 %v3546
        %v3669 = vpop.f32.mrb[0].mxu0
        %v3670 = vadd.f32 0.0, %v3669
        %v3671 = vpop.f32.mrb[0].mxu0
        %v3672 = vpop.f32.mrb[0].mxu0
        %v3673 = vadd.f32 0.0, %v3672
        %v3674 = vpop.f32.mrb[0].mxu0
        %3675 = vdwg.mxu0
        %v3676 = vadd.f32 %v2612, %v3614
        %v3677 = vadd.f32 %v2613, %v3617
        %v3678 = vadd.f32 %v2614, %v3622
        %v3679 = vadd.f32 %v2615, %v3625
        %v3680 = vadd.f32 %v2616, %v3630
        %v3681 = vadd.f32 %v2617, %v3633
        %v3682 = vadd.f32 %v2618, %v3638
        %v3683 = vadd.f32 %v2619, %v3641
        %v3684 = vadd.f32 %v2620, %v3646
        %v3685 = vadd.f32 %v2621, %v3649
        %v3686 = vadd.f32 %v2622, %v3654
        %v3687 = vadd.f32 %v2623, %v3657
        %v3688 = vadd.f32 %v2624, %v3662
        %v3689 = vadd.f32 %v2625, %v3665
        %v3690 = vadd.f32 %v2626, %v3670
        %v3691 = vadd.f32 %v2627, %v3673
        %v3692 = vlaneseq
        %v3693 = vshrl.u32 %v3692, 7
        %v3694 = vsub.s32 7, %v3693
        %v3695 = vrot.slane %v378, %v3694
        %v3696 = vadd.f32 %v3676, %v3695
        %v3697 = vadd.f32 %v3677, %v3695
        %v3698 = vadd.f32 %v3678, %v3695
        %v3699 = vadd.f32 %v3679, %v3695
        %v3700 = vadd.f32 %v3680, %v3695
        %v3701 = vadd.f32 %v3681, %v3695
        %v3702 = vadd.f32 %v3682, %v3695
        %v3703 = vadd.f32 %v3683, %v3695
        %v3704 = vadd.f32 %v3684, %v3695
        %v3705 = vadd.f32 %v3685, %v3695
        %v3706 = vadd.f32 %v3686, %v3695
        %v3707 = vadd.f32 %v3687, %v3695
        %v3708 = vadd.f32 %v3688, %v3695
        %v3709 = vadd.f32 %v3689, %v3695
        %v3710 = vadd.f32 %v3690, %v3695
        %v3711 = vadd.f32 %v3691, %v3695
        %v3712 = vpack.c.bf16 %v3697, %v3696
        %v3713 = vpack.c.bf16 %v3699, %v3698
        %v3714 = vpack.c.bf16 %v3701, %v3700
        %v3715 = vpack.c.bf16 %v3703, %v3702
        %v3716 = vpack.c.bf16 %v3705, %v3704
        %v3717 = vpack.c.bf16 %v3707, %v3706
        %v3718 = vpack.c.bf16 %v3709, %v3708
        %v3719 = vpack.c.bf16 %v3711, %v3710
        %3720 = vmatprep.subr.bf16.mxu0 0
        %3721 = vmatpush1.bf16.msra.mxu0 %v422
        %3722 = vmatprep.subr.bf16.mxu0 0
        %3723 = vmatpush1.bf16.msra.mxu0 %v423
        %3724 = vmatprep.subr.bf16.mxu0 0
        %3725 = vmatpush1.bf16.msra.mxu0 %v424
        %3726 = vmatprep.subr.bf16.mxu0 0
        %3727 = vmatpush1.bf16.msra.mxu0 %v425
        %3728 = vmatprep.subr.bf16.mxu0 0
        %3729 = vmatpush1.bf16.msra.mxu0 %v426
        %3730 = vmatprep.subr.bf16.mxu0 0
        %3731 = vmatpush1.bf16.msra.mxu0 %v427
        %3732 = vmatprep.subr.bf16.mxu0 0
        %3733 = vmatpush1.bf16.msra.mxu0 %v428
        %3734 = vmatprep.subr.bf16.mxu0 0
        %3735 = vmatpush1.bf16.msra.mxu0 %v429
        %3736 = vmatprep.subr.bf16.mxu0 0
        %3737 = vmatpush1.bf16.msra.mxu0 0
        %3738 = vmatprep.subr.bf16.mxu0 0
        %3739 = vmatpush1.bf16.msra.mxu0 0
        %3740 = vmatprep.subr.bf16.mxu0 0
        %3741 = vmatpush1.bf16.msra.mxu0 0
        %3742 = vmatprep.subr.bf16.mxu0 0
        %3743 = vmatpush1.bf16.msra.mxu0 0
        %3744 = vmatprep.subr.bf16.mxu0 0
        %3745 = vmatpush1.bf16.msra.mxu0 0
        %3746 = vmatprep.subr.bf16.mxu0 0
        %3747 = vmatpush1.bf16.msra.mxu0 0
        %3748 = vmatprep.subr.bf16.mxu0 0
        %3749 = vmatpush1.bf16.msra.mxu0 0
        %3750 = vmatprep.subr.bf16.mxu0 0
        %3751 = vmatpush1.bf16.msra.mxu0 0
        %3752 = vmatprep.mubr.bf16.mxu0 0
        %3753 = vmatmul.mubr.bf16.gmra.mrb[0].mxu0 %v3712
        %v3754 = vpop.f32.mrb[0].mxu0
        %v3755 = vadd.f32 0.0, %v3754
        %v3756 = vpop.f32.mrb[0].mxu0
        %v3757 = vpop.f32.mrb[0].mxu0
        %v3758 = vadd.f32 0.0, %v3757
        %v3759 = vpop.f32.mrb[0].mxu0
        %3760 = vmatprep.mubr.bf16.mxu0 0
        %3761 = vmatmul.mubr.bf16.gmra.mrb[0].mxu0 %v3713
        %v3762 = vpop.f32.mrb[0].mxu0
        %v3763 = vadd.f32 0.0, %v3762
        %v3764 = vpop.f32.mrb[0].mxu0
        %v3765 = vpop.f32.mrb[0].mxu0
        %v3766 = vadd.f32 0.0, %v3765
        %v3767 = vpop.f32.mrb[0].mxu0
        %3768 = vmatprep.mubr.bf16.mxu0 0
        %3769 = vmatmul.mubr.bf16.gmra.mrb[0].mxu0 %v3714
        %v3770 = vpop.f32.mrb[0].mxu0
        %v3771 = vadd.f32 0.0, %v3770
        %v3772 = vpop.f32.mrb[0].mxu0
        %v3773 = vpop.f32.mrb[0].mxu0
        %v3774 = vadd.f32 0.0, %v3773
        %v3775 = vpop.f32.mrb[0].mxu0
        %3776 = vmatprep.mubr.bf16.mxu0 0
        %3777 = vmatmul.mubr.bf16.gmra.mrb[0].mxu0 %v3715
        %v3778 = vpop.f32.mrb[0].mxu0
        %v3779 = vadd.f32 0.0, %v3778
        %v3780 = vpop.f32.mrb[0].mxu0
        %v3781 = vpop.f32.mrb[0].mxu0
        %v3782 = vadd.f32 0.0, %v3781
        %v3783 = vpop.f32.mrb[0].mxu0
        %3784 = vmatprep.mubr.bf16.mxu0 0
        %3785 = vmatmul.mubr.bf16.gmra.mrb[0].mxu0 %v3716
        %v3786 = vpop.f32.mrb[0].mxu0
        %v3787 = vadd.f32 0.0, %v3786
        %v3788 = vpop.f32.mrb[0].mxu0
        %v3789 = vpop.f32.mrb[0].mxu0
        %v3790 = vadd.f32 0.0, %v3789
        %v3791 = vpop.f32.mrb[0].mxu0
        %3792 = vmatprep.mubr.bf16.mxu0 0
        %3793 = vmatmul.mubr.bf16.gmra.mrb[0].mxu0 %v3717
        %v3794 = vpop.f32.mrb[0].mxu0
        %v3795 = vadd.f32 0.0, %v3794
        %v3796 = vpop.f32.mrb[0].mxu0
        %v3797 = vpop.f32.mrb[0].mxu0
        %v3798 = vadd.f32 0.0, %v3797
        %v3799 = vpop.f32.mrb[0].mxu0
        %3800 = vmatprep.mubr.bf16.mxu0 0
        %3801 = vmatmul.mubr.bf16.gmra.mrb[0].mxu0 %v3718
        %v3802 = vpop.f32.mrb[0].mxu0
        %v3803 = vadd.f32 0.0, %v3802
        %v3804 = vpop.f32.mrb[0].mxu0
        %v3805 = vpop.f32.mrb[0].mxu0
        %v3806 = vadd.f32 0.0, %v3805
        %v3807 = vpop.f32.mrb[0].mxu0
        %3808 = vmatprep.mubr.bf16.mxu0 0
        %3809 = vmatmul.mubr.bf16.gmra.mrb[0].mxu0 %v3719
        %v3810 = vpop.f32.mrb[0].mxu0
        %v3811 = vadd.f32 0.0, %v3810
        %v3812 = vpop.f32.mrb[0].mxu0
        %v3813 = vpop.f32.mrb[0].mxu0
        %v3814 = vadd.f32 0.0, %v3813
        %v3815 = vpop.f32.mrb[0].mxu0
        %3816 = vdwg.mxu0
        %v3817 = vadd.f32 %v3696, %v3755
        %v3818 = vadd.f32 %v3697, %v3758
        %v3819 = vadd.f32 %v3698, %v3763
        %v3820 = vadd.f32 %v3699, %v3766
        %v3821 = vadd.f32 %v3700, %v3771
        %v3822 = vadd.f32 %v3701, %v3774
        %v3823 = vadd.f32 %v3702, %v3779
        %v3824 = vadd.f32 %v3703, %v3782
        %v3825 = vadd.f32 %v3704, %v3787
        %v3826 = vadd.f32 %v3705, %v3790
        %v3827 = vadd.f32 %v3706, %v3795
        %v3828 = vadd.f32 %v3707, %v3798
        %v3829 = vadd.f32 %v3708, %v3803
        %v3830 = vadd.f32 %v3709, %v3806
        %v3831 = vadd.f32 %v3710, %v3811
        %v3832 = vadd.f32 %v3711, %v3814
        %v3833 = vadd.f32 %v3817, %v574
        %v3834 = vadd.f32 %v3818, %v574
        %v3835 = vadd.f32 %v3819, %v574
        %v3836 = vadd.f32 %v3820, %v574
        %v3837 = vadd.f32 %v3821, %v574
        %v3838 = vadd.f32 %v3822, %v574
        %v3839 = vadd.f32 %v3823, %v574
        %v3840 = vadd.f32 %v3824, %v574
        %v3841 = vadd.f32 %v3825, %v574
        %v3842 = vadd.f32 %v3826, %v574
        %v3843 = vadd.f32 %v3827, %v574
        %v3844 = vadd.f32 %v3828, %v574
        %v3845 = vadd.f32 %v3829, %v574
        %v3846 = vadd.f32 %v3830, %v574
        %v3847 = vadd.f32 %v3831, %v574
        %v3848 = vadd.f32 %v3832, %v574
        %3849 = vadd.xlane.f32.xlu0 %v3833
        %v3850 = vpop.xlane.xlu0 %3849
        %3851 = vadd.xlane.f32.xlu0 %v3834
        %v3852 = vpop.xlane.xlu0 %3851
        %3853 = vadd.xlane.f32.xlu0 %v3835
        %v3854 = vpop.xlane.xlu0 %3853
        %3855 = vadd.xlane.f32.xlu0 %v3836
        %v3856 = vpop.xlane.xlu0 %3855
        %3857 = vadd.xlane.f32.xlu0 %v3837
        %v3858 = vpop.xlane.xlu0 %3857
        %3859 = vadd.xlane.f32.xlu0 %v3838
        %v3860 = vpop.xlane.xlu0 %3859
        %3861 = vadd.xlane.f32.xlu0 %v3839
        %v3862 = vpop.xlane.xlu0 %3861
        %3863 = vadd.xlane.f32.xlu0 %v3840
        %v3864 = vpop.xlane.xlu0 %3863
        %3865 = vadd.xlane.f32.xlu0 %v3841
        %v3866 = vpop.xlane.xlu0 %3865
        %3867 = vadd.xlane.f32.xlu0 %v3842
        %v3868 = vpop.xlane.xlu0 %3867
        %3869 = vadd.xlane.f32.xlu0 %v3843
        %v3870 = vpop.xlane.xlu0 %3869
        %3871 = vadd.xlane.f32.xlu0 %v3844
        %v3872 = vpop.xlane.xlu0 %3871
        %3873 = vadd.xlane.f32.xlu0 %v3845
        %v3874 = vpop.xlane.xlu0 %3873
        %3875 = vadd.xlane.f32.xlu0 %v3846
        %v3876 = vpop.xlane.xlu0 %3875
        %3877 = vadd.xlane.f32.xlu0 %v3847
        %v3878 = vpop.xlane.xlu0 %3877
        %3879 = vadd.xlane.f32.xlu0 %v3848
        %v3880 = vpop.xlane.xlu0 %3879
        %v3881 = vmul.f32 %v3850, %v635
        %v3882 = vmul.f32 %v3852, %v635
        %v3883 = vmul.f32 %v3854, %v635
        %v3884 = vmul.f32 %v3856, %v635
        %v3885 = vmul.f32 %v3858, %v635
        %v3886 = vmul.f32 %v3860, %v635
        %v3887 = vmul.f32 %v3862, %v635
        %v3888 = vmul.f32 %v3864, %v635
        %v3889 = vmul.f32 %v3866, %v635
        %v3890 = vmul.f32 %v3868, %v635
        %v3891 = vmul.f32 %v3870, %v635
        %v3892 = vmul.f32 %v3872, %v635
        %v3893 = vmul.f32 %v3874, %v635
        %v3894 = vmul.f32 %v3876, %v635
        %v3895 = vmul.f32 %v3878, %v635
        %v3896 = vmul.f32 %v3880, %v635
        %v3897 = vsub.f32 %v3833, %v3881
        %v3898 = vsub.f32 %v3834, %v3882
        %v3899 = vsub.f32 %v3835, %v3883
        %v3900 = vsub.f32 %v3836, %v3884
        %v3901 = vsub.f32 %v3837, %v3885
        %v3902 = vsub.f32 %v3838, %v3886
        %v3903 = vsub.f32 %v3839, %v3887
        %v3904 = vsub.f32 %v3840, %v3888
        %v3905 = vsub.f32 %v3841, %v3889
        %v3906 = vsub.f32 %v3842, %v3890
        %v3907 = vsub.f32 %v3843, %v3891
        %v3908 = vsub.f32 %v3844, %v3892
        %v3909 = vsub.f32 %v3845, %v3893
        %v3910 = vsub.f32 %v3846, %v3894
        %v3911 = vsub.f32 %v3847, %v3895
        %v3912 = vsub.f32 %v3848, %v3896
        %v3913 = vmul.f32 %v3897, %v3897
        %v3914 = vmul.f32 %v3898, %v3898
        %v3915 = vmul.f32 %v3899, %v3899
        %v3916 = vmul.f32 %v3900, %v3900
        %v3917 = vmul.f32 %v3901, %v3901
        %v3918 = vmul.f32 %v3902, %v3902
        %v3919 = vmul.f32 %v3903, %v3903
        %v3920 = vmul.f32 %v3904, %v3904
        %v3921 = vmul.f32 %v3905, %v3905
        %v3922 = vmul.f32 %v3906, %v3906
        %v3923 = vmul.f32 %v3907, %v3907
        %v3924 = vmul.f32 %v3908, %v3908
        %v3925 = vmul.f32 %v3909, %v3909
        %v3926 = vmul.f32 %v3910, %v3910
        %v3927 = vmul.f32 %v3911, %v3911
        %v3928 = vmul.f32 %v3912, %v3912
        %3929 = vadd.xlane.f32.xlu0 %v3913
        %v3930 = vpop.xlane.xlu0 %3929
        %3931 = vadd.xlane.f32.xlu0 %v3914
        %v3932 = vpop.xlane.xlu0 %3931
        %3933 = vadd.xlane.f32.xlu0 %v3915
        %v3934 = vpop.xlane.xlu0 %3933
        %3935 = vadd.xlane.f32.xlu0 %v3916
        %v3936 = vpop.xlane.xlu0 %3935
        %3937 = vadd.xlane.f32.xlu0 %v3917
        %v3938 = vpop.xlane.xlu0 %3937
        %3939 = vadd.xlane.f32.xlu0 %v3918
        %v3940 = vpop.xlane.xlu0 %3939
        %3941 = vadd.xlane.f32.xlu0 %v3919
        %v3942 = vpop.xlane.xlu0 %3941
        %3943 = vadd.xlane.f32.xlu0 %v3920
        %v3944 = vpop.xlane.xlu0 %3943
        %3945 = vadd.xlane.f32.xlu0 %v3921
        %v3946 = vpop.xlane.xlu0 %3945
        %3947 = vadd.xlane.f32.xlu0 %v3922
        %v3948 = vpop.xlane.xlu0 %3947
        %3949 = vadd.xlane.f32.xlu0 %v3923
        %v3950 = vpop.xlane.xlu0 %3949
        %3951 = vadd.xlane.f32.xlu0 %v3924
        %v3952 = vpop.xlane.xlu0 %3951
        %3953 = vadd.xlane.f32.xlu0 %v3925
        %v3954 = vpop.xlane.xlu0 %3953
        %3955 = vadd.xlane.f32.xlu0 %v3926
        %v3956 = vpop.xlane.xlu0 %3955
        %3957 = vadd.xlane.f32.xlu0 %v3927
        %v3958 = vpop.xlane.xlu0 %3957
        %3959 = vadd.xlane.f32.xlu0 %v3928
        %v3960 = vpop.xlane.xlu0 %3959
        %v3961 = vmul.f32 %v3930, %v635
        %v3962 = vmul.f32 %v3932, %v635
        %v3963 = vmul.f32 %v3934, %v635
        %v3964 = vmul.f32 %v3936, %v635
        %v3965 = vmul.f32 %v3938, %v635
        %v3966 = vmul.f32 %v3940, %v635
        %v3967 = vmul.f32 %v3942, %v635
        %v3968 = vmul.f32 %v3944, %v635
        %v3969 = vmul.f32 %v3946, %v635
        %v3970 = vmul.f32 %v3948, %v635
        %v3971 = vmul.f32 %v3950, %v635
        %v3972 = vmul.f32 %v3952, %v635
        %v3973 = vmul.f32 %v3954, %v635
        %v3974 = vmul.f32 %v3956, %v635
        %v3975 = vmul.f32 %v3958, %v635
        %v3976 = vmul.f32 %v3960, %v635
        %v3977 = vadd.f32 %v3961, 1e-05
        %v3978 = vadd.f32 %v3962, 1e-05
        %v3979 = vadd.f32 %v3963, 1e-05
        %v3980 = vadd.f32 %v3964, 1e-05
        %v3981 = vadd.f32 %v3965, 1e-05
        %v3982 = vadd.f32 %v3966, 1e-05
        %v3983 = vadd.f32 %v3967, 1e-05
        %v3984 = vadd.f32 %v3968, 1e-05
        %v3985 = vadd.f32 %v3969, 1e-05
        %v3986 = vadd.f32 %v3970, 1e-05
        %v3987 = vadd.f32 %v3971, 1e-05
        %v3988 = vadd.f32 %v3972, 1e-05
        %v3989 = vadd.f32 %v3973, 1e-05
        %v3990 = vadd.f32 %v3974, 1e-05
        %v3991 = vadd.f32 %v3975, 1e-05
        %v3992 = vadd.f32 %v3976, 1e-05
        %v3993 = vrsqrt.pop %v3977
        %v3994 = vrsqrt.pop %v3978
        %v3995 = vrsqrt.pop %v3979
        %v3996 = vrsqrt.pop %v3980
        %v3997 = vrsqrt.pop %v3981
        %v3998 = vrsqrt.pop %v3982
        %v3999 = vrsqrt.pop %v3983
        %v4000 = vrsqrt.pop %v3984
        %v4001 = vrsqrt.pop %v3985
        %v4002 = vrsqrt.pop %v3986
        %v4003 = vrsqrt.pop %v3987
        %v4004 = vrsqrt.pop %v3988
        %v4005 = vrsqrt.pop %v3989
        %v4006 = vrsqrt.pop %v3990
        %v4007 = vrsqrt.pop %v3991
        %v4008 = vrsqrt.pop %v3992
        %v4009 = vmul.f32 %v3897, %v3993
        %v4010 = vmul.f32 %v3898, %v3994
        %v4011 = vmul.f32 %v3899, %v3995
        %v4012 = vmul.f32 %v3900, %v3996
        %v4013 = vmul.f32 %v3901, %v3997
        %v4014 = vmul.f32 %v3902, %v3998
        %v4015 = vmul.f32 %v3903, %v3999
        %v4016 = vmul.f32 %v3904, %v4000
        %v4017 = vmul.f32 %v3905, %v4001
        %v4018 = vmul.f32 %v3906, %v4002
        %v4019 = vmul.f32 %v3907, %v4003
        %v4020 = vmul.f32 %v3908, %v4004
        %v4021 = vmul.f32 %v3909, %v4005
        %v4022 = vmul.f32 %v3910, %v4006
        %v4023 = vmul.f32 %v3911, %v4007
        %v4024 = vmul.f32 %v3912, %v4008
        %v4025 = vlaneseq
        %v4026 = vshrl.u32 %v4025, 7
        %v4027 = vsub.s32 0, %v4026
        %v4028 = vrot.slane %v379, %v4027
        %v4029 = vmul.f32 %v4009, %v4028
        %v4030 = vmul.f32 %v4010, %v4028
        %v4031 = vmul.f32 %v4011, %v4028
        %v4032 = vmul.f32 %v4012, %v4028
        %v4033 = vmul.f32 %v4013, %v4028
        %v4034 = vmul.f32 %v4014, %v4028
        %v4035 = vmul.f32 %v4015, %v4028
        %v4036 = vmul.f32 %v4016, %v4028
        %v4037 = vmul.f32 %v4017, %v4028
        %v4038 = vmul.f32 %v4018, %v4028
        %v4039 = vmul.f32 %v4019, %v4028
        %v4040 = vmul.f32 %v4020, %v4028
        %v4041 = vmul.f32 %v4021, %v4028
        %v4042 = vmul.f32 %v4022, %v4028
        %v4043 = vmul.f32 %v4023, %v4028
        %v4044 = vmul.f32 %v4024, %v4028
        %v4045 = vlaneseq
        %v4046 = vshrl.u32 %v4045, 7
        %v4047 = vsub.s32 1, %v4046
        %v4048 = vrot.slane %v379, %v4047
        %v4049 = vadd.f32 %v4029, %v4048
        %v4050 = vadd.f32 %v4030, %v4048
        %v4051 = vadd.f32 %v4031, %v4048
        %v4052 = vadd.f32 %v4032, %v4048
        %v4053 = vadd.f32 %v4033, %v4048
        %v4054 = vadd.f32 %v4034, %v4048
        %v4055 = vadd.f32 %v4035, %v4048
        %v4056 = vadd.f32 %v4036, %v4048
        %v4057 = vadd.f32 %v4037, %v4048
        %v4058 = vadd.f32 %v4038, %v4048
        %v4059 = vadd.f32 %v4039, %v4048
        %v4060 = vadd.f32 %v4040, %v4048
        %v4061 = vadd.f32 %v4041, %v4048
        %v4062 = vadd.f32 %v4042, %v4048
        %v4063 = vadd.f32 %v4043, %v4048
        %v4064 = vadd.f32 %v4044, %v4048
        %4065 = vst [vmem:[%s285] sm:$0xff] %v4049
        %4066 = vst [vmem:[%s285 + $0x8] sm:$0xff] %v4050
        %4067 = vst [vmem:[%s285 + $0x10] sm:$0xff] %v4051
        %4068 = vst [vmem:[%s285 + $0x18] sm:$0xff] %v4052
        %4069 = vst [vmem:[%s285 + $0x20] sm:$0xff] %v4053
        %4070 = vst [vmem:[%s285 + $0x28] sm:$0xff] %v4054
        %4071 = vst [vmem:[%s285 + $0x30] sm:$0xff] %v4055
        %4072 = vst [vmem:[%s285 + $0x38] sm:$0xff] %v4056
        %4073 = vst [vmem:[%s285 + $0x40] sm:$0xff] %v4057
        %4074 = vst [vmem:[%s285 + $0x48] sm:$0xff] %v4058
        %4075 = vst [vmem:[%s285 + $0x50] sm:$0xff] %v4059
        %4076 = vst [vmem:[%s285 + $0x58] sm:$0xff] %v4060
        %4077 = vst [vmem:[%s285 + $0x60] sm:$0xff] %v4061
        %4078 = vst [vmem:[%s285 + $0x68] sm:$0xff] %v4062
        %4079 = vst [vmem:[%s285 + $0x70] sm:$0xff] %v4063
        %4080 = vst [vmem:[%s285 + $0x78] sm:$0xff] %v4064
        %s4081 = sand.u32 %s127, 1
        %s4082 = scalar_lea.sflag [#allocation4], %s4081
        %s4083 = sand.u32 %s127, 1
        %s4084 = smul.addr %s4083, 128
        %s4085 = scalar_lea.vmem [#allocation10], %s4084
        // Predicated region
        $region53: #{tpu_custom_call.1} parent=35 // pred_check
          %p4086 = pneg %p137
        $region54: #{tpu_custom_call.1} parent=35 // pred_check_branch
          %4088 = sbr.rel (%p4086) target = $region56
        $region55: #{tpu_custom_call.1} parent=35 // pred_region
          %s4089 = smul.u32 8, %s25
          %s4091 = ssub.s32 2048, 2048
          %4092 = vsyncadd %s4082, %s4091
          %s4093 = smul.addr %s4089, 2
          %s4094 = smul.addr %s4093, 128
          %s4095 = scalar_lea.hbm %s4, %s4094
          %s4096 = sshll.u32 %s4085, 4
          %s4097 = int_to_ptr.vmem [resolvable:$true] %s4096
          %4102 = dma.vmem_to_hbm [thread:$0]  %s4097, 2048, %s4095, %s4082, 128, 128, 8
        $region56: #{tpu_custom_call.1} parent=35 // pred_fallthru
          _
      $region36: #{tpu_custom_call.1} parent=5 // pred_fallthru
        _
      %p4103 = scmp.le.s32.totalorder 2, %s20
      // Predicated region
      $region57: #{tpu_custom_call.1} parent=5 // pred_check
        %p4104 = pneg %p4103
      $region58: #{tpu_custom_call.1} parent=5 // pred_check_branch
        %4106 = sbr.rel (%p4104) target = $region60
      $region59: #{tpu_custom_call.1} parent=5 // pred_region
        %s4107 = ssub.s32 %s20, 2
        // Predicated region
        $region61: #{tpu_custom_call.1} parent=59 // pred_check
          %p4108 = pneg %p143
        $region62: #{tpu_custom_call.1} parent=59 // pred_check_branch
          %4110 = sbr.rel (%p4108) target = $region64
        $region63: #{tpu_custom_call.1} parent=59 // pred_region
          %s4111 = sand.u32 %s128, 1
          %s4112 = scalar_lea.sflag [#allocation4], %s4111
          %s4113 = sand.u32 %s128, 1
          %s4114 = smul.addr %s4113, 128
          %s4115 = scalar_lea.vmem [#allocation10], %s4114
          %4116 = dma.done %s4112, 2048
        $region64: #{tpu_custom_call.1} parent=59 // pred_fallthru
          _
      $region60: #{tpu_custom_call.1} parent=5 // pred_fallthru
        _
    $region6: #{tpu_custom_call.1} parent=1 // loop_footer
      %s24 = sadd.s32 1, %s20
    $region7: #{tpu_custom_call.1} parent=1 // loop_footer_branch
      %19 = sbr.rel target = $region3
    $region8: #{tpu_custom_call.1} parent=1 // loop_exit
      _
    %4117 = vsyncpa [#allocation3], 1
    %s4118 = scalar_lea.sflag [#allocation3], 1
    %4119 = vsyncpa %s4118, 1
    %4120 = vsyncpa [#allocation6], 1
    %s4121 = scalar_lea.sflag [#allocation6], 1
    %4122 = vsyncpa %s4121, 1
    %4123 = vsyncpa [#allocation9], 1
    %4124 = vsyncpa [#allocation4], 1
    %s4125 = scalar_lea.sflag [#allocation4], 1
    %4126 = vsyncpa %s4125, 1

// kernel: tpu_custom_call.1
$region0: #{tpu_custom_call.1}
  #allocation0 [shape = 'u32[]', space=smem, size = 0x4, offset = 0x4, fixed_abs, tag = 'smem constant byte address 0x4 - core index']
  #allocation1 [shape = 'u32[144,128]{1,0:T(1,128)}', space=vmem, size = 0x12000, scoped, tag = 'internal scratch']
  %s0 = inlined_call_operand.hbm [shape: f32[16,16,128], index: 0, kind: input, shape index: {}]
  %s1 = inlined_call_operand.hbm [shape: f32[2,2,16,128], index: 1, kind: input, shape index: {}]
  %s2 = inlined_call_operand.hbm [shape: bf16[128,1024], index: 2, kind: input, shape index: {}]
  %s3 = inlined_call_operand.hbm [shape: f32[18,128], index: 3, kind: input, shape index: {}]
  %s4 = inlined_call_operand.hbm [shape: f32[16,16,128], index: 4, kind: output, shape index: {}]
  %s5 = sld [smem:[#allocation0]]
  $region65: #{tpu_custom_call.1} parent=0
    _
  %s7 = ssub.s32 1, %s5
  %s8 = scalar_select 0, %s7, %s5
  $region1: #{tpu_custom_call.1} parent=0
    #allocation2 [shape = 'u8[131072]{0}', space=vmem, size = 0x20000, scoped, tag = 'input window, operand 0']
    #allocation3 [shape = 's32[2]{0}', space=sflag, size = 0x8, scoped, tag = 'scoped memory for tpu_custom_call.1']
    #allocation4 [shape = 's32[2]{0}', space=sflag, size = 0x8, scoped, tag = 'scoped memory for tpu_custom_call.1']
    #allocation5 [shape = 'u8[32768]{0}', space=vmem, size = 0x8000, scoped, tag = 'input window, operand 1']
    #allocation6 [shape = 's32[2]{0}', space=sflag, size = 0x8, scoped, tag = 'scoped memory for tpu_custom_call.1']
    #allocation7 [shape = 'u8[262144]{0}', space=vmem, size = 0x40000, scoped, tag = 'input window, operand 2, single buffered']
    #allocation8 [shape = 'u8[12288]{0}', space=vmem, size = 0x3000, scoped, tag = 'input window, operand 3, single buffered']
    #allocation9 [shape = 's32[1]{0}', space=sflag, size = 0x4, scoped, tag = 'scoped memory for tpu_custom_call.1']
    #allocation10 [shape = 'u8[131072]{0}', space=vmem, size = 0x20000, scoped, tag = 'output window, operand 0']
    %9 = vsyncpa [#allocation3], 0
    %s10 = scalar_lea.sflag [#allocation3], 1
    %11 = vsyncpa %s10, 0
    %12 = vsyncpa [#allocation6], 0
    %s13 = scalar_lea.sflag [#allocation6], 1
    %14 = vsyncpa %s13, 0
    %15 = vsyncpa [#allocation9], 0
    %16 = vsyncpa [#allocation4], 0
    %s17 = scalar_lea.sflag [#allocation4], 1
    %18 = vsyncpa %s17, 0
    loop: start=0, step=1, limit=4
    $region2: #{tpu_custom_call.1} parent=1 // loop_pre_header
      _
    $region3: #{tpu_custom_call.1} parent=1 // loop_header
      %s20 = sphi 0, %s24
      %p21 = scmp.ge.s32.totalorder %s20, 4
      %s30 = sphi 0, %s32
      %s33 = sphi 0, %s30
      %s34 = sphi 0, %s33
      %s50 = sphi 0, %s34
      %s56 = sphi 0, %s58
      %s59 = sphi 0, %s56
      %s60 = sphi 0, %s59
      %s76 = sphi 0, %s60
      %s80 = sphi 0, %s80
      %s82 = sphi 0, %s80
      %s83 = sphi 0, %s82
      %s97 = sphi 0, %s83
      %s101 = sphi 0, %s101
      %s103 = sphi 0, %s101
      %s104 = sphi 0, %s103
      %s118 = sphi 0, %s104
      %s124 = sphi 0, %s126
      %s127 = sphi 0, %s124
      %s128 = sphi 0, %s127
      %s144 = sphi 0, %s128
    $region4: #{tpu_custom_call.1} parent=1 // loop_header_branch
      %23 = sbr.rel (%p21) target = $region8
    $region5: #{tpu_custom_call.1} parent=1 // loop_body
      %s25 = ssub.s32 %s20, 1
      %s26 = ssub.s32 %s20, 2
      %s27 = sadd.s32 %s20, 1
      %s28 = ssub.s32 %s20, %s27
      %p29 = scmp.eq.s32.totalorder %s28, 0
      %s31 = sadd.s32 %s30, 1
      %s32 = scalar_select %p29, %s30, %s31
      %p35 = pneg %p29
      %p36 = scmp.eq.s32.totalorder %s20, 1
      %p37 = por %p35, %p36
      %p38 = scmp.ne.s32.totalorder %s30, %s33
      %p39 = scmp.eq.s32.totalorder %s20, 0
      %p40 = por %p38, %p39
      %p41 = scmp.ne.s32.totalorder %s30, %s33
      %p42 = scmp.eq.s32.totalorder %s25, 1
      %p43 = por %p41, %p42
      %p44 = scmp.ne.s32.totalorder %s33, %s34
      %p45 = scmp.eq.s32.totalorder %s25, 0
      %p46 = por %p44, %p45
      %p47 = scmp.ne.s32.totalorder %s33, %s34
      %p48 = scmp.eq.s32.totalorder %s26, 1
      %p49 = por %p47, %p48
      %p51 = scmp.ne.s32.totalorder %s34, %s50
      %p52 = scmp.eq.s32.totalorder %s26, 0
      %p53 = por %p51, %p52
      %s54 = ssub.s32 %s20, %s27
      %p55 = scmp.eq.s32.totalorder %s54, 0
      %s57 = sadd.s32 %s56, 1
      %s58 = scalar_select %p55, %s56, %s57
      %p61 = pneg %p55
      %p62 = scmp.eq.s32.totalorder %s20, 1
      %p63 = por %p61, %p62
      %p64 = scmp.ne.s32.totalorder %s56, %s59
      %p65 = scmp.eq.s32.totalorder %s20, 0
      %p66 = por %p64, %p65
      %p67 = scmp.ne.s32.totalorder %s56, %s59
      %p68 = scmp.eq.s32.totalorder %s25, 1
      %p69 = por %p67, %p68
      %p70 = scmp.ne.s32.totalorder %s59, %s60
      %p71 = scmp.eq.s32.totalorder %s25, 0
      %p72 = por %p70, %p71
      %p73 = scmp.ne.s32.totalorder %s59, %s60
      %p74 = scmp.eq.s32.totalorder %s26, 1
      %p75 = por %p73, %p74
      %p77 = scmp.ne.s32.totalorder %s60, %s76
      %p78 = scmp.eq.s32.totalorder %s26, 0
      %p79 = por %p77, %p78
      %s81 = sadd.s32 %s80, 1
      %p84 = scmp.eq.s32.totalorder %s20, 1
      %p85 = scmp.ne.s32.totalorder %s80, %s82
      %p86 = scmp.eq.s32.totalorder %s20, 0
      %p87 = por %p85, %p86
      %p88 = scmp.ne.s32.totalorder %s80, %s82
      %p89 = scmp.eq.s32.totalorder %s25, 1
      %p90 = por %p88, %p89
      %p91 = scmp.ne.s32.totalorder %s82, %s83
      %p92 = scmp.eq.s32.totalorder %s25, 0
      %p93 = por %p91, %p92
      %p94 = scmp.ne.s32.totalorder %s82, %s83
      %p95 = scmp.eq.s32.totalorder %s26, 1
      %p96 = por %p94, %p95
      %p98 = scmp.ne.s32.totalorder %s83, %s97
      %p99 = scmp.eq.s32.totalorder %s26, 0
      %p100 = por %p98, %p99
      %s102 = sadd.s32 %s101, 1
      %p105 = scmp.eq.s32.totalorder %s20, 1
      %p106 = scmp.ne.s32.totalorder %s101, %s103
      %p107 = scmp.eq.s32.totalorder %s20, 0
      %p108 = por %p106, %p107
      %p109 = scmp.ne.s32.totalorder %s101, %s103
      %p110 = scmp.eq.s32.totalorder %s25, 1
      %p111 = por %p109, %p110
      %p112 = scmp.ne.s32.totalorder %s103, %s104
      %p113 = scmp.eq.s32.totalorder %s25, 0
      %p114 = por %p112, %p113
      %p115 = scmp.ne.s32.totalorder %s103, %s104
      %p116 = scmp.eq.s32.totalorder %s26, 1
      %p117 = por %p115, %p116
      %p119 = scmp.ne.s32.totalorder %s104, %s118
      %p120 = scmp.eq.s32.totalorder %s26, 0
      %p121 = por %p119, %p120
      %s122 = ssub.s32 %s20, %s27
      %p123 = scmp.eq.s32.totalorder %s122, 0
      %s125 = sadd.s32 %s124, 1
      %s126 = scalar_select %p123, %s124, %s125
      %p129 = pneg %p123
      %p130 = scmp.eq.s32.totalorder %s20, 1
      %p131 = por %p129, %p130
      %p132 = scmp.ne.s32.totalorder %s124, %s127
      %p133 = scmp.eq.s32.totalorder %s20, 0
      %p134 = por %p132, %p133
      %p135 = scmp.ne.s32.totalorder %s124, %s127
      %p136 = scmp.eq.s32.totalorder %s25, 1
      %p137 = por %p135, %p136
      %p138 = scmp.ne.s32.totalorder %s127, %s128
      %p139 = scmp.eq.s32.totalorder %s25, 0
      %p140 = por %p138, %p139
      %p141 = scmp.ne.s32.totalorder %s127, %s128
      %p142 = scmp.eq.s32.totalorder %s26, 1
      %p143 = por %p141, %p142
      %p145 = scmp.ne.s32.totalorder %s128, %s144
      %p146 = scmp.eq.s32.totalorder %s26, 0
      %p147 = por %p145, %p146
      %p148 = scmp.le.s32.totalorder 1, %s20
      %p149 = scmp.lt.s32.totalorder %s20, 3
      %p150 = pnand %p148, %p149
      %p151 = pneg %p150
      // Predicated region
      $region9: #{tpu_custom_call.1} parent=5 // pred_check
        _
      $region10: #{tpu_custom_call.1} parent=5 // pred_check_branch
        %153 = sbr.rel (%p150) target = $region12
      $region11: #{tpu_custom_call.1} parent=5 // pred_region
        %s154 = ssub.s32 %s20, 1
        // Predicated region
        $region13: #{tpu_custom_call.1} parent=11 // pred_check
          %p155 = pneg %p93
        $region14: #{tpu_custom_call.1} parent=11 // pred_check_branch
          %157 = sbr.rel (%p155) target = $region16
        $region15: #{tpu_custom_call.1} parent=11 // pred_region
          %s159 = ssub.s32 8192, 8192
          %160 = vsyncadd [#allocation6], %s159
          %s161 = sshll.u32 [#allocation7], 4
          %s162 = int_to_ptr.vmem [resolvable:$true] %s161
          %167 = dma.hbm_to_vmem [thread:$0]  %s2, 8192, %s162, [#allocation6], 512, 512, 32
        $region16: #{tpu_custom_call.1} parent=11 // pred_fallthru
          _
        // Predicated region
        $region17: #{tpu_custom_call.1} parent=11 // pred_check
          %p168 = pneg %p114
        $region18: #{tpu_custom_call.1} parent=11 // pred_check_branch
          %170 = sbr.rel (%p168) target = $region20
        $region19: #{tpu_custom_call.1} parent=11 // pred_region
          %s172 = ssub.s32 384, 384
          %173 = vsyncadd [#allocation9], %s172
          %s174 = sshll.u32 [#allocation8], 4
          %s175 = int_to_ptr.vmem [resolvable:$true] %s174
          %180 = dma.hbm_to_vmem [thread:$0]  %s3, 384, %s175, [#allocation9], 128, 128, 8
        $region20: #{tpu_custom_call.1} parent=11 // pred_fallthru
          _
      $region12: #{tpu_custom_call.1} parent=5 // pred_fallthru
        _
      %p181 = scmp.lt.s32.totalorder %s20, 2
      // Predicated region
      $region21: #{tpu_custom_call.1} parent=5 // pred_check
        %p182 = pneg %p181
      $region22: #{tpu_custom_call.1} parent=5 // pred_check_branch
        %184 = sbr.rel (%p182) target = $region24
      $region23: #{tpu_custom_call.1} parent=5 // pred_region
        // Predicated region
        $region25: #{tpu_custom_call.1} parent=23 // pred_check
          %p185 = pneg %p40
        $region26: #{tpu_custom_call.1} parent=23 // pred_check_branch
          %187 = sbr.rel (%p185) target = $region28
        $region27: #{tpu_custom_call.1} parent=23 // pred_region
          %s188 = sand.u32 %s30, 1
          %s189 = scalar_lea.sflag [#allocation3], %s188
          %s190 = sand.u32 %s30, 1
          %s191 = smul.addr %s190, 128
          %s192 = scalar_lea.vmem [#allocation2], %s191
          %s193 = smul.u32 8, %s20
          %s195 = ssub.s32 2048, 2048
          %196 = vsyncadd %s189, %s195
          %s197 = smul.addr %s193, 2
          %s198 = smul.addr %s197, 128
          %s199 = scalar_lea.hbm %s0, %s198
          %s200 = sshll.u32 %s192, 4
          %s201 = int_to_ptr.vmem [resolvable:$true] %s200
          %206 = dma.hbm_to_vmem [thread:$0]  %s199, 2048, %s201, %s189, 128, 128, 8
        $region28: #{tpu_custom_call.1} parent=23 // pred_fallthru
          _
        // Predicated region
        $region29: #{tpu_custom_call.1} parent=23 // pred_check
          %p207 = pneg %p66
        $region30: #{tpu_custom_call.1} parent=23 // pred_check_branch
          %209 = sbr.rel (%p207) target = $region32
        $region31: #{tpu_custom_call.1} parent=23 // pred_region
          %s210 = sand.u32 %s20, 1
          %s211 = scalar_lea.sflag [#allocation6], %s210
          %s212 = sand.u32 %s56, 1
          %s213 = smul.addr %s212, 32
          %s214 = scalar_lea.vmem [#allocation5], %s213
          %s216 = ssub.s32 512, 512
          %217 = vsyncadd %s211, %s216
          %s218 = smul.addr %s20, 4
          %s219 = smul.addr %s218, 128
          %s220 = scalar_lea.hbm %s1, %s219
          %s221 = sshll.u32 %s214, 4
          %s222 = int_to_ptr.vmem [resolvable:$true] %s221
          %227 = dma.hbm_to_vmem [thread:$0]  %s220, 512, %s222, %s211, 128, 128, 8
        $region32: #{tpu_custom_call.1} parent=23 // pred_fallthru
          _
      $region24: #{tpu_custom_call.1} parent=5 // pred_fallthru
        _
      %p228 = scmp.le.s32.totalorder 1, %s20
      %p229 = scmp.lt.s32.totalorder %s20, 3
      %p230 = pnand %p228, %p229
      %p231 = pneg %p230
      // Predicated region
      $region33: #{tpu_custom_call.1} parent=5 // pred_check
        _
      $region34: #{tpu_custom_call.1} parent=5 // pred_check_branch
        %233 = sbr.rel (%p230) target = $region36
      $region35: #{tpu_custom_call.1} parent=5 // pred_region
        %s234 = ssub.s32 %s20, 1
        %s235 = sand.u32 %s33, 1
        %s236 = scalar_lea.sflag [#allocation3], %s235
        %s237 = sand.u32 %s33, 1
        %s238 = smul.addr %s237, 128
        %s239 = scalar_lea.vmem [#allocation2], %s238
        // Predicated region
        $region37: #{tpu_custom_call.1} parent=35 // pred_check
          %p240 = pneg %p46
        $region38: #{tpu_custom_call.1} parent=35 // pred_check_branch
          %242 = sbr.rel (%p240) target = $region40
        $region39: #{tpu_custom_call.1} parent=35 // pred_region
          %243 = dma.done %s236, 2048
        $region40: #{tpu_custom_call.1} parent=35 // pred_fallthru
          _
        %s244 = sand.u32 %s25, 1
        %s245 = scalar_lea.sflag [#allocation6], %s244
        %s246 = sand.u32 %s59, 1
        %s247 = smul.addr %s246, 32
        %s248 = scalar_lea.vmem [#allocation5], %s247
        // Predicated region
        $region41: #{tpu_custom_call.1} parent=35 // pred_check
          %p249 = pneg %p72
        $region42: #{tpu_custom_call.1} parent=35 // pred_check_branch
          %251 = sbr.rel (%p249) target = $region44
        $region43: #{tpu_custom_call.1} parent=35 // pred_region
          %252 = dma.done %s245, 512
        $region44: #{tpu_custom_call.1} parent=35 // pred_fallthru
          _
        // Predicated region
        $region45: #{tpu_custom_call.1} parent=35 // pred_check
          %p253 = pneg %p93
        $region46: #{tpu_custom_call.1} parent=35 // pred_check_branch
          %255 = sbr.rel (%p253) target = $region48
        $region47: #{tpu_custom_call.1} parent=35 // pred_region
          %256 = dma.done [#allocation6], 8192
        $region48: #{tpu_custom_call.1} parent=35 // pred_fallthru
          _
        // Predicated region
        $region49: #{tpu_custom_call.1} parent=35 // pred_check
          %p257 = pneg %p114
        $region50: #{tpu_custom_call.1} parent=35 // pred_check_branch
          %259 = sbr.rel (%p257) target = $region52
        $region51: #{tpu_custom_call.1} parent=35 // pred_region
          %260 = dma.done [#allocation9], 384
        $region52: #{tpu_custom_call.1} parent=35 // pred_fallthru
          _
        %s261 = sand.u32 %s33, 1
        %s262 = scalar_lea.sflag [#allocation3], %s261
        %s263 = sand.u32 %s33, 1
        %s264 = smul.addr %s263, 128
        %s265 = scalar_lea.vmem [#allocation2], %s264
        %p266 = pneg %p46
        %p267 = pneg %p43
        %s268 = sand.u32 %s25, 1
        %s269 = scalar_lea.sflag [#allocation6], %s268
        %s270 = sand.u32 %s59, 1
        %s271 = smul.addr %s270, 32
        %s272 = scalar_lea.vmem [#allocation5], %s271
        %p273 = pneg %p72
        %p274 = pneg %p69
        %p275 = pneg %p93
        %p276 = pneg %p90
        %p277 = pneg %p114
        %p278 = pneg %p111
        %p279 = pneg %p140
        %p280 = pneg %p137
        %s281 = sand.u32 %s127, 1
        %s282 = scalar_lea.sflag [#allocation4], %s281
        %s283 = sand.u32 %s127, 1
        %s284 = smul.addr %s283, 128
        %s285 = scalar_lea.vmem [#allocation10], %s284
        %s286 = smul.u32 8, %s25
        %s287 = smul.u32 8, %s25
        %p289 = scmp.gt.s32.totalorder %s25, 0
        %s290 = scalar_select %p289, 1.0, 0.0
        %p291 = scmp.lt.s32.totalorder %s25, 1
        %s292 = scalar_select %p291, 1.0, 0.0
        %v293 = vld [vmem:[%s239] sm:$0xff]
        %v294 = vld [vmem:[%s239 + $0x8] sm:$0xff]
        %v295 = vld [vmem:[%s239 + $0x10] sm:$0xff]
        %v296 = vld [vmem:[%s239 + $0x18] sm:$0xff]
        %v297 = vld [vmem:[%s239 + $0x20] sm:$0xff]
        %v298 = vld [vmem:[%s239 + $0x28] sm:$0xff]
        %v299 = vld [vmem:[%s239 + $0x30] sm:$0xff]
        %v300 = vld [vmem:[%s239 + $0x38] sm:$0xff]
        %v301 = vld [vmem:[%s239 + $0x40] sm:$0xff]
        %v302 = vld [vmem:[%s239 + $0x48] sm:$0xff]
        %v303 = vld [vmem:[%s239 + $0x50] sm:$0xff]
        %v304 = vld [vmem:[%s239 + $0x58] sm:$0xff]
        %v305 = vld [vmem:[%s239 + $0x60] sm:$0xff]
        %v306 = vld [vmem:[%s239 + $0x68] sm:$0xff]
        %v307 = vld [vmem:[%s239 + $0x70] sm:$0xff]
        %v308 = vld [vmem:[%s239 + $0x78] sm:$0xff]
        %v309 = vld [vmem:[%s248] sm:$0xff]
        %v310 = vld [vmem:[%s248 + $0x8] sm:$0xff]
        %v311 = vld [vmem:[%s248 + $0x10] sm:$0xff]
        %v312 = vld [vmem:[%s248 + $0x18] sm:$0xff]
        %v313 = vld [vmem:[#allocation7] sm:$0xff]
        %v314 = vld [vmem:[#allocation7 + $0x8] sm:$0xff]
        %v315 = vld [vmem:[#allocation7 + $0x10] sm:$0xff]
        %v316 = vld [vmem:[#allocation7 + $0x18] sm:$0xff]
        %v317 = vld [vmem:[#allocation7 + $0x20] sm:$0xff]
        %v318 = vld [vmem:[#allocation7 + $0x28] sm:$0xff]
        %v319 = vld [vmem:[#allocation7 + $0x30] sm:$0xff]
        %v320 = vld [vmem:[#allocation7 + $0x38] sm:$0xff]
        %v321 = vld [vmem:[#allocation7 + $0x40] sm:$0xff]
        %v322 = vld [vmem:[#allocation7 + $0x48] sm:$0xff]
        %v323 = vld [vmem:[#allocation7 + $0x50] sm:$0xff]
        %v324 = vld [vmem:[#allocation7 + $0x58] sm:$0xff]
        %v325 = vld [vmem:[#allocation7 + $0x60] sm:$0xff]
        %v326 = vld [vmem:[#allocation7 + $0x68] sm:$0xff]
        %v327 = vld [vmem:[#allocation7 + $0x70] sm:$0xff]
        %v328 = vld [vmem:[#allocation7 + $0x78] sm:$0xff]
        %v329 = vld [vmem:[#allocation7 + $0x80] sm:$0xff]
        %v330 = vld [vmem:[#allocation7 + $0x88] sm:$0xff]
        %v331 = vld [vmem:[#allocation7 + $0x90] sm:$0xff]
        %v332 = vld [vmem:[#allocation7 + $0x98] sm:$0xff]
        %v333 = vld [vmem:[#allocation7 + $0xa0] sm:$0xff]
        %v334 = vld [vmem:[#allocation7 + $0xa8] sm:$0xff]
        %v335 = vld [vmem:[#allocation7 + $0xb0] sm:$0xff]
        %v336 = vld [vmem:[#allocation7 + $0xb8] sm:$0xff]
        %v337 = vld [vmem:[#allocation7 + $0xc0] sm:$0xff]
        %v338 = vld [vmem:[#allocation7 + $0xc8] sm:$0xff]
        %v339 = vld [vmem:[#allocation7 + $0xd0] sm:$0xff]
        %v340 = vld [vmem:[#allocation7 + $0xd8] sm:$0xff]
        %v341 = vld [vmem:[#allocation7 + $0xe0] sm:$0xff]
        %v342 = vld [vmem:[#allocation7 + $0xe8] sm:$0xff]
        %v343 = vld [vmem:[#allocation7 + $0xf0] sm:$0xff]
        %v344 = vld [vmem:[#allocation7 + $0xf8] sm:$0xff]
        %v345 = vld [vmem:[#allocation7 + $0x100] sm:$0xff]
        %v346 = vld [vmem:[#allocation7 + $0x108] sm:$0xff]
        %v347 = vld [vmem:[#allocation7 + $0x110] sm:$0xff]
        %v348 = vld [vmem:[#allocation7 + $0x118] sm:$0xff]
        %v349 = vld [vmem:[#allocation7 + $0x120] sm:$0xff]
        %v350 = vld [vmem:[#allocation7 + $0x128] sm:$0xff]
        %v351 = vld [vmem:[#allocation7 + $0x130] sm:$0xff]
        %v352 = vld [vmem:[#allocation7 + $0x138] sm:$0xff]
        %v353 = vld [vmem:[#allocation7 + $0x140] sm:$0xff]
        %v354 = vld [vmem:[#allocation7 + $0x148] sm:$0xff]
        %v355 = vld [vmem:[#allocation7 + $0x150] sm:$0xff]
        %v356 = vld [vmem:[#allocation7 + $0x158] sm:$0xff]
        %v357 = vld [vmem:[#allocation7 + $0x160] sm:$0xff]
        %v358 = vld [vmem:[#allocation7 + $0x168] sm:$0xff]
        %v359 = vld [vmem:[#allocation7 + $0x170] sm:$0xff]
        %v360 = vld [vmem:[#allocation7 + $0x178] sm:$0xff]
        %v361 = vld [vmem:[#allocation7 + $0x180] sm:$0xff]
        %v362 = vld [vmem:[#allocation7 + $0x188] sm:$0xff]
        %v363 = vld [vmem:[#allocation7 + $0x190] sm:$0xff]
        %v364 = vld [vmem:[#allocation7 + $0x198] sm:$0xff]
        %v365 = vld [vmem:[#allocation7 + $0x1a0] sm:$0xff]
        %v366 = vld [vmem:[#allocation7 + $0x1a8] sm:$0xff]
        %v367 = vld [vmem:[#allocation7 + $0x1b0] sm:$0xff]
        %v368 = vld [vmem:[#allocation7 + $0x1b8] sm:$0xff]
        %v369 = vld [vmem:[#allocation7 + $0x1c0] sm:$0xff]
        %v370 = vld [vmem:[#allocation7 + $0x1c8] sm:$0xff]
        %v371 = vld [vmem:[#allocation7 + $0x1d0] sm:$0xff]
        %v372 = vld [vmem:[#allocation7 + $0x1d8] sm:$0xff]
        %v373 = vld [vmem:[#allocation7 + $0x1e0] sm:$0xff]
        %v374 = vld [vmem:[#allocation7 + $0x1e8] sm:$0xff]
        %v375 = vld [vmem:[#allocation7 + $0x1f0] sm:$0xff]
        %v376 = vld [vmem:[#allocation7 + $0x1f8] sm:$0xff]
        %v377 = vld [vmem:[#allocation8] sm:$0xff]
        %v378 = vld [vmem:[#allocation8 + $0x8] sm:$0xff]
        %v379 = vld [vmem:[#allocation8 + $0x10] sm:$0x3]
        %v380 = vpack.c.bf16 %v310, %v309
        %v381 = vpack.c.bf16 %v294, %v293
        %v382 = vpack.c.bf16 %v296, %v295
        %v383 = vpack.c.bf16 %v298, %v297
        %v384 = vpack.c.bf16 %v300, %v299
        %v385 = vpack.c.bf16 %v302, %v301
        %v386 = vpack.c.bf16 %v304, %v303
        %v387 = vpack.c.bf16 %v306, %v305
        %v388 = vpack.c.bf16 %v308, %v307
        %v389 = vpack.c.bf16 %v312, %v311
        %v406 = vunpack.c.l.b16 %v313
        %v407 = vunpack.c.l.b16 %v317
        %v408 = vunpack.c.l.b16 %v321
        %v409 = vunpack.c.l.b16 %v325
        %v410 = vunpack.c.l.b16 %v329
        %v411 = vunpack.c.l.b16 %v333
        %v412 = vunpack.c.l.b16 %v337
        %v413 = vunpack.c.l.b16 %v341
        %v414 = vunpack.c.l.b16 %v345
        %v415 = vunpack.c.l.b16 %v349
        %v416 = vunpack.c.l.b16 %v353
        %v417 = vunpack.c.l.b16 %v357
        %v418 = vunpack.c.l.b16 %v361
        %v419 = vunpack.c.l.b16 %v365
        %v420 = vunpack.c.l.b16 %v369
        %v421 = vunpack.c.l.b16 %v373
        %v422 = vpack.c.b16 %v407, %v406
        %v423 = vpack.c.b16 %v409, %v408
        %v424 = vpack.c.b16 %v411, %v410
        %v425 = vpack.c.b16 %v413, %v412
        %v426 = vpack.c.b16 %v415, %v414
        %v427 = vpack.c.b16 %v417, %v416
        %v428 = vpack.c.b16 %v419, %v418
        %v429 = vpack.c.b16 %v421, %v420
        %438 = vmatprep.subr.bf16.mxu0 0
        %439 = vmatpush1.bf16.msra.mxu0 %v422
        %440 = vmatprep.subr.bf16.mxu0 0
        %441 = vmatpush1.bf16.msra.mxu0 %v423
        %442 = vmatprep.subr.bf16.mxu0 0
        %443 = vmatpush1.bf16.msra.mxu0 %v424
        %444 = vmatprep.subr.bf16.mxu0 0
        %445 = vmatpush1.bf16.msra.mxu0 %v425
        %446 = vmatprep.subr.bf16.mxu0 0
        %447 = vmatpush1.bf16.msra.mxu0 %v426
        %448 = vmatprep.subr.bf16.mxu0 0
        %449 = vmatpush1.bf16.msra.mxu0 %v427
        %450 = vmatprep.subr.bf16.mxu0 0
        %451 = vmatpush1.bf16.msra.mxu0 %v428
        %452 = vmatprep.subr.bf16.mxu0 0
        %453 = vmatpush1.bf16.msra.mxu0 %v429
        %454 = vmatprep.subr.bf16.mxu0 0
        %455 = vmatpush1.bf16.msra.mxu0 0
        %456 = vmatprep.subr.bf16.mxu0 0
        %457 = vmatpush1.bf16.msra.mxu0 0
        %458 = vmatprep.subr.bf16.mxu0 0
        %459 = vmatpush1.bf16.msra.mxu0 0
        %460 = vmatprep.subr.bf16.mxu0 0
        %461 = vmatpush1.bf16.msra.mxu0 0
        %462 = vmatprep.subr.bf16.mxu0 0
        %463 = vmatpush1.bf16.msra.mxu0 0
        %464 = vmatprep.subr.bf16.mxu0 0
        %465 = vmatpush1.bf16.msra.mxu0 0
        %466 = vmatprep.subr.bf16.mxu0 0
        %467 = vmatpush1.bf16.msra.mxu0 0
        %468 = vmatprep.subr.bf16.mxu0 0
        %469 = vmatpush1.bf16.msra.mxu0 0
        %470 = vmatprep.mubr.bf16.mxu0 0
        %471 = vmatmul.mubr.bf16.gmra.mrb[0].mxu0 %v380
        %v472 = vpop.f32.mrb[0].mxu0
        %v473 = vadd.f32 0.0, %v472
        %v474 = vpop.f32.mrb[0].mxu0
        %v475 = vpop.f32.mrb[0].mxu0
        %v476 = vadd.f32 0.0, %v475
        %v477 = vpop.f32.mrb[0].mxu0
        %478 = vmatprep.mubr.bf16.mxu0 0
        %479 = vmatmul.mubr.bf16.gmra.mrb[0].mxu0 %v381
        %v480 = vpop.f32.mrb[0].mxu0
        %v481 = vadd.f32 0.0, %v480
        %v482 = vpop.f32.mrb[0].mxu0
        %v483 = vpop.f32.mrb[0].mxu0
        %v484 = vadd.f32 0.0, %v483
        %v485 = vpop.f32.mrb[0].mxu0
        %486 = vmatprep.mubr.bf16.mxu0 0
        %487 = vmatmul.mubr.bf16.gmra.mrb[0].mxu0 %v382
        %v488 = vpop.f32.mrb[0].mxu0
        %v489 = vadd.f32 0.0, %v488
        %v490 = vpop.f32.mrb[0].mxu0
        %v491 = vpop.f32.mrb[0].mxu0
        %v492 = vadd.f32 0.0, %v491
        %v493 = vpop.f32.mrb[0].mxu0
        %494 = vmatprep.mubr.bf16.mxu0 0
        %495 = vmatmul.mubr.bf16.gmra.mrb[0].mxu0 %v383
        %v496 = vpop.f32.mrb[0].mxu0
        %v497 = vadd.f32 0.0, %v496
        %v498 = vpop.f32.mrb[0].mxu0
        %v499 = vpop.f32.mrb[0].mxu0
        %v500 = vadd.f32 0.0, %v499
        %v501 = vpop.f32.mrb[0].mxu0
        %502 = vmatprep.mubr.bf16.mxu0 0
        %503 = vmatmul.mubr.bf16.gmra.mrb[0].mxu0 %v384
        %v504 = vpop.f32.mrb[0].mxu0
        %v505 = vadd.f32 0.0, %v504
        %v506 = vpop.f32.mrb[0].mxu0
        %v507 = vpop.f32.mrb[0].mxu0
        %v508 = vadd.f32 0.0, %v507
        %v509 = vpop.f32.mrb[0].mxu0
        %510 = vmatprep.mubr.bf16.mxu0 0
        %511 = vmatmul.mubr.bf16.gmra.mrb[0].mxu0 %v385
        %v512 = vpop.f32.mrb[0].mxu0
        %v513 = vadd.f32 0.0, %v512
        %v514 = vpop.f32.mrb[0].mxu0
        %v515 = vpop.f32.mrb[0].mxu0
        %v516 = vadd.f32 0.0, %v515
        %v517 = vpop.f32.mrb[0].mxu0
        %518 = vmatprep.mubr.bf16.mxu0 0
        %519 = vmatmul.mubr.bf16.gmra.mrb[0].mxu0 %v386
        %v520 = vpop.f32.mrb[0].mxu0
        %v521 = vadd.f32 0.0, %v520
        %v522 = vpop.f32.mrb[0].mxu0
        %v523 = vpop.f32.mrb[0].mxu0
        %v524 = vadd.f32 0.0, %v523
        %v525 = vpop.f32.mrb[0].mxu0
        %526 = vmatprep.mubr.bf16.mxu0 0
        %527 = vmatmul.mubr.bf16.gmra.mrb[0].mxu0 %v387
        %v528 = vpop.f32.mrb[0].mxu0
        %v529 = vadd.f32 0.0, %v528
        %v530 = vpop.f32.mrb[0].mxu0
        %v531 = vpop.f32.mrb[0].mxu0
        %v532 = vadd.f32 0.0, %v531
        %v533 = vpop.f32.mrb[0].mxu0
        %534 = vmatprep.mubr.bf16.mxu0 0
        %535 = vmatmul.mubr.bf16.gmra.mrb[0].mxu0 %v388
        %v536 = vpop.f32.mrb[0].mxu0
        %v537 = vadd.f32 0.0, %v536
        %v538 = vpop.f32.mrb[0].mxu0
        %v539 = vpop.f32.mrb[0].mxu0
        %v540 = vadd.f32 0.0, %v539
        %v541 = vpop.f32.mrb[0].mxu0
        %542 = vmatprep.mubr.bf16.mxu0 0
        %543 = vmatmul.mubr.bf16.gmra.mrb[0].mxu0 %v389
        %v544 = vpop.f32.mrb[0].mxu0
        %v545 = vadd.f32 0.0, %v544
        %v546 = vpop.f32.mrb[0].mxu0
        %v547 = vpop.f32.mrb[0].mxu0
        %v548 = vadd.f32 0.0, %v547
        %v549 = vpop.f32.mrb[0].mxu0
        %550 = vdwg.mxu0
        %v551 = vadd.f32 %v309, %v473
        %v552 = vadd.f32 %v310, %v476
        %v553 = vadd.f32 %v293, %v481
        %v554 = vadd.f32 %v294, %v484
        %v555 = vadd.f32 %v295, %v489
        %v556 = vadd.f32 %v296, %v492
        %v557 = vadd.f32 %v297, %v497
        %v558 = vadd.f32 %v298, %v500
        %v559 = vadd.f32 %v299, %v505
        %v560 = vadd.f32 %v300, %v508
        %v561 = vadd.f32 %v301, %v513
        %v562 = vadd.f32 %v302, %v516
        %v563 = vadd.f32 %v303, %v521
        %v564 = vadd.f32 %v304, %v524
        %v565 = vadd.f32 %v305, %v529
        %v566 = vadd.f32 %v306, %v532
        %v567 = vadd.f32 %v307, %v537
        %v568 = vadd.f32 %v308, %v540
        %v569 = vadd.f32 %v311, %v545
        %v570 = vadd.f32 %v312, %v548
        %v571 = vlaneseq
        %v572 = vshrl.u32 %v571, 7
        %v573 = vsub.s32 0, %v572
        %v574 = vrot.slane %v377, %v573
        %v575 = vadd.f32 %v551, %v574
        %v576 = vadd.f32 %v552, %v574
        %v577 = vadd.f32 %v553, %v574
        %v578 = vadd.f32 %v554, %v574
        %v579 = vadd.f32 %v555, %v574
        %v580 = vadd.f32 %v556, %v574
        %v581 = vadd.f32 %v557, %v574
        %v582 = vadd.f32 %v558, %v574
        %v583 = vadd.f32 %v559, %v574
        %v584 = vadd.f32 %v560, %v574
        %v585 = vadd.f32 %v561, %v574
        %v586 = vadd.f32 %v562, %v574
        %v587 = vadd.f32 %v563, %v574
        %v588 = vadd.f32 %v564, %v574
        %v589 = vadd.f32 %v565, %v574
        %v590 = vadd.f32 %v566, %v574
        %v591 = vadd.f32 %v567, %v574
        %v592 = vadd.f32 %v568, %v574
        %v593 = vadd.f32 %v569, %v574
        %v594 = vadd.f32 %v570, %v574
        %595 = vadd.xlane.f32.xlu0 %v575
        %v596 = vpop.xlane.xlu0 %595
        %597 = vadd.xlane.f32.xlu0 %v576
        %v598 = vpop.xlane.xlu0 %597
        %599 = vadd.xlane.f32.xlu0 %v577
        %v600 = vpop.xlane.xlu0 %599
        %601 = vadd.xlane.f32.xlu0 %v578
        %v602 = vpop.xlane.xlu0 %601
        %603 = vadd.xlane.f32.xlu0 %v579
        %v604 = vpop.xlane.xlu0 %603
        %605 = vadd.xlane.f32.xlu0 %v580
        %v606 = vpop.xlane.xlu0 %605
        %607 = vadd.xlane.f32.xlu0 %v581
        %v608 = vpop.xlane.xlu0 %607
        %609 = vadd.xlane.f32.xlu0 %v582
        %v610 = vpop.xlane.xlu0 %609
        %611 = vadd.xlane.f32.xlu0 %v583
        %v612 = vpop.xlane.xlu0 %611
        %613 = vadd.xlane.f32.xlu0 %v584
        %v614 = vpop.xlane.xlu0 %613
        %615 = vadd.xlane.f32.xlu0 %v585
        %v616 = vpop.xlane.xlu0 %615
        %617 = vadd.xlane.f32.xlu0 %v586
        %v618 = vpop.xlane.xlu0 %617
        %619 = vadd.xlane.f32.xlu0 %v587
        %v620 = vpop.xlane.xlu0 %619
        %621 = vadd.xlane.f32.xlu0 %v588
        %v622 = vpop.xlane.xlu0 %621
        %623 = vadd.xlane.f32.xlu0 %v589
        %v624 = vpop.xlane.xlu0 %623
        %625 = vadd.xlane.f32.xlu0 %v590
        %v626 = vpop.xlane.xlu0 %625
        %627 = vadd.xlane.f32.xlu0 %v591
        %v628 = vpop.xlane.xlu0 %627
        %629 = vadd.xlane.f32.xlu0 %v592
        %v630 = vpop.xlane.xlu0 %629
        %631 = vadd.xlane.f32.xlu0 %v593
        %v632 = vpop.xlane.xlu0 %631
        %633 = vadd.xlane.f32.xlu0 %v594
        %v634 = vpop.xlane.xlu0 %633
        %v635 = vrcp.pop 128.0
        %v636 = vmul.f32 %v596, %v635
        %v637 = vmul.f32 %v598, %v635
        %v638 = vmul.f32 %v600, %v635
        %v639 = vmul.f32 %v602, %v635
        %v640 = vmul.f32 %v604, %v635
        %v641 = vmul.f32 %v606, %v635
        %v642 = vmul.f32 %v608, %v635
        %v643 = vmul.f32 %v610, %v635
        %v644 = vmul.f32 %v612, %v635
        %v645 = vmul.f32 %v614, %v635
        %v646 = vmul.f32 %v616, %v635
        %v647 = vmul.f32 %v618, %v635
        %v648 = vmul.f32 %v620, %v635
        %v649 = vmul.f32 %v622, %v635
        %v650 = vmul.f32 %v624, %v635
        %v651 = vmul.f32 %v626, %v635
        %v652 = vmul.f32 %v628, %v635
        %v653 = vmul.f32 %v630, %v635
        %v654 = vmul.f32 %v632, %v635
        %v655 = vmul.f32 %v634, %v635
        %v656 = vsub.f32 %v575, %v636
        %v657 = vsub.f32 %v576, %v637
        %v658 = vsub.f32 %v577, %v638
        %v659 = vsub.f32 %v578, %v639
        %v660 = vsub.f32 %v579, %v640
        %v661 = vsub.f32 %v580, %v641
        %v662 = vsub.f32 %v581, %v642
        %v663 = vsub.f32 %v582, %v643
        %v664 = vsub.f32 %v583, %v644
        %v665 = vsub.f32 %v584, %v645
        %v666 = vsub.f32 %v585, %v646
        %v667 = vsub.f32 %v586, %v647
        %v668 = vsub.f32 %v587, %v648
        %v669 = vsub.f32 %v588, %v649
        %v670 = vsub.f32 %v589, %v650
        %v671 = vsub.f32 %v590, %v651
        %v672 = vsub.f32 %v591, %v652
        %v673 = vsub.f32 %v592, %v653
        %v674 = vsub.f32 %v593, %v654
        %v675 = vsub.f32 %v594, %v655
        %v676 = vmul.f32 %v656, %v656
        %v677 = vmul.f32 %v657, %v657
        %v678 = vmul.f32 %v658, %v658
        %v679 = vmul.f32 %v659, %v659
        %v680 = vmul.f32 %v660, %v660
        %v681 = vmul.f32 %v661, %v661
        %v682 = vmul.f32 %v662, %v662
        %v683 = vmul.f32 %v663, %v663
        %v684 = vmul.f32 %v664, %v664
        %v685 = vmul.f32 %v665, %v665
        %v686 = vmul.f32 %v666, %v666
        %v687 = vmul.f32 %v667, %v667
        %v688 = vmul.f32 %v668, %v668
        %v689 = vmul.f32 %v669, %v669
        %v690 = vmul.f32 %v670, %v670
        %v691 = vmul.f32 %v671, %v671
        %v692 = vmul.f32 %v672, %v672
        %v693 = vmul.f32 %v673, %v673
        %v694 = vmul.f32 %v674, %v674
        %v695 = vmul.f32 %v675, %v675
        %696 = vadd.xlane.f32.xlu0 %v676
        %v697 = vpop.xlane.xlu0 %696
        %698 = vadd.xlane.f32.xlu0 %v677
        %v699 = vpop.xlane.xlu0 %698
        %700 = vadd.xlane.f32.xlu0 %v678
        %v701 = vpop.xlane.xlu0 %700
        %702 = vadd.xlane.f32.xlu0 %v679
        %v703 = vpop.xlane.xlu0 %702
        %704 = vadd.xlane.f32.xlu0 %v680
        %v705 = vpop.xlane.xlu0 %704
        %706 = vadd.xlane.f32.xlu0 %v681
        %v707 = vpop.xlane.xlu0 %706
        %708 = vadd.xlane.f32.xlu0 %v682
        %v709 = vpop.xlane.xlu0 %708
        %710 = vadd.xlane.f32.xlu0 %v683
        %v711 = vpop.xlane.xlu0 %710
        %712 = vadd.xlane.f32.xlu0 %v684
        %v713 = vpop.xlane.xlu0 %712
        %714 = vadd.xlane.f32.xlu0 %v685
        %v715 = vpop.xlane.xlu0 %714
        %716 = vadd.xlane.f32.xlu0 %v686
        %v717 = vpop.xlane.xlu0 %716
        %718 = vadd.xlane.f32.xlu0 %v687
        %v719 = vpop.xlane.xlu0 %718
        %720 = vadd.xlane.f32.xlu0 %v688
        %v721 = vpop.xlane.xlu0 %720
        %722 = vadd.xlane.f32.xlu0 %v689
        %v723 = vpop.xlane.xlu0 %722
        %724 = vadd.xlane.f32.xlu0 %v690
        %v725 = vpop.xlane.xlu0 %724
        %726 = vadd.xlane.f32.xlu0 %v691
        %v727 = vpop.xlane.xlu0 %726
        %728 = vadd.xlane.f32.xlu0 %v692
        %v729 = vpop.xlane.xlu0 %728
        %730 = vadd.xlane.f32.xlu0 %v693
        %v731 = vpop.xlane.xlu0 %730
        %732 = vadd.xlane.f32.xlu0 %v694
        %v733 = vpop.xlane.xlu0 %732
        %734 = vadd.xlane.f32.xlu0 %v695
        %v735 = vpop.xlane.xlu0 %734
        %v736 = vmul.f32 %v697, %v635
        %v737 = vmul.f32 %v699, %v635
        %v738 = vmul.f32 %v701, %v635
        %v739 = vmul.f32 %v703, %v635
        %v740 = vmul.f32 %v705, %v635
        %v741 = vmul.f32 %v707, %v635
        %v742 = vmul.f32 %v709, %v635
        %v743 = vmul.f32 %v711, %v635
        %v744 = vmul.f32 %v713, %v635
        %v745 = vmul.f32 %v715, %v635
        %v746 = vmul.f32 %v717, %v635
        %v747 = vmul.f32 %v719, %v635
        %v748 = vmul.f32 %v721, %v635
        %v749 = vmul.f32 %v723, %v635
        %v750 = vmul.f32 %v725, %v635
        %v751 = vmul.f32 %v727, %v635
        %v752 = vmul.f32 %v729, %v635
        %v753 = vmul.f32 %v731, %v635
        %v754 = vmul.f32 %v733, %v635
        %v755 = vmul.f32 %v735, %v635
        %v756 = vadd.f32 %v736, 1e-05
        %v757 = vadd.f32 %v737, 1e-05
        %v758 = vadd.f32 %v738, 1e-05
        %v759 = vadd.f32 %v739, 1e-05
        %v760 = vadd.f32 %v740, 1e-05
        %v761 = vadd.f32 %v741, 1e-05
        %v762 = vadd.f32 %v742, 1e-05
        %v763 = vadd.f32 %v743, 1e-05
        %v764 = vadd.f32 %v744, 1e-05
        %v765 = vadd.f32 %v745, 1e-05
        %v766 = vadd.f32 %v746, 1e-05
        %v767 = vadd.f32 %v747, 1e-05
        %v768 = vadd.f32 %v748, 1e-05
        %v769 = vadd.f32 %v749, 1e-05
        %v770 = vadd.f32 %v750, 1e-05
        %v771 = vadd.f32 %v751, 1e-05
        %v772 = vadd.f32 %v752, 1e-05
        %v773 = vadd.f32 %v753, 1e-05
        %v774 = vadd.f32 %v754, 1e-05
        %v775 = vadd.f32 %v755, 1e-05
        %v776 = vrsqrt.pop %v756
        %v777 = vrsqrt.pop %v757
        %v778 = vrsqrt.pop %v758
        %v779 = vrsqrt.pop %v759
        %v780 = vrsqrt.pop %v760
        %v781 = vrsqrt.pop %v761
        %v782 = vrsqrt.pop %v762
        %v783 = vrsqrt.pop %v763
        %v784 = vrsqrt.pop %v764
        %v785 = vrsqrt.pop %v765
        %v786 = vrsqrt.pop %v766
        %v787 = vrsqrt.pop %v767
        %v788 = vrsqrt.pop %v768
        %v789 = vrsqrt.pop %v769
        %v790 = vrsqrt.pop %v770
        %v791 = vrsqrt.pop %v771
        %v792 = vrsqrt.pop %v772
        %v793 = vrsqrt.pop %v773
        %v794 = vrsqrt.pop %v774
        %v795 = vrsqrt.pop %v775
        %v796 = vmul.f32 %v656, %v776
        %v797 = vmul.f32 %v657, %v777
        %v798 = vmul.f32 %v658, %v778
        %v799 = vmul.f32 %v659, %v779
        %v800 = vmul.f32 %v660, %v780
        %v801 = vmul.f32 %v661, %v781
        %v802 = vmul.f32 %v662, %v782
        %v803 = vmul.f32 %v663, %v783
        %v804 = vmul.f32 %v664, %v784
        %v805 = vmul.f32 %v665, %v785
        %v806 = vmul.f32 %v666, %v786
        %v807 = vmul.f32 %v667, %v787
        %v808 = vmul.f32 %v668, %v788
        %v809 = vmul.f32 %v669, %v789
        %v810 = vmul.f32 %v670, %v790
        %v811 = vmul.f32 %v671, %v791
        %v812 = vmul.f32 %v672, %v792
        %v813 = vmul.f32 %v673, %v793
        %v814 = vmul.f32 %v674, %v794
        %v815 = vmul.f32 %v675, %v795
        %v816 = vlaneseq
        %v817 = vshrl.u32 %v816, 7
        %v818 = vsub.s32 1, %v817
        %v819 = vrot.slane %v377, %v818
        %v820 = vmul.f32 %v796, %v819
        %v821 = vmul.f32 %v797, %v819
        %v822 = vmul.f32 %v798, %v819
        %v823 = vmul.f32 %v799, %v819
        %v824 = vmul.f32 %v800, %v819
        %v825 = vmul.f32 %v801, %v819
        %v826 = vmul.f32 %v802, %v819
        %v827 = vmul.f32 %v803, %v819
        %v828 = vmul.f32 %v804, %v819
        %v829 = vmul.f32 %v805, %v819
        %v830 = vmul.f32 %v806, %v819
        %v831 = vmul.f32 %v807, %v819
        %v832 = vmul.f32 %v808, %v819
        %v833 = vmul.f32 %v809, %v819
        %v834 = vmul.f32 %v810, %v819
        %v835 = vmul.f32 %v811, %v819
        %v836 = vmul.f32 %v812, %v819
        %v837 = vmul.f32 %v813, %v819
        %v838 = vmul.f32 %v814, %v819
        %v839 = vmul.f32 %v815, %v819
        %v840 = vlaneseq
        %v841 = vshrl.u32 %v840, 7
        %v842 = vsub.s32 2, %v841
        %v843 = vrot.slane %v377, %v842
        %v844 = vadd.f32 %v820, %v843
        %v845 = vadd.f32 %v821, %v843
        %v846 = vadd.f32 %v822, %v843
        %v847 = vadd.f32 %v823, %v843
        %v848 = vadd.f32 %v824, %v843
        %v849 = vadd.f32 %v825, %v843
        %v850 = vadd.f32 %v826, %v843
        %v851 = vadd.f32 %v827, %v843
        %v852 = vadd.f32 %v828, %v843
        %v853 = vadd.f32 %v829, %v843
        %v854 = vadd.f32 %v830, %v843
        %v855 = vadd.f32 %v831, %v843
        %v856 = vadd.f32 %v832, %v843
        %v857 = vadd.f32 %v833, %v843
        %v858 = vadd.f32 %v834, %v843
        %v859 = vadd.f32 %v835, %v843
        %v860 = vadd.f32 %v836, %v843
        %v861 = vadd.f32 %v837, %v843
        %v862 = vadd.f32 %v838, %v843
        %v863 = vadd.f32 %v839, %v843
        %v864 = vpack.c.bf16 %v845, %v844
        %v865 = vpack.c.bf16 %v847, %v846
        %v866 = vpack.c.bf16 %v849, %v848
        %v867 = vpack.c.bf16 %v851, %v850
        %v868 = vpack.c.bf16 %v853, %v852
        %v869 = vpack.c.bf16 %v855, %v854
        %v870 = vpack.c.bf16 %v857, %v856
        %v871 = vpack.c.bf16 %v859, %v858
        %v872 = vpack.c.bf16 %v861, %v860
        %v873 = vpack.c.bf16 %v863, %v862
        %v890 = vunpack.c.h.b16 %v313
        %v891 = vunpack.c.l.b16 %v314
        %v892 = vunpack.c.h.b16 %v314
        %v893 = vunpack.c.h.b16 %v317
        %v894 = vunpack.c.l.b16 %v318
        %v895 = vunpack.c.h.b16 %v318
        %v896 = vunpack.c.h.b16 %v321
        %v897 = vunpack.c.l.b16 %v322
        %v898 = vunpack.c.h.b16 %v322
        %v899 = vunpack.c.h.b16 %v325
        %v900 = vunpack.c.l.b16 %v326
        %v901 = vunpack.c.h.b16 %v326
        %v902 = vunpack.c.h.b16 %v329
        %v903 = vunpack.c.l.b16 %v330
        %v904 = vunpack.c.h.b16 %v330
        %v905 = vunpack.c.h.b16 %v333
        %v906 = vunpack.c.l.b16 %v334
        %v907 = vunpack.c.h.b16 %v334
        %v908 = vunpack.c.h.b16 %v337
        %v909 = vunpack.c.l.b16 %v338
        %v910 = vunpack.c.h.b16 %v338
        %v911 = vunpack.c.h.b16 %v341
        %v912 = vunpack.c.l.b16 %v342
        %v913 = vunpack.c.h.b16 %v342
        %v914 = vunpack.c.h.b16 %v345
        %v915 = vunpack.c.l.b16 %v346
        %v916 = vunpack.c.h.b16 %v346
        %v917 = vunpack.c.h.b16 %v349
        %v918 = vunpack.c.l.b16 %v350
        %v919 = vunpack.c.h.b16 %v350
        %v920 = vunpack.c.h.b16 %v353
        %v921 = vunpack.c.l.b16 %v354
        %v922 = vunpack.c.h.b16 %v354
        %v923 = vunpack.c.h.b16 %v357
        %v924 = vunpack.c.l.b16 %v358
        %v925 = vunpack.c.h.b16 %v358
        %v926 = vunpack.c.h.b16 %v361
        %v927 = vunpack.c.l.b16 %v362
        %v928 = vunpack.c.h.b16 %v362
        %v929 = vunpack.c.h.b16 %v365
        %v930 = vunpack.c.l.b16 %v366
        %v931 = vunpack.c.h.b16 %v366
        %v932 = vunpack.c.h.b16 %v369
        %v933 = vunpack.c.l.b16 %v370
        %v934 = vunpack.c.h.b16 %v370
        %v935 = vunpack.c.h.b16 %v373
        %v936 = vunpack.c.l.b16 %v374
        %v937 = vunpack.c.h.b16 %v374
        %v938 = vpack.c.b16 %v893, %v890
        %v939 = vpack.c.b16 %v894, %v891
        %v940 = vpack.c.b16 %v895, %v892
        %v941 = vpack.c.b16 %v899, %v896
        %v942 = vpack.c.b16 %v900, %v897
        %v943 = vpack.c.b16 %v901, %v898
        %v944 = vpack.c.b16 %v905, %v902
        %v945 = vpack.c.b16 %v906, %v903
        %v946 = vpack.c.b16 %v907, %v904
        %v947 = vpack.c.b16 %v911, %v908
        %v948 = vpack.c.b16 %v912, %v909
        %v949 = vpack.c.b16 %v913, %v910
        %v950 = vpack.c.b16 %v917, %v914
        %v951 = vpack.c.b16 %v918, %v915
        %v952 = vpack.c.b16 %v919, %v916
        %v953 = vpack.c.b16 %v923, %v920
        %v954 = vpack.c.b16 %v924, %v921
        %v955 = vpack.c.b16 %v925, %v922
        %v956 = vpack.c.b16 %v929, %v926
        %v957 = vpack.c.b16 %v930, %v927
        %v958 = vpack.c.b16 %v931, %v928
        %v959 = vpack.c.b16 %v935, %v932
        %v960 = vpack.c.b16 %v936, %v933
        %v961 = vpack.c.b16 %v937, %v934
        %986 = vmatprep.subr.bf16.mxu0 %v939
        %987 = vmatpush1.bf16.msra.mxu0 %v938
        %988 = vmatprep.subr.bf16.mxu0 %v942
        %989 = vmatpush1.bf16.msra.mxu0 %v941
        %990 = vmatprep.subr.bf16.mxu0 %v945
        %991 = vmatpush1.bf16.msra.mxu0 %v944
        %992 = vmatprep.subr.bf16.mxu0 %v948
        %993 = vmatpush1.bf16.msra.mxu0 %v947
        %994 = vmatprep.subr.bf16.mxu0 %v951
        %995 = vmatpush1.bf16.msra.mxu0 %v950
        %996 = vmatprep.subr.bf16.mxu0 %v954
        %997 = vmatpush1.bf16.msra.mxu0 %v953
        %998 = vmatprep.subr.bf16.mxu0 %v957
        %999 = vmatpush1.bf16.msra.mxu0 %v956
        %1000 = vmatprep.subr.bf16.mxu0 %v960
        %1001 = vmatpush1.bf16.msra.mxu0 %v959
        %1002 = vmatprep.subr.bf16.mxu0 0
        %1003 = vmatpush1.bf16.msra.mxu0 0
        %1004 = vmatprep.subr.bf16.mxu0 0
        %1005 = vmatpush1.bf16.msra.mxu0 0
        %1006 = vmatprep.subr.bf16.mxu0 0
        %1007 = vmatpush1.bf16.msra.mxu0 0
        %1008 = vmatprep.subr.bf16.mxu0 0
        %1009 = vmatpush1.bf16.msra.mxu0 0
        %1010 = vmatprep.subr.bf16.mxu0 0
        %1011 = vmatpush1.bf16.msra.mxu0 0
        %1012 = vmatprep.subr.bf16.mxu0 0
        %1013 = vmatpush1.bf16.msra.mxu0 0
        %1014 = vmatprep.subr.bf16.mxu0 0
        %1015 = vmatpush1.bf16.msra.mxu0 0
        %1016 = vmatprep.subr.bf16.mxu0 0
        %1017 = vmatpush1.bf16.msra.mxu0 0
        %1018 = vmatprep.mubr.bf16.mxu0 0
        %1019 = vmatmul.mubr.bf16.gmra.mrb[0].mxu0 %v864
        %v1020 = vpop.f32.mrb[0].mxu0
        %v1021 = vadd.f32 0.0, %v1020
        %v1022 = vpop.f32.mrb[0].mxu0
        %v1023 = vadd.f32 0.0, %v1022
        %v1024 = vpop.f32.mrb[0].mxu0
        %v1025 = vadd.f32 0.0, %v1024
        %v1026 = vpop.f32.mrb[0].mxu0
        %v1027 = vadd.f32 0.0, %v1026
        %1028 = vmatprep.mubr.bf16.mxu0 0
        %1029 = vmatmul.mubr.bf16.gmra.mrb[0].mxu0 %v865
        %v1030 = vpop.f32.mrb[0].mxu0
        %v1031 = vadd.f32 0.0, %v1030
        %v1032 = vpop.f32.mrb[0].mxu0
        %v1033 = vadd.f32 0.0, %v1032
        %v1034 = vpop.f32.mrb[0].mxu0
        %v1035 = vadd.f32 0.0, %v1034
        %v1036 = vpop.f32.mrb[0].mxu0
        %v1037 = vadd.f32 0.0, %v1036
        %1038 = vmatprep.mubr.bf16.mxu0 0
        %1039 = vmatmul.mubr.bf16.gmra.mrb[0].mxu0 %v866
        %v1040 = vpop.f32.mrb[0].mxu0
        %v1041 = vadd.f32 0.0, %v1040
        %v1042 = vpop.f32.mrb[0].mxu0
        %v1043 = vadd.f32 0.0, %v1042
        %v1044 = vpop.f32.mrb[0].mxu0
        %v1045 = vadd.f32 0.0, %v1044
        %v1046 = vpop.f32.mrb[0].mxu0
        %v1047 = vadd.f32 0.0, %v1046
        %1048 = vmatprep.mubr.bf16.mxu0 0
        %1049 = vmatmul.mubr.bf16.gmra.mrb[0].mxu0 %v867
        %v1050 = vpop.f32.mrb[0].mxu0
        %v1051 = vadd.f32 0.0, %v1050
        %v1052 = vpop.f32.mrb[0].mxu0
        %v1053 = vadd.f32 0.0, %v1052
        %v1054 = vpop.f32.mrb[0].mxu0
        %v1055 = vadd.f32 0.0, %v1054
        %v1056 = vpop.f32.mrb[0].mxu0
        %v1057 = vadd.f32 0.0, %v1056
        %1058 = vmatprep.mubr.bf16.mxu0 0
        %1059 = vmatmul.mubr.bf16.gmra.mrb[0].mxu0 %v868
        %v1060 = vpop.f32.mrb[0].mxu0
        %v1061 = vadd.f32 0.0, %v1060
        %v1062 = vpop.f32.mrb[0].mxu0
        %v1063 = vadd.f32 0.0, %v1062
        %v1064 = vpop.f32.mrb[0].mxu0
        %v1065 = vadd.f32 0.0, %v1064
        %v1066 = vpop.f32.mrb[0].mxu0
        %v1067 = vadd.f32 0.0, %v1066
        %1068 = vmatprep.mubr.bf16.mxu0 0
        %1069 = vmatmul.mubr.bf16.gmra.mrb[0].mxu0 %v869
        %v1070 = vpop.f32.mrb[0].mxu0
        %v1071 = vadd.f32 0.0, %v1070
        %v1072 = vpop.f32.mrb[0].mxu0
        %v1073 = vadd.f32 0.0, %v1072
        %v1074 = vpop.f32.mrb[0].mxu0
        %v1075 = vadd.f32 0.0, %v1074
        %v1076 = vpop.f32.mrb[0].mxu0
        %v1077 = vadd.f32 0.0, %v1076
        %1078 = vmatprep.mubr.bf16.mxu0 0
        %1079 = vmatmul.mubr.bf16.gmra.mrb[0].mxu0 %v870
        %v1080 = vpop.f32.mrb[0].mxu0
        %v1081 = vadd.f32 0.0, %v1080
        %v1082 = vpop.f32.mrb[0].mxu0
        %v1083 = vadd.f32 0.0, %v1082
        %v1084 = vpop.f32.mrb[0].mxu0
        %v1085 = vadd.f32 0.0, %v1084
        %v1086 = vpop.f32.mrb[0].mxu0
        %v1087 = vadd.f32 0.0, %v1086
        %1088 = vmatprep.mubr.bf16.mxu0 0
        %1089 = vmatmul.mubr.bf16.gmra.mrb[0].mxu0 %v871
        %v1090 = vpop.f32.mrb[0].mxu0
        %v1091 = vadd.f32 0.0, %v1090
        %v1092 = vpop.f32.mrb[0].mxu0
        %v1093 = vadd.f32 0.0, %v1092
        %v1094 = vpop.f32.mrb[0].mxu0
        %v1095 = vadd.f32 0.0, %v1094
        %v1096 = vpop.f32.mrb[0].mxu0
        %v1097 = vadd.f32 0.0, %v1096
        %1098 = vmatprep.mubr.bf16.mxu0 0
        %1099 = vmatmul.mubr.bf16.gmra.mrb[0].mxu0 %v872
        %v1100 = vpop.f32.mrb[0].mxu0
        %v1101 = vadd.f32 0.0, %v1100
        %v1102 = vpop.f32.mrb[0].mxu0
        %v1103 = vadd.f32 0.0, %v1102
        %v1104 = vpop.f32.mrb[0].mxu0
        %v1105 = vadd.f32 0.0, %v1104
        %v1106 = vpop.f32.mrb[0].mxu0
        %v1107 = vadd.f32 0.0, %v1106
        %1108 = vmatprep.mubr.bf16.mxu0 0
        %1109 = vmatmul.mubr.bf16.gmra.mrb[0].mxu0 %v873
        %v1110 = vpop.f32.mrb[0].mxu0
        %v1111 = vadd.f32 0.0, %v1110
        %v1112 = vpop.f32.mrb[0].mxu0
        %v1113 = vadd.f32 0.0, %v1112
        %v1114 = vpop.f32.mrb[0].mxu0
        %v1115 = vadd.f32 0.0, %v1114
        %v1116 = vpop.f32.mrb[0].mxu0
        %v1117 = vadd.f32 0.0, %v1116
        %1118 = vdwg.mxu0
        %1119 = vmatprep.subr.bf16.mxu0 0
        %1120 = vmatpush1.bf16.msra.mxu0 %v940
        %1121 = vmatprep.subr.bf16.mxu0 0
        %1122 = vmatpush1.bf16.msra.mxu0 %v943
        %1123 = vmatprep.subr.bf16.mxu0 0
        %1124 = vmatpush1.bf16.msra.mxu0 %v946
        %1125 = vmatprep.subr.bf16.mxu0 0
        %1126 = vmatpush1.bf16.msra.mxu0 %v949
        %1127 = vmatprep.subr.bf16.mxu0 0
        %1128 = vmatpush1.bf16.msra.mxu0 %v952
        %1129 = vmatprep.subr.bf16.mxu0 0
        %1130 = vmatpush1.bf16.msra.mxu0 %v955
        %1131 = vmatprep.subr.bf16.mxu0 0
        %1132 = vmatpush1.bf16.msra.mxu0 %v958
        %1133 = vmatprep.subr.bf16.mxu0 0
        %1134 = vmatpush1.bf16.msra.mxu0 %v961
        %1135 = vmatprep.subr.bf16.mxu0 0
        %1136 = vmatpush1.bf16.msra.mxu0 0
        %1137 = vmatprep.subr.bf16.mxu0 0
        %1138 = vmatpush1.bf16.msra.mxu0 0
        %1139 = vmatprep.subr.bf16.mxu0 0
        %1140 = vmatpush1.bf16.msra.mxu0 0
        %1141 = vmatprep.subr.bf16.mxu0 0
        %1142 = vmatpush1.bf16.msra.mxu0 0
        %1143 = vmatprep.subr.bf16.mxu0 0
        %1144 = vmatpush1.bf16.msra.mxu0 0
        %1145 = vmatprep.subr.bf16.mxu0 0
        %1146 = vmatpush1.bf16.msra.mxu0 0
        %1147 = vmatprep.subr.bf16.mxu0 0
        %1148 = vmatpush1.bf16.msra.mxu0 0
        %1149 = vmatprep.subr.bf16.mxu0 0
        %1150 = vmatpush1.bf16.msra.mxu0 0
        %1151 = vmatprep.mubr.bf16.mxu0 0
        %1152 = vmatmul.mubr.bf16.gmra.mrb[0].mxu0 %v864
        %v1153 = vpop.f32.mrb[0].mxu0
        %v1154 = vadd.f32 0.0, %v1153
        %v1155 = vpop.f32.mrb[0].mxu0
        %v1156 = vpop.f32.mrb[0].mxu0
        %v1157 = vadd.f32 0.0, %v1156
        %v1158 = vpop.f32.mrb[0].mxu0
        %1159 = vmatprep.mubr.bf16.mxu0 0
        %1160 = vmatmul.mubr.bf16.gmra.mrb[0].mxu0 %v865
        %v1161 = vpop.f32.mrb[0].mxu0
        %v1162 = vadd.f32 0.0, %v1161
        %v1163 = vpop.f32.mrb[0].mxu0
        %v1164 = vpop.f32.mrb[0].mxu0
        %v1165 = vadd.f32 0.0, %v1164
        %v1166 = vpop.f32.mrb[0].mxu0
        %1167 = vmatprep.mubr.bf16.mxu0 0
        %1168 = vmatmul.mubr.bf16.gmra.mrb[0].mxu0 %v866
        %v1169 = vpop.f32.mrb[0].mxu0
        %v1170 = vadd.f32 0.0, %v1169
        %v1171 = vpop.f32.mrb[0].mxu0
        %v1172 = vpop.f32.mrb[0].mxu0
        %v1173 = vadd.f32 0.0, %v1172
        %v1174 = vpop.f32.mrb[0].mxu0
        %1175 = vmatprep.mubr.bf16.mxu0 0
        %1176 = vmatmul.mubr.bf16.gmra.mrb[0].mxu0 %v867
        %v1177 = vpop.f32.mrb[0].mxu0
        %v1178 = vadd.f32 0.0, %v1177
        %v1179 = vpop.f32.mrb[0].mxu0
        %v1180 = vpop.f32.mrb[0].mxu0
        %v1181 = vadd.f32 0.0, %v1180
        %v1182 = vpop.f32.mrb[0].mxu0
        %1183 = vmatprep.mubr.bf16.mxu0 0
        %1184 = vmatmul.mubr.bf16.gmra.mrb[0].mxu0 %v868
        %v1185 = vpop.f32.mrb[0].mxu0
        %v1186 = vadd.f32 0.0, %v1185
        %v1187 = vpop.f32.mrb[0].mxu0
        %v1188 = vpop.f32.mrb[0].mxu0
        %v1189 = vadd.f32 0.0, %v1188
        %v1190 = vpop.f32.mrb[0].mxu0
        %1191 = vmatprep.mubr.bf16.mxu0 0
        %1192 = vmatmul.mubr.bf16.gmra.mrb[0].mxu0 %v869
        %v1193 = vpop.f32.mrb[0].mxu0
        %v1194 = vadd.f32 0.0, %v1193
        %v1195 = vpop.f32.mrb[0].mxu0
        %v1196 = vpop.f32.mrb[0].mxu0
        %v1197 = vadd.f32 0.0, %v1196
        %v1198 = vpop.f32.mrb[0].mxu0
        %1199 = vmatprep.mubr.bf16.mxu0 0
        %1200 = vmatmul.mubr.bf16.gmra.mrb[0].mxu0 %v870
        %v1201 = vpop.f32.mrb[0].mxu0
        %v1202 = vadd.f32 0.0, %v1201
        %v1203 = vpop.f32.mrb[0].mxu0
        %v1204 = vpop.f32.mrb[0].mxu0
        %v1205 = vadd.f32 0.0, %v1204
        %v1206 = vpop.f32.mrb[0].mxu0
        %1207 = vmatprep.mubr.bf16.mxu0 0
        %1208 = vmatmul.mubr.bf16.gmra.mrb[0].mxu0 %v871
        %v1209 = vpop.f32.mrb[0].mxu0
        %v1210 = vadd.f32 0.0, %v1209
        %v1211 = vpop.f32.mrb[0].mxu0
        %v1212 = vpop.f32.mrb[0].mxu0
        %v1213 = vadd.f32 0.0, %v1212
        %v1214 = vpop.f32.mrb[0].mxu0
        %1215 = vmatprep.mubr.bf16.mxu0 0
        %1216 = vmatmul.mubr.bf16.gmra.mrb[0].mxu0 %v872
        %v1217 = vpop.f32.mrb[0].mxu0
        %v1218 = vadd.f32 0.0, %v1217
        %v1219 = vpop.f32.mrb[0].mxu0
        %v1220 = vpop.f32.mrb[0].mxu0
        %v1221 = vadd.f32 0.0, %v1220
        %v1222 = vpop.f32.mrb[0].mxu0
        %1223 = vmatprep.mubr.bf16.mxu0 0
        %1224 = vmatmul.mubr.bf16.gmra.mrb[0].mxu0 %v873
        %v1225 = vpop.f32.mrb[0].mxu0
        %v1226 = vadd.f32 0.0, %v1225
        %v1227 = vpop.f32.mrb[0].mxu0
        %v1228 = vpop.f32.mrb[0].mxu0
        %v1229 = vadd.f32 0.0, %v1228
        %v1230 = vpop.f32.mrb[0].mxu0
        %1231 = vdwg.mxu0
        %v1232 = vlaneseq
        %v1233 = vshrl.u32 %v1232, 7
        %v1234 = vsub.s32 3, %v1233
        %v1235 = vrot.slane %v377, %v1234
        %v1236 = vadd.f32 %v1021, %v1235
        %v1237 = vadd.f32 %v1025, %v1235
        %v1238 = vadd.f32 %v1031, %v1235
        %v1239 = vadd.f32 %v1035, %v1235
        %v1240 = vadd.f32 %v1041, %v1235
        %v1241 = vadd.f32 %v1045, %v1235
        %v1242 = vadd.f32 %v1051, %v1235
        %v1243 = vadd.f32 %v1055, %v1235
        %v1244 = vadd.f32 %v1061, %v1235
        %v1245 = vadd.f32 %v1065, %v1235
        %v1246 = vadd.f32 %v1071, %v1235
        %v1247 = vadd.f32 %v1075, %v1235
        %v1248 = vadd.f32 %v1081, %v1235
        %v1249 = vadd.f32 %v1085, %v1235
        %v1250 = vadd.f32 %v1091, %v1235
        %v1251 = vadd.f32 %v1095, %v1235
        %v1252 = vadd.f32 %v1101, %v1235
        %v1253 = vadd.f32 %v1105, %v1235
        %v1254 = vadd.f32 %v1111, %v1235
        %v1255 = vadd.f32 %v1115, %v1235
        %v1256 = vpack.c.bf16 %v1237, %v1236
        %v1257 = vpack.c.bf16 %v1239, %v1238
        %v1258 = vpack.c.bf16 %v1241, %v1240
        %v1259 = vpack.c.bf16 %v1243, %v1242
        %v1260 = vpack.c.bf16 %v1245, %v1244
        %v1261 = vpack.c.bf16 %v1247, %v1246
        %v1262 = vpack.c.bf16 %v1249, %v1248
        %v1263 = vpack.c.bf16 %v1251, %v1250
        %v1264 = vpack.c.bf16 %v1253, %v1252
        %v1265 = vpack.c.bf16 %v1255, %v1254
        %v1266 = vlaneseq
        %v1267 = vshrl.u32 %v1266, 7
        %v1268 = vsub.s32 4, %v1267
        %v1269 = vrot.slane %v377, %v1268
        %v1270 = vadd.f32 %v1023, %v1269
        %v1271 = vadd.f32 %v1027, %v1269
        %v1272 = vadd.f32 %v1033, %v1269
        %v1273 = vadd.f32 %v1037, %v1269
        %v1274 = vadd.f32 %v1043, %v1269
        %v1275 = vadd.f32 %v1047, %v1269
        %v1276 = vadd.f32 %v1053, %v1269
        %v1277 = vadd.f32 %v1057, %v1269
        %v1278 = vadd.f32 %v1063, %v1269
        %v1279 = vadd.f32 %v1067, %v1269
        %v1280 = vadd.f32 %v1073, %v1269
        %v1281 = vadd.f32 %v1077, %v1269
        %v1282 = vadd.f32 %v1083, %v1269
        %v1283 = vadd.f32 %v1087, %v1269
        %v1284 = vadd.f32 %v1093, %v1269
        %v1285 = vadd.f32 %v1097, %v1269
        %v1286 = vadd.f32 %v1103, %v1269
        %v1287 = vadd.f32 %v1107, %v1269
        %v1288 = vadd.f32 %v1113, %v1269
        %v1289 = vadd.f32 %v1117, %v1269
        %v1290 = vpack.c.bf16 %v1271, %v1270
        %v1291 = vpack.c.bf16 %v1273, %v1272
        %v1292 = vpack.c.bf16 %v1275, %v1274
        %v1293 = vpack.c.bf16 %v1277, %v1276
        %v1294 = vpack.c.bf16 %v1279, %v1278
        %v1295 = vpack.c.bf16 %v1281, %v1280
        %v1296 = vpack.c.bf16 %v1283, %v1282
        %v1297 = vpack.c.bf16 %v1285, %v1284
        %v1298 = vpack.c.bf16 %v1287, %v1286
        %v1299 = vpack.c.bf16 %v1289, %v1288
        %v1300 = vlaneseq
        %v1301 = vshrl.u32 %v1300, 7
        %v1302 = vsub.s32 5, %v1301
        %v1303 = vrot.slane %v377, %v1302
        %v1304 = vadd.f32 %v1154, %v1303
        %v1305 = vadd.f32 %v1157, %v1303
        %v1306 = vadd.f32 %v1162, %v1303
        %v1307 = vadd.f32 %v1165, %v1303
        %v1308 = vadd.f32 %v1170, %v1303
        %v1309 = vadd.f32 %v1173, %v1303
        %v1310 = vadd.f32 %v1178, %v1303
        %v1311 = vadd.f32 %v1181, %v1303
        %v1312 = vadd.f32 %v1186, %v1303
        %v1313 = vadd.f32 %v1189, %v1303
        %v1314 = vadd.f32 %v1194, %v1303
        %v1315 = vadd.f32 %v1197, %v1303
        %v1316 = vadd.f32 %v1202, %v1303
        %v1317 = vadd.f32 %v1205, %v1303
        %v1318 = vadd.f32 %v1210, %v1303
        %v1319 = vadd.f32 %v1213, %v1303
        %v1320 = vadd.f32 %v1218, %v1303
        %v1321 = vadd.f32 %v1221, %v1303
        %v1322 = vadd.f32 %v1226, %v1303
        %v1323 = vadd.f32 %v1229, %v1303
        %v1324 = vpack.c.bf16 %v1305, %v1304
        %v1325 = vpack.c.bf16 %v1307, %v1306
        %v1326 = vpack.c.bf16 %v1309, %v1308
        %v1327 = vpack.c.bf16 %v1311, %v1310
        %v1328 = vpack.c.bf16 %v1313, %v1312
        %v1329 = vpack.c.bf16 %v1315, %v1314
        %v1330 = vpack.c.bf16 %v1317, %v1316
        %v1331 = vpack.c.bf16 %v1319, %v1318
        %v1332 = vpack.c.bf16 %v1321, %v1320
        %v1333 = vpack.c.bf16 %v1323, %v1322
        %1334 = vmatprep.subr.bf16.mxu0 0
        %1335 = vmatpush1.bf16.xpose.msra.mxu0 %v1290
        %1336 = vmatprep.subr.bf16.mxu0 0
        %1337 = vmatpush1.bf16.xpose.msra.mxu0 0
        %1338 = vmatprep.subr.bf16.mxu0 0
        %1339 = vmatpush1.bf16.xpose.msra.mxu0 0
        %1340 = vmatprep.subr.bf16.mxu0 0
        %1341 = vmatpush1.bf16.xpose.msra.mxu0 0
        %1342 = vmatprep.subr.bf16.mxu0 0
        %1343 = vmatpush1.bf16.xpose.msra.mxu0 0
        %1344 = vmatprep.subr.bf16.mxu0 0
        %1345 = vmatpush1.bf16.xpose.msra.mxu0 0
        %1346 = vmatprep.subr.bf16.mxu0 0
        %1347 = vmatpush1.bf16.xpose.msra.mxu0 0
        %1348 = vmatprep.subr.bf16.mxu0 0
        %1349 = vmatpush1.bf16.xpose.msra.mxu0 0
        %1350 = vmatprep.subr.bf16.mxu0 0
        %1351 = vmatpush1.bf16.xpose.msra.mxu0 0
        %1352 = vmatprep.subr.bf16.mxu0 0
        %1353 = vmatpush1.bf16.xpose.msra.mxu0 0
        %1354 = vmatprep.subr.bf16.mxu0 0
        %1355 = vmatpush1.bf16.xpose.msra.mxu0 0
        %1356 = vmatprep.subr.bf16.mxu0 0
        %1357 = vmatpush1.bf16.xpose.msra.mxu0 0
        %1358 = vmatprep.subr.bf16.mxu0 0
        %1359 = vmatpush1.bf16.xpose.msra.mxu0 0
        %1360 = vmatprep.subr.bf16.mxu0 0
        %1361 = vmatpush1.bf16.xpose.msra.mxu0 0
        %1362 = vmatprep.subr.bf16.mxu0 0
        %1363 = vmatpush1.bf16.xpose.msra.mxu0 0
        %1364 = vmatprep.subr.bf16.mxu0 0
        %1365 = vmatpush1.bf16.xpose.msra.mxu0 0
        %1366 = vmatprep.mubr.bf16.mxu0 0
        %1367 = vmatmul.mubr.bf16.gmra.mrb[0].mxu0 %v1256
        %v1368 = vpop.f32.mrb[0].mxu0
        %v1369 = vadd.f32 0.0, %v1368
        %v1370 = vpop.f32.mrb[0].mxu0
        %v1371 = vpop.f32.mrb[0].mxu0
        %v1372 = vadd.f32 0.0, %v1371
        %v1373 = vpop.f32.mrb[0].mxu0
        %1374 = vdwg.mxu0
        %1375 = vmatprep.subr.bf16.mxu0 0
        %1376 = vmatpush1.bf16.xpose.msra.mxu0 %v1291
        %1377 = vmatprep.subr.bf16.mxu0 0
        %1378 = vmatpush1.bf16.xpose.msra.mxu0 0
        %1379 = vmatprep.subr.bf16.mxu0 0
        %1380 = vmatpush1.bf16.xpose.msra.mxu0 0
        %1381 = vmatprep.subr.bf16.mxu0 0
        %1382 = vmatpush1.bf16.xpose.msra.mxu0 0
        %1383 = vmatprep.subr.bf16.mxu0 0
        %1384 = vmatpush1.bf16.xpose.msra.mxu0 0
        %1385 = vmatprep.subr.bf16.mxu0 0
        %1386 = vmatpush1.bf16.xpose.msra.mxu0 0
        %1387 = vmatprep.subr.bf16.mxu0 0
        %1388 = vmatpush1.bf16.xpose.msra.mxu0 0
        %1389 = vmatprep.subr.bf16.mxu0 0
        %1390 = vmatpush1.bf16.xpose.msra.mxu0 0
        %1391 = vmatprep.subr.bf16.mxu0 0
        %1392 = vmatpush1.bf16.xpose.msra.mxu0 0
        %1393 = vmatprep.subr.bf16.mxu0 0
        %1394 = vmatpush1.bf16.xpose.msra.mxu0 0
        %1395 = vmatprep.subr.bf16.mxu0 0
        %1396 = vmatpush1.bf16.xpose.msra.mxu0 0
        %1397 = vmatprep.subr.bf16.mxu0 0
        %1398 = vmatpush1.bf16.xpose.msra.mxu0 0
        %1399 = vmatprep.subr.bf16.mxu0 0
        %1400 = vmatpush1.bf16.xpose.msra.mxu0 0
        %1401 = vmatprep.subr.bf16.mxu0 0
        %1402 = vmatpush1.bf16.xpose.msra.mxu0 0
        %1403 = vmatprep.subr.bf16.mxu0 0
        %1404 = vmatpush1.bf16.xpose.msra.mxu0 0
        %1405 = vmatprep.subr.bf16.mxu0 0
        %1406 = vmatpush1.bf16.xpose.msra.mxu0 0
        %1407 = vmatprep.mubr.bf16.mxu0 0
        %1408 = vmatmul.mubr.bf16.gmra.mrb[0].mxu0 %v1257
        %v1409 = vpop.f32.mrb[0].mxu0
        %v1410 = vadd.f32 0.0, %v1409
        %v1411 = vpop.f32.mrb[0].mxu0
        %v1412 = vpop.f32.mrb[0].mxu0
        %v1413 = vadd.f32 0.0, %v1412
        %v1414 = vpop.f32.mrb[0].mxu0
        %1415 = vdwg.mxu0
        %1416 = vmatprep.subr.bf16.mxu0 0
        %1417 = vmatpush1.bf16.xpose.msra.mxu0 %v1292
        %1418 = vmatprep.subr.bf16.mxu0 0
        %1419 = vmatpush1.bf16.xpose.msra.mxu0 0
        %1420 = vmatprep.subr.bf16.mxu0 0
        %1421 = vmatpush1.bf16.xpose.msra.mxu0 0
        %1422 = vmatprep.subr.bf16.mxu0 0
        %1423 = vmatpush1.bf16.xpose.msra.mxu0 0
        %1424 = vmatprep.subr.bf16.mxu0 0
        %1425 = vmatpush1.bf16.xpose.msra.mxu0 0
        %1426 = vmatprep.subr.bf16.mxu0 0
        %1427 = vmatpush1.bf16.xpose.msra.mxu0 0
        %1428 = vmatprep.subr.bf16.mxu0 0
        %1429 = vmatpush1.bf16.xpose.msra.mxu0 0
        %1430 = vmatprep.subr.bf16.mxu0 0
        %1431 = vmatpush1.bf16.xpose.msra.mxu0 0
        %1432 = vmatprep.subr.bf16.mxu0 0
        %1433 = vmatpush1.bf16.xpose.msra.mxu0 0
        %1434 = vmatprep.subr.bf16.mxu0 0
        %1435 = vmatpush1.bf16.xpose.msra.mxu0 0
        %1436 = vmatprep.subr.bf16.mxu0 0
        %1437 = vmatpush1.bf16.xpose.msra.mxu0 0
        %1438 = vmatprep.subr.bf16.mxu0 0
        %1439 = vmatpush1.bf16.xpose.msra.mxu0 0
        %1440 = vmatprep.subr.bf16.mxu0 0
        %1441 = vmatpush1.bf16.xpose.msra.mxu0 0
        %1442 = vmatprep.subr.bf16.mxu0 0
        %1443 = vmatpush1.bf16.xpose.msra.mxu0 0
        %1444 = vmatprep.subr.bf16.mxu0 0
        %1445 = vmatpush1.bf16.xpose.msra.mxu0 0
        %1446 = vmatprep.subr.bf16.mxu0 0
        %1447 = vmatpush1.bf16.xpose.msra.mxu0 0
        %1448 = vmatprep.mubr.bf16.mxu0 0
        %1449 = vmatmul.mubr.bf16.gmra.mrb[0].mxu0 %v1258
        %v1450 = vpop.f32.mrb[0].mxu0
        %v1451 = vadd.f32 0.0, %v1450
        %v1452 = vpop.f32.mrb[0].mxu0
        %v1453 = vpop.f32.mrb[0].mxu0
        %v1454 = vadd.f32 0.0, %v1453
        %v1455 = vpop.f32.mrb[0].mxu0
        %1456 = vdwg.mxu0
        %1457 = vmatprep.subr.bf16.mxu0 0
        %1458 = vmatpush1.bf16.xpose.msra.mxu0 %v1293
        %1459 = vmatprep.subr.bf16.mxu0 0
        %1460 = vmatpush1.bf16.xpose.msra.mxu0 0
        %1461 = vmatprep.subr.bf16.mxu0 0
        %1462 = vmatpush1.bf16.xpose.msra.mxu0 0
        %1463 = vmatprep.subr.bf16.mxu0 0
        %1464 = vmatpush1.bf16.xpose.msra.mxu0 0
        %1465 = vmatprep.subr.bf16.mxu0 0
        %1466 = vmatpush1.bf16.xpose.msra.mxu0 0
        %1467 = vmatprep.subr.bf16.mxu0 0
        %1468 = vmatpush1.bf16.xpose.msra.mxu0 0
        %1469 = vmatprep.subr.bf16.mxu0 0
        %1470 = vmatpush1.bf16.xpose.msra.mxu0 0
        %1471 = vmatprep.subr.bf16.mxu0 0
        %1472 = vmatpush1.bf16.xpose.msra.mxu0 0
        %1473 = vmatprep.subr.bf16.mxu0 0
        %1474 = vmatpush1.bf16.xpose.msra.mxu0 0
        %1475 = vmatprep.subr.bf16.mxu0 0
        %1476 = vmatpush1.bf16.xpose.msra.mxu0 0
        %1477 = vmatprep.subr.bf16.mxu0 0
        %1478 = vmatpush1.bf16.xpose.msra.mxu0 0
        %1479 = vmatprep.subr.bf16.mxu0 0
        %1480 = vmatpush1.bf16.xpose.msra.mxu0 0
        %1481 = vmatprep.subr.bf16.mxu0 0
        %1482 = vmatpush1.bf16.xpose.msra.mxu0 0
        %1483 = vmatprep.subr.bf16.mxu0 0
        %1484 = vmatpush1.bf16.xpose.msra.mxu0 0
        %1485 = vmatprep.subr.bf16.mxu0 0
        %1486 = vmatpush1.bf16.xpose.msra.mxu0 0
        %1487 = vmatprep.subr.bf16.mxu0 0
        %1488 = vmatpush1.bf16.xpose.msra.mxu0 0
        %1489 = vmatprep.mubr.bf16.mxu0 0
        %1490 = vmatmul.mubr.bf16.gmra.mrb[0].mxu0 %v1259
        %v1491 = vpop.f32.mrb[0].mxu0
        %v1492 = vadd.f32 0.0, %v1491
        %v1493 = vpop.f32.mrb[0].mxu0
        %v1494 = vpop.f32.mrb[0].mxu0
        %v1495 = vadd.f32 0.0, %v1494
        %v1496 = vpop.f32.mrb[0].mxu0
        %1497 = vdwg.mxu0
        %1498 = vmatprep.subr.bf16.mxu0 0
        %1499 = vmatpush1.bf16.xpose.msra.mxu0 %v1294
        %1500 = vmatprep.subr.bf16.mxu0 0
        %1501 = vmatpush1.bf16.xpose.msra.mxu0 0
        %1502 = vmatprep.subr.bf16.mxu0 0
        %1503 = vmatpush1.bf16.xpose.msra.mxu0 0
        %1504 = vmatprep.subr.bf16.mxu0 0
        %1505 = vmatpush1.bf16.xpose.msra.mxu0 0
        %1506 = vmatprep.subr.bf16.mxu0 0
        %1507 = vmatpush1.bf16.xpose.msra.mxu0 0
        %1508 = vmatprep.subr.bf16.mxu0 0
        %1509 = vmatpush1.bf16.xpose.msra.mxu0 0
        %1510 = vmatprep.subr.bf16.mxu0 0
        %1511 = vmatpush1.bf16.xpose.msra.mxu0 0
        %1512 = vmatprep.subr.bf16.mxu0 0
        %1513 = vmatpush1.bf16.xpose.msra.mxu0 0
        %1514 = vmatprep.subr.bf16.mxu0 0
        %1515 = vmatpush1.bf16.xpose.msra.mxu0 0
        %1516 = vmatprep.subr.bf16.mxu0 0
        %1517 = vmatpush1.bf16.xpose.msra.mxu0 0
        %1518 = vmatprep.subr.bf16.mxu0 0
        %1519 = vmatpush1.bf16.xpose.msra.mxu0 0
        %1520 = vmatprep.subr.bf16.mxu0 0
        %1521 = vmatpush1.bf16.xpose.msra.mxu0 0
        %1522 = vmatprep.subr.bf16.mxu0 0
        %1523 = vmatpush1.bf16.xpose.msra.mxu0 0
        %1524 = vmatprep.subr.bf16.mxu0 0
        %1525 = vmatpush1.bf16.xpose.msra.mxu0 0
        %1526 = vmatprep.subr.bf16.mxu0 0
        %1527 = vmatpush1.bf16.xpose.msra.mxu0 0
        %1528 = vmatprep.subr.bf16.mxu0 0
        %1529 = vmatpush1.bf16.xpose.msra.mxu0 0
        %1530 = vmatprep.mubr.bf16.mxu0 0
        %1531 = vmatmul.mubr.bf16.gmra.mrb[0].mxu0 %v1260
        %v1532 = vpop.f32.mrb[0].mxu0
        %v1533 = vadd.f32 0.0, %v1532
        %v1534 = vpop.f32.mrb[0].mxu0
        %v1535 = vpop.f32.mrb[0].mxu0
        %v1536 = vadd.f32 0.0, %v1535
        %v1537 = vpop.f32.mrb[0].mxu0
        %1538 = vdwg.mxu0
        %1539 = vmatprep.subr.bf16.mxu0 0
        %1540 = vmatpush1.bf16.xpose.msra.mxu0 %v1295
        %1541 = vmatprep.subr.bf16.mxu0 0
        %1542 = vmatpush1.bf16.xpose.msra.mxu0 0
        %1543 = vmatprep.subr.bf16.mxu0 0
        %1544 = vmatpush1.bf16.xpose.msra.mxu0 0
        %1545 = vmatprep.subr.bf16.mxu0 0
        %1546 = vmatpush1.bf16.xpose.msra.mxu0 0
        %1547 = vmatprep.subr.bf16.mxu0 0
        %1548 = vmatpush1.bf16.xpose.msra.mxu0 0
        %1549 = vmatprep.subr.bf16.mxu0 0
        %1550 = vmatpush1.bf16.xpose.msra.mxu0 0
        %1551 = vmatprep.subr.bf16.mxu0 0
        %1552 = vmatpush1.bf16.xpose.msra.mxu0 0
        %1553 = vmatprep.subr.bf16.mxu0 0
        %1554 = vmatpush1.bf16.xpose.msra.mxu0 0
        %1555 = vmatprep.subr.bf16.mxu0 0
        %1556 = vmatpush1.bf16.xpose.msra.mxu0 0
        %1557 = vmatprep.subr.bf16.mxu0 0
        %1558 = vmatpush1.bf16.xpose.msra.mxu0 0
        %1559 = vmatprep.subr.bf16.mxu0 0
        %1560 = vmatpush1.bf16.xpose.msra.mxu0 0
        %1561 = vmatprep.subr.bf16.mxu0 0
        %1562 = vmatpush1.bf16.xpose.msra.mxu0 0
        %1563 = vmatprep.subr.bf16.mxu0 0
        %1564 = vmatpush1.bf16.xpose.msra.mxu0 0
        %1565 = vmatprep.subr.bf16.mxu0 0
        %1566 = vmatpush1.bf16.xpose.msra.mxu0 0
        %1567 = vmatprep.subr.bf16.mxu0 0
        %1568 = vmatpush1.bf16.xpose.msra.mxu0 0
        %1569 = vmatprep.subr.bf16.mxu0 0
        %1570 = vmatpush1.bf16.xpose.msra.mxu0 0
        %1571 = vmatprep.mubr.bf16.mxu0 0
        %1572 = vmatmul.mubr.bf16.gmra.mrb[0].mxu0 %v1261
        %v1573 = vpop.f32.mrb[0].mxu0
        %v1574 = vadd.f32 0.0, %v1573
        %v1575 = vpop.f32.mrb[0].mxu0
        %v1576 = vpop.f32.mrb[0].mxu0
        %v1577 = vadd.f32 0.0, %v1576
        %v1578 = vpop.f32.mrb[0].mxu0
        %1579 = vdwg.mxu0
        %1580 = vmatprep.subr.bf16.mxu0 0
        %1581 = vmatpush1.bf16.xpose.msra.mxu0 %v1296
        %1582 = vmatprep.subr.bf16.mxu0 0
        %1583 = vmatpush1.bf16.xpose.msra.mxu0 0
        %1584 = vmatprep.subr.bf16.mxu0 0
        %1585 = vmatpush1.bf16.xpose.msra.mxu0 0
        %1586 = vmatprep.subr.bf16.mxu0 0
        %1587 = vmatpush1.bf16.xpose.msra.mxu0 0
        %1588 = vmatprep.subr.bf16.mxu0 0
        %1589 = vmatpush1.bf16.xpose.msra.mxu0 0
        %1590 = vmatprep.subr.bf16.mxu0 0
        %1591 = vmatpush1.bf16.xpose.msra.mxu0 0
        %1592 = vmatprep.subr.bf16.mxu0 0
        %1593 = vmatpush1.bf16.xpose.msra.mxu0 0
        %1594 = vmatprep.subr.bf16.mxu0 0
        %1595 = vmatpush1.bf16.xpose.msra.mxu0 0
        %1596 = vmatprep.subr.bf16.mxu0 0
        %1597 = vmatpush1.bf16.xpose.msra.mxu0 0
        %1598 = vmatprep.subr.bf16.mxu0 0
        %1599 = vmatpush1.bf16.xpose.msra.mxu0 0
        %1600 = vmatprep.subr.bf16.mxu0 0
        %1601 = vmatpush1.bf16.xpose.msra.mxu0 0
        %1602 = vmatprep.subr.bf16.mxu0 0
        %1603 = vmatpush1.bf16.xpose.msra.mxu0 0
        %1604 = vmatprep.subr.bf16.mxu0 0
        %1605 = vmatpush1.bf16.xpose.msra.mxu0 0
        %1606 = vmatprep.subr.bf16.mxu0 0
        %1607 = vmatpush1.bf16.xpose.msra.mxu0 0
        %1608 = vmatprep.subr.bf16.mxu0 0
        %1609 = vmatpush1.bf16.xpose.msra.mxu0 0
        %1610 = vmatprep.subr.bf16.mxu0 0
        %1611 = vmatpush1.bf16.xpose.msra.mxu0 0
        %1612 = vmatprep.mubr.bf16.mxu0 0
        %1613 = vmatmul.mubr.bf16.gmra.mrb[0].mxu0 %v1262
        %v1614 = vpop.f32.mrb[0].mxu0
        %v1615 = vadd.f32 0.0, %v1614
        %v1616 = vpop.f32.mrb[0].mxu0
        %v1617 = vpop.f32.mrb[0].mxu0
        %v1618 = vadd.f32 0.0, %v1617
        %v1619 = vpop.f32.mrb[0].mxu0
        %1620 = vdwg.mxu0
        %1621 = vmatprep.subr.bf16.mxu0 0
        %1622 = vmatpush1.bf16.xpose.msra.mxu0 %v1297
        %1623 = vmatprep.subr.bf16.mxu0 0
        %1624 = vmatpush1.bf16.xpose.msra.mxu0 0
        %1625 = vmatprep.subr.bf16.mxu0 0
        %1626 = vmatpush1.bf16.xpose.msra.mxu0 0
        %1627 = vmatprep.subr.bf16.mxu0 0
        %1628 = vmatpush1.bf16.xpose.msra.mxu0 0
        %1629 = vmatprep.subr.bf16.mxu0 0
        %1630 = vmatpush1.bf16.xpose.msra.mxu0 0
        %1631 = vmatprep.subr.bf16.mxu0 0
        %1632 = vmatpush1.bf16.xpose.msra.mxu0 0
        %1633 = vmatprep.subr.bf16.mxu0 0
        %1634 = vmatpush1.bf16.xpose.msra.mxu0 0
        %1635 = vmatprep.subr.bf16.mxu0 0
        %1636 = vmatpush1.bf16.xpose.msra.mxu0 0
        %1637 = vmatprep.subr.bf16.mxu0 0
        %1638 = vmatpush1.bf16.xpose.msra.mxu0 0
        %1639 = vmatprep.subr.bf16.mxu0 0
        %1640 = vmatpush1.bf16.xpose.msra.mxu0 0
        %1641 = vmatprep.subr.bf16.mxu0 0
        %1642 = vmatpush1.bf16.xpose.msra.mxu0 0
        %1643 = vmatprep.subr.bf16.mxu0 0
        %1644 = vmatpush1.bf16.xpose.msra.mxu0 0
        %1645 = vmatprep.subr.bf16.mxu0 0
        %1646 = vmatpush1.bf16.xpose.msra.mxu0 0
        %1647 = vmatprep.subr.bf16.mxu0 0
        %1648 = vmatpush1.bf16.xpose.msra.mxu0 0
        %1649 = vmatprep.subr.bf16.mxu0 0
        %1650 = vmatpush1.bf16.xpose.msra.mxu0 0
        %1651 = vmatprep.subr.bf16.mxu0 0
        %1652 = vmatpush1.bf16.xpose.msra.mxu0 0
        %1653 = vmatprep.mubr.bf16.mxu0 0
        %1654 = vmatmul.mubr.bf16.gmra.mrb[0].mxu0 %v1263
        %v1655 = vpop.f32.mrb[0].mxu0
        %v1656 = vadd.f32 0.0, %v1655
        %v1657 = vpop.f32.mrb[0].mxu0
        %v1658 = vpop.f32.mrb[0].mxu0
        %v1659 = vadd.f32 0.0, %v1658
        %v1660 = vpop.f32.mrb[0].mxu0
        %1661 = vdwg.mxu0
        %1662 = vmatprep.subr.bf16.mxu0 0
        %1663 = vmatpush1.bf16.xpose.msra.mxu0 %v1298
        %1664 = vmatprep.subr.bf16.mxu0 0
        %1665 = vmatpush1.bf16.xpose.msra.mxu0 0
        %1666 = vmatprep.subr.bf16.mxu0 0
        %1667 = vmatpush1.bf16.xpose.msra.mxu0 0
        %1668 = vmatprep.subr.bf16.mxu0 0
        %1669 = vmatpush1.bf16.xpose.msra.mxu0 0
        %1670 = vmatprep.subr.bf16.mxu0 0
        %1671 = vmatpush1.bf16.xpose.msra.mxu0 0
        %1672 = vmatprep.subr.bf16.mxu0 0
        %1673 = vmatpush1.bf16.xpose.msra.mxu0 0
        %1674 = vmatprep.subr.bf16.mxu0 0
        %1675 = vmatpush1.bf16.xpose.msra.mxu0 0
        %1676 = vmatprep.subr.bf16.mxu0 0
        %1677 = vmatpush1.bf16.xpose.msra.mxu0 0
        %1678 = vmatprep.subr.bf16.mxu0 0
        %1679 = vmatpush1.bf16.xpose.msra.mxu0 0
        %1680 = vmatprep.subr.bf16.mxu0 0
        %1681 = vmatpush1.bf16.xpose.msra.mxu0 0
        %1682 = vmatprep.subr.bf16.mxu0 0
        %1683 = vmatpush1.bf16.xpose.msra.mxu0 0
        %1684 = vmatprep.subr.bf16.mxu0 0
        %1685 = vmatpush1.bf16.xpose.msra.mxu0 0
        %1686 = vmatprep.subr.bf16.mxu0 0
        %1687 = vmatpush1.bf16.xpose.msra.mxu0 0
        %1688 = vmatprep.subr.bf16.mxu0 0
        %1689 = vmatpush1.bf16.xpose.msra.mxu0 0
        %1690 = vmatprep.subr.bf16.mxu0 0
        %1691 = vmatpush1.bf16.xpose.msra.mxu0 0
        %1692 = vmatprep.subr.bf16.mxu0 0
        %1693 = vmatpush1.bf16.xpose.msra.mxu0 0
        %1694 = vmatprep.mubr.bf16.mxu0 0
        %1695 = vmatmul.mubr.bf16.gmra.mrb[0].mxu0 %v1264
        %v1696 = vpop.f32.mrb[0].mxu0
        %v1697 = vadd.f32 0.0, %v1696
        %v1698 = vpop.f32.mrb[0].mxu0
        %v1699 = vpop.f32.mrb[0].mxu0
        %v1700 = vadd.f32 0.0, %v1699
        %v1701 = vpop.f32.mrb[0].mxu0
        %1702 = vdwg.mxu0
        %1703 = vmatprep.subr.bf16.mxu0 0
        %1704 = vmatpush1.bf16.xpose.msra.mxu0 %v1299
        %1705 = vmatprep.subr.bf16.mxu0 0
        %1706 = vmatpush1.bf16.xpose.msra.mxu0 0
        %1707 = vmatprep.subr.bf16.mxu0 0
        %1708 = vmatpush1.bf16.xpose.msra.mxu0 0
        %1709 = vmatprep.subr.bf16.mxu0 0
        %1710 = vmatpush1.bf16.xpose.msra.mxu0 0
        %1711 = vmatprep.subr.bf16.mxu0 0
        %1712 = vmatpush1.bf16.xpose.msra.mxu0 0
        %1713 = vmatprep.subr.bf16.mxu0 0
        %1714 = vmatpush1.bf16.xpose.msra.mxu0 0
        %1715 = vmatprep.subr.bf16.mxu0 0
        %1716 = vmatpush1.bf16.xpose.msra.mxu0 0
        %1717 = vmatprep.subr.bf16.mxu0 0
        %1718 = vmatpush1.bf16.xpose.msra.mxu0 0
        %1719 = vmatprep.subr.bf16.mxu0 0
        %1720 = vmatpush1.bf16.xpose.msra.mxu0 0
        %1721 = vmatprep.subr.bf16.mxu0 0
        %1722 = vmatpush1.bf16.xpose.msra.mxu0 0
        %1723 = vmatprep.subr.bf16.mxu0 0
        %1724 = vmatpush1.bf16.xpose.msra.mxu0 0
        %1725 = vmatprep.subr.bf16.mxu0 0
        %1726 = vmatpush1.bf16.xpose.msra.mxu0 0
        %1727 = vmatprep.subr.bf16.mxu0 0
        %1728 = vmatpush1.bf16.xpose.msra.mxu0 0
        %1729 = vmatprep.subr.bf16.mxu0 0
        %1730 = vmatpush1.bf16.xpose.msra.mxu0 0
        %1731 = vmatprep.subr.bf16.mxu0 0
        %1732 = vmatpush1.bf16.xpose.msra.mxu0 0
        %1733 = vmatprep.subr.bf16.mxu0 0
        %1734 = vmatpush1.bf16.xpose.msra.mxu0 0
        %1735 = vmatprep.mubr.bf16.mxu0 0
        %1736 = vmatmul.mubr.bf16.gmra.mrb[0].mxu0 %v1265
        %v1737 = vpop.f32.mrb[0].mxu0
        %v1738 = vadd.f32 0.0, %v1737
        %v1739 = vpop.f32.mrb[0].mxu0
        %v1740 = vpop.f32.mrb[0].mxu0
        %v1741 = vadd.f32 0.0, %v1740
        %v1742 = vpop.f32.mrb[0].mxu0
        %1743 = vdwg.mxu0
        %vm1744 = vcmask 130048
        %v1745 = vsel %vm1744, %v1369, -inf
        %1746 = vmax.xlane.f32.xlu0 %v1745
        %v1747 = vpop.xlane.xlu0 %1746
        %v1748 = vsel %vm1744, %v1372, -inf
        %1749 = vmax.xlane.f32.xlu0 %v1748
        %v1750 = vpop.xlane.xlu0 %1749
        %v1751 = vsel %vm1744, %v1410, -inf
        %1752 = vmax.xlane.f32.xlu0 %v1751
        %v1753 = vpop.xlane.xlu0 %1752
        %v1754 = vsel %vm1744, %v1413, -inf
        %1755 = vmax.xlane.f32.xlu0 %v1754
        %v1756 = vpop.xlane.xlu0 %1755
        %v1757 = vsel %vm1744, %v1451, -inf
        %1758 = vmax.xlane.f32.xlu0 %v1757
        %v1759 = vpop.xlane.xlu0 %1758
        %v1760 = vsel %vm1744, %v1454, -inf
        %1761 = vmax.xlane.f32.xlu0 %v1760
        %v1762 = vpop.xlane.xlu0 %1761
        %v1763 = vsel %vm1744, %v1492, -inf
        %1764 = vmax.xlane.f32.xlu0 %v1763
        %v1765 = vpop.xlane.xlu0 %1764
        %v1766 = vsel %vm1744, %v1495, -inf
        %1767 = vmax.xlane.f32.xlu0 %v1766
        %v1768 = vpop.xlane.xlu0 %1767
        %v1769 = vsel %vm1744, %v1533, -inf
        %1770 = vmax.xlane.f32.xlu0 %v1769
        %v1771 = vpop.xlane.xlu0 %1770
        %v1772 = vsel %vm1744, %v1536, -inf
        %1773 = vmax.xlane.f32.xlu0 %v1772
        %v1774 = vpop.xlane.xlu0 %1773
        %v1775 = vsel %vm1744, %v1574, -inf
        %1776 = vmax.xlane.f32.xlu0 %v1775
        %v1777 = vpop.xlane.xlu0 %1776
        %v1778 = vsel %vm1744, %v1577, -inf
        %1779 = vmax.xlane.f32.xlu0 %v1778
        %v1780 = vpop.xlane.xlu0 %1779
        %v1781 = vsel %vm1744, %v1615, -inf
        %1782 = vmax.xlane.f32.xlu0 %v1781
        %v1783 = vpop.xlane.xlu0 %1782
        %v1784 = vsel %vm1744, %v1618, -inf
        %1785 = vmax.xlane.f32.xlu0 %v1784
        %v1786 = vpop.xlane.xlu0 %1785
        %v1787 = vsel %vm1744, %v1656, -inf
        %1788 = vmax.xlane.f32.xlu0 %v1787
        %v1789 = vpop.xlane.xlu0 %1788
        %v1790 = vsel %vm1744, %v1659, -inf
        %1791 = vmax.xlane.f32.xlu0 %v1790
        %v1792 = vpop.xlane.xlu0 %1791
        %v1793 = vsel %vm1744, %v1697, -inf
        %1794 = vmax.xlane.f32.xlu0 %v1793
        %v1795 = vpop.xlane.xlu0 %1794
        %v1796 = vsel %vm1744, %v1700, -inf
        %1797 = vmax.xlane.f32.xlu0 %v1796
        %v1798 = vpop.xlane.xlu0 %1797
        %v1799 = vsel %vm1744, %v1738, -inf
        %1800 = vmax.xlane.f32.xlu0 %v1799
        %v1801 = vpop.xlane.xlu0 %1800
        %v1802 = vsel %vm1744, %v1741, -inf
        %1803 = vmax.xlane.f32.xlu0 %v1802
        %v1804 = vpop.xlane.xlu0 %1803
        %v1805 = vsub.f32 %v1369, %v1747
        %v1806 = vsub.f32 %v1372, %v1750
        %v1807 = vsub.f32 %v1410, %v1753
        %v1808 = vsub.f32 %v1413, %v1756
        %v1809 = vsub.f32 %v1451, %v1759
        %v1810 = vsub.f32 %v1454, %v1762
        %v1811 = vsub.f32 %v1492, %v1765
        %v1812 = vsub.f32 %v1495, %v1768
        %v1813 = vsub.f32 %v1533, %v1771
        %v1814 = vsub.f32 %v1536, %v1774
        %v1815 = vsub.f32 %v1574, %v1777
        %v1816 = vsub.f32 %v1577, %v1780
        %v1817 = vsub.f32 %v1615, %v1783
        %v1818 = vsub.f32 %v1618, %v1786
        %v1819 = vsub.f32 %v1656, %v1789
        %v1820 = vsub.f32 %v1659, %v1792
        %v1821 = vsub.f32 %v1697, %v1795
        %v1822 = vsub.f32 %v1700, %v1798
        %v1823 = vsub.f32 %v1738, %v1801
        %v1824 = vsub.f32 %v1741, %v1804
        %v1825 = vmul.f32 %v1805, 1.442695
        %v1826 = vpow.pop %v1825
        %v1827 = vmul.f32 %v1806, 1.442695
        %v1828 = vpow.pop %v1827
        %v1829 = vmul.f32 %v1807, 1.442695
        %v1830 = vpow.pop %v1829
        %v1831 = vmul.f32 %v1808, 1.442695
        %v1832 = vpow.pop %v1831
        %v1833 = vmul.f32 %v1809, 1.442695
        %v1834 = vpow.pop %v1833
        %v1835 = vmul.f32 %v1810, 1.442695
        %v1836 = vpow.pop %v1835
        %v1837 = vmul.f32 %v1811, 1.442695
        %v1838 = vpow.pop %v1837
        %v1839 = vmul.f32 %v1812, 1.442695
        %v1840 = vpow.pop %v1839
        %v1841 = vmul.f32 %v1813, 1.442695
        %v1842 = vpow.pop %v1841
        %v1843 = vmul.f32 %v1814, 1.442695
        %v1844 = vpow.pop %v1843
        %v1845 = vmul.f32 %v1815, 1.442695
        %v1846 = vpow.pop %v1845
        %v1847 = vmul.f32 %v1816, 1.442695
        %v1848 = vpow.pop %v1847
        %v1849 = vmul.f32 %v1817, 1.442695
        %v1850 = vpow.pop %v1849
        %v1851 = vmul.f32 %v1818, 1.442695
        %v1852 = vpow.pop %v1851
        %v1853 = vmul.f32 %v1819, 1.442695
        %v1854 = vpow.pop %v1853
        %v1855 = vmul.f32 %v1820, 1.442695
        %v1856 = vpow.pop %v1855
        %v1857 = vmul.f32 %v1821, 1.442695
        %v1858 = vpow.pop %v1857
        %v1859 = vmul.f32 %v1822, 1.442695
        %v1860 = vpow.pop %v1859
        %v1861 = vmul.f32 %v1823, 1.442695
        %v1862 = vpow.pop %v1861
        %v1863 = vmul.f32 %v1824, 1.442695
        %v1864 = vpow.pop %v1863
        %v1865 = vsel %vm1744, %v1826, 0.0
        %1866 = vadd.xlane.f32.xlu0 %v1865
        %v1867 = vpop.xlane.xlu0 %1866
        %v1868 = vsel %vm1744, %v1828, 0.0
        %1869 = vadd.xlane.f32.xlu0 %v1868
        %v1870 = vpop.xlane.xlu0 %1869
        %v1871 = vsel %vm1744, %v1830, 0.0
        %1872 = vadd.xlane.f32.xlu0 %v1871
        %v1873 = vpop.xlane.xlu0 %1872
        %v1874 = vsel %vm1744, %v1832, 0.0
        %1875 = vadd.xlane.f32.xlu0 %v1874
        %v1876 = vpop.xlane.xlu0 %1875
        %v1877 = vsel %vm1744, %v1834, 0.0
        %1878 = vadd.xlane.f32.xlu0 %v1877
        %v1879 = vpop.xlane.xlu0 %1878
        %v1880 = vsel %vm1744, %v1836, 0.0
        %1881 = vadd.xlane.f32.xlu0 %v1880
        %v1882 = vpop.xlane.xlu0 %1881
        %v1883 = vsel %vm1744, %v1838, 0.0
        %1884 = vadd.xlane.f32.xlu0 %v1883
        %v1885 = vpop.xlane.xlu0 %1884
        %v1886 = vsel %vm1744, %v1840, 0.0
        %1887 = vadd.xlane.f32.xlu0 %v1886
        %v1888 = vpop.xlane.xlu0 %1887
        %v1889 = vsel %vm1744, %v1842, 0.0
        %1890 = vadd.xlane.f32.xlu0 %v1889
        %v1891 = vpop.xlane.xlu0 %1890
        %v1892 = vsel %vm1744, %v1844, 0.0
        %1893 = vadd.xlane.f32.xlu0 %v1892
        %v1894 = vpop.xlane.xlu0 %1893
        %v1895 = vsel %vm1744, %v1846, 0.0
        %1896 = vadd.xlane.f32.xlu0 %v1895
        %v1897 = vpop.xlane.xlu0 %1896
        %v1898 = vsel %vm1744, %v1848, 0.0
        %1899 = vadd.xlane.f32.xlu0 %v1898
        %v1900 = vpop.xlane.xlu0 %1899
        %v1901 = vsel %vm1744, %v1850, 0.0
        %1902 = vadd.xlane.f32.xlu0 %v1901
        %v1903 = vpop.xlane.xlu0 %1902
        %v1904 = vsel %vm1744, %v1852, 0.0
        %1905 = vadd.xlane.f32.xlu0 %v1904
        %v1906 = vpop.xlane.xlu0 %1905
        %v1907 = vsel %vm1744, %v1854, 0.0
        %1908 = vadd.xlane.f32.xlu0 %v1907
        %v1909 = vpop.xlane.xlu0 %1908
        %v1910 = vsel %vm1744, %v1856, 0.0
        %1911 = vadd.xlane.f32.xlu0 %v1910
        %v1912 = vpop.xlane.xlu0 %1911
        %v1913 = vsel %vm1744, %v1858, 0.0
        %1914 = vadd.xlane.f32.xlu0 %v1913
        %v1915 = vpop.xlane.xlu0 %1914
        %v1916 = vsel %vm1744, %v1860, 0.0
        %1917 = vadd.xlane.f32.xlu0 %v1916
        %v1918 = vpop.xlane.xlu0 %1917
        %v1919 = vsel %vm1744, %v1862, 0.0
        %1920 = vadd.xlane.f32.xlu0 %v1919
        %v1921 = vpop.xlane.xlu0 %1920
        %v1922 = vsel %vm1744, %v1864, 0.0
        %1923 = vadd.xlane.f32.xlu0 %v1922
        %v1924 = vpop.xlane.xlu0 %1923
        %v1925 = vrcp.pop %v1867
        %v1926 = vrcp.pop %v1870
        %v1927 = vrcp.pop %v1873
        %v1928 = vrcp.pop %v1876
        %v1929 = vrcp.pop %v1879
        %v1930 = vrcp.pop %v1882
        %v1931 = vrcp.pop %v1885
        %v1932 = vrcp.pop %v1888
        %v1933 = vrcp.pop %v1891
        %v1934 = vrcp.pop %v1894
        %v1935 = vrcp.pop %v1897
        %v1936 = vrcp.pop %v1900
        %v1937 = vrcp.pop %v1903
        %v1938 = vrcp.pop %v1906
        %v1939 = vrcp.pop %v1909
        %v1940 = vrcp.pop %v1912
        %v1941 = vrcp.pop %v1915
        %v1942 = vrcp.pop %v1918
        %v1943 = vrcp.pop %v1921
        %v1944 = vrcp.pop %v1924
        %v1945 = vmul.f32 %v1826, %v1925
        %v1946 = vmul.f32 %v1828, %v1926
        %v1947 = vmul.f32 %v1830, %v1927
        %v1948 = vmul.f32 %v1832, %v1928
        %v1949 = vmul.f32 %v1834, %v1929
        %v1950 = vmul.f32 %v1836, %v1930
        %v1951 = vmul.f32 %v1838, %v1931
        %v1952 = vmul.f32 %v1840, %v1932
        %v1953 = vmul.f32 %v1842, %v1933
        %v1954 = vmul.f32 %v1844, %v1934
        %v1955 = vmul.f32 %v1846, %v1935
        %v1956 = vmul.f32 %v1848, %v1936
        %v1957 = vmul.f32 %v1850, %v1937
        %v1958 = vmul.f32 %v1852, %v1938
        %v1959 = vmul.f32 %v1854, %v1939
        %v1960 = vmul.f32 %v1856, %v1940
        %v1961 = vmul.f32 %v1858, %v1941
        %v1962 = vmul.f32 %v1860, %v1942
        %v1963 = vmul.f32 %v1862, %v1943
        %v1964 = vmul.f32 %v1864, %v1944
        %v1965 = vpack.c.bf16 %v1946, %v1945
        %v1966 = vpack.c.bf16 %v1948, %v1947
        %v1967 = vpack.c.bf16 %v1950, %v1949
        %v1968 = vpack.c.bf16 %v1952, %v1951
        %v1969 = vpack.c.bf16 %v1954, %v1953
        %v1970 = vpack.c.bf16 %v1956, %v1955
        %v1971 = vpack.c.bf16 %v1958, %v1957
        %v1972 = vpack.c.bf16 %v1960, %v1959
        %v1973 = vpack.c.bf16 %v1962, %v1961
        %v1974 = vpack.c.bf16 %v1964, %v1963
        %v1976 = vsel %vm1744, %v1965, 0
        %1978 = vmatprep.subr.bf16.mxu0 0
        %1979 = vmatpush1.bf16.msra.mxu0 %v1324
        %1980 = vmatprep.subr.bf16.mxu0 0
        %1981 = vmatpush1.bf16.msra.mxu0 0
        %1982 = vmatprep.subr.bf16.mxu0 0
        %1983 = vmatpush1.bf16.msra.mxu0 0
        %1984 = vmatprep.subr.bf16.mxu0 0
        %1985 = vmatpush1.bf16.msra.mxu0 0
        %1986 = vmatprep.subr.bf16.mxu0 0
        %1987 = vmatpush1.bf16.msra.mxu0 0
        %1988 = vmatprep.subr.bf16.mxu0 0
        %1989 = vmatpush1.bf16.msra.mxu0 0
        %1990 = vmatprep.subr.bf16.mxu0 0
        %1991 = vmatpush1.bf16.msra.mxu0 0
        %1992 = vmatprep.subr.bf16.mxu0 0
        %1993 = vmatpush1.bf16.msra.mxu0 0
        %1994 = vmatprep.subr.bf16.mxu0 0
        %1995 = vmatpush1.bf16.msra.mxu0 0
        %1996 = vmatprep.subr.bf16.mxu0 0
        %1997 = vmatpush1.bf16.msra.mxu0 0
        %1998 = vmatprep.subr.bf16.mxu0 0
        %1999 = vmatpush1.bf16.msra.mxu0 0
        %2000 = vmatprep.subr.bf16.mxu0 0
        %2001 = vmatpush1.bf16.msra.mxu0 0
        %2002 = vmatprep.subr.bf16.mxu0 0
        %2003 = vmatpush1.bf16.msra.mxu0 0
        %2004 = vmatprep.subr.bf16.mxu0 0
        %2005 = vmatpush1.bf16.msra.mxu0 0
        %2006 = vmatprep.subr.bf16.mxu0 0
        %2007 = vmatpush1.bf16.msra.mxu0 0
        %2008 = vmatprep.subr.bf16.mxu0 0
        %2009 = vmatpush1.bf16.msra.mxu0 0
        %2010 = vmatprep.mubr.bf16.mxu0 0
        %2011 = vmatmul.mubr.bf16.gmra.mrb[0].mxu0 %v1976
        %v2012 = vpop.f32.mrb[0].mxu0
        %v2013 = vadd.f32 0.0, %v2012
        %v2014 = vpop.f32.mrb[0].mxu0
        %v2015 = vpop.f32.mrb[0].mxu0
        %v2016 = vadd.f32 0.0, %v2015
        %v2017 = vpop.f32.mrb[0].mxu0
        %2018 = vdwg.mxu0
        %v2020 = vsel %vm1744, %v1966, 0
        %2022 = vmatprep.subr.bf16.mxu0 0
        %2023 = vmatpush1.bf16.msra.mxu0 %v1325
        %2024 = vmatprep.subr.bf16.mxu0 0
        %2025 = vmatpush1.bf16.msra.mxu0 0
        %2026 = vmatprep.subr.bf16.mxu0 0
        %2027 = vmatpush1.bf16.msra.mxu0 0
        %2028 = vmatprep.subr.bf16.mxu0 0
        %2029 = vmatpush1.bf16.msra.mxu0 0
        %2030 = vmatprep.subr.bf16.mxu0 0
        %2031 = vmatpush1.bf16.msra.mxu0 0
        %2032 = vmatprep.subr.bf16.mxu0 0
        %2033 = vmatpush1.bf16.msra.mxu0 0
        %2034 = vmatprep.subr.bf16.mxu0 0
        %2035 = vmatpush1.bf16.msra.mxu0 0
        %2036 = vmatprep.subr.bf16.mxu0 0
        %2037 = vmatpush1.bf16.msra.mxu0 0
        %2038 = vmatprep.subr.bf16.mxu0 0
        %2039 = vmatpush1.bf16.msra.mxu0 0
        %2040 = vmatprep.subr.bf16.mxu0 0
        %2041 = vmatpush1.bf16.msra.mxu0 0
        %2042 = vmatprep.subr.bf16.mxu0 0
        %2043 = vmatpush1.bf16.msra.mxu0 0
        %2044 = vmatprep.subr.bf16.mxu0 0
        %2045 = vmatpush1.bf16.msra.mxu0 0
        %2046 = vmatprep.subr.bf16.mxu0 0
        %2047 = vmatpush1.bf16.msra.mxu0 0
        %2048 = vmatprep.subr.bf16.mxu0 0
        %2049 = vmatpush1.bf16.msra.mxu0 0
        %2050 = vmatprep.subr.bf16.mxu0 0
        %2051 = vmatpush1.bf16.msra.mxu0 0
        %2052 = vmatprep.subr.bf16.mxu0 0
        %2053 = vmatpush1.bf16.msra.mxu0 0
        %2054 = vmatprep.mubr.bf16.mxu0 0
        %2055 = vmatmul.mubr.bf16.gmra.mrb[0].mxu0 %v2020
        %v2056 = vpop.f32.mrb[0].mxu0
        %v2057 = vadd.f32 0.0, %v2056
        %v2058 = vpop.f32.mrb[0].mxu0
        %v2059 = vpop.f32.mrb[0].mxu0
        %v2060 = vadd.f32 0.0, %v2059
        %v2061 = vpop.f32.mrb[0].mxu0
        %2062 = vdwg.mxu0
        %v2064 = vsel %vm1744, %v1967, 0
        %2066 = vmatprep.subr.bf16.mxu0 0
        %2067 = vmatpush1.bf16.msra.mxu0 %v1326
        %2068 = vmatprep.subr.bf16.mxu0 0
        %2069 = vmatpush1.bf16.msra.mxu0 0
        %2070 = vmatprep.subr.bf16.mxu0 0
        %2071 = vmatpush1.bf16.msra.mxu0 0
        %2072 = vmatprep.subr.bf16.mxu0 0
        %2073 = vmatpush1.bf16.msra.mxu0 0
        %2074 = vmatprep.subr.bf16.mxu0 0
        %2075 = vmatpush1.bf16.msra.mxu0 0
        %2076 = vmatprep.subr.bf16.mxu0 0
        %2077 = vmatpush1.bf16.msra.mxu0 0
        %2078 = vmatprep.subr.bf16.mxu0 0
        %2079 = vmatpush1.bf16.msra.mxu0 0
        %2080 = vmatprep.subr.bf16.mxu0 0
        %2081 = vmatpush1.bf16.msra.mxu0 0
        %2082 = vmatprep.subr.bf16.mxu0 0
        %2083 = vmatpush1.bf16.msra.mxu0 0
        %2084 = vmatprep.subr.bf16.mxu0 0
        %2085 = vmatpush1.bf16.msra.mxu0 0
        %2086 = vmatprep.subr.bf16.mxu0 0
        %2087 = vmatpush1.bf16.msra.mxu0 0
        %2088 = vmatprep.subr.bf16.mxu0 0
        %2089 = vmatpush1.bf16.msra.mxu0 0
        %2090 = vmatprep.subr.bf16.mxu0 0
        %2091 = vmatpush1.bf16.msra.mxu0 0
        %2092 = vmatprep.subr.bf16.mxu0 0
        %2093 = vmatpush1.bf16.msra.mxu0 0
        %2094 = vmatprep.subr.bf16.mxu0 0
        %2095 = vmatpush1.bf16.msra.mxu0 0
        %2096 = vmatprep.subr.bf16.mxu0 0
        %2097 = vmatpush1.bf16.msra.mxu0 0
        %2098 = vmatprep.mubr.bf16.mxu0 0
        %2099 = vmatmul.mubr.bf16.gmra.mrb[0].mxu0 %v2064
        %v2100 = vpop.f32.mrb[0].mxu0
        %v2101 = vadd.f32 0.0, %v2100
        %v2102 = vpop.f32.mrb[0].mxu0
        %v2103 = vpop.f32.mrb[0].mxu0
        %v2104 = vadd.f32 0.0, %v2103
        %v2105 = vpop.f32.mrb[0].mxu0
        %2106 = vdwg.mxu0
        %v2108 = vsel %vm1744, %v1968, 0
        %2110 = vmatprep.subr.bf16.mxu0 0
        %2111 = vmatpush1.bf16.msra.mxu0 %v1327
        %2112 = vmatprep.subr.bf16.mxu0 0
        %2113 = vmatpush1.bf16.msra.mxu0 0
        %2114 = vmatprep.subr.bf16.mxu0 0
        %2115 = vmatpush1.bf16.msra.mxu0 0
        %2116 = vmatprep.subr.bf16.mxu0 0
        %2117 = vmatpush1.bf16.msra.mxu0 0
        %2118 = vmatprep.subr.bf16.mxu0 0
        %2119 = vmatpush1.bf16.msra.mxu0 0
        %2120 = vmatprep.subr.bf16.mxu0 0
        %2121 = vmatpush1.bf16.msra.mxu0 0
        %2122 = vmatprep.subr.bf16.mxu0 0
        %2123 = vmatpush1.bf16.msra.mxu0 0
        %2124 = vmatprep.subr.bf16.mxu0 0
        %2125 = vmatpush1.bf16.msra.mxu0 0
        %2126 = vmatprep.subr.bf16.mxu0 0
        %2127 = vmatpush1.bf16.msra.mxu0 0
        %2128 = vmatprep.subr.bf16.mxu0 0
        %2129 = vmatpush1.bf16.msra.mxu0 0
        %2130 = vmatprep.subr.bf16.mxu0 0
        %2131 = vmatpush1.bf16.msra.mxu0 0
        %2132 = vmatprep.subr.bf16.mxu0 0
        %2133 = vmatpush1.bf16.msra.mxu0 0
        %2134 = vmatprep.subr.bf16.mxu0 0
        %2135 = vmatpush1.bf16.msra.mxu0 0
        %2136 = vmatprep.subr.bf16.mxu0 0
        %2137 = vmatpush1.bf16.msra.mxu0 0
        %2138 = vmatprep.subr.bf16.mxu0 0
        %2139 = vmatpush1.bf16.msra.mxu0 0
        %2140 = vmatprep.subr.bf16.mxu0 0
        %2141 = vmatpush1.bf16.msra.mxu0 0
        %2142 = vmatprep.mubr.bf16.mxu0 0
        %2143 = vmatmul.mubr.bf16.gmra.mrb[0].mxu0 %v2108
        %v2144 = vpop.f32.mrb[0].mxu0
        %v2145 = vadd.f32 0.0, %v2144
        %v2146 = vpop.f32.mrb[0].mxu0
        %v2147 = vpop.f32.mrb[0].mxu0
        %v2148 = vadd.f32 0.0, %v2147
        %v2149 = vpop.f32.mrb[0].mxu0
        %2150 = vdwg.mxu0
        %v2152 = vsel %vm1744, %v1969, 0
        %2154 = vmatprep.subr.bf16.mxu0 0
        %2155 = vmatpush1.bf16.msra.mxu0 %v1328
        %2156 = vmatprep.subr.bf16.mxu0 0
        %2157 = vmatpush1.bf16.msra.mxu0 0
        %2158 = vmatprep.subr.bf16.mxu0 0
        %2159 = vmatpush1.bf16.msra.mxu0 0
        %2160 = vmatprep.subr.bf16.mxu0 0
        %2161 = vmatpush1.bf16.msra.mxu0 0
        %2162 = vmatprep.subr.bf16.mxu0 0
        %2163 = vmatpush1.bf16.msra.mxu0 0
        %2164 = vmatprep.subr.bf16.mxu0 0
        %2165 = vmatpush1.bf16.msra.mxu0 0
        %2166 = vmatprep.subr.bf16.mxu0 0
        %2167 = vmatpush1.bf16.msra.mxu0 0
        %2168 = vmatprep.subr.bf16.mxu0 0
        %2169 = vmatpush1.bf16.msra.mxu0 0
        %2170 = vmatprep.subr.bf16.mxu0 0
        %2171 = vmatpush1.bf16.msra.mxu0 0
        %2172 = vmatprep.subr.bf16.mxu0 0
        %2173 = vmatpush1.bf16.msra.mxu0 0
        %2174 = vmatprep.subr.bf16.mxu0 0
        %2175 = vmatpush1.bf16.msra.mxu0 0
        %2176 = vmatprep.subr.bf16.mxu0 0
        %2177 = vmatpush1.bf16.msra.mxu0 0
        %2178 = vmatprep.subr.bf16.mxu0 0
        %2179 = vmatpush1.bf16.msra.mxu0 0
        %2180 = vmatprep.subr.bf16.mxu0 0
        %2181 = vmatpush1.bf16.msra.mxu0 0
        %2182 = vmatprep.subr.bf16.mxu0 0
        %2183 = vmatpush1.bf16.msra.mxu0 0
        %2184 = vmatprep.subr.bf16.mxu0 0
        %2185 = vmatpush1.bf16.msra.mxu0 0
        %2186 = vmatprep.mubr.bf16.mxu0 0
        %2187 = vmatmul.mubr.bf16.gmra.mrb[0].mxu0 %v2152
        %v2188 = vpop.f32.mrb[0].mxu0
        %v2189 = vadd.f32 0.0, %v2188
        %v2190 = vpop.f32.mrb[0].mxu0
        %v2191 = vpop.f32.mrb[0].mxu0
        %v2192 = vadd.f32 0.0, %v2191
        %v2193 = vpop.f32.mrb[0].mxu0
        %2194 = vdwg.mxu0
        %v2196 = vsel %vm1744, %v1970, 0
        %2198 = vmatprep.subr.bf16.mxu0 0
        %2199 = vmatpush1.bf16.msra.mxu0 %v1329
        %2200 = vmatprep.subr.bf16.mxu0 0
        %2201 = vmatpush1.bf16.msra.mxu0 0
        %2202 = vmatprep.subr.bf16.mxu0 0
        %2203 = vmatpush1.bf16.msra.mxu0 0
        %2204 = vmatprep.subr.bf16.mxu0 0
        %2205 = vmatpush1.bf16.msra.mxu0 0
        %2206 = vmatprep.subr.bf16.mxu0 0
        %2207 = vmatpush1.bf16.msra.mxu0 0
        %2208 = vmatprep.subr.bf16.mxu0 0
        %2209 = vmatpush1.bf16.msra.mxu0 0
        %2210 = vmatprep.subr.bf16.mxu0 0
        %2211 = vmatpush1.bf16.msra.mxu0 0
        %2212 = vmatprep.subr.bf16.mxu0 0
        %2213 = vmatpush1.bf16.msra.mxu0 0
        %2214 = vmatprep.subr.bf16.mxu0 0
        %2215 = vmatpush1.bf16.msra.mxu0 0
        %2216 = vmatprep.subr.bf16.mxu0 0
        %2217 = vmatpush1.bf16.msra.mxu0 0
        %2218 = vmatprep.subr.bf16.mxu0 0
        %2219 = vmatpush1.bf16.msra.mxu0 0
        %2220 = vmatprep.subr.bf16.mxu0 0
        %2221 = vmatpush1.bf16.msra.mxu0 0
        %2222 = vmatprep.subr.bf16.mxu0 0
        %2223 = vmatpush1.bf16.msra.mxu0 0
        %2224 = vmatprep.subr.bf16.mxu0 0
        %2225 = vmatpush1.bf16.msra.mxu0 0
        %2226 = vmatprep.subr.bf16.mxu0 0
        %2227 = vmatpush1.bf16.msra.mxu0 0
        %2228 = vmatprep.subr.bf16.mxu0 0
        %2229 = vmatpush1.bf16.msra.mxu0 0
        %2230 = vmatprep.mubr.bf16.mxu0 0
        %2231 = vmatmul.mubr.bf16.gmra.mrb[0].mxu0 %v2196
        %v2232 = vpop.f32.mrb[0].mxu0
        %v2233 = vadd.f32 0.0, %v2232
        %v2234 = vpop.f32.mrb[0].mxu0
        %v2235 = vpop.f32.mrb[0].mxu0
        %v2236 = vadd.f32 0.0, %v2235
        %v2237 = vpop.f32.mrb[0].mxu0
        %2238 = vdwg.mxu0
        %v2240 = vsel %vm1744, %v1971, 0
        %2242 = vmatprep.subr.bf16.mxu0 0
        %2243 = vmatpush1.bf16.msra.mxu0 %v1330
        %2244 = vmatprep.subr.bf16.mxu0 0
        %2245 = vmatpush1.bf16.msra.mxu0 0
        %2246 = vmatprep.subr.bf16.mxu0 0
        %2247 = vmatpush1.bf16.msra.mxu0 0
        %2248 = vmatprep.subr.bf16.mxu0 0
        %2249 = vmatpush1.bf16.msra.mxu0 0
        %2250 = vmatprep.subr.bf16.mxu0 0
        %2251 = vmatpush1.bf16.msra.mxu0 0
        %2252 = vmatprep.subr.bf16.mxu0 0
        %2253 = vmatpush1.bf16.msra.mxu0 0
        %2254 = vmatprep.subr.bf16.mxu0 0
        %2255 = vmatpush1.bf16.msra.mxu0 0
        %2256 = vmatprep.subr.bf16.mxu0 0
        %2257 = vmatpush1.bf16.msra.mxu0 0
        %2258 = vmatprep.subr.bf16.mxu0 0
        %2259 = vmatpush1.bf16.msra.mxu0 0
        %2260 = vmatprep.subr.bf16.mxu0 0
        %2261 = vmatpush1.bf16.msra.mxu0 0
        %2262 = vmatprep.subr.bf16.mxu0 0
        %2263 = vmatpush1.bf16.msra.mxu0 0
        %2264 = vmatprep.subr.bf16.mxu0 0
        %2265 = vmatpush1.bf16.msra.mxu0 0
        %2266 = vmatprep.subr.bf16.mxu0 0
        %2267 = vmatpush1.bf16.msra.mxu0 0
        %2268 = vmatprep.subr.bf16.mxu0 0
        %2269 = vmatpush1.bf16.msra.mxu0 0
        %2270 = vmatprep.subr.bf16.mxu0 0
        %2271 = vmatpush1.bf16.msra.mxu0 0
        %2272 = vmatprep.subr.bf16.mxu0 0
        %2273 = vmatpush1.bf16.msra.mxu0 0
        %2274 = vmatprep.mubr.bf16.mxu0 0
        %2275 = vmatmul.mubr.bf16.gmra.mrb[0].mxu0 %v2240
        %v2276 = vpop.f32.mrb[0].mxu0
        %v2277 = vadd.f32 0.0, %v2276
        %v2278 = vpop.f32.mrb[0].mxu0
        %v2279 = vpop.f32.mrb[0].mxu0
        %v2280 = vadd.f32 0.0, %v2279
        %v2281 = vpop.f32.mrb[0].mxu0
        %2282 = vdwg.mxu0
        %v2284 = vsel %vm1744, %v1972, 0
        %2286 = vmatprep.subr.bf16.mxu0 0
        %2287 = vmatpush1.bf16.msra.mxu0 %v1331
        %2288 = vmatprep.subr.bf16.mxu0 0
        %2289 = vmatpush1.bf16.msra.mxu0 0
        %2290 = vmatprep.subr.bf16.mxu0 0
        %2291 = vmatpush1.bf16.msra.mxu0 0
        %2292 = vmatprep.subr.bf16.mxu0 0
        %2293 = vmatpush1.bf16.msra.mxu0 0
        %2294 = vmatprep.subr.bf16.mxu0 0
        %2295 = vmatpush1.bf16.msra.mxu0 0
        %2296 = vmatprep.subr.bf16.mxu0 0
        %2297 = vmatpush1.bf16.msra.mxu0 0
        %2298 = vmatprep.subr.bf16.mxu0 0
        %2299 = vmatpush1.bf16.msra.mxu0 0
        %2300 = vmatprep.subr.bf16.mxu0 0
        %2301 = vmatpush1.bf16.msra.mxu0 0
        %2302 = vmatprep.subr.bf16.mxu0 0
        %2303 = vmatpush1.bf16.msra.mxu0 0
        %2304 = vmatprep.subr.bf16.mxu0 0
        %2305 = vmatpush1.bf16.msra.mxu0 0
        %2306 = vmatprep.subr.bf16.mxu0 0
        %2307 = vmatpush1.bf16.msra.mxu0 0
        %2308 = vmatprep.subr.bf16.mxu0 0
        %2309 = vmatpush1.bf16.msra.mxu0 0
        %2310 = vmatprep.subr.bf16.mxu0 0
        %2311 = vmatpush1.bf16.msra.mxu0 0
        %2312 = vmatprep.subr.bf16.mxu0 0
        %2313 = vmatpush1.bf16.msra.mxu0 0
        %2314 = vmatprep.subr.bf16.mxu0 0
        %2315 = vmatpush1.bf16.msra.mxu0 0
        %2316 = vmatprep.subr.bf16.mxu0 0
        %2317 = vmatpush1.bf16.msra.mxu0 0
        %2318 = vmatprep.mubr.bf16.mxu0 0
        %2319 = vmatmul.mubr.bf16.gmra.mrb[0].mxu0 %v2284
        %v2320 = vpop.f32.mrb[0].mxu0
        %v2321 = vadd.f32 0.0, %v2320
        %v2322 = vpop.f32.mrb[0].mxu0
        %v2323 = vpop.f32.mrb[0].mxu0
        %v2324 = vadd.f32 0.0, %v2323
        %v2325 = vpop.f32.mrb[0].mxu0
        %2326 = vdwg.mxu0
        %v2328 = vsel %vm1744, %v1973, 0
        %2330 = vmatprep.subr.bf16.mxu0 0
        %2331 = vmatpush1.bf16.msra.mxu0 %v1332
        %2332 = vmatprep.subr.bf16.mxu0 0
        %2333 = vmatpush1.bf16.msra.mxu0 0
        %2334 = vmatprep.subr.bf16.mxu0 0
        %2335 = vmatpush1.bf16.msra.mxu0 0
        %2336 = vmatprep.subr.bf16.mxu0 0
        %2337 = vmatpush1.bf16.msra.mxu0 0
        %2338 = vmatprep.subr.bf16.mxu0 0
        %2339 = vmatpush1.bf16.msra.mxu0 0
        %2340 = vmatprep.subr.bf16.mxu0 0
        %2341 = vmatpush1.bf16.msra.mxu0 0
        %2342 = vmatprep.subr.bf16.mxu0 0
        %2343 = vmatpush1.bf16.msra.mxu0 0
        %2344 = vmatprep.subr.bf16.mxu0 0
        %2345 = vmatpush1.bf16.msra.mxu0 0
        %2346 = vmatprep.subr.bf16.mxu0 0
        %2347 = vmatpush1.bf16.msra.mxu0 0
        %2348 = vmatprep.subr.bf16.mxu0 0
        %2349 = vmatpush1.bf16.msra.mxu0 0
        %2350 = vmatprep.subr.bf16.mxu0 0
        %2351 = vmatpush1.bf16.msra.mxu0 0
        %2352 = vmatprep.subr.bf16.mxu0 0
        %2353 = vmatpush1.bf16.msra.mxu0 0
        %2354 = vmatprep.subr.bf16.mxu0 0
        %2355 = vmatpush1.bf16.msra.mxu0 0
        %2356 = vmatprep.subr.bf16.mxu0 0
        %2357 = vmatpush1.bf16.msra.mxu0 0
        %2358 = vmatprep.subr.bf16.mxu0 0
        %2359 = vmatpush1.bf16.msra.mxu0 0
        %2360 = vmatprep.subr.bf16.mxu0 0
        %2361 = vmatpush1.bf16.msra.mxu0 0
        %2362 = vmatprep.mubr.bf16.mxu0 0
        %2363 = vmatmul.mubr.bf16.gmra.mrb[0].mxu0 %v2328
        %v2364 = vpop.f32.mrb[0].mxu0
        %v2365 = vadd.f32 0.0, %v2364
        %v2366 = vpop.f32.mrb[0].mxu0
        %v2367 = vpop.f32.mrb[0].mxu0
        %v2368 = vadd.f32 0.0, %v2367
        %v2369 = vpop.f32.mrb[0].mxu0
        %2370 = vdwg.mxu0
        %v2372 = vsel %vm1744, %v1974, 0
        %2374 = vmatprep.subr.bf16.mxu0 0
        %2375 = vmatpush1.bf16.msra.mxu0 %v1333
        %2376 = vmatprep.subr.bf16.mxu0 0
        %2377 = vmatpush1.bf16.msra.mxu0 0
        %2378 = vmatprep.subr.bf16.mxu0 0
        %2379 = vmatpush1.bf16.msra.mxu0 0
        %2380 = vmatprep.subr.bf16.mxu0 0
        %2381 = vmatpush1.bf16.msra.mxu0 0
        %2382 = vmatprep.subr.bf16.mxu0 0
        %2383 = vmatpush1.bf16.msra.mxu0 0
        %2384 = vmatprep.subr.bf16.mxu0 0
        %2385 = vmatpush1.bf16.msra.mxu0 0
        %2386 = vmatprep.subr.bf16.mxu0 0
        %2387 = vmatpush1.bf16.msra.mxu0 0
        %2388 = vmatprep.subr.bf16.mxu0 0
        %2389 = vmatpush1.bf16.msra.mxu0 0
        %2390 = vmatprep.subr.bf16.mxu0 0
        %2391 = vmatpush1.bf16.msra.mxu0 0
        %2392 = vmatprep.subr.bf16.mxu0 0
        %2393 = vmatpush1.bf16.msra.mxu0 0
        %2394 = vmatprep.subr.bf16.mxu0 0
        %2395 = vmatpush1.bf16.msra.mxu0 0
        %2396 = vmatprep.subr.bf16.mxu0 0
        %2397 = vmatpush1.bf16.msra.mxu0 0
        %2398 = vmatprep.subr.bf16.mxu0 0
        %2399 = vmatpush1.bf16.msra.mxu0 0
        %2400 = vmatprep.subr.bf16.mxu0 0
        %2401 = vmatpush1.bf16.msra.mxu0 0
        %2402 = vmatprep.subr.bf16.mxu0 0
        %2403 = vmatpush1.bf16.msra.mxu0 0
        %2404 = vmatprep.subr.bf16.mxu0 0
        %2405 = vmatpush1.bf16.msra.mxu0 0
        %2406 = vmatprep.mubr.bf16.mxu0 0
        %2407 = vmatmul.mubr.bf16.gmra.mrb[0].mxu0 %v2372
        %v2408 = vpop.f32.mrb[0].mxu0
        %v2409 = vadd.f32 0.0, %v2408
        %v2410 = vpop.f32.mrb[0].mxu0
        %v2411 = vpop.f32.mrb[0].mxu0
        %v2412 = vadd.f32 0.0, %v2411
        %v2413 = vpop.f32.mrb[0].mxu0
        %2414 = vdwg.mxu0
        %v2415 = vpack.c.bf16 %v2016, %v2013
        %v2416 = vpack.c.bf16 %v2060, %v2057
        %v2417 = vpack.c.bf16 %v2104, %v2101
        %v2418 = vpack.c.bf16 %v2148, %v2145
        %v2419 = vpack.c.bf16 %v2192, %v2189
        %v2420 = vpack.c.bf16 %v2236, %v2233
        %v2421 = vpack.c.bf16 %v2280, %v2277
        %v2422 = vpack.c.bf16 %v2324, %v2321
        %v2423 = vpack.c.bf16 %v2368, %v2365
        %v2424 = vpack.c.bf16 %v2412, %v2409
        %v2441 = vunpack.c.l.b16 %v315
        %v2442 = vunpack.c.l.b16 %v319
        %v2443 = vunpack.c.l.b16 %v323
        %v2444 = vunpack.c.l.b16 %v327
        %v2445 = vunpack.c.l.b16 %v331
        %v2446 = vunpack.c.l.b16 %v335
        %v2447 = vunpack.c.l.b16 %v339
        %v2448 = vunpack.c.l.b16 %v343
        %v2449 = vunpack.c.l.b16 %v347
        %v2450 = vunpack.c.l.b16 %v351
        %v2451 = vunpack.c.l.b16 %v355
        %v2452 = vunpack.c.l.b16 %v359
        %v2453 = vunpack.c.l.b16 %v363
        %v2454 = vunpack.c.l.b16 %v367
        %v2455 = vunpack.c.l.b16 %v371
        %v2456 = vunpack.c.l.b16 %v375
        %v2457 = vpack.c.b16 %v2442, %v2441
        %v2458 = vpack.c.b16 %v2444, %v2443
        %v2459 = vpack.c.b16 %v2446, %v2445
        %v2460 = vpack.c.b16 %v2448, %v2447
        %v2461 = vpack.c.b16 %v2450, %v2449
        %v2462 = vpack.c.b16 %v2452, %v2451
        %v2463 = vpack.c.b16 %v2454, %v2453
        %v2464 = vpack.c.b16 %v2456, %v2455
        %2473 = vmatprep.subr.bf16.mxu0 0
        %2474 = vmatpush1.bf16.msra.mxu0 %v2457
        %2475 = vmatprep.subr.bf16.mxu0 0
        %2476 = vmatpush1.bf16.msra.mxu0 %v2458
        %2477 = vmatprep.subr.bf16.mxu0 0
        %2478 = vmatpush1.bf16.msra.mxu0 %v2459
        %2479 = vmatprep.subr.bf16.mxu0 0
        %2480 = vmatpush1.bf16.msra.mxu0 %v2460
        %2481 = vmatprep.subr.bf16.mxu0 0
        %2482 = vmatpush1.bf16.msra.mxu0 %v2461
        %2483 = vmatprep.subr.bf16.mxu0 0
        %2484 = vmatpush1.bf16.msra.mxu0 %v2462
        %2485 = vmatprep.subr.bf16.mxu0 0
        %2486 = vmatpush1.bf16.msra.mxu0 %v2463
        %2487 = vmatprep.subr.bf16.mxu0 0
        %2488 = vmatpush1.bf16.msra.mxu0 %v2464
        %2489 = vmatprep.subr.bf16.mxu0 0
        %2490 = vmatpush1.bf16.msra.mxu0 0
        %2491 = vmatprep.subr.bf16.mxu0 0
        %2492 = vmatpush1.bf16.msra.mxu0 0
        %2493 = vmatprep.subr.bf16.mxu0 0
        %2494 = vmatpush1.bf16.msra.mxu0 0
        %2495 = vmatprep.subr.bf16.mxu0 0
        %2496 = vmatpush1.bf16.msra.mxu0 0
        %2497 = vmatprep.subr.bf16.mxu0 0
        %2498 = vmatpush1.bf16.msra.mxu0 0
        %2499 = vmatprep.subr.bf16.mxu0 0
        %2500 = vmatpush1.bf16.msra.mxu0 0
        %2501 = vmatprep.subr.bf16.mxu0 0
        %2502 = vmatpush1.bf16.msra.mxu0 0
        %2503 = vmatprep.subr.bf16.mxu0 0
        %2504 = vmatpush1.bf16.msra.mxu0 0
        %2505 = vmatprep.mubr.bf16.mxu0 0
        %2506 = vmatmul.mubr.bf16.gmra.mrb[0].mxu0 %v2415
        %v2507 = vpop.f32.mrb[0].mxu0
        %v2508 = vadd.f32 0.0, %v2507
        %v2509 = vpop.f32.mrb[0].mxu0
        %v2510 = vpop.f32.mrb[0].mxu0
        %v2511 = vadd.f32 0.0, %v2510
        %v2512 = vpop.f32.mrb[0].mxu0
        %2513 = vmatprep.mubr.bf16.mxu0 0
        %2514 = vmatmul.mubr.bf16.gmra.mrb[0].mxu0 %v2416
        %v2515 = vpop.f32.mrb[0].mxu0
        %v2516 = vadd.f32 0.0, %v2515
        %v2517 = vpop.f32.mrb[0].mxu0
        %v2518 = vpop.f32.mrb[0].mxu0
        %v2519 = vadd.f32 0.0, %v2518
        %v2520 = vpop.f32.mrb[0].mxu0
        %2521 = vmatprep.mubr.bf16.mxu0 0
        %2522 = vmatmul.mubr.bf16.gmra.mrb[0].mxu0 %v2417
        %v2523 = vpop.f32.mrb[0].mxu0
        %v2524 = vadd.f32 0.0, %v2523
        %v2525 = vpop.f32.mrb[0].mxu0
        %v2526 = vpop.f32.mrb[0].mxu0
        %v2527 = vadd.f32 0.0, %v2526
        %v2528 = vpop.f32.mrb[0].mxu0
        %2529 = vmatprep.mubr.bf16.mxu0 0
        %2530 = vmatmul.mubr.bf16.gmra.mrb[0].mxu0 %v2418
        %v2531 = vpop.f32.mrb[0].mxu0
        %v2532 = vadd.f32 0.0, %v2531
        %v2533 = vpop.f32.mrb[0].mxu0
        %v2534 = vpop.f32.mrb[0].mxu0
        %v2535 = vadd.f32 0.0, %v2534
        %v2536 = vpop.f32.mrb[0].mxu0
        %2537 = vmatprep.mubr.bf16.mxu0 0
        %2538 = vmatmul.mubr.bf16.gmra.mrb[0].mxu0 %v2419
        %v2539 = vpop.f32.mrb[0].mxu0
        %v2540 = vadd.f32 0.0, %v2539
        %v2541 = vpop.f32.mrb[0].mxu0
        %v2542 = vpop.f32.mrb[0].mxu0
        %v2543 = vadd.f32 0.0, %v2542
        %v2544 = vpop.f32.mrb[0].mxu0
        %2545 = vmatprep.mubr.bf16.mxu0 0
        %2546 = vmatmul.mubr.bf16.gmra.mrb[0].mxu0 %v2420
        %v2547 = vpop.f32.mrb[0].mxu0
        %v2548 = vadd.f32 0.0, %v2547
        %v2549 = vpop.f32.mrb[0].mxu0
        %v2550 = vpop.f32.mrb[0].mxu0
        %v2551 = vadd.f32 0.0, %v2550
        %v2552 = vpop.f32.mrb[0].mxu0
        %2553 = vmatprep.mubr.bf16.mxu0 0
        %2554 = vmatmul.mubr.bf16.gmra.mrb[0].mxu0 %v2421
        %v2555 = vpop.f32.mrb[0].mxu0
        %v2556 = vadd.f32 0.0, %v2555
        %v2557 = vpop.f32.mrb[0].mxu0
        %v2558 = vpop.f32.mrb[0].mxu0
        %v2559 = vadd.f32 0.0, %v2558
        %v2560 = vpop.f32.mrb[0].mxu0
        %2561 = vmatprep.mubr.bf16.mxu0 0
        %2562 = vmatmul.mubr.bf16.gmra.mrb[0].mxu0 %v2422
        %v2563 = vpop.f32.mrb[0].mxu0
        %v2564 = vadd.f32 0.0, %v2563
        %v2565 = vpop.f32.mrb[0].mxu0
        %v2566 = vpop.f32.mrb[0].mxu0
        %v2567 = vadd.f32 0.0, %v2566
        %v2568 = vpop.f32.mrb[0].mxu0
        %2569 = vmatprep.mubr.bf16.mxu0 0
        %2570 = vmatmul.mubr.bf16.gmra.mrb[0].mxu0 %v2423
        %v2571 = vpop.f32.mrb[0].mxu0
        %v2572 = vadd.f32 0.0, %v2571
        %v2573 = vpop.f32.mrb[0].mxu0
        %v2574 = vpop.f32.mrb[0].mxu0
        %v2575 = vadd.f32 0.0, %v2574
        %v2576 = vpop.f32.mrb[0].mxu0
        %2577 = vmatprep.mubr.bf16.mxu0 0
        %2578 = vmatmul.mubr.bf16.gmra.mrb[0].mxu0 %v2424
        %v2579 = vpop.f32.mrb[0].mxu0
        %v2580 = vadd.f32 0.0, %v2579
        %v2581 = vpop.f32.mrb[0].mxu0
        %v2582 = vpop.f32.mrb[0].mxu0
        %v2583 = vadd.f32 0.0, %v2582
        %v2584 = vpop.f32.mrb[0].mxu0
        %2585 = vdwg.mxu0
        %v2586 = vadd.f32 %v575, %v2508
        %v2587 = vadd.f32 %v576, %v2511
        %v2588 = vadd.f32 %v577, %v2516
        %v2589 = vadd.f32 %v578, %v2519
        %v2590 = vadd.f32 %v579, %v2524
        %v2591 = vadd.f32 %v580, %v2527
        %v2592 = vadd.f32 %v581, %v2532
        %v2593 = vadd.f32 %v582, %v2535
        %v2594 = vadd.f32 %v583, %v2540
        %v2595 = vadd.f32 %v584, %v2543
        %v2596 = vadd.f32 %v585, %v2548
        %v2597 = vadd.f32 %v586, %v2551
        %v2598 = vadd.f32 %v587, %v2556
        %v2599 = vadd.f32 %v588, %v2559
        %v2600 = vadd.f32 %v589, %v2564
        %v2601 = vadd.f32 %v590, %v2567
        %v2602 = vadd.f32 %v591, %v2572
        %v2603 = vadd.f32 %v592, %v2575
        %v2604 = vadd.f32 %v593, %v2580
        %v2605 = vadd.f32 %v594, %v2583
        %v2606 = vlaneseq
        %v2607 = vshrl.u32 %v2606, 7
        %v2608 = vsub.s32 6, %v2607
        %v2609 = vrot.slane %v377, %v2608
        %v2610 = vadd.f32 %v2586, %v2609
        %v2611 = vadd.f32 %v2587, %v2609
        %v2612 = vadd.f32 %v2588, %v2609
        %v2613 = vadd.f32 %v2589, %v2609
        %v2614 = vadd.f32 %v2590, %v2609
        %v2615 = vadd.f32 %v2591, %v2609
        %v2616 = vadd.f32 %v2592, %v2609
        %v2617 = vadd.f32 %v2593, %v2609
        %v2618 = vadd.f32 %v2594, %v2609
        %v2619 = vadd.f32 %v2595, %v2609
        %v2620 = vadd.f32 %v2596, %v2609
        %v2621 = vadd.f32 %v2597, %v2609
        %v2622 = vadd.f32 %v2598, %v2609
        %v2623 = vadd.f32 %v2599, %v2609
        %v2624 = vadd.f32 %v2600, %v2609
        %v2625 = vadd.f32 %v2601, %v2609
        %v2626 = vadd.f32 %v2602, %v2609
        %v2627 = vadd.f32 %v2603, %v2609
        %v2628 = vadd.f32 %v2604, %v2609
        %v2629 = vadd.f32 %v2605, %v2609
        %2630 = vadd.xlane.f32.xlu0 %v2610
        %v2631 = vpop.xlane.xlu0 %2630
        %2632 = vadd.xlane.f32.xlu0 %v2611
        %v2633 = vpop.xlane.xlu0 %2632
        %2634 = vadd.xlane.f32.xlu0 %v2612
        %v2635 = vpop.xlane.xlu0 %2634
        %2636 = vadd.xlane.f32.xlu0 %v2613
        %v2637 = vpop.xlane.xlu0 %2636
        %2638 = vadd.xlane.f32.xlu0 %v2614
        %v2639 = vpop.xlane.xlu0 %2638
        %2640 = vadd.xlane.f32.xlu0 %v2615
        %v2641 = vpop.xlane.xlu0 %2640
        %2642 = vadd.xlane.f32.xlu0 %v2616
        %v2643 = vpop.xlane.xlu0 %2642
        %2644 = vadd.xlane.f32.xlu0 %v2617
        %v2645 = vpop.xlane.xlu0 %2644
        %2646 = vadd.xlane.f32.xlu0 %v2618
        %v2647 = vpop.xlane.xlu0 %2646
        %2648 = vadd.xlane.f32.xlu0 %v2619
        %v2649 = vpop.xlane.xlu0 %2648
        %2650 = vadd.xlane.f32.xlu0 %v2620
        %v2651 = vpop.xlane.xlu0 %2650
        %2652 = vadd.xlane.f32.xlu0 %v2621
        %v2653 = vpop.xlane.xlu0 %2652
        %2654 = vadd.xlane.f32.xlu0 %v2622
        %v2655 = vpop.xlane.xlu0 %2654
        %2656 = vadd.xlane.f32.xlu0 %v2623
        %v2657 = vpop.xlane.xlu0 %2656
        %2658 = vadd.xlane.f32.xlu0 %v2624
        %v2659 = vpop.xlane.xlu0 %2658
        %2660 = vadd.xlane.f32.xlu0 %v2625
        %v2661 = vpop.xlane.xlu0 %2660
        %2662 = vadd.xlane.f32.xlu0 %v2626
        %v2663 = vpop.xlane.xlu0 %2662
        %2664 = vadd.xlane.f32.xlu0 %v2627
        %v2665 = vpop.xlane.xlu0 %2664
        %2666 = vadd.xlane.f32.xlu0 %v2628
        %v2667 = vpop.xlane.xlu0 %2666
        %2668 = vadd.xlane.f32.xlu0 %v2629
        %v2669 = vpop.xlane.xlu0 %2668
        %v2670 = vmul.f32 %v2631, %v635
        %v2671 = vmul.f32 %v2633, %v635
        %v2672 = vmul.f32 %v2635, %v635
        %v2673 = vmul.f32 %v2637, %v635
        %v2674 = vmul.f32 %v2639, %v635
        %v2675 = vmul.f32 %v2641, %v635
        %v2676 = vmul.f32 %v2643, %v635
        %v2677 = vmul.f32 %v2645, %v635
        %v2678 = vmul.f32 %v2647, %v635
        %v2679 = vmul.f32 %v2649, %v635
        %v2680 = vmul.f32 %v2651, %v635
        %v2681 = vmul.f32 %v2653, %v635
        %v2682 = vmul.f32 %v2655, %v635
        %v2683 = vmul.f32 %v2657, %v635
        %v2684 = vmul.f32 %v2659, %v635
        %v2685 = vmul.f32 %v2661, %v635
        %v2686 = vmul.f32 %v2663, %v635
        %v2687 = vmul.f32 %v2665, %v635
        %v2688 = vmul.f32 %v2667, %v635
        %v2689 = vmul.f32 %v2669, %v635
        %v2690 = vsub.f32 %v2610, %v2670
        %v2691 = vsub.f32 %v2611, %v2671
        %v2692 = vsub.f32 %v2612, %v2672
        %v2693 = vsub.f32 %v2613, %v2673
        %v2694 = vsub.f32 %v2614, %v2674
        %v2695 = vsub.f32 %v2615, %v2675
        %v2696 = vsub.f32 %v2616, %v2676
        %v2697 = vsub.f32 %v2617, %v2677
        %v2698 = vsub.f32 %v2618, %v2678
        %v2699 = vsub.f32 %v2619, %v2679
        %v2700 = vsub.f32 %v2620, %v2680
        %v2701 = vsub.f32 %v2621, %v2681
        %v2702 = vsub.f32 %v2622, %v2682
        %v2703 = vsub.f32 %v2623, %v2683
        %v2704 = vsub.f32 %v2624, %v2684
        %v2705 = vsub.f32 %v2625, %v2685
        %v2706 = vsub.f32 %v2626, %v2686
        %v2707 = vsub.f32 %v2627, %v2687
        %v2708 = vsub.f32 %v2628, %v2688
        %v2709 = vsub.f32 %v2629, %v2689
        %v2710 = vmul.f32 %v2690, %v2690
        %v2711 = vmul.f32 %v2691, %v2691
        %v2712 = vmul.f32 %v2692, %v2692
        %v2713 = vmul.f32 %v2693, %v2693
        %v2714 = vmul.f32 %v2694, %v2694
        %v2715 = vmul.f32 %v2695, %v2695
        %v2716 = vmul.f32 %v2696, %v2696
        %v2717 = vmul.f32 %v2697, %v2697
        %v2718 = vmul.f32 %v2698, %v2698
        %v2719 = vmul.f32 %v2699, %v2699
        %v2720 = vmul.f32 %v2700, %v2700
        %v2721 = vmul.f32 %v2701, %v2701
        %v2722 = vmul.f32 %v2702, %v2702
        %v2723 = vmul.f32 %v2703, %v2703
        %v2724 = vmul.f32 %v2704, %v2704
        %v2725 = vmul.f32 %v2705, %v2705
        %v2726 = vmul.f32 %v2706, %v2706
        %v2727 = vmul.f32 %v2707, %v2707
        %v2728 = vmul.f32 %v2708, %v2708
        %v2729 = vmul.f32 %v2709, %v2709
        %2730 = vadd.xlane.f32.xlu0 %v2710
        %v2731 = vpop.xlane.xlu0 %2730
        %2732 = vadd.xlane.f32.xlu0 %v2711
        %v2733 = vpop.xlane.xlu0 %2732
        %2734 = vadd.xlane.f32.xlu0 %v2712
        %v2735 = vpop.xlane.xlu0 %2734
        %2736 = vadd.xlane.f32.xlu0 %v2713
        %v2737 = vpop.xlane.xlu0 %2736
        %2738 = vadd.xlane.f32.xlu0 %v2714
        %v2739 = vpop.xlane.xlu0 %2738
        %2740 = vadd.xlane.f32.xlu0 %v2715
        %v2741 = vpop.xlane.xlu0 %2740
        %2742 = vadd.xlane.f32.xlu0 %v2716
        %v2743 = vpop.xlane.xlu0 %2742
        %2744 = vadd.xlane.f32.xlu0 %v2717
        %v2745 = vpop.xlane.xlu0 %2744
        %2746 = vadd.xlane.f32.xlu0 %v2718
        %v2747 = vpop.xlane.xlu0 %2746
        %2748 = vadd.xlane.f32.xlu0 %v2719
        %v2749 = vpop.xlane.xlu0 %2748
        %2750 = vadd.xlane.f32.xlu0 %v2720
        %v2751 = vpop.xlane.xlu0 %2750
        %2752 = vadd.xlane.f32.xlu0 %v2721
        %v2753 = vpop.xlane.xlu0 %2752
        %2754 = vadd.xlane.f32.xlu0 %v2722
        %v2755 = vpop.xlane.xlu0 %2754
        %2756 = vadd.xlane.f32.xlu0 %v2723
        %v2757 = vpop.xlane.xlu0 %2756
        %2758 = vadd.xlane.f32.xlu0 %v2724
        %v2759 = vpop.xlane.xlu0 %2758
        %2760 = vadd.xlane.f32.xlu0 %v2725
        %v2761 = vpop.xlane.xlu0 %2760
        %2762 = vadd.xlane.f32.xlu0 %v2726
        %v2763 = vpop.xlane.xlu0 %2762
        %2764 = vadd.xlane.f32.xlu0 %v2727
        %v2765 = vpop.xlane.xlu0 %2764
        %2766 = vadd.xlane.f32.xlu0 %v2728
        %v2767 = vpop.xlane.xlu0 %2766
        %2768 = vadd.xlane.f32.xlu0 %v2729
        %v2769 = vpop.xlane.xlu0 %2768
        %v2770 = vmul.f32 %v2731, %v635
        %v2771 = vmul.f32 %v2733, %v635
        %v2772 = vmul.f32 %v2735, %v635
        %v2773 = vmul.f32 %v2737, %v635
        %v2774 = vmul.f32 %v2739, %v635
        %v2775 = vmul.f32 %v2741, %v635
        %v2776 = vmul.f32 %v2743, %v635
        %v2777 = vmul.f32 %v2745, %v635
        %v2778 = vmul.f32 %v2747, %v635
        %v2779 = vmul.f32 %v2749, %v635
        %v2780 = vmul.f32 %v2751, %v635
        %v2781 = vmul.f32 %v2753, %v635
        %v2782 = vmul.f32 %v2755, %v635
        %v2783 = vmul.f32 %v2757, %v635
        %v2784 = vmul.f32 %v2759, %v635
        %v2785 = vmul.f32 %v2761, %v635
        %v2786 = vmul.f32 %v2763, %v635
        %v2787 = vmul.f32 %v2765, %v635
        %v2788 = vmul.f32 %v2767, %v635
        %v2789 = vmul.f32 %v2769, %v635
        %v2790 = vadd.f32 %v2770, 1e-05
        %v2791 = vadd.f32 %v2771, 1e-05
        %v2792 = vadd.f32 %v2772, 1e-05
        %v2793 = vadd.f32 %v2773, 1e-05
        %v2794 = vadd.f32 %v2774, 1e-05
        %v2795 = vadd.f32 %v2775, 1e-05
        %v2796 = vadd.f32 %v2776, 1e-05
        %v2797 = vadd.f32 %v2777, 1e-05
        %v2798 = vadd.f32 %v2778, 1e-05
        %v2799 = vadd.f32 %v2779, 1e-05
        %v2800 = vadd.f32 %v2780, 1e-05
        %v2801 = vadd.f32 %v2781, 1e-05
        %v2802 = vadd.f32 %v2782, 1e-05
        %v2803 = vadd.f32 %v2783, 1e-05
        %v2804 = vadd.f32 %v2784, 1e-05
        %v2805 = vadd.f32 %v2785, 1e-05
        %v2806 = vadd.f32 %v2786, 1e-05
        %v2807 = vadd.f32 %v2787, 1e-05
        %v2808 = vadd.f32 %v2788, 1e-05
        %v2809 = vadd.f32 %v2789, 1e-05
        %v2810 = vrsqrt.pop %v2790
        %v2811 = vrsqrt.pop %v2791
        %v2812 = vrsqrt.pop %v2792
        %v2813 = vrsqrt.pop %v2793
        %v2814 = vrsqrt.pop %v2794
        %v2815 = vrsqrt.pop %v2795
        %v2816 = vrsqrt.pop %v2796
        %v2817 = vrsqrt.pop %v2797
        %v2818 = vrsqrt.pop %v2798
        %v2819 = vrsqrt.pop %v2799
        %v2820 = vrsqrt.pop %v2800
        %v2821 = vrsqrt.pop %v2801
        %v2822 = vrsqrt.pop %v2802
        %v2823 = vrsqrt.pop %v2803
        %v2824 = vrsqrt.pop %v2804
        %v2825 = vrsqrt.pop %v2805
        %v2826 = vrsqrt.pop %v2806
        %v2827 = vrsqrt.pop %v2807
        %v2828 = vrsqrt.pop %v2808
        %v2829 = vrsqrt.pop %v2809
        %v2830 = vmul.f32 %v2690, %v2810
        %v2831 = vmul.f32 %v2691, %v2811
        %v2832 = vmul.f32 %v2692, %v2812
        %v2833 = vmul.f32 %v2693, %v2813
        %v2834 = vmul.f32 %v2694, %v2814
        %v2835 = vmul.f32 %v2695, %v2815
        %v2836 = vmul.f32 %v2696, %v2816
        %v2837 = vmul.f32 %v2697, %v2817
        %v2838 = vmul.f32 %v2698, %v2818
        %v2839 = vmul.f32 %v2699, %v2819
        %v2840 = vmul.f32 %v2700, %v2820
        %v2841 = vmul.f32 %v2701, %v2821
        %v2842 = vmul.f32 %v2702, %v2822
        %v2843 = vmul.f32 %v2703, %v2823
        %v2844 = vmul.f32 %v2704, %v2824
        %v2845 = vmul.f32 %v2705, %v2825
        %v2846 = vmul.f32 %v2706, %v2826
        %v2847 = vmul.f32 %v2707, %v2827
        %v2848 = vmul.f32 %v2708, %v2828
        %v2849 = vmul.f32 %v2709, %v2829
        %v2850 = vlaneseq
        %v2851 = vshrl.u32 %v2850, 7
        %v2852 = vsub.s32 7, %v2851
        %v2853 = vrot.slane %v377, %v2852
        %v2854 = vmul.f32 %v2830, %v2853
        %v2855 = vmul.f32 %v2831, %v2853
        %v2856 = vmul.f32 %v2832, %v2853
        %v2857 = vmul.f32 %v2833, %v2853
        %v2858 = vmul.f32 %v2834, %v2853
        %v2859 = vmul.f32 %v2835, %v2853
        %v2860 = vmul.f32 %v2836, %v2853
        %v2861 = vmul.f32 %v2837, %v2853
        %v2862 = vmul.f32 %v2838, %v2853
        %v2863 = vmul.f32 %v2839, %v2853
        %v2864 = vmul.f32 %v2840, %v2853
        %v2865 = vmul.f32 %v2841, %v2853
        %v2866 = vmul.f32 %v2842, %v2853
        %v2867 = vmul.f32 %v2843, %v2853
        %v2868 = vmul.f32 %v2844, %v2853
        %v2869 = vmul.f32 %v2845, %v2853
        %v2870 = vmul.f32 %v2846, %v2853
        %v2871 = vmul.f32 %v2847, %v2853
        %v2872 = vmul.f32 %v2848, %v2853
        %v2873 = vmul.f32 %v2849, %v2853
        %v2874 = vlaneseq
        %v2875 = vshrl.u32 %v2874, 7
        %v2876 = vsub.s32 0, %v2875
        %v2877 = vrot.slane %v378, %v2876
        %v2878 = vadd.f32 %v2854, %v2877
        %v2879 = vadd.f32 %v2855, %v2877
        %v2880 = vadd.f32 %v2856, %v2877
        %v2881 = vadd.f32 %v2857, %v2877
        %v2882 = vadd.f32 %v2858, %v2877
        %v2883 = vadd.f32 %v2859, %v2877
        %v2884 = vadd.f32 %v2860, %v2877
        %v2885 = vadd.f32 %v2861, %v2877
        %v2886 = vadd.f32 %v2862, %v2877
        %v2887 = vadd.f32 %v2863, %v2877
        %v2888 = vadd.f32 %v2864, %v2877
        %v2889 = vadd.f32 %v2865, %v2877
        %v2890 = vadd.f32 %v2866, %v2877
        %v2891 = vadd.f32 %v2867, %v2877
        %v2892 = vadd.f32 %v2868, %v2877
        %v2893 = vadd.f32 %v2869, %v2877
        %v2894 = vadd.f32 %v2870, %v2877
        %v2895 = vadd.f32 %v2871, %v2877
        %v2896 = vadd.f32 %v2872, %v2877
        %v2897 = vadd.f32 %v2873, %v2877
        %v2898 = vpack.c.bf16 %v2879, %v2878
        %v2899 = vpack.c.bf16 %v2881, %v2880
        %v2900 = vpack.c.bf16 %v2883, %v2882
        %v2901 = vpack.c.bf16 %v2885, %v2884
        %v2902 = vpack.c.bf16 %v2887, %v2886
        %v2903 = vpack.c.bf16 %v2889, %v2888
        %v2904 = vpack.c.bf16 %v2891, %v2890
        %v2905 = vpack.c.bf16 %v2893, %v2892
        %v2906 = vpack.c.bf16 %v2895, %v2894
        %v2907 = vpack.c.bf16 %v2897, %v2896
        %v2924 = vunpack.c.h.b16 %v315
        %v2925 = vunpack.c.l.b16 %v316
        %v2926 = vunpack.c.h.b16 %v319
        %v2927 = vunpack.c.l.b16 %v320
        %v2928 = vunpack.c.h.b16 %v323
        %v2929 = vunpack.c.l.b16 %v324
        %v2930 = vunpack.c.h.b16 %v327
        %v2931 = vunpack.c.l.b16 %v328
        %v2932 = vunpack.c.h.b16 %v331
        %v2933 = vunpack.c.l.b16 %v332
        %v2934 = vunpack.c.h.b16 %v335
        %v2935 = vunpack.c.l.b16 %v336
        %v2936 = vunpack.c.h.b16 %v339
        %v2937 = vunpack.c.l.b16 %v340
        %v2938 = vunpack.c.h.b16 %v343
        %v2939 = vunpack.c.l.b16 %v344
        %v2940 = vunpack.c.h.b16 %v347
        %v2941 = vunpack.c.l.b16 %v348
        %v2942 = vunpack.c.h.b16 %v351
        %v2943 = vunpack.c.l.b16 %v352
        %v2944 = vunpack.c.h.b16 %v355
        %v2945 = vunpack.c.l.b16 %v356
        %v2946 = vunpack.c.h.b16 %v359
        %v2947 = vunpack.c.l.b16 %v360
        %v2948 = vunpack.c.h.b16 %v363
        %v2949 = vunpack.c.l.b16 %v364
        %v2950 = vunpack.c.h.b16 %v367
        %v2951 = vunpack.c.l.b16 %v368
        %v2952 = vunpack.c.h.b16 %v371
        %v2953 = vunpack.c.l.b16 %v372
        %v2954 = vunpack.c.h.b16 %v375
        %v2955 = vunpack.c.l.b16 %v376
        %v2956 = vpack.c.b16 %v2926, %v2924
        %v2957 = vpack.c.b16 %v2927, %v2925
        %v2958 = vpack.c.b16 %v2930, %v2928
        %v2959 = vpack.c.b16 %v2931, %v2929
        %v2960 = vpack.c.b16 %v2934, %v2932
        %v2961 = vpack.c.b16 %v2935, %v2933
        %v2962 = vpack.c.b16 %v2938, %v2936
        %v2963 = vpack.c.b16 %v2939, %v2937
        %v2964 = vpack.c.b16 %v2942, %v2940
        %v2965 = vpack.c.b16 %v2943, %v2941
        %v2966 = vpack.c.b16 %v2946, %v2944
        %v2967 = vpack.c.b16 %v2947, %v2945
        %v2968 = vpack.c.b16 %v2950, %v2948
        %v2969 = vpack.c.b16 %v2951, %v2949
        %v2970 = vpack.c.b16 %v2954, %v2952
        %v2971 = vpack.c.b16 %v2955, %v2953
        %2988 = vmatprep.subr.bf16.mxu0 %v2957
        %2989 = vmatpush1.bf16.msra.mxu0 %v2956
        %2990 = vmatprep.subr.bf16.mxu0 %v2959
        %2991 = vmatpush1.bf16.msra.mxu0 %v2958
        %2992 = vmatprep.subr.bf16.mxu0 %v2961
        %2993 = vmatpush1.bf16.msra.mxu0 %v2960
        %2994 = vmatprep.subr.bf16.mxu0 %v2963
        %2995 = vmatpush1.bf16.msra.mxu0 %v2962
        %2996 = vmatprep.subr.bf16.mxu0 %v2965
        %2997 = vmatpush1.bf16.msra.mxu0 %v2964
        %2998 = vmatprep.subr.bf16.mxu0 %v2967
        %2999 = vmatpush1.bf16.msra.mxu0 %v2966
        %3000 = vmatprep.subr.bf16.mxu0 %v2969
        %3001 = vmatpush1.bf16.msra.mxu0 %v2968
        %3002 = vmatprep.subr.bf16.mxu0 %v2971
        %3003 = vmatpush1.bf16.msra.mxu0 %v2970
        %3004 = vmatprep.subr.bf16.mxu0 0
        %3005 = vmatpush1.bf16.msra.mxu0 0
        %3006 = vmatprep.subr.bf16.mxu0 0
        %3007 = vmatpush1.bf16.msra.mxu0 0
        %3008 = vmatprep.subr.bf16.mxu0 0
        %3009 = vmatpush1.bf16.msra.mxu0 0
        %3010 = vmatprep.subr.bf16.mxu0 0
        %3011 = vmatpush1.bf16.msra.mxu0 0
        %3012 = vmatprep.subr.bf16.mxu0 0
        %3013 = vmatpush1.bf16.msra.mxu0 0
        %3014 = vmatprep.subr.bf16.mxu0 0
        %3015 = vmatpush1.bf16.msra.mxu0 0
        %3016 = vmatprep.subr.bf16.mxu0 0
        %3017 = vmatpush1.bf16.msra.mxu0 0
        %3018 = vmatprep.subr.bf16.mxu0 0
        %3019 = vmatpush1.bf16.msra.mxu0 0
        %3020 = vmatprep.mubr.bf16.mxu0 0
        %3021 = vmatmul.mubr.bf16.gmra.mrb[0].mxu0 %v2898
        %v3022 = vpop.f32.mrb[0].mxu0
        %v3023 = vadd.f32 0.0, %v3022
        %v3024 = vpop.f32.mrb[0].mxu0
        %v3025 = vadd.f32 0.0, %v3024
        %v3026 = vpop.f32.mrb[0].mxu0
        %v3027 = vadd.f32 0.0, %v3026
        %v3028 = vpop.f32.mrb[0].mxu0
        %v3029 = vadd.f32 0.0, %v3028
        %3030 = vmatprep.mubr.bf16.mxu0 0
        %3031 = vmatmul.mubr.bf16.gmra.mrb[0].mxu0 %v2899
        %v3032 = vpop.f32.mrb[0].mxu0
        %v3033 = vadd.f32 0.0, %v3032
        %v3034 = vpop.f32.mrb[0].mxu0
        %v3035 = vadd.f32 0.0, %v3034
        %v3036 = vpop.f32.mrb[0].mxu0
        %v3037 = vadd.f32 0.0, %v3036
        %v3038 = vpop.f32.mrb[0].mxu0
        %v3039 = vadd.f32 0.0, %v3038
        %3040 = vmatprep.mubr.bf16.mxu0 0
        %3041 = vmatmul.mubr.bf16.gmra.mrb[0].mxu0 %v2900
        %v3042 = vpop.f32.mrb[0].mxu0
        %v3043 = vadd.f32 0.0, %v3042
        %v3044 = vpop.f32.mrb[0].mxu0
        %v3045 = vadd.f32 0.0, %v3044
        %v3046 = vpop.f32.mrb[0].mxu0
        %v3047 = vadd.f32 0.0, %v3046
        %v3048 = vpop.f32.mrb[0].mxu0
        %v3049 = vadd.f32 0.0, %v3048
        %3050 = vmatprep.mubr.bf16.mxu0 0
        %3051 = vmatmul.mubr.bf16.gmra.mrb[0].mxu0 %v2901
        %v3052 = vpop.f32.mrb[0].mxu0
        %v3053 = vadd.f32 0.0, %v3052
        %v3054 = vpop.f32.mrb[0].mxu0
        %v3055 = vadd.f32 0.0, %v3054
        %v3056 = vpop.f32.mrb[0].mxu0
        %v3057 = vadd.f32 0.0, %v3056
        %v3058 = vpop.f32.mrb[0].mxu0
        %v3059 = vadd.f32 0.0, %v3058
        %3060 = vmatprep.mubr.bf16.mxu0 0
        %3061 = vmatmul.mubr.bf16.gmra.mrb[0].mxu0 %v2902
        %v3062 = vpop.f32.mrb[0].mxu0
        %v3063 = vadd.f32 0.0, %v3062
        %v3064 = vpop.f32.mrb[0].mxu0
        %v3065 = vadd.f32 0.0, %v3064
        %v3066 = vpop.f32.mrb[0].mxu0
        %v3067 = vadd.f32 0.0, %v3066
        %v3068 = vpop.f32.mrb[0].mxu0
        %v3069 = vadd.f32 0.0, %v3068
        %3070 = vmatprep.mubr.bf16.mxu0 0
        %3071 = vmatmul.mubr.bf16.gmra.mrb[0].mxu0 %v2903
        %v3072 = vpop.f32.mrb[0].mxu0
        %v3073 = vadd.f32 0.0, %v3072
        %v3074 = vpop.f32.mrb[0].mxu0
        %v3075 = vadd.f32 0.0, %v3074
        %v3076 = vpop.f32.mrb[0].mxu0
        %v3077 = vadd.f32 0.0, %v3076
        %v3078 = vpop.f32.mrb[0].mxu0
        %v3079 = vadd.f32 0.0, %v3078
        %3080 = vmatprep.mubr.bf16.mxu0 0
        %3081 = vmatmul.mubr.bf16.gmra.mrb[0].mxu0 %v2904
        %v3082 = vpop.f32.mrb[0].mxu0
        %v3083 = vadd.f32 0.0, %v3082
        %v3084 = vpop.f32.mrb[0].mxu0
        %v3085 = vadd.f32 0.0, %v3084
        %v3086 = vpop.f32.mrb[0].mxu0
        %v3087 = vadd.f32 0.0, %v3086
        %v3088 = vpop.f32.mrb[0].mxu0
        %v3089 = vadd.f32 0.0, %v3088
        %3090 = vmatprep.mubr.bf16.mxu0 0
        %3091 = vmatmul.mubr.bf16.gmra.mrb[0].mxu0 %v2905
        %v3092 = vpop.f32.mrb[0].mxu0
        %v3093 = vadd.f32 0.0, %v3092
        %v3094 = vpop.f32.mrb[0].mxu0
        %v3095 = vadd.f32 0.0, %v3094
        %v3096 = vpop.f32.mrb[0].mxu0
        %v3097 = vadd.f32 0.0, %v3096
        %v3098 = vpop.f32.mrb[0].mxu0
        %v3099 = vadd.f32 0.0, %v3098
        %3100 = vmatprep.mubr.bf16.mxu0 0
        %3101 = vmatmul.mubr.bf16.gmra.mrb[0].mxu0 %v2906
        %v3102 = vpop.f32.mrb[0].mxu0
        %v3103 = vadd.f32 0.0, %v3102
        %v3104 = vpop.f32.mrb[0].mxu0
        %v3105 = vadd.f32 0.0, %v3104
        %v3106 = vpop.f32.mrb[0].mxu0
        %v3107 = vadd.f32 0.0, %v3106
        %v3108 = vpop.f32.mrb[0].mxu0
        %v3109 = vadd.f32 0.0, %v3108
        %3110 = vmatprep.mubr.bf16.mxu0 0
        %3111 = vmatmul.mubr.bf16.gmra.mrb[0].mxu0 %v2907
        %v3112 = vpop.f32.mrb[0].mxu0
        %v3113 = vadd.f32 0.0, %v3112
        %v3114 = vpop.f32.mrb[0].mxu0
        %v3115 = vadd.f32 0.0, %v3114
        %v3116 = vpop.f32.mrb[0].mxu0
        %v3117 = vadd.f32 0.0, %v3116
        %v3118 = vpop.f32.mrb[0].mxu0
        %v3119 = vadd.f32 0.0, %v3118
        %3120 = vdwg.mxu0
        %v3121 = vlaneseq
        %v3122 = vshrl.u32 %v3121, 7
        %v3123 = vsub.s32 1, %v3122
        %v3124 = vrot.slane %v378, %v3123
        %v3125 = vadd.f32 %v3023, %v3124
        %v3126 = vadd.f32 %v3027, %v3124
        %v3127 = vadd.f32 %v3033, %v3124
        %v3128 = vadd.f32 %v3037, %v3124
        %v3129 = vadd.f32 %v3043, %v3124
        %v3130 = vadd.f32 %v3047, %v3124
        %v3131 = vadd.f32 %v3053, %v3124
        %v3132 = vadd.f32 %v3057, %v3124
        %v3133 = vadd.f32 %v3063, %v3124
        %v3134 = vadd.f32 %v3067, %v3124
        %v3135 = vadd.f32 %v3073, %v3124
        %v3136 = vadd.f32 %v3077, %v3124
        %v3137 = vadd.f32 %v3083, %v3124
        %v3138 = vadd.f32 %v3087, %v3124
        %v3139 = vadd.f32 %v3093, %v3124
        %v3140 = vadd.f32 %v3097, %v3124
        %v3141 = vadd.f32 %v3103, %v3124
        %v3142 = vadd.f32 %v3107, %v3124
        %v3143 = vadd.f32 %v3113, %v3124
        %v3144 = vadd.f32 %v3117, %v3124
        %v3145 = vlaneseq
        %v3146 = vshrl.u32 %v3145, 7
        %v3147 = vsub.s32 2, %v3146
        %v3148 = vrot.slane %v378, %v3147
        %v3149 = vadd.f32 %v3025, %v3148
        %v3150 = vadd.f32 %v3029, %v3148
        %v3151 = vadd.f32 %v3035, %v3148
        %v3152 = vadd.f32 %v3039, %v3148
        %v3153 = vadd.f32 %v3045, %v3148
        %v3154 = vadd.f32 %v3049, %v3148
        %v3155 = vadd.f32 %v3055, %v3148
        %v3156 = vadd.f32 %v3059, %v3148
        %v3157 = vadd.f32 %v3065, %v3148
        %v3158 = vadd.f32 %v3069, %v3148
        %v3159 = vadd.f32 %v3075, %v3148
        %v3160 = vadd.f32 %v3079, %v3148
        %v3161 = vadd.f32 %v3085, %v3148
        %v3162 = vadd.f32 %v3089, %v3148
        %v3163 = vadd.f32 %v3095, %v3148
        %v3164 = vadd.f32 %v3099, %v3148
        %v3165 = vadd.f32 %v3105, %v3148
        %v3166 = vadd.f32 %v3109, %v3148
        %v3167 = vadd.f32 %v3115, %v3148
        %v3168 = vadd.f32 %v3119, %v3148
        %v3169 = vxor.u32 %v3149, 2147483648
        %v3170 = vxor.u32 %v3150, 2147483648
        %v3171 = vxor.u32 %v3151, 2147483648
        %v3172 = vxor.u32 %v3152, 2147483648
        %v3173 = vxor.u32 %v3153, 2147483648
        %v3174 = vxor.u32 %v3154, 2147483648
        %v3175 = vxor.u32 %v3155, 2147483648
        %v3176 = vxor.u32 %v3156, 2147483648
        %v3177 = vxor.u32 %v3157, 2147483648
        %v3178 = vxor.u32 %v3158, 2147483648
        %v3179 = vxor.u32 %v3159, 2147483648
        %v3180 = vxor.u32 %v3160, 2147483648
        %v3181 = vxor.u32 %v3161, 2147483648
        %v3182 = vxor.u32 %v3162, 2147483648
        %v3183 = vxor.u32 %v3163, 2147483648
        %v3184 = vxor.u32 %v3164, 2147483648
        %v3185 = vxor.u32 %v3165, 2147483648
        %v3186 = vxor.u32 %v3166, 2147483648
        %v3187 = vxor.u32 %v3167, 2147483648
        %v3188 = vxor.u32 %v3168, 2147483648
        %v3189 = vmul.f32 %v3169, 1.442695
        %v3190 = vpow.pop %v3189
        %v3191 = vmul.f32 %v3170, 1.442695
        %v3192 = vpow.pop %v3191
        %v3193 = vmul.f32 %v3171, 1.442695
        %v3194 = vpow.pop %v3193
        %v3195 = vmul.f32 %v3172, 1.442695
        %v3196 = vpow.pop %v3195
        %v3197 = vmul.f32 %v3173, 1.442695
        %v3198 = vpow.pop %v3197
        %v3199 = vmul.f32 %v3174, 1.442695
        %v3200 = vpow.pop %v3199
        %v3201 = vmul.f32 %v3175, 1.442695
        %v3202 = vpow.pop %v3201
        %v3203 = vmul.f32 %v3176, 1.442695
        %v3204 = vpow.pop %v3203
        %v3205 = vmul.f32 %v3177, 1.442695
        %v3206 = vpow.pop %v3205
        %v3207 = vmul.f32 %v3178, 1.442695
        %v3208 = vpow.pop %v3207
        %v3209 = vmul.f32 %v3179, 1.442695
        %v3210 = vpow.pop %v3209
        %v3211 = vmul.f32 %v3180, 1.442695
        %v3212 = vpow.pop %v3211
        %v3213 = vmul.f32 %v3181, 1.442695
        %v3214 = vpow.pop %v3213
        %v3215 = vmul.f32 %v3182, 1.442695
        %v3216 = vpow.pop %v3215
        %v3217 = vmul.f32 %v3183, 1.442695
        %v3218 = vpow.pop %v3217
        %v3219 = vmul.f32 %v3184, 1.442695
        %v3220 = vpow.pop %v3219
        %v3221 = vmul.f32 %v3185, 1.442695
        %v3222 = vpow.pop %v3221
        %v3223 = vmul.f32 %v3186, 1.442695
        %v3224 = vpow.pop %v3223
        %v3225 = vmul.f32 %v3187, 1.442695
        %v3226 = vpow.pop %v3225
        %v3227 = vmul.f32 %v3188, 1.442695
        %v3228 = vpow.pop %v3227
        %v3229 = vadd.f32 %v3190, 1.0
        %v3230 = vadd.f32 %v3192, 1.0
        %v3231 = vadd.f32 %v3194, 1.0
        %v3232 = vadd.f32 %v3196, 1.0
        %v3233 = vadd.f32 %v3198, 1.0
        %v3234 = vadd.f32 %v3200, 1.0
        %v3235 = vadd.f32 %v3202, 1.0
        %v3236 = vadd.f32 %v3204, 1.0
        %v3237 = vadd.f32 %v3206, 1.0
        %v3238 = vadd.f32 %v3208, 1.0
        %v3239 = vadd.f32 %v3210, 1.0
        %v3240 = vadd.f32 %v3212, 1.0
        %v3241 = vadd.f32 %v3214, 1.0
        %v3242 = vadd.f32 %v3216, 1.0
        %v3243 = vadd.f32 %v3218, 1.0
        %v3244 = vadd.f32 %v3220, 1.0
        %v3245 = vadd.f32 %v3222, 1.0
        %v3246 = vadd.f32 %v3224, 1.0
        %v3247 = vadd.f32 %v3226, 1.0
        %v3248 = vadd.f32 %v3228, 1.0
        %v3249 = vrcp.pop %v3229
        %v3250 = vmul.f32 1.0, %v3249
        %v3251 = vrcp.pop %v3230
        %v3252 = vmul.f32 1.0, %v3251
        %v3253 = vrcp.pop %v3231
        %v3254 = vmul.f32 1.0, %v3253
        %v3255 = vrcp.pop %v3232
        %v3256 = vmul.f32 1.0, %v3255
        %v3257 = vrcp.pop %v3233
        %v3258 = vmul.f32 1.0, %v3257
        %v3259 = vrcp.pop %v3234
        %v3260 = vmul.f32 1.0, %v3259
        %v3261 = vrcp.pop %v3235
        %v3262 = vmul.f32 1.0, %v3261
        %v3263 = vrcp.pop %v3236
        %v3264 = vmul.f32 1.0, %v3263
        %v3265 = vrcp.pop %v3237
        %v3266 = vmul.f32 1.0, %v3265
        %v3267 = vrcp.pop %v3238
        %v3268 = vmul.f32 1.0, %v3267
        %v3269 = vrcp.pop %v3239
        %v3270 = vmul.f32 1.0, %v3269
        %v3271 = vrcp.pop %v3240
        %v3272 = vmul.f32 1.0, %v3271
        %v3273 = vrcp.pop %v3241
        %v3274 = vmul.f32 1.0, %v3273
        %v3275 = vrcp.pop %v3242
        %v3276 = vmul.f32 1.0, %v3275
        %v3277 = vrcp.pop %v3243
        %v3278 = vmul.f32 1.0, %v3277
        %v3279 = vrcp.pop %v3244
        %v3280 = vmul.f32 1.0, %v3279
        %v3281 = vrcp.pop %v3245
        %v3282 = vmul.f32 1.0, %v3281
        %v3283 = vrcp.pop %v3246
        %v3284 = vmul.f32 1.0, %v3283
        %v3285 = vrcp.pop %v3247
        %v3286 = vmul.f32 1.0, %v3285
        %v3287 = vrcp.pop %v3248
        %v3288 = vmul.f32 1.0, %v3287
        %v3289 = vmul.f32 %v3125, %v3250
        %v3290 = vmul.f32 %v3126, %v3252
        %v3291 = vmul.f32 %v3127, %v3254
        %v3292 = vmul.f32 %v3128, %v3256
        %v3293 = vmul.f32 %v3129, %v3258
        %v3294 = vmul.f32 %v3130, %v3260
        %v3295 = vmul.f32 %v3131, %v3262
        %v3296 = vmul.f32 %v3132, %v3264
        %v3297 = vmul.f32 %v3133, %v3266
        %v3298 = vmul.f32 %v3134, %v3268
        %v3299 = vmul.f32 %v3135, %v3270
        %v3300 = vmul.f32 %v3136, %v3272
        %v3301 = vmul.f32 %v3137, %v3274
        %v3302 = vmul.f32 %v3138, %v3276
        %v3303 = vmul.f32 %v3139, %v3278
        %v3304 = vmul.f32 %v3140, %v3280
        %v3305 = vmul.f32 %v3141, %v3282
        %v3306 = vmul.f32 %v3142, %v3284
        %v3307 = vmul.f32 %v3143, %v3286
        %v3308 = vmul.f32 %v3144, %v3288
        %v3309 = vstv %s290
        %v3310 = vmul.f32 %v3289, %v3309
        %v3311 = vmul.f32 %v3290, %v3309
        %v3312 = vstv %s292
        %v3313 = vmul.f32 %v3307, %v3312
        %v3314 = vmul.f32 %v3308, %v3312
        %v3315 = vlaneseq
        %v3316 = vshrl.u32 %v3315, 7
        %v3317 = vsub.s32 3, %v3316
        %v3318 = vrot.slane %v378, %v3317
        %v3319 = vmul.f32 %v3310, %v3318
        %v3320 = vmul.f32 %v3311, %v3318
        %v3321 = vmul.f32 %v3291, %v3318
        %v3322 = vmul.f32 %v3292, %v3318
        %v3323 = vmul.f32 %v3293, %v3318
        %v3324 = vmul.f32 %v3294, %v3318
        %v3325 = vmul.f32 %v3295, %v3318
        %v3326 = vmul.f32 %v3296, %v3318
        %v3327 = vmul.f32 %v3297, %v3318
        %v3328 = vmul.f32 %v3298, %v3318
        %v3329 = vmul.f32 %v3299, %v3318
        %v3330 = vmul.f32 %v3300, %v3318
        %v3331 = vmul.f32 %v3301, %v3318
        %v3332 = vmul.f32 %v3302, %v3318
        %v3333 = vmul.f32 %v3303, %v3318
        %v3334 = vmul.f32 %v3304, %v3318
        %v3335 = vlaneseq
        %v3336 = vshrl.u32 %v3335, 7
        %v3337 = vsub.s32 4, %v3336
        %v3338 = vrot.slane %v378, %v3337
        %v3339 = vmul.f32 %v3291, %v3338
        %v3340 = vmul.f32 %v3292, %v3338
        %v3341 = vmul.f32 %v3293, %v3338
        %v3342 = vmul.f32 %v3294, %v3338
        %v3343 = vmul.f32 %v3295, %v3338
        %v3344 = vmul.f32 %v3296, %v3338
        %v3345 = vmul.f32 %v3297, %v3338
        %v3346 = vmul.f32 %v3298, %v3338
        %v3347 = vmul.f32 %v3299, %v3338
        %v3348 = vmul.f32 %v3300, %v3338
        %v3349 = vmul.f32 %v3301, %v3338
        %v3350 = vmul.f32 %v3302, %v3338
        %v3351 = vmul.f32 %v3303, %v3338
        %v3352 = vmul.f32 %v3304, %v3338
        %v3353 = vmul.f32 %v3305, %v3338
        %v3354 = vmul.f32 %v3306, %v3338
        %v3355 = vadd.f32 %v3319, %v3339
        %v3356 = vadd.f32 %v3320, %v3340
        %v3357 = vadd.f32 %v3321, %v3341
        %v3358 = vadd.f32 %v3322, %v3342
        %v3359 = vadd.f32 %v3323, %v3343
        %v3360 = vadd.f32 %v3324, %v3344
        %v3361 = vadd.f32 %v3325, %v3345
        %v3362 = vadd.f32 %v3326, %v3346
        %v3363 = vadd.f32 %v3327, %v3347
        %v3364 = vadd.f32 %v3328, %v3348
        %v3365 = vadd.f32 %v3329, %v3349
        %v3366 = vadd.f32 %v3330, %v3350
        %v3367 = vadd.f32 %v3331, %v3351
        %v3368 = vadd.f32 %v3332, %v3352
        %v3369 = vadd.f32 %v3333, %v3353
        %v3370 = vadd.f32 %v3334, %v3354
        %v3371 = vlaneseq
        %v3372 = vshrl.u32 %v3371, 7
        %v3373 = vsub.s32 5, %v3372
        %v3374 = vrot.slane %v378, %v3373
        %v3375 = vmul.f32 %v3293, %v3374
        %v3376 = vmul.f32 %v3294, %v3374
        %v3377 = vmul.f32 %v3295, %v3374
        %v3378 = vmul.f32 %v3296, %v3374
        %v3379 = vmul.f32 %v3297, %v3374
        %v3380 = vmul.f32 %v3298, %v3374
        %v3381 = vmul.f32 %v3299, %v3374
        %v3382 = vmul.f32 %v3300, %v3374
        %v3383 = vmul.f32 %v3301, %v3374
        %v3384 = vmul.f32 %v3302, %v3374
        %v3385 = vmul.f32 %v3303, %v3374
        %v3386 = vmul.f32 %v3304, %v3374
        %v3387 = vmul.f32 %v3305, %v3374
        %v3388 = vmul.f32 %v3306, %v3374
        %v3389 = vmul.f32 %v3313, %v3374
        %v3390 = vmul.f32 %v3314, %v3374
        %v3391 = vadd.f32 %v3355, %v3375
        %v3392 = vadd.f32 %v3356, %v3376
        %v3393 = vadd.f32 %v3357, %v3377
        %v3394 = vadd.f32 %v3358, %v3378
        %v3395 = vadd.f32 %v3359, %v3379
        %v3396 = vadd.f32 %v3360, %v3380
        %v3397 = vadd.f32 %v3361, %v3381
        %v3398 = vadd.f32 %v3362, %v3382
        %v3399 = vadd.f32 %v3363, %v3383
        %v3400 = vadd.f32 %v3364, %v3384
        %v3401 = vadd.f32 %v3365, %v3385
        %v3402 = vadd.f32 %v3366, %v3386
        %v3403 = vadd.f32 %v3367, %v3387
        %v3404 = vadd.f32 %v3368, %v3388
        %v3405 = vadd.f32 %v3369, %v3389
        %v3406 = vadd.f32 %v3370, %v3390
        %v3407 = vlaneseq
        %v3408 = vshrl.u32 %v3407, 7
        %v3409 = vsub.s32 6, %v3408
        %v3410 = vrot.slane %v378, %v3409
        %v3411 = vadd.f32 %v3391, %v3410
        %v3412 = vadd.f32 %v3392, %v3410
        %v3413 = vadd.f32 %v3393, %v3410
        %v3414 = vadd.f32 %v3394, %v3410
        %v3415 = vadd.f32 %v3395, %v3410
        %v3416 = vadd.f32 %v3396, %v3410
        %v3417 = vadd.f32 %v3397, %v3410
        %v3418 = vadd.f32 %v3398, %v3410
        %v3419 = vadd.f32 %v3399, %v3410
        %v3420 = vadd.f32 %v3400, %v3410
        %v3421 = vadd.f32 %v3401, %v3410
        %v3422 = vadd.f32 %v3402, %v3410
        %v3423 = vadd.f32 %v3403, %v3410
        %v3424 = vadd.f32 %v3404, %v3410
        %v3425 = vadd.f32 %v3405, %v3410
        %v3426 = vadd.f32 %v3406, %v3410
        %v3427 = vxor.u32 %v3411, 2147483648
        %v3428 = vxor.u32 %v3412, 2147483648
        %v3429 = vxor.u32 %v3413, 2147483648
        %v3430 = vxor.u32 %v3414, 2147483648
        %v3431 = vxor.u32 %v3415, 2147483648
        %v3432 = vxor.u32 %v3416, 2147483648
        %v3433 = vxor.u32 %v3417, 2147483648
        %v3434 = vxor.u32 %v3418, 2147483648
        %v3435 = vxor.u32 %v3419, 2147483648
        %v3436 = vxor.u32 %v3420, 2147483648
        %v3437 = vxor.u32 %v3421, 2147483648
        %v3438 = vxor.u32 %v3422, 2147483648
        %v3439 = vxor.u32 %v3423, 2147483648
        %v3440 = vxor.u32 %v3424, 2147483648
        %v3441 = vxor.u32 %v3425, 2147483648
        %v3442 = vxor.u32 %v3426, 2147483648
        %v3443 = vmul.f32 %v3427, 1.442695
        %v3444 = vpow.pop %v3443
        %v3445 = vmul.f32 %v3428, 1.442695
        %v3446 = vpow.pop %v3445
        %v3447 = vmul.f32 %v3429, 1.442695
        %v3448 = vpow.pop %v3447
        %v3449 = vmul.f32 %v3430, 1.442695
        %v3450 = vpow.pop %v3449
        %v3451 = vmul.f32 %v3431, 1.442695
        %v3452 = vpow.pop %v3451
        %v3453 = vmul.f32 %v3432, 1.442695
        %v3454 = vpow.pop %v3453
        %v3455 = vmul.f32 %v3433, 1.442695
        %v3456 = vpow.pop %v3455
        %v3457 = vmul.f32 %v3434, 1.442695
        %v3458 = vpow.pop %v3457
        %v3459 = vmul.f32 %v3435, 1.442695
        %v3460 = vpow.pop %v3459
        %v3461 = vmul.f32 %v3436, 1.442695
        %v3462 = vpow.pop %v3461
        %v3463 = vmul.f32 %v3437, 1.442695
        %v3464 = vpow.pop %v3463
        %v3465 = vmul.f32 %v3438, 1.442695
        %v3466 = vpow.pop %v3465
        %v3467 = vmul.f32 %v3439, 1.442695
        %v3468 = vpow.pop %v3467
        %v3469 = vmul.f32 %v3440, 1.442695
        %v3470 = vpow.pop %v3469
        %v3471 = vmul.f32 %v3441, 1.442695
        %v3472 = vpow.pop %v3471
        %v3473 = vmul.f32 %v3442, 1.442695
        %v3474 = vpow.pop %v3473
        %v3475 = vadd.f32 %v3444, 1.0
        %v3476 = vadd.f32 %v3446, 1.0
        %v3477 = vadd.f32 %v3448, 1.0
        %v3478 = vadd.f32 %v3450, 1.0
        %v3479 = vadd.f32 %v3452, 1.0
        %v3480 = vadd.f32 %v3454, 1.0
        %v3481 = vadd.f32 %v3456, 1.0
        %v3482 = vadd.f32 %v3458, 1.0
        %v3483 = vadd.f32 %v3460, 1.0
        %v3484 = vadd.f32 %v3462, 1.0
        %v3485 = vadd.f32 %v3464, 1.0
        %v3486 = vadd.f32 %v3466, 1.0
        %v3487 = vadd.f32 %v3468, 1.0
        %v3488 = vadd.f32 %v3470, 1.0
        %v3489 = vadd.f32 %v3472, 1.0
        %v3490 = vadd.f32 %v3474, 1.0
        %v3491 = vrcp.pop %v3475
        %v3492 = vmul.f32 1.0, %v3491
        %v3493 = vrcp.pop %v3476
        %v3494 = vmul.f32 1.0, %v3493
        %v3495 = vrcp.pop %v3477
        %v3496 = vmul.f32 1.0, %v3495
        %v3497 = vrcp.pop %v3478
        %v3498 = vmul.f32 1.0, %v3497
        %v3499 = vrcp.pop %v3479
        %v3500 = vmul.f32 1.0, %v3499
        %v3501 = vrcp.pop %v3480
        %v3502 = vmul.f32 1.0, %v3501
        %v3503 = vrcp.pop %v3481
        %v3504 = vmul.f32 1.0, %v3503
        %v3505 = vrcp.pop %v3482
        %v3506 = vmul.f32 1.0, %v3505
        %v3507 = vrcp.pop %v3483
        %v3508 = vmul.f32 1.0, %v3507
        %v3509 = vrcp.pop %v3484
        %v3510 = vmul.f32 1.0, %v3509
        %v3511 = vrcp.pop %v3485
        %v3512 = vmul.f32 1.0, %v3511
        %v3513 = vrcp.pop %v3486
        %v3514 = vmul.f32 1.0, %v3513
        %v3515 = vrcp.pop %v3487
        %v3516 = vmul.f32 1.0, %v3515
        %v3517 = vrcp.pop %v3488
        %v3518 = vmul.f32 1.0, %v3517
        %v3519 = vrcp.pop %v3489
        %v3520 = vmul.f32 1.0, %v3519
        %v3521 = vrcp.pop %v3490
        %v3522 = vmul.f32 1.0, %v3521
        %v3523 = vmul.f32 %v3411, %v3492
        %v3524 = vmul.f32 %v3412, %v3494
        %v3525 = vmul.f32 %v3413, %v3496
        %v3526 = vmul.f32 %v3414, %v3498
        %v3527 = vmul.f32 %v3415, %v3500
        %v3528 = vmul.f32 %v3416, %v3502
        %v3529 = vmul.f32 %v3417, %v3504
        %v3530 = vmul.f32 %v3418, %v3506
        %v3531 = vmul.f32 %v3419, %v3508
        %v3532 = vmul.f32 %v3420, %v3510
        %v3533 = vmul.f32 %v3421, %v3512
        %v3534 = vmul.f32 %v3422, %v3514
        %v3535 = vmul.f32 %v3423, %v3516
        %v3536 = vmul.f32 %v3424, %v3518
        %v3537 = vmul.f32 %v3425, %v3520
        %v3538 = vmul.f32 %v3426, %v3522
        %v3539 = vpack.c.bf16 %v3524, %v3523
        %v3540 = vpack.c.bf16 %v3526, %v3525
        %v3541 = vpack.c.bf16 %v3528, %v3527
        %v3542 = vpack.c.bf16 %v3530, %v3529
        %v3543 = vpack.c.bf16 %v3532, %v3531
        %v3544 = vpack.c.bf16 %v3534, %v3533
        %v3545 = vpack.c.bf16 %v3536, %v3535
        %v3546 = vpack.c.bf16 %v3538, %v3537
        %v3547 = vunpack.c.h.b16 %v316
        %v3548 = vunpack.c.h.b16 %v320
        %v3549 = vunpack.c.h.b16 %v324
        %v3550 = vunpack.c.h.b16 %v328
        %v3551 = vunpack.c.h.b16 %v332
        %v3552 = vunpack.c.h.b16 %v336
        %v3553 = vunpack.c.h.b16 %v340
        %v3554 = vunpack.c.h.b16 %v344
        %v3555 = vunpack.c.h.b16 %v348
        %v3556 = vunpack.c.h.b16 %v352
        %v3557 = vunpack.c.h.b16 %v356
        %v3558 = vunpack.c.h.b16 %v360
        %v3559 = vunpack.c.h.b16 %v364
        %v3560 = vunpack.c.h.b16 %v368
        %v3561 = vunpack.c.h.b16 %v372
        %v3562 = vunpack.c.h.b16 %v376
        %v3563 = vpack.c.b16 %v3548, %v3547
        %v3564 = vpack.c.b16 %v3550, %v3549
        %v3565 = vpack.c.b16 %v3552, %v3551
        %v3566 = vpack.c.b16 %v3554, %v3553
        %v3567 = vpack.c.b16 %v3556, %v3555
        %v3568 = vpack.c.b16 %v3558, %v3557
        %v3569 = vpack.c.b16 %v3560, %v3559
        %v3570 = vpack.c.b16 %v3562, %v3561
        %3579 = vmatprep.subr.bf16.mxu0 0
        %3580 = vmatpush1.bf16.msra.mxu0 %v3563
        %3581 = vmatprep.subr.bf16.mxu0 0
        %3582 = vmatpush1.bf16.msra.mxu0 %v3564
        %3583 = vmatprep.subr.bf16.mxu0 0
        %3584 = vmatpush1.bf16.msra.mxu0 %v3565
        %3585 = vmatprep.subr.bf16.mxu0 0
        %3586 = vmatpush1.bf16.msra.mxu0 %v3566
        %3587 = vmatprep.subr.bf16.mxu0 0
        %3588 = vmatpush1.bf16.msra.mxu0 %v3567
        %3589 = vmatprep.subr.bf16.mxu0 0
        %3590 = vmatpush1.bf16.msra.mxu0 %v3568
        %3591 = vmatprep.subr.bf16.mxu0 0
        %3592 = vmatpush1.bf16.msra.mxu0 %v3569
        %3593 = vmatprep.subr.bf16.mxu0 0
        %3594 = vmatpush1.bf16.msra.mxu0 %v3570
        %3595 = vmatprep.subr.bf16.mxu0 0
        %3596 = vmatpush1.bf16.msra.mxu0 0
        %3597 = vmatprep.subr.bf16.mxu0 0
        %3598 = vmatpush1.bf16.msra.mxu0 0
        %3599 = vmatprep.subr.bf16.mxu0 0
        %3600 = vmatpush1.bf16.msra.mxu0 0
        %3601 = vmatprep.subr.bf16.mxu0 0
        %3602 = vmatpush1.bf16.msra.mxu0 0
        %3603 = vmatprep.subr.bf16.mxu0 0
        %3604 = vmatpush1.bf16.msra.mxu0 0
        %3605 = vmatprep.subr.bf16.mxu0 0
        %3606 = vmatpush1.bf16.msra.mxu0 0
        %3607 = vmatprep.subr.bf16.mxu0 0
        %3608 = vmatpush1.bf16.msra.mxu0 0
        %3609 = vmatprep.subr.bf16.mxu0 0
        %3610 = vmatpush1.bf16.msra.mxu0 0
        %3611 = vmatprep.mubr.bf16.mxu0 0
        %3612 = vmatmul.mubr.bf16.gmra.mrb[0].mxu0 %v3539
        %v3613 = vpop.f32.mrb[0].mxu0
        %v3614 = vadd.f32 0.0, %v3613
        %v3615 = vpop.f32.mrb[0].mxu0
        %v3616 = vpop.f32.mrb[0].mxu0
        %v3617 = vadd.f32 0.0, %v3616
        %v3618 = vpop.f32.mrb[0].mxu0
        %3619 = vmatprep.mubr.bf16.mxu0 0
        %3620 = vmatmul.mubr.bf16.gmra.mrb[0].mxu0 %v3540
        %v3621 = vpop.f32.mrb[0].mxu0
        %v3622 = vadd.f32 0.0, %v3621
        %v3623 = vpop.f32.mrb[0].mxu0
        %v3624 = vpop.f32.mrb[0].mxu0
        %v3625 = vadd.f32 0.0, %v3624
        %v3626 = vpop.f32.mrb[0].mxu0
        %3627 = vmatprep.mubr.bf16.mxu0 0
        %3628 = vmatmul.mubr.bf16.gmra.mrb[0].mxu0 %v3541
        %v3629 = vpop.f32.mrb[0].mxu0
        %v3630 = vadd.f32 0.0, %v3629
        %v3631 = vpop.f32.mrb[0].mxu0
        %v3632 = vpop.f32.mrb[0].mxu0
        %v3633 = vadd.f32 0.0, %v3632
        %v3634 = vpop.f32.mrb[0].mxu0
        %3635 = vmatprep.mubr.bf16.mxu0 0
        %3636 = vmatmul.mubr.bf16.gmra.mrb[0].mxu0 %v3542
        %v3637 = vpop.f32.mrb[0].mxu0
        %v3638 = vadd.f32 0.0, %v3637
        %v3639 = vpop.f32.mrb[0].mxu0
        %v3640 = vpop.f32.mrb[0].mxu0
        %v3641 = vadd.f32 0.0, %v3640
        %v3642 = vpop.f32.mrb[0].mxu0
        %3643 = vmatprep.mubr.bf16.mxu0 0
        %3644 = vmatmul.mubr.bf16.gmra.mrb[0].mxu0 %v3543
        %v3645 = vpop.f32.mrb[0].mxu0
        %v3646 = vadd.f32 0.0, %v3645
        %v3647 = vpop.f32.mrb[0].mxu0
        %v3648 = vpop.f32.mrb[0].mxu0
        %v3649 = vadd.f32 0.0, %v3648
        %v3650 = vpop.f32.mrb[0].mxu0
        %3651 = vmatprep.mubr.bf16.mxu0 0
        %3652 = vmatmul.mubr.bf16.gmra.mrb[0].mxu0 %v3544
        %v3653 = vpop.f32.mrb[0].mxu0
        %v3654 = vadd.f32 0.0, %v3653
        %v3655 = vpop.f32.mrb[0].mxu0
        %v3656 = vpop.f32.mrb[0].mxu0
        %v3657 = vadd.f32 0.0, %v3656
        %v3658 = vpop.f32.mrb[0].mxu0
        %3659 = vmatprep.mubr.bf16.mxu0 0
        %3660 = vmatmul.mubr.bf16.gmra.mrb[0].mxu0 %v3545
        %v3661 = vpop.f32.mrb[0].mxu0
        %v3662 = vadd.f32 0.0, %v3661
        %v3663 = vpop.f32.mrb[0].mxu0
        %v3664 = vpop.f32.mrb[0].mxu0
        %v3665 = vadd.f32 0.0, %v3664
        %v3666 = vpop.f32.mrb[0].mxu0
        %3667 = vmatprep.mubr.bf16.mxu0 0
        %3668 = vmatmul.mubr.bf16.gmra.mrb[0].mxu0 %v3546
        %v3669 = vpop.f32.mrb[0].mxu0
        %v3670 = vadd.f32 0.0, %v3669
        %v3671 = vpop.f32.mrb[0].mxu0
        %v3672 = vpop.f32.mrb[0].mxu0
        %v3673 = vadd.f32 0.0, %v3672
        %v3674 = vpop.f32.mrb[0].mxu0
        %3675 = vdwg.mxu0
        %v3676 = vadd.f32 %v2612, %v3614
        %v3677 = vadd.f32 %v2613, %v3617
        %v3678 = vadd.f32 %v2614, %v3622
        %v3679 = vadd.f32 %v2615, %v3625
        %v3680 = vadd.f32 %v2616, %v3630
        %v3681 = vadd.f32 %v2617, %v3633
        %v3682 = vadd.f32 %v2618, %v3638
        %v3683 = vadd.f32 %v2619, %v3641
        %v3684 = vadd.f32 %v2620, %v3646
        %v3685 = vadd.f32 %v2621, %v3649
        %v3686 = vadd.f32 %v2622, %v3654
        %v3687 = vadd.f32 %v2623, %v3657
        %v3688 = vadd.f32 %v2624, %v3662
        %v3689 = vadd.f32 %v2625, %v3665
        %v3690 = vadd.f32 %v2626, %v3670
        %v3691 = vadd.f32 %v2627, %v3673
        %v3692 = vlaneseq
        %v3693 = vshrl.u32 %v3692, 7
        %v3694 = vsub.s32 7, %v3693
        %v3695 = vrot.slane %v378, %v3694
        %v3696 = vadd.f32 %v3676, %v3695
        %v3697 = vadd.f32 %v3677, %v3695
        %v3698 = vadd.f32 %v3678, %v3695
        %v3699 = vadd.f32 %v3679, %v3695
        %v3700 = vadd.f32 %v3680, %v3695
        %v3701 = vadd.f32 %v3681, %v3695
        %v3702 = vadd.f32 %v3682, %v3695
        %v3703 = vadd.f32 %v3683, %v3695
        %v3704 = vadd.f32 %v3684, %v3695
        %v3705 = vadd.f32 %v3685, %v3695
        %v3706 = vadd.f32 %v3686, %v3695
        %v3707 = vadd.f32 %v3687, %v3695
        %v3708 = vadd.f32 %v3688, %v3695
        %v3709 = vadd.f32 %v3689, %v3695
        %v3710 = vadd.f32 %v3690, %v3695
        %v3711 = vadd.f32 %v3691, %v3695
        %v3712 = vpack.c.bf16 %v3697, %v3696
        %v3713 = vpack.c.bf16 %v3699, %v3698
        %v3714 = vpack.c.bf16 %v3701, %v3700
        %v3715 = vpack.c.bf16 %v3703, %v3702
        %v3716 = vpack.c.bf16 %v3705, %v3704
        %v3717 = vpack.c.bf16 %v3707, %v3706
        %v3718 = vpack.c.bf16 %v3709, %v3708
        %v3719 = vpack.c.bf16 %v3711, %v3710
        %3720 = vmatprep.subr.bf16.mxu0 0
        %3721 = vmatpush1.bf16.msra.mxu0 %v422
        %3722 = vmatprep.subr.bf16.mxu0 0
        %3723 = vmatpush1.bf16.msra.mxu0 %v423
        %3724 = vmatprep.subr.bf16.mxu0 0
        %3725 = vmatpush1.bf16.msra.mxu0 %v424
        %3726 = vmatprep.subr.bf16.mxu0 0
        %3727 = vmatpush1.bf16.msra.mxu0 %v425
        %3728 = vmatprep.subr.bf16.mxu0 0
        %3729 = vmatpush1.bf16.msra.mxu0 %v426
        %3730 = vmatprep.subr.bf16.mxu0 0
        %3731 = vmatpush1.bf16.msra.mxu0 %v427
        %3732 = vmatprep.subr.bf16.mxu0 0
        %3733 = vmatpush1.bf16.msra.mxu0 %v428
        %3734 = vmatprep.subr.bf16.mxu0 0
        %3735 = vmatpush1.bf16.msra.mxu0 %v429
        %3736 = vmatprep.subr.bf16.mxu0 0
        %3737 = vmatpush1.bf16.msra.mxu0 0
        %3738 = vmatprep.subr.bf16.mxu0 0
        %3739 = vmatpush1.bf16.msra.mxu0 0
        %3740 = vmatprep.subr.bf16.mxu0 0
        %3741 = vmatpush1.bf16.msra.mxu0 0
        %3742 = vmatprep.subr.bf16.mxu0 0
        %3743 = vmatpush1.bf16.msra.mxu0 0
        %3744 = vmatprep.subr.bf16.mxu0 0
        %3745 = vmatpush1.bf16.msra.mxu0 0
        %3746 = vmatprep.subr.bf16.mxu0 0
        %3747 = vmatpush1.bf16.msra.mxu0 0
        %3748 = vmatprep.subr.bf16.mxu0 0
        %3749 = vmatpush1.bf16.msra.mxu0 0
        %3750 = vmatprep.subr.bf16.mxu0 0
        %3751 = vmatpush1.bf16.msra.mxu0 0
        %3752 = vmatprep.mubr.bf16.mxu0 0
        %3753 = vmatmul.mubr.bf16.gmra.mrb[0].mxu0 %v3712
        %v3754 = vpop.f32.mrb[0].mxu0
        %v3755 = vadd.f32 0.0, %v3754
        %v3756 = vpop.f32.mrb[0].mxu0
        %v3757 = vpop.f32.mrb[0].mxu0
        %v3758 = vadd.f32 0.0, %v3757
        %v3759 = vpop.f32.mrb[0].mxu0
        %3760 = vmatprep.mubr.bf16.mxu0 0
        %3761 = vmatmul.mubr.bf16.gmra.mrb[0].mxu0 %v3713
        %v3762 = vpop.f32.mrb[0].mxu0
        %v3763 = vadd.f32 0.0, %v3762
        %v3764 = vpop.f32.mrb[0].mxu0
        %v3765 = vpop.f32.mrb[0].mxu0
        %v3766 = vadd.f32 0.0, %v3765
        %v3767 = vpop.f32.mrb[0].mxu0
        %3768 = vmatprep.mubr.bf16.mxu0 0
        %3769 = vmatmul.mubr.bf16.gmra.mrb[0].mxu0 %v3714
        %v3770 = vpop.f32.mrb[0].mxu0
        %v3771 = vadd.f32 0.0, %v3770
        %v3772 = vpop.f32.mrb[0].mxu0
        %v3773 = vpop.f32.mrb[0].mxu0
        %v3774 = vadd.f32 0.0, %v3773
        %v3775 = vpop.f32.mrb[0].mxu0
        %3776 = vmatprep.mubr.bf16.mxu0 0
        %3777 = vmatmul.mubr.bf16.gmra.mrb[0].mxu0 %v3715
        %v3778 = vpop.f32.mrb[0].mxu0
        %v3779 = vadd.f32 0.0, %v3778
        %v3780 = vpop.f32.mrb[0].mxu0
        %v3781 = vpop.f32.mrb[0].mxu0
        %v3782 = vadd.f32 0.0, %v3781
        %v3783 = vpop.f32.mrb[0].mxu0
        %3784 = vmatprep.mubr.bf16.mxu0 0
        %3785 = vmatmul.mubr.bf16.gmra.mrb[0].mxu0 %v3716
        %v3786 = vpop.f32.mrb[0].mxu0
        %v3787 = vadd.f32 0.0, %v3786
        %v3788 = vpop.f32.mrb[0].mxu0
        %v3789 = vpop.f32.mrb[0].mxu0
        %v3790 = vadd.f32 0.0, %v3789
        %v3791 = vpop.f32.mrb[0].mxu0
        %3792 = vmatprep.mubr.bf16.mxu0 0
        %3793 = vmatmul.mubr.bf16.gmra.mrb[0].mxu0 %v3717
        %v3794 = vpop.f32.mrb[0].mxu0
        %v3795 = vadd.f32 0.0, %v3794
        %v3796 = vpop.f32.mrb[0].mxu0
        %v3797 = vpop.f32.mrb[0].mxu0
        %v3798 = vadd.f32 0.0, %v3797
        %v3799 = vpop.f32.mrb[0].mxu0
        %3800 = vmatprep.mubr.bf16.mxu0 0
        %3801 = vmatmul.mubr.bf16.gmra.mrb[0].mxu0 %v3718
        %v3802 = vpop.f32.mrb[0].mxu0
        %v3803 = vadd.f32 0.0, %v3802
        %v3804 = vpop.f32.mrb[0].mxu0
        %v3805 = vpop.f32.mrb[0].mxu0
        %v3806 = vadd.f32 0.0, %v3805
        %v3807 = vpop.f32.mrb[0].mxu0
        %3808 = vmatprep.mubr.bf16.mxu0 0
        %3809 = vmatmul.mubr.bf16.gmra.mrb[0].mxu0 %v3719
        %v3810 = vpop.f32.mrb[0].mxu0
        %v3811 = vadd.f32 0.0, %v3810
        %v3812 = vpop.f32.mrb[0].mxu0
        %v3813 = vpop.f32.mrb[0].mxu0
        %v3814 = vadd.f32 0.0, %v3813
        %v3815 = vpop.f32.mrb[0].mxu0
        %3816 = vdwg.mxu0
        %v3817 = vadd.f32 %v3696, %v3755
        %v3818 = vadd.f32 %v3697, %v3758
        %v3819 = vadd.f32 %v3698, %v3763
        %v3820 = vadd.f32 %v3699, %v3766
        %v3821 = vadd.f32 %v3700, %v3771
        %v3822 = vadd.f32 %v3701, %v3774
        %v3823 = vadd.f32 %v3702, %v3779
        %v3824 = vadd.f32 %v3703, %v3782
        %v3825 = vadd.f32 %v3704, %v3787
        %v3826 = vadd.f32 %v3705, %v3790
        %v3827 = vadd.f32 %v3706, %v3795
        %v3828 = vadd.f32 %v3707, %v3798
        %v3829 = vadd.f32 %v3708, %v3803
        %v3830 = vadd.f32 %v3709, %v3806
        %v3831 = vadd.f32 %v3710, %v3811
        %v3832 = vadd.f32 %v3711, %v3814
        %v3833 = vadd.f32 %v3817, %v574
        %v3834 = vadd.f32 %v3818, %v574
        %v3835 = vadd.f32 %v3819, %v574
        %v3836 = vadd.f32 %v3820, %v574
        %v3837 = vadd.f32 %v3821, %v574
        %v3838 = vadd.f32 %v3822, %v574
        %v3839 = vadd.f32 %v3823, %v574
        %v3840 = vadd.f32 %v3824, %v574
        %v3841 = vadd.f32 %v3825, %v574
        %v3842 = vadd.f32 %v3826, %v574
        %v3843 = vadd.f32 %v3827, %v574
        %v3844 = vadd.f32 %v3828, %v574
        %v3845 = vadd.f32 %v3829, %v574
        %v3846 = vadd.f32 %v3830, %v574
        %v3847 = vadd.f32 %v3831, %v574
        %v3848 = vadd.f32 %v3832, %v574
        %3849 = vadd.xlane.f32.xlu0 %v3833
        %v3850 = vpop.xlane.xlu0 %3849
        %3851 = vadd.xlane.f32.xlu0 %v3834
        %v3852 = vpop.xlane.xlu0 %3851
        %3853 = vadd.xlane.f32.xlu0 %v3835
        %v3854 = vpop.xlane.xlu0 %3853
        %3855 = vadd.xlane.f32.xlu0 %v3836
        %v3856 = vpop.xlane.xlu0 %3855
        %3857 = vadd.xlane.f32.xlu0 %v3837
        %v3858 = vpop.xlane.xlu0 %3857
        %3859 = vadd.xlane.f32.xlu0 %v3838
        %v3860 = vpop.xlane.xlu0 %3859
        %3861 = vadd.xlane.f32.xlu0 %v3839
        %v3862 = vpop.xlane.xlu0 %3861
        %3863 = vadd.xlane.f32.xlu0 %v3840
        %v3864 = vpop.xlane.xlu0 %3863
        %3865 = vadd.xlane.f32.xlu0 %v3841
        %v3866 = vpop.xlane.xlu0 %3865
        %3867 = vadd.xlane.f32.xlu0 %v3842
        %v3868 = vpop.xlane.xlu0 %3867
        %3869 = vadd.xlane.f32.xlu0 %v3843
        %v3870 = vpop.xlane.xlu0 %3869
        %3871 = vadd.xlane.f32.xlu0 %v3844
        %v3872 = vpop.xlane.xlu0 %3871
        %3873 = vadd.xlane.f32.xlu0 %v3845
        %v3874 = vpop.xlane.xlu0 %3873
        %3875 = vadd.xlane.f32.xlu0 %v3846
        %v3876 = vpop.xlane.xlu0 %3875
        %3877 = vadd.xlane.f32.xlu0 %v3847
        %v3878 = vpop.xlane.xlu0 %3877
        %3879 = vadd.xlane.f32.xlu0 %v3848
        %v3880 = vpop.xlane.xlu0 %3879
        %v3881 = vmul.f32 %v3850, %v635
        %v3882 = vmul.f32 %v3852, %v635
        %v3883 = vmul.f32 %v3854, %v635
        %v3884 = vmul.f32 %v3856, %v635
        %v3885 = vmul.f32 %v3858, %v635
        %v3886 = vmul.f32 %v3860, %v635
        %v3887 = vmul.f32 %v3862, %v635
        %v3888 = vmul.f32 %v3864, %v635
        %v3889 = vmul.f32 %v3866, %v635
        %v3890 = vmul.f32 %v3868, %v635
        %v3891 = vmul.f32 %v3870, %v635
        %v3892 = vmul.f32 %v3872, %v635
        %v3893 = vmul.f32 %v3874, %v635
        %v3894 = vmul.f32 %v3876, %v635
        %v3895 = vmul.f32 %v3878, %v635
        %v3896 = vmul.f32 %v3880, %v635
        %v3897 = vsub.f32 %v3833, %v3881
        %v3898 = vsub.f32 %v3834, %v3882
        %v3899 = vsub.f32 %v3835, %v3883
        %v3900 = vsub.f32 %v3836, %v3884
        %v3901 = vsub.f32 %v3837, %v3885
        %v3902 = vsub.f32 %v3838, %v3886
        %v3903 = vsub.f32 %v3839, %v3887
        %v3904 = vsub.f32 %v3840, %v3888
        %v3905 = vsub.f32 %v3841, %v3889
        %v3906 = vsub.f32 %v3842, %v3890
        %v3907 = vsub.f32 %v3843, %v3891
        %v3908 = vsub.f32 %v3844, %v3892
        %v3909 = vsub.f32 %v3845, %v3893
        %v3910 = vsub.f32 %v3846, %v3894
        %v3911 = vsub.f32 %v3847, %v3895
        %v3912 = vsub.f32 %v3848, %v3896
        %v3913 = vmul.f32 %v3897, %v3897
        %v3914 = vmul.f32 %v3898, %v3898
        %v3915 = vmul.f32 %v3899, %v3899
        %v3916 = vmul.f32 %v3900, %v3900
        %v3917 = vmul.f32 %v3901, %v3901
        %v3918 = vmul.f32 %v3902, %v3902
        %v3919 = vmul.f32 %v3903, %v3903
        %v3920 = vmul.f32 %v3904, %v3904
        %v3921 = vmul.f32 %v3905, %v3905
        %v3922 = vmul.f32 %v3906, %v3906
        %v3923 = vmul.f32 %v3907, %v3907
        %v3924 = vmul.f32 %v3908, %v3908
        %v3925 = vmul.f32 %v3909, %v3909
        %v3926 = vmul.f32 %v3910, %v3910
        %v3927 = vmul.f32 %v3911, %v3911
        %v3928 = vmul.f32 %v3912, %v3912
        %3929 = vadd.xlane.f32.xlu0 %v3913
        %v3930 = vpop.xlane.xlu0 %3929
        %3931 = vadd.xlane.f32.xlu0 %v3914
        %v3932 = vpop.xlane.xlu0 %3931
        %3933 = vadd.xlane.f32.xlu0 %v3915
        %v3934 = vpop.xlane.xlu0 %3933
        %3935 = vadd.xlane.f32.xlu0 %v3916
        %v3936 = vpop.xlane.xlu0 %3935
        %3937 = vadd.xlane.f32.xlu0 %v3917
        %v3938 = vpop.xlane.xlu0 %3937
        %3939 = vadd.xlane.f32.xlu0 %v3918
        %v3940 = vpop.xlane.xlu0 %3939
        %3941 = vadd.xlane.f32.xlu0 %v3919
        %v3942 = vpop.xlane.xlu0 %3941
        %3943 = vadd.xlane.f32.xlu0 %v3920
        %v3944 = vpop.xlane.xlu0 %3943
        %3945 = vadd.xlane.f32.xlu0 %v3921
        %v3946 = vpop.xlane.xlu0 %3945
        %3947 = vadd.xlane.f32.xlu0 %v3922
        %v3948 = vpop.xlane.xlu0 %3947
        %3949 = vadd.xlane.f32.xlu0 %v3923
        %v3950 = vpop.xlane.xlu0 %3949
        %3951 = vadd.xlane.f32.xlu0 %v3924
        %v3952 = vpop.xlane.xlu0 %3951
        %3953 = vadd.xlane.f32.xlu0 %v3925
        %v3954 = vpop.xlane.xlu0 %3953
        %3955 = vadd.xlane.f32.xlu0 %v3926
        %v3956 = vpop.xlane.xlu0 %3955
        %3957 = vadd.xlane.f32.xlu0 %v3927
        %v3958 = vpop.xlane.xlu0 %3957
        %3959 = vadd.xlane.f32.xlu0 %v3928
        %v3960 = vpop.xlane.xlu0 %3959
        %v3961 = vmul.f32 %v3930, %v635
        %v3962 = vmul.f32 %v3932, %v635
        %v3963 = vmul.f32 %v3934, %v635
        %v3964 = vmul.f32 %v3936, %v635
        %v3965 = vmul.f32 %v3938, %v635
        %v3966 = vmul.f32 %v3940, %v635
        %v3967 = vmul.f32 %v3942, %v635
        %v3968 = vmul.f32 %v3944, %v635
        %v3969 = vmul.f32 %v3946, %v635
        %v3970 = vmul.f32 %v3948, %v635
        %v3971 = vmul.f32 %v3950, %v635
        %v3972 = vmul.f32 %v3952, %v635
        %v3973 = vmul.f32 %v3954, %v635
        %v3974 = vmul.f32 %v3956, %v635
        %v3975 = vmul.f32 %v3958, %v635
        %v3976 = vmul.f32 %v3960, %v635
        %v3977 = vadd.f32 %v3961, 1e-05
        %v3978 = vadd.f32 %v3962, 1e-05
        %v3979 = vadd.f32 %v3963, 1e-05
        %v3980 = vadd.f32 %v3964, 1e-05
        %v3981 = vadd.f32 %v3965, 1e-05
        %v3982 = vadd.f32 %v3966, 1e-05
        %v3983 = vadd.f32 %v3967, 1e-05
        %v3984 = vadd.f32 %v3968, 1e-05
        %v3985 = vadd.f32 %v3969, 1e-05
        %v3986 = vadd.f32 %v3970, 1e-05
        %v3987 = vadd.f32 %v3971, 1e-05
        %v3988 = vadd.f32 %v3972, 1e-05
        %v3989 = vadd.f32 %v3973, 1e-05
        %v3990 = vadd.f32 %v3974, 1e-05
        %v3991 = vadd.f32 %v3975, 1e-05
        %v3992 = vadd.f32 %v3976, 1e-05
        %v3993 = vrsqrt.pop %v3977
        %v3994 = vrsqrt.pop %v3978
        %v3995 = vrsqrt.pop %v3979
        %v3996 = vrsqrt.pop %v3980
        %v3997 = vrsqrt.pop %v3981
        %v3998 = vrsqrt.pop %v3982
        %v3999 = vrsqrt.pop %v3983
        %v4000 = vrsqrt.pop %v3984
        %v4001 = vrsqrt.pop %v3985
        %v4002 = vrsqrt.pop %v3986
        %v4003 = vrsqrt.pop %v3987
        %v4004 = vrsqrt.pop %v3988
        %v4005 = vrsqrt.pop %v3989
        %v4006 = vrsqrt.pop %v3990
        %v4007 = vrsqrt.pop %v3991
        %v4008 = vrsqrt.pop %v3992
        %v4009 = vmul.f32 %v3897, %v3993
        %v4010 = vmul.f32 %v3898, %v3994
        %v4011 = vmul.f32 %v3899, %v3995
        %v4012 = vmul.f32 %v3900, %v3996
        %v4013 = vmul.f32 %v3901, %v3997
        %v4014 = vmul.f32 %v3902, %v3998
        %v4015 = vmul.f32 %v3903, %v3999
        %v4016 = vmul.f32 %v3904, %v4000
        %v4017 = vmul.f32 %v3905, %v4001
        %v4018 = vmul.f32 %v3906, %v4002
        %v4019 = vmul.f32 %v3907, %v4003
        %v4020 = vmul.f32 %v3908, %v4004
        %v4021 = vmul.f32 %v3909, %v4005
        %v4022 = vmul.f32 %v3910, %v4006
        %v4023 = vmul.f32 %v3911, %v4007
        %v4024 = vmul.f32 %v3912, %v4008
        %v4025 = vlaneseq
        %v4026 = vshrl.u32 %v4025, 7
        %v4027 = vsub.s32 0, %v4026
        %v4028 = vrot.slane %v379, %v4027
        %v4029 = vmul.f32 %v4009, %v4028
        %v4030 = vmul.f32 %v4010, %v4028
        %v4031 = vmul.f32 %v4011, %v4028
        %v4032 = vmul.f32 %v4012, %v4028
        %v4033 = vmul.f32 %v4013, %v4028
        %v4034 = vmul.f32 %v4014, %v4028
        %v4035 = vmul.f32 %v4015, %v4028
        %v4036 = vmul.f32 %v4016, %v4028
        %v4037 = vmul.f32 %v4017, %v4028
        %v4038 = vmul.f32 %v4018, %v4028
        %v4039 = vmul.f32 %v4019, %v4028
        %v4040 = vmul.f32 %v4020, %v4028
        %v4041 = vmul.f32 %v4021, %v4028
        %v4042 = vmul.f32 %v4022, %v4028
        %v4043 = vmul.f32 %v4023, %v4028
        %v4044 = vmul.f32 %v4024, %v4028
        %v4045 = vlaneseq
        %v4046 = vshrl.u32 %v4045, 7
        %v4047 = vsub.s32 1, %v4046
        %v4048 = vrot.slane %v379, %v4047
        %v4049 = vadd.f32 %v4029, %v4048
        %v4050 = vadd.f32 %v4030, %v4048
        %v4051 = vadd.f32 %v4031, %v4048
        %v4052 = vadd.f32 %v4032, %v4048
        %v4053 = vadd.f32 %v4033, %v4048
        %v4054 = vadd.f32 %v4034, %v4048
        %v4055 = vadd.f32 %v4035, %v4048
        %v4056 = vadd.f32 %v4036, %v4048
        %v4057 = vadd.f32 %v4037, %v4048
        %v4058 = vadd.f32 %v4038, %v4048
        %v4059 = vadd.f32 %v4039, %v4048
        %v4060 = vadd.f32 %v4040, %v4048
        %v4061 = vadd.f32 %v4041, %v4048
        %v4062 = vadd.f32 %v4042, %v4048
        %v4063 = vadd.f32 %v4043, %v4048
        %v4064 = vadd.f32 %v4044, %v4048
        %4065 = vst [vmem:[%s285] sm:$0xff] %v4049
        %4066 = vst [vmem:[%s285 + $0x8] sm:$0xff] %v4050
        %4067 = vst [vmem:[%s285 + $0x10] sm:$0xff] %v4051
        %4068 = vst [vmem:[%s285 + $0x18] sm:$0xff] %v4052
        %4069 = vst [vmem:[%s285 + $0x20] sm:$0xff] %v4053
        %4070 = vst [vmem:[%s285 + $0x28] sm:$0xff] %v4054
        %4071 = vst [vmem:[%s285 + $0x30] sm:$0xff] %v4055
        %4072 = vst [vmem:[%s285 + $0x38] sm:$0xff] %v4056
        %4073 = vst [vmem:[%s285 + $0x40] sm:$0xff] %v4057
        %4074 = vst [vmem:[%s285 + $0x48] sm:$0xff] %v4058
        %4075 = vst [vmem:[%s285 + $0x50] sm:$0xff] %v4059
        %4076 = vst [vmem:[%s285 + $0x58] sm:$0xff] %v4060
        %4077 = vst [vmem:[%s285 + $0x60] sm:$0xff] %v4061
        %4078 = vst [vmem:[%s285 + $0x68] sm:$0xff] %v4062
        %4079 = vst [vmem:[%s285 + $0x70] sm:$0xff] %v4063
        %4080 = vst [vmem:[%s285 + $0x78] sm:$0xff] %v4064
        %s4081 = sand.u32 %s127, 1
        %s4082 = scalar_lea.sflag [#allocation4], %s4081
        %s4083 = sand.u32 %s127, 1
        %s4084 = smul.addr %s4083, 128
        %s4085 = scalar_lea.vmem [#allocation10], %s4084
        // Predicated region
        $region53: #{tpu_custom_call.1} parent=35 // pred_check
          %p4086 = pneg %p137
        $region54: #{tpu_custom_call.1} parent=35 // pred_check_branch
          %4088 = sbr.rel (%p4086) target = $region56
        $region55: #{tpu_custom_call.1} parent=35 // pred_region
          %s4089 = smul.u32 8, %s25
          %s4091 = ssub.s32 2048, 2048
          %4092 = vsyncadd %s4082, %s4091
          %s4093 = smul.addr %s4089, 2
          %s4094 = smul.addr %s4093, 128
          %s4095 = scalar_lea.hbm %s4, %s4094
          %s4096 = sshll.u32 %s4085, 4
          %s4097 = int_to_ptr.vmem [resolvable:$true] %s4096
          %4102 = dma.vmem_to_hbm [thread:$0]  %s4097, 2048, %s4095, %s4082, 128, 128, 8
        $region56: #{tpu_custom_call.1} parent=35 // pred_fallthru
          _
      $region36: #{tpu_custom_call.1} parent=5 // pred_fallthru
        _
      %p4103 = scmp.le.s32.totalorder 2, %s20
      // Predicated region
      $region57: #{tpu_custom_call.1} parent=5 // pred_check
        %p4104 = pneg %p4103
      $region58: #{tpu_custom_call.1} parent=5 // pred_check_branch
        %4106 = sbr.rel (%p4104) target = $region60
      $region59: #{tpu_custom_call.1} parent=5 // pred_region
        %s4107 = ssub.s32 %s20, 2
        // Predicated region
        $region61: #{tpu_custom_call.1} parent=59 // pred_check
          %p4108 = pneg %p143
        $region62: #{tpu_custom_call.1} parent=59 // pred_check_branch
          %4110 = sbr.rel (%p4108) target = $region64
        $region63: #{tpu_custom_call.1} parent=59 // pred_region
          %s4111 = sand.u32 %s128, 1
          %s4112 = scalar_lea.sflag [#allocation4], %s4111
          %s4113 = sand.u32 %s128, 1
          %s4114 = smul.addr %s4113, 128
          %s4115 = scalar_lea.vmem [#allocation10], %s4114
          %4116 = dma.done %s4112, 2048
        $region64: #{tpu_custom_call.1} parent=59 // pred_fallthru
          _
      $region60: #{tpu_custom_call.1} parent=5 // pred_fallthru
        _
    $region6: #{tpu_custom_call.1} parent=1 // loop_footer
      %s24 = sadd.s32 1, %s20
    $region7: #{tpu_custom_call.1} parent=1 // loop_footer_branch
      %19 = sbr.rel target = $region3
    $region8: #{tpu_custom_call.1} parent=1 // loop_exit
      _
    %4117 = vsyncpa [#allocation3], 1
    %s4118 = scalar_lea.sflag [#allocation3], 1
    %4119 = vsyncpa %s4118, 1
    %4120 = vsyncpa [#allocation6], 1
    %s4121 = scalar_lea.sflag [#allocation6], 1
    %4122 = vsyncpa %s4121, 1
    %4123 = vsyncpa [#allocation9], 1
    %4124 = vsyncpa [#allocation4], 1
    %s4125 = scalar_lea.sflag [#allocation4], 1
    %4126 = vsyncpa %s4125, 1

</llo_original>
